<compile_context>
chip_gen: v5e
topology: v5e:2x2
jax: 0.10.0
libtpu: 0.0.40
codegen_flags: <defaults>
</compile_context>

<pallas_src>
import math
from functools import partial

import jax
import jax.numpy as jnp
from jax.experimental import pallas as pl
from jax.experimental.pallas import tpu as pltpu


CP = 128          # padded channel width (lane-dense)
EMBED_DIM = 64    # true num_features of the synthetic TIMM_RN


def _round_up(x, m):
    return (x + m - 1) // m * m


def _pick_tm(M, cap=256):
    # At least two row blocks when possible (keeps both v7x TCs busy, keeps
    # double buffering alive), capped so tiles stay VMEM-friendly.
    return max(8, min(cap, _round_up(-(-M // 2), 8)))


def _pick_tk(K):
    for t in (512, 384, 256, 128):
        if K % t == 0:
            return t
    return K  # K is always a multiple of 128 by construction


# ---------------------------------------------------------------------------
# Fused conv kernel: tiled matmul + BN affine (+residual) (+ReLU) epilogue
# ---------------------------------------------------------------------------

def _fused_matmul_kernel(*refs, relu, has_res):
    if has_res:
        a_ref, b_ref, s_ref, t_ref, r_ref, o_ref, acc_ref = refs
    else:
        a_ref, b_ref, s_ref, t_ref, o_ref, acc_ref = refs
        r_ref = None
    k = pl.program_id(1)

    @pl.when(k == 0)
    def _init():
        acc_ref[...] = jnp.zeros_like(acc_ref)

    acc_ref[...] += jnp.dot(a_ref[...], b_ref[...],
                            preferred_element_type=jnp.float32)

    @pl.when(k == pl.num_programs(1) - 1)
    def _epilogue():
        y = acc_ref[...] * s_ref[...] + t_ref[...]
        if r_ref is not None:
            y = y + r_ref[...].astype(jnp.float32)
        if relu:
            y = jnp.maximum(y, 0.0)
        o_ref[...] = y.astype(o_ref.dtype)


def fused_conv_matmul(a, b, scale, shift, *, relu, residual=None):
    """a: (M, K) bf16 patches, b: (K, CP) bf16, scale/shift: (1, CP) f32.
    residual: optional (M, CP) bf16.  Returns (M, CP) bf16."""
    M, K = a.shape
    Kb, N = b.shape
    assert K == Kb and N == CP
    tm = _pick_tm(M)
    tk = _pick_tk(K)
    grid = (pl.cdiv(M, tm), K // tk)

    in_specs = [
        pl.BlockSpec((tm, tk), lambda i, k: (i, k)),
        pl.BlockSpec((tk, CP), lambda i, k: (k, 0)),
        pl.BlockSpec((1, CP), lambda i, k: (0, 0)),
        pl.BlockSpec((1, CP), lambda i, k: (0, 0)),
    ]
    args = [a, b, scale, shift]
    if residual is not None:
        in_specs.append(pl.BlockSpec((tm, CP), lambda i, k: (i, 0)))
        args.append(residual)

    return pl.pallas_call(
        partial(_fused_matmul_kernel, relu=relu, has_res=residual is not None),
        out_shape=jax.ShapeDtypeStruct((M, CP), jnp.bfloat16),
        grid=grid,
        in_specs=in_specs,
        out_specs=pl.BlockSpec((tm, CP), lambda i, k: (i, 0)),
        scratch_shapes=[pltpu.VMEM((tm, CP), jnp.float32)],
        compiler_params=pltpu.CompilerParams(
            dimension_semantics=("parallel", "arbitrary")),
    )(*args)


# ---------------------------------------------------------------------------
# Max-pool 3x3/s2: elementwise max chain over the 9 taps, tiled over M
# ---------------------------------------------------------------------------

def _max9_kernel(*refs):
    o_ref = refs[-1]
    m = refs[0][...].astype(jnp.float32)
    for r in refs[1:-1]:
        m = jnp.maximum(m, r[...].astype(jnp.float32))
    o_ref[...] = m.astype(o_ref.dtype)


def pallas_max9(taps):
    M, C = taps[0].shape
    tm = _pick_tm(M)
    return pl.pallas_call(
        _max9_kernel,
        out_shape=jax.ShapeDtypeStruct((M, C), taps[0].dtype),
        grid=(pl.cdiv(M, tm),),
        in_specs=[pl.BlockSpec((tm, C), lambda i: (i, 0)) for _ in taps],
        out_specs=pl.BlockSpec((tm, C), lambda i: (i, 0)),
        compiler_params=pltpu.CompilerParams(
            dimension_semantics=("parallel",)),
    )(*taps)


def maxpool_3x3_s2(x):
    """x: (N, H, W, CP) bf16 -> (N, Ho, Wo, CP) bf16."""
    xp = jnp.pad(x, ((0, 0), (1, 1), (1, 1), (0, 0)),
                 constant_values=-jnp.inf)
    N, Hp, Wp, C = xp.shape
    Ho = (Hp - 3) // 2 + 1
    Wo = (Wp - 3) // 2 + 1
    taps = []
    for i in range(3):
        for j in range(3):
            taps.append(
                xp[:, i:i + (Ho - 1) * 2 + 1:2,
                      j:j + (Wo - 1) * 2 + 1:2, :].reshape(N * Ho * Wo, C))
    out = pallas_max9(taps)
    return out.reshape(N, Ho, Wo, C)


# ---------------------------------------------------------------------------
# Global average pool: grid over batch (parallel), f32 reduce
# ---------------------------------------------------------------------------

def _gap_kernel(x_ref, o_ref):
    o_ref[...] = jnp.mean(x_ref[...].astype(jnp.float32), axis=1,
                          keepdims=True)


def pallas_gap(x):
    """(N, H, W, CP) bf16 -> (N, CP) f32 mean over spatial positions."""
    N, H, W, C = x.shape
    xf = x.reshape(N, H * W, C)
    out = pl.pallas_call(
        _gap_kernel,
        out_shape=jax.ShapeDtypeStruct((N, 1, C), jnp.float32),
        grid=(N,),
        in_specs=[pl.BlockSpec((1, H * W, C), lambda i: (i, 0, 0))],
        out_specs=pl.BlockSpec((1, 1, C), lambda i: (i, 0, 0)),
        compiler_params=pltpu.CompilerParams(
            dimension_semantics=("parallel",)),
    )(xf)
    return out.reshape(N, C)


# ---------------------------------------------------------------------------
# Plain-JAX glue: im2col patch extraction (static strides only)
# ---------------------------------------------------------------------------

def _extract_patches(x_nhwc, kh, kw, stride, pad):
    x = jnp.pad(x_nhwc, ((0, 0), (pad, pad), (pad, pad), (0, 0)))
    N, H, W, C = x.shape
    Ho = (H - kh) // stride + 1
    Wo = (W - kw) // stride + 1
    taps = []
    for i in range(kh):
        hi = i + (Ho - 1) * stride + 1
        for j in range(kw):
            wj = j + (Wo - 1) * stride + 1
            taps.append(x[:, i:hi:stride, j:wj:stride, :])
    patches = jnp.stack(taps, axis=-2)           # (N, Ho, Wo, kh*kw, C)
    return patches, (N, Ho, Wo)


def conv_bn(x, cp, kh, kw, stride, pad, relu, residual=None):
    """Fused conv + BN (+residual) (+ReLU).  x: (N,H,W,Cin_p) bf16.
    cp: dict with 'w' (K_pad, CP) bf16, 'scale'/'shift' (1, CP) f32."""
    if kh == 1 and kw == 1:
        if stride > 1:
            x = x[:, ::stride, ::stride, :]
        N, Ho, Wo, Cin = x.shape
        a = x.reshape(N * Ho * Wo, Cin)
    else:
        patches, (N, Ho, Wo) = _extract_patches(x, kh, kw, stride, pad)
        a = patches.reshape(N * Ho * Wo, kh * kw * x.shape[-1])
    K_pad = cp["w"].shape[0]
    if a.shape[1] < K_pad:                       # e.g. stem K=147 -> 256
        a = jnp.pad(a, ((0, 0), (0, K_pad - a.shape[1])))
    out = fused_conv_matmul(a.astype(jnp.bfloat16), cp["w"],
                            cp["scale"], cp["shift"],
                            relu=relu, residual=residual)
    return out.reshape(N, Ho, Wo, CP)


# ---------------------------------------------------------------------------
# Deterministic parameter construction (synthetic, no checkpoint)
# ---------------------------------------------------------------------------

def _make_conv_bn(key, kh, kw, cin, cout, cin_pad):
    k1, k2, k3, k4, k5 = jax.random.split(key, 5)
    fan_in = kh * kw * cin
    w = jax.random.normal(k1, (kh, kw, cin, cout), jnp.float32) / math.sqrt(fan_in)
    gamma = 1.0 + 0.1 * jax.random.normal(k2, (cout,), jnp.float32)
    beta = 0.1 * jax.random.normal(k3, (cout,), jnp.float32)
    mean = 0.1 * jax.random.normal(k4, (cout,), jnp.float32)
    var = 0.9 + 0.2 * jax.random.uniform(k5, (cout,), jnp.float32)
    eps = 1e-5
    scale = gamma * jax.lax.rsqrt(var + eps)
    shift = beta - mean * scale

    # Pad weight to (kh*kw*cin_pad rounded to 128, CP); zeros keep pad lanes 0.
    wp = jnp.zeros((kh, kw, cin_pad, CP), jnp.float32)
    wp = wp.at[:, :, :cin, :cout].set(w)
    K = kh * kw * cin_pad
    K_pad = _round_up(K, 128)
    w_mat = jnp.pad(wp.reshape(K, CP), ((0, K_pad - K), (0, 0)))
    sp = jnp.zeros((1, CP), jnp.float32).at[0, :cout].set(scale)
    tp = jnp.zeros((1, CP), jnp.float32).at[0, :cout].set(shift)
    return {"w": w_mat.astype(jnp.bfloat16), "scale": sp, "shift": tp}


def make_params(key):
    ks = jax.random.split(key, 9)
    p = {}
    # stem: conv1 7x7/2 (3->16), bn1, relu, maxpool 3x3/2
    p["stem"] = _make_conv_bn(ks[0], 7, 7, 3, 16, cin_pad=3)
    # layer1-style bottleneck: in 16, planes 8, out 32, stride 1, w/ downsample
    p["b1_conv1"] = _make_conv_bn(ks[1], 1, 1, 16, 8, CP)
    p["b1_conv2"] = _make_conv_bn(ks[2], 3, 3, 8, 8, CP)
    p["b1_conv3"] = _make_conv_bn(ks[3], 1, 1, 8, 32, CP)
    p["b1_down"] = _make_conv_bn(ks[4], 1, 1, 16, 32, CP)
    # layer2-style bottleneck: in 32, planes 16, out 64, stride 2, w/ downsample
    p["b2_conv1"] = _make_conv_bn(ks[5], 1, 1, 32, 16, CP)
    p["b2_conv2"] = _make_conv_bn(ks[6], 3, 3, 16, 16, CP)
    p["b2_conv3"] = _make_conv_bn(ks[7], 1, 1, 16, 64, CP)
    p["b2_down"] = _make_conv_bn(ks[8], 1, 1, 32, 64, CP)
    return p


# ---------------------------------------------------------------------------
# Forward pass (mirrors PEFT_RN.forward for the TIMM_RN branch)
# ---------------------------------------------------------------------------

def bottleneck(x, params, name, stride):
    # stride is a static Python int (NOT stored in the traced params pytree)
    p1 = params[name + "_conv1"]
    p2 = params[name + "_conv2"]
    p3 = params[name + "_conv3"]
    pd = params[name + "_down"]

    out = conv_bn(x, p1, 1, 1, 1, 0, relu=True)
    out = conv_bn(out, p2, 3, 3, stride, 1, relu=True)
    identity = conv_bn(x, pd, 1, 1, stride, 0, relu=False)

    N, H, W, C = out.shape
    res = identity.reshape(N * H * W, C)
    # conv3 + bn3 + residual-add + ReLU fused in one kernel
    y = conv_bn(out, p3, 1, 1, 1, 0, relu=True, residual=res)
    return y


def peft_rn_forward(image_nchw, params):
    # x = image.type(self.dtype); NCHW -> NHWC, bf16 for MXU inputs
    x = image_nchw.astype(jnp.float32)
    x = jnp.transpose(x, (0, 2, 3, 1)).astype(jnp.bfloat16)

    # stem: conv1 + bn1 + act1 (fused) + maxpool
    x = conv_bn(x, params["stem"], 7, 7, 2, 3, relu=True)
    x = maxpool_3x3_s2(x)

    # blocks
    x = bottleneck(x, params, "b1", stride=1)
    x = bottleneck(x, params, "b2", stride=2)

    # global_pool (SelectAdaptivePool2d avg + flatten) -> (N, embed_dim)
    feat = pallas_gap(x)                 # (N, CP) f32, pad lanes are exact 0
    return feat[:, :EMBED_DIM]
    # tuner has no 'ssf' for a default-constructed module -> no-op


# ---------------------------------------------------------------------------
# Main
# ---------------------------------------------------------------------------

if __name__ == "__main__":
    key = jax.random.PRNGKey(0)
    image = jax.random.normal(key, (2, 3, 32, 32), jnp.float32)  # NCHW like torch
    params = make_params(jax.random.PRNGKey(42))

    out = jax.jit(peft_rn_forward)(image, params)
    out = jax.block_until_ready(out)

    assert out.shape == (2, EMBED_DIM), out.shape
    assert bool(jnp.all(jnp.isfinite(out)))
    print("KERNEL_OK")
</pallas_src>

<mosaic_0001>
module attributes {stable_mosaic.version = 11 : i64} {
  func.func @_fused_matmul_kernel(%arg0: i32, %arg1: i32, %arg2: memref<256x256xbf16, #tpu.memory_space<vmem>>, %arg3: memref<256x128xbf16, #tpu.memory_space<vmem>>, %arg4: memref<1x128xf32, #tpu.memory_space<vmem>>, %arg5: memref<1x128xf32, #tpu.memory_space<vmem>>, %arg6: memref<256x128xbf16, #tpu.memory_space<vmem>>, %arg7: memref<256x128xf32, #tpu.memory_space<vmem>>) attributes {dimension_semantics = [#tpu.dimension_semantics<parallel>, #tpu.dimension_semantics<arbitrary>], iteration_bounds = array<i64: 2, 1>, scalar_prefetch = 0 : i64, scratch_operands = 1 : i64, tpu.core_type = #tpu.core_type<tc>, window_params = [{transform_indices = @transform_0, window_bounds = array<i64: 256, 256>}, {transform_indices = @transform_1, window_bounds = array<i64: 256, 128>}, {pipeline_mode = #tpu.pipeline_mode<synchronous>, transform_indices = @transform_2, window_bounds = array<i64: 1, 128>}, {pipeline_mode = #tpu.pipeline_mode<synchronous>, transform_indices = @transform_3, window_bounds = array<i64: 1, 128>}, {transform_indices = @transform_4, window_bounds = array<i64: 256, 128>}]} {
    %c0_i32 = arith.constant 0 : i32
    %0 = arith.cmpi eq, %arg1, %c0_i32 : i32
    %1 = arith.extui %0 : i1 to i32
    %c0_i32_0 = arith.constant 0 : i32
    %2 = arith.cmpi ne, %1, %c0_i32_0 : i32
    scf.if %2 {
      %cst_10 = arith.constant 0.000000e+00 : f32
      %12 = vector.broadcast %cst_10 : f32 to vector<256x128xf32>
      %c0_11 = arith.constant 0 : index
      %c0_12 = arith.constant 0 : index
      %13 = vector.load %arg7[%c0_11, %c0_12] : memref<256x128xf32, #tpu.memory_space<vmem>>, vector<256x128xf32>
      tpu.vector_store %arg7[%c0_11, %c0_12], %12 {strides = array<i32>} : memref<256x128xf32, #tpu.memory_space<vmem>>, vector<256x128xf32>,
    } else {
    }
    %c0 = arith.constant 0 : index
    %c0_1 = arith.constant 0 : index
    %3 = vector.load %arg7[%c0, %c0_1] : memref<256x128xf32, #tpu.memory_space<vmem>>, vector<256x128xf32>
    %c0_2 = arith.constant 0 : index
    %c0_3 = arith.constant 0 : index
    %4 = vector.load %arg2[%c0_2, %c0_3] : memref<256x256xbf16, #tpu.memory_space<vmem>>, vector<256x256xbf16>
    %c0_4 = arith.constant 0 : index
    %c0_5 = arith.constant 0 : index
    %5 = vector.load %arg3[%c0_4, %c0_5] : memref<256x128xbf16, #tpu.memory_space<vmem>>, vector<256x128xbf16>
    %cst = arith.constant dense<0.000000e+00> : vector<256x128xf32>
    %6 = tpu.matmul %4, %5, %cst {dimension_numbers = #tpu.dot_dimension_numbers<[1], [0], [0], [1], [0, 0, 1, 1], [], []>} : vector<256x256xbf16>, vector<256x128xbf16>, vector<256x128xf32> -> vector<256x128xf32>
    %7 = arith.addf %3, %6 : vector<256x128xf32>
    %c0_6 = arith.constant 0 : index
    %c0_7 = arith.constant 0 : index
    %8 = vector.load %arg7[%c0_6, %c0_7] : memref<256x128xf32, #tpu.memory_space<vmem>>, vector<256x128xf32>
    tpu.vector_store %arg7[%c0_6, %c0_7], %7 {strides = array<i32>} : memref<256x128xf32, #tpu.memory_space<vmem>>, vector<256x128xf32>,
    %c0_i32_8 = arith.constant 0 : i32
    %9 = arith.cmpi eq, %arg1, %c0_i32_8 : i32
    %10 = arith.extui %9 : i1 to i32
    %c0_i32_9 = arith.constant 0 : i32
    %11 = arith.cmpi ne, %10, %c0_i32_9 : i32
    scf.if %11 {
      %c0_10 = arith.constant 0 : index
      %c0_11 = arith.constant 0 : index
      %12 = vector.load %arg7[%c0_10, %c0_11] : memref<256x128xf32, #tpu.memory_space<vmem>>, vector<256x128xf32>
      %c0_12 = arith.constant 0 : index
      %c0_13 = arith.constant 0 : index
      %13 = vector.load %arg4[%c0_12, %c0_13] : memref<1x128xf32, #tpu.memory_space<vmem>>, vector<1x128xf32>
      %14 = vector.broadcast %13 : vector<1x128xf32> to vector<256x128xf32>
      %15 = arith.mulf %12, %14 : vector<256x128xf32>
      %c0_14 = arith.constant 0 : index
      %c0_15 = arith.constant 0 : index
      %16 = vector.load %arg5[%c0_14, %c0_15] : memref<1x128xf32, #tpu.memory_space<vmem>>, vector<1x128xf32>
      %17 = vector.broadcast %16 : vector<1x128xf32> to vector<256x128xf32>
      %18 = arith.addf %15, %17 : vector<256x128xf32>
      %cst_16 = arith.constant 0.000000e+00 : f32
      %19 = vector.broadcast %cst_16 : f32 to vector<256x128xf32>
      %20 = arith.maximumf %18, %19 : vector<256x128xf32>
      %21 = arith.truncf %20 : vector<256x128xf32> to vector<256x128xbf16>
      %c0_17 = arith.constant 0 : index
      %c0_18 = arith.constant 0 : index
      %22 = vector.load %arg6[%c0_17, %c0_18] : memref<256x128xbf16, #tpu.memory_space<vmem>>, vector<256x128xbf16>
      tpu.vector_store %arg6[%c0_17, %c0_18], %21 {strides = array<i32>} : memref<256x128xbf16, #tpu.memory_space<vmem>>, vector<256x128xbf16>,
    } else {
    }
    return
  }
  func.func @transform_0(%arg0: i32, %arg1: i32) -> (i32, i32) {
    %c0_i32 = arith.constant 0 : i32
    return %arg0, %arg1 : i32, i32
  }
  func.func @transform_1(%arg0: i32, %arg1: i32) -> (i32, i32) {
    %c0_i32 = arith.constant 0 : i32
    %c0_i32_0 = arith.constant 0 : i32
    return %arg1, %c0_i32 : i32, i32
  }
  func.func @transform_2(%arg0: i32, %arg1: i32) -> (i32, i32) {
    %c0_i32 = arith.constant 0 : i32
    %c0_i32_0 = arith.constant 0 : i32
    %c0_i32_1 = arith.constant 0 : i32
    return %c0_i32, %c0_i32_0 : i32, i32
  }
  func.func @transform_3(%arg0: i32, %arg1: i32) -> (i32, i32) {
    %c0_i32 = arith.constant 0 : i32
    %c0_i32_0 = arith.constant 0 : i32
    %c0_i32_1 = arith.constant 0 : i32
    return %c0_i32, %c0_i32_0 : i32, i32
  }
  func.func @transform_4(%arg0: i32, %arg1: i32) -> (i32, i32) {
    %c0_i32 = arith.constant 0 : i32
    %c0_i32_0 = arith.constant 0 : i32
    return %arg0, %c0_i32 : i32, i32
  }
}

module attributes {stable_mosaic.version = 11 : i64} {
  func.func @_max9_kernel(%arg0: i32, %arg1: memref<64x128xbf16, #tpu.memory_space<vmem>>, %arg2: memref<64x128xbf16, #tpu.memory_space<vmem>>, %arg3: memref<64x128xbf16, #tpu.memory_space<vmem>>, %arg4: memref<64x128xbf16, #tpu.memory_space<vmem>>, %arg5: memref<64x128xbf16, #tpu.memory_space<vmem>>, %arg6: memref<64x128xbf16, #tpu.memory_space<vmem>>, %arg7: memref<64x128xbf16, #tpu.memory_space<vmem>>, %arg8: memref<64x128xbf16, #tpu.memory_space<vmem>>, %arg9: memref<64x128xbf16, #tpu.memory_space<vmem>>, %arg10: memref<64x128xbf16, #tpu.memory_space<vmem>>) attributes {dimension_semantics = [#tpu.dimension_semantics<parallel>], iteration_bounds = array<i64: 2>, scalar_prefetch = 0 : i64, scratch_operands = 0 : i64, tpu.core_type = #tpu.core_type<tc>, window_params = [{transform_indices = @transform_0, window_bounds = array<i64: 64, 128>}, {transform_indices = @transform_1, window_bounds = array<i64: 64, 128>}, {transform_indices = @transform_2, window_bounds = array<i64: 64, 128>}, {transform_indices = @transform_3, window_bounds = array<i64: 64, 128>}, {transform_indices = @transform_4, window_bounds = array<i64: 64, 128>}, {transform_indices = @transform_5, window_bounds = array<i64: 64, 128>}, {transform_indices = @transform_6, window_bounds = array<i64: 64, 128>}, {transform_indices = @transform_7, window_bounds = array<i64: 64, 128>}, {transform_indices = @transform_8, window_bounds = array<i64: 64, 128>}, {transform_indices = @transform_9, window_bounds = array<i64: 64, 128>}]} {
    %c0 = arith.constant 0 : index
    %c0_0 = arith.constant 0 : index
    %0 = vector.load %arg1[%c0, %c0_0] : memref<64x128xbf16, #tpu.memory_space<vmem>>, vector<64x128xbf16>
    %1 = arith.extf %0 : vector<64x128xbf16> to vector<64x128xf32>
    %c0_1 = arith.constant 0 : index
    %c0_2 = arith.constant 0 : index
    %2 = vector.load %arg2[%c0_1, %c0_2] : memref<64x128xbf16, #tpu.memory_space<vmem>>, vector<64x128xbf16>
    %3 = arith.extf %2 : vector<64x128xbf16> to vector<64x128xf32>
    %4 = arith.maximumf %1, %3 : vector<64x128xf32>
    %c0_3 = arith.constant 0 : index
    %c0_4 = arith.constant 0 : index
    %5 = vector.load %arg3[%c0_3, %c0_4] : memref<64x128xbf16, #tpu.memory_space<vmem>>, vector<64x128xbf16>
    %6 = arith.extf %5 : vector<64x128xbf16> to vector<64x128xf32>
    %7 = arith.maximumf %4, %6 : vector<64x128xf32>
    %c0_5 = arith.constant 0 : index
    %c0_6 = arith.constant 0 : index
    %8 = vector.load %arg4[%c0_5, %c0_6] : memref<64x128xbf16, #tpu.memory_space<vmem>>, vector<64x128xbf16>
    %9 = arith.extf %8 : vector<64x128xbf16> to vector<64x128xf32>
    %10 = arith.maximumf %7, %9 : vector<64x128xf32>
    %c0_7 = arith.constant 0 : index
    %c0_8 = arith.constant 0 : index
    %11 = vector.load %arg5[%c0_7, %c0_8] : memref<64x128xbf16, #tpu.memory_space<vmem>>, vector<64x128xbf16>
    %12 = arith.extf %11 : vector<64x128xbf16> to vector<64x128xf32>
    %13 = arith.maximumf %10, %12 : vector<64x128xf32>
    %c0_9 = arith.constant 0 : index
    %c0_10 = arith.constant 0 : index
    %14 = vector.load %arg6[%c0_9, %c0_10] : memref<64x128xbf16, #tpu.memory_space<vmem>>, vector<64x128xbf16>
    %15 = arith.extf %14 : vector<64x128xbf16> to vector<64x128xf32>
    %16 = arith.maximumf %13, %15 : vector<64x128xf32>
    %c0_11 = arith.constant 0 : index
    %c0_12 = arith.constant 0 : index
    %17 = vector.load %arg7[%c0_11, %c0_12] : memref<64x128xbf16, #tpu.memory_space<vmem>>, vector<64x128xbf16>
    %18 = arith.extf %17 : vector<64x128xbf16> to vector<64x128xf32>
    %19 = arith.maximumf %16, %18 : vector<64x128xf32>
    %c0_13 = arith.constant 0 : index
    %c0_14 = arith.constant 0 : index
    %20 = vector.load %arg8[%c0_13, %c0_14] : memref<64x128xbf16, #tpu.memory_space<vmem>>, vector<64x128xbf16>
    %21 = arith.extf %20 : vector<64x128xbf16> to vector<64x128xf32>
    %22 = arith.maximumf %19, %21 : vector<64x128xf32>
    %c0_15 = arith.constant 0 : index
    %c0_16 = arith.constant 0 : index
    %23 = vector.load %arg9[%c0_15, %c0_16] : memref<64x128xbf16, #tpu.memory_space<vmem>>, vector<64x128xbf16>
    %24 = arith.extf %23 : vector<64x128xbf16> to vector<64x128xf32>
    %25 = arith.maximumf %22, %24 : vector<64x128xf32>
    %26 = arith.truncf %25 : vector<64x128xf32> to vector<64x128xbf16>
    %c0_17 = arith.constant 0 : index
    %c0_18 = arith.constant 0 : index
    %27 = vector.load %arg10[%c0_17, %c0_18] : memref<64x128xbf16, #tpu.memory_space<vmem>>, vector<64x128xbf16>
    tpu.vector_store %arg10[%c0_17, %c0_18], %26 {strides = array<i32>} : memref<64x128xbf16, #tpu.memory_space<vmem>>, vector<64x128xbf16>,
    return
  }
  func.func @transform_0(%arg0: i32) -> (i32, i32) {
    %c0_i32 = arith.constant 0 : i32
    %c0_i32_0 = arith.constant 0 : i32
    return %arg0, %c0_i32 : i32, i32
  }
  func.func @transform_1(%arg0: i32) -> (i32, i32) {
    %c0_i32 = arith.constant 0 : i32
    %c0_i32_0 = arith.constant 0 : i32
    return %arg0, %c0_i32 : i32, i32
  }
  func.func @transform_2(%arg0: i32) -> (i32, i32) {
    %c0_i32 = arith.constant 0 : i32
    %c0_i32_0 = arith.constant 0 : i32
    return %arg0, %c0_i32 : i32, i32
  }
  func.func @transform_3(%arg0: i32) -> (i32, i32) {
    %c0_i32 = arith.constant 0 : i32
    %c0_i32_0 = arith.constant 0 : i32
    return %arg0, %c0_i32 : i32, i32
  }
  func.func @transform_4(%arg0: i32) -> (i32, i32) {
    %c0_i32 = arith.constant 0 : i32
    %c0_i32_0 = arith.constant 0 : i32
    return %arg0, %c0_i32 : i32, i32
  }
  func.func @transform_5(%arg0: i32) -> (i32, i32) {
    %c0_i32 = arith.constant 0 : i32
    %c0_i32_0 = arith.constant 0 : i32
    return %arg0, %c0_i32 : i32, i32
  }
  func.func @transform_6(%arg0: i32) -> (i32, i32) {
    %c0_i32 = arith.constant 0 : i32
    %c0_i32_0 = arith.constant 0 : i32
    return %arg0, %c0_i32 : i32, i32
  }
  func.func @transform_7(%arg0: i32) -> (i32, i32) {
    %c0_i32 = arith.constant 0 : i32
    %c0_i32_0 = arith.constant 0 : i32
    return %arg0, %c0_i32 : i32, i32
  }
  func.func @transform_8(%arg0: i32) -> (i32, i32) {
    %c0_i32 = arith.constant 0 : i32
    %c0_i32_0 = arith.constant 0 : i32
    return %arg0, %c0_i32 : i32, i32
  }
  func.func @transform_9(%arg0: i32) -> (i32, i32) {
    %c0_i32 = arith.constant 0 : i32
    %c0_i32_0 = arith.constant 0 : i32
    return %arg0, %c0_i32 : i32, i32
  }
}

module attributes {stable_mosaic.version = 11 : i64} {
  func.func @_fused_matmul_kernel(%arg0: i32, %arg1: i32, %arg2: memref<64x128xbf16, #tpu.memory_space<vmem>>, %arg3: memref<128x128xbf16, #tpu.memory_space<vmem>>, %arg4: memref<1x128xf32, #tpu.memory_space<vmem>>, %arg5: memref<1x128xf32, #tpu.memory_space<vmem>>, %arg6: memref<64x128xbf16, #tpu.memory_space<vmem>>, %arg7: memref<64x128xf32, #tpu.memory_space<vmem>>) attributes {dimension_semantics = [#tpu.dimension_semantics<parallel>, #tpu.dimension_semantics<arbitrary>], iteration_bounds = array<i64: 2, 1>, scalar_prefetch = 0 : i64, scratch_operands = 1 : i64, tpu.core_type = #tpu.core_type<tc>, window_params = [{transform_indices = @transform_0, window_bounds = array<i64: 64, 128>}, {transform_indices = @transform_1, window_bounds = array<i64: 128, 128>}, {pipeline_mode = #tpu.pipeline_mode<synchronous>, transform_indices = @transform_2, window_bounds = array<i64: 1, 128>}, {pipeline_mode = #tpu.pipeline_mode<synchronous>, transform_indices = @transform_3, window_bounds = array<i64: 1, 128>}, {transform_indices = @transform_4, window_bounds = array<i64: 64, 128>}]} {
    %c0_i32 = arith.constant 0 : i32
    %0 = arith.cmpi eq, %arg1, %c0_i32 : i32
    %1 = arith.extui %0 : i1 to i32
    %c0_i32_0 = arith.constant 0 : i32
    %2 = arith.cmpi ne, %1, %c0_i32_0 : i32
    scf.if %2 {
      %cst_10 = arith.constant 0.000000e+00 : f32
      %12 = vector.broadcast %cst_10 : f32 to vector<64x128xf32>
      %c0_11 = arith.constant 0 : index
      %c0_12 = arith.constant 0 : index
      %13 = vector.load %arg7[%c0_11, %c0_12] : memref<64x128xf32, #tpu.memory_space<vmem>>, vector<64x128xf32>
      tpu.vector_store %arg7[%c0_11, %c0_12], %12 {strides = array<i32>} : memref<64x128xf32, #tpu.memory_space<vmem>>, vector<64x128xf32>,
    } else {
    }
    %c0 = arith.constant 0 : index
    %c0_1 = arith.constant 0 : index
    %3 = vector.load %arg7[%c0, %c0_1] : memref<64x128xf32, #tpu.memory_space<vmem>>, vector<64x128xf32>
    %c0_2 = arith.constant 0 : index
    %c0_3 = arith.constant 0 : index
    %4 = vector.load %arg2[%c0_2, %c0_3] : memref<64x128xbf16, #tpu.memory_space<vmem>>, vector<64x128xbf16>
    %c0_4 = arith.constant 0 : index
    %c0_5 = arith.constant 0 : index
    %5 = vector.load %arg3[%c0_4, %c0_5] : memref<128x128xbf16, #tpu.memory_space<vmem>>, vector<128x128xbf16>
    %cst = arith.constant dense<0.000000e+00> : vector<64x128xf32>
    %6 = tpu.matmul %4, %5, %cst {dimension_numbers = #tpu.dot_dimension_numbers<[1], [0], [0], [1], [0, 0, 1, 1], [], []>} : vector<64x128xbf16>, vector<128x128xbf16>, vector<64x128xf32> -> vector<64x128xf32>
    %7 = arith.addf %3, %6 : vector<64x128xf32>
    %c0_6 = arith.constant 0 : index
    %c0_7 = arith.constant 0 : index
    %8 = vector.load %arg7[%c0_6, %c0_7] : memref<64x128xf32, #tpu.memory_space<vmem>>, vector<64x128xf32>
    tpu.vector_store %arg7[%c0_6, %c0_7], %7 {strides = array<i32>} : memref<64x128xf32, #tpu.memory_space<vmem>>, vector<64x128xf32>,
    %c0_i32_8 = arith.constant 0 : i32
    %9 = arith.cmpi eq, %arg1, %c0_i32_8 : i32
    %10 = arith.extui %9 : i1 to i32
    %c0_i32_9 = arith.constant 0 : i32
    %11 = arith.cmpi ne, %10, %c0_i32_9 : i32
    scf.if %11 {
      %c0_10 = arith.constant 0 : index
      %c0_11 = arith.constant 0 : index
      %12 = vector.load %arg7[%c0_10, %c0_11] : memref<64x128xf32, #tpu.memory_space<vmem>>, vector<64x128xf32>
      %c0_12 = arith.constant 0 : index
      %c0_13 = arith.constant 0 : index
      %13 = vector.load %arg4[%c0_12, %c0_13] : memref<1x128xf32, #tpu.memory_space<vmem>>, vector<1x128xf32>
      %14 = vector.broadcast %13 : vector<1x128xf32> to vector<64x128xf32>
      %15 = arith.mulf %12, %14 : vector<64x128xf32>
      %c0_14 = arith.constant 0 : index
      %c0_15 = arith.constant 0 : index
      %16 = vector.load %arg5[%c0_14, %c0_15] : memref<1x128xf32, #tpu.memory_space<vmem>>, vector<1x128xf32>
      %17 = vector.broadcast %16 : vector<1x128xf32> to vector<64x128xf32>
      %18 = arith.addf %15, %17 : vector<64x128xf32>
      %cst_16 = arith.constant 0.000000e+00 : f32
      %19 = vector.broadcast %cst_16 : f32 to vector<64x128xf32>
      %20 = arith.maximumf %18, %19 : vector<64x128xf32>
      %21 = arith.truncf %20 : vector<64x128xf32> to vector<64x128xbf16>
      %c0_17 = arith.constant 0 : index
      %c0_18 = arith.constant 0 : index
      %22 = vector.load %arg6[%c0_17, %c0_18] : memref<64x128xbf16, #tpu.memory_space<vmem>>, vector<64x128xbf16>
      tpu.vector_store %arg6[%c0_17, %c0_18], %21 {strides = array<i32>} : memref<64x128xbf16, #tpu.memory_space<vmem>>, vector<64x128xbf16>,
    } else {
    }
    return
  }
  func.func @transform_0(%arg0: i32, %arg1: i32) -> (i32, i32) {
    %c0_i32 = arith.constant 0 : i32
    return %arg0, %arg1 : i32, i32
  }
  func.func @transform_1(%arg0: i32, %arg1: i32) -> (i32, i32) {
    %c0_i32 = arith.constant 0 : i32
    %c0_i32_0 = arith.constant 0 : i32
    return %arg1, %c0_i32 : i32, i32
  }
  func.func @transform_2(%arg0: i32, %arg1: i32) -> (i32, i32) {
    %c0_i32 = arith.constant 0 : i32
    %c0_i32_0 = arith.constant 0 : i32
    %c0_i32_1 = arith.constant 0 : i32
    return %c0_i32, %c0_i32_0 : i32, i32
  }
  func.func @transform_3(%arg0: i32, %arg1: i32) -> (i32, i32) {
    %c0_i32 = arith.constant 0 : i32
    %c0_i32_0 = arith.constant 0 : i32
    %c0_i32_1 = arith.constant 0 : i32
    return %c0_i32, %c0_i32_0 : i32, i32
  }
  func.func @transform_4(%arg0: i32, %arg1: i32) -> (i32, i32) {
    %c0_i32 = arith.constant 0 : i32
    %c0_i32_0 = arith.constant 0 : i32
    return %arg0, %c0_i32 : i32, i32
  }
}

module attributes {stable_mosaic.version = 11 : i64} {
  func.func @_fused_matmul_kernel(%arg0: i32, %arg1: i32, %arg2: memref<64x128xbf16, #tpu.memory_space<vmem>>, %arg3: memref<128x128xbf16, #tpu.memory_space<vmem>>, %arg4: memref<1x128xf32, #tpu.memory_space<vmem>>, %arg5: memref<1x128xf32, #tpu.memory_space<vmem>>, %arg6: memref<64x128xbf16, #tpu.memory_space<vmem>>, %arg7: memref<64x128xf32, #tpu.memory_space<vmem>>) attributes {dimension_semantics = [#tpu.dimension_semantics<parallel>, #tpu.dimension_semantics<arbitrary>], iteration_bounds = array<i64: 2, 1>, scalar_prefetch = 0 : i64, scratch_operands = 1 : i64, tpu.core_type = #tpu.core_type<tc>, window_params = [{transform_indices = @transform_0, window_bounds = array<i64: 64, 128>}, {transform_indices = @transform_1, window_bounds = array<i64: 128, 128>}, {pipeline_mode = #tpu.pipeline_mode<synchronous>, transform_indices = @transform_2, window_bounds = array<i64: 1, 128>}, {pipeline_mode = #tpu.pipeline_mode<synchronous>, transform_indices = @transform_3, window_bounds = array<i64: 1, 128>}, {transform_indices = @transform_4, window_bounds = array<i64: 64, 128>}]} {
    %c0_i32 = arith.constant 0 : i32
    %0 = arith.cmpi eq, %arg1, %c0_i32 : i32
    %1 = arith.extui %0 : i1 to i32
    %c0_i32_0 = arith.constant 0 : i32
    %2 = arith.cmpi ne, %1, %c0_i32_0 : i32
    scf.if %2 {
      %cst_10 = arith.constant 0.000000e+00 : f32
      %12 = vector.broadcast %cst_10 : f32 to vector<64x128xf32>
      %c0_11 = arith.constant 0 : index
      %c0_12 = arith.constant 0 : index
      %13 = vector.load %arg7[%c0_11, %c0_12] : memref<64x128xf32, #tpu.memory_space<vmem>>, vector<64x128xf32>
      tpu.vector_store %arg7[%c0_11, %c0_12], %12 {strides = array<i32>} : memref<64x128xf32, #tpu.memory_space<vmem>>, vector<64x128xf32>,
    } else {
    }
    %c0 = arith.constant 0 : index
    %c0_1 = arith.constant 0 : index
    %3 = vector.load %arg7[%c0, %c0_1] : memref<64x128xf32, #tpu.memory_space<vmem>>, vector<64x128xf32>
    %c0_2 = arith.constant 0 : index
    %c0_3 = arith.constant 0 : index
    %4 = vector.load %arg2[%c0_2, %c0_3] : memref<64x128xbf16, #tpu.memory_space<vmem>>, vector<64x128xbf16>
    %c0_4 = arith.constant 0 : index
    %c0_5 = arith.constant 0 : index
    %5 = vector.load %arg3[%c0_4, %c0_5] : memref<128x128xbf16, #tpu.memory_space<vmem>>, vector<128x128xbf16>
    %cst = arith.constant dense<0.000000e+00> : vector<64x128xf32>
    %6 = tpu.matmul %4, %5, %cst {dimension_numbers = #tpu.dot_dimension_numbers<[1], [0], [0], [1], [0, 0, 1, 1], [], []>} : vector<64x128xbf16>, vector<128x128xbf16>, vector<64x128xf32> -> vector<64x128xf32>
    %7 = arith.addf %3, %6 : vector<64x128xf32>
    %c0_6 = arith.constant 0 : index
    %c0_7 = arith.constant 0 : index
    %8 = vector.load %arg7[%c0_6, %c0_7] : memref<64x128xf32, #tpu.memory_space<vmem>>, vector<64x128xf32>
    tpu.vector_store %arg7[%c0_6, %c0_7], %7 {strides = array<i32>} : memref<64x128xf32, #tpu.memory_space<vmem>>, vector<64x128xf32>,
    %c0_i32_8 = arith.constant 0 : i32
    %9 = arith.cmpi eq, %arg1, %c0_i32_8 : i32
    %10 = arith.extui %9 : i1 to i32
    %c0_i32_9 = arith.constant 0 : i32
    %11 = arith.cmpi ne, %10, %c0_i32_9 : i32
    scf.if %11 {
      %c0_10 = arith.constant 0 : index
      %c0_11 = arith.constant 0 : index
      %12 = vector.load %arg7[%c0_10, %c0_11] : memref<64x128xf32, #tpu.memory_space<vmem>>, vector<64x128xf32>
      %c0_12 = arith.constant 0 : index
      %c0_13 = arith.constant 0 : index
      %13 = vector.load %arg4[%c0_12, %c0_13] : memref<1x128xf32, #tpu.memory_space<vmem>>, vector<1x128xf32>
      %14 = vector.broadcast %13 : vector<1x128xf32> to vector<64x128xf32>
      %15 = arith.mulf %12, %14 : vector<64x128xf32>
      %c0_14 = arith.constant 0 : index
      %c0_15 = arith.constant 0 : index
      %16 = vector.load %arg5[%c0_14, %c0_15] : memref<1x128xf32, #tpu.memory_space<vmem>>, vector<1x128xf32>
      %17 = vector.broadcast %16 : vector<1x128xf32> to vector<64x128xf32>
      %18 = arith.addf %15, %17 : vector<64x128xf32>
      %19 = arith.truncf %18 : vector<64x128xf32> to vector<64x128xbf16>
      %c0_16 = arith.constant 0 : index
      %c0_17 = arith.constant 0 : index
      %20 = vector.load %arg6[%c0_16, %c0_17] : memref<64x128xbf16, #tpu.memory_space<vmem>>, vector<64x128xbf16>
      tpu.vector_store %arg6[%c0_16, %c0_17], %19 {strides = array<i32>} : memref<64x128xbf16, #tpu.memory_space<vmem>>, vector<64x128xbf16>,
    } else {
    }
    return
  }
  func.func @transform_0(%arg0: i32, %arg1: i32) -> (i32, i32) {
    %c0_i32 = arith.constant 0 : i32
    return %arg0, %arg1 : i32, i32
  }
  func.func @transform_1(%arg0: i32, %arg1: i32) -> (i32, i32) {
    %c0_i32 = arith.constant 0 : i32
    %c0_i32_0 = arith.constant 0 : i32
    return %arg1, %c0_i32 : i32, i32
  }
  func.func @transform_2(%arg0: i32, %arg1: i32) -> (i32, i32) {
    %c0_i32 = arith.constant 0 : i32
    %c0_i32_0 = arith.constant 0 : i32
    %c0_i32_1 = arith.constant 0 : i32
    return %c0_i32, %c0_i32_0 : i32, i32
  }
  func.func @transform_3(%arg0: i32, %arg1: i32) -> (i32, i32) {
    %c0_i32 = arith.constant 0 : i32
    %c0_i32_0 = arith.constant 0 : i32
    %c0_i32_1 = arith.constant 0 : i32
    return %c0_i32, %c0_i32_0 : i32, i32
  }
  func.func @transform_4(%arg0: i32, %arg1: i32) -> (i32, i32) {
    %c0_i32 = arith.constant 0 : i32
    %c0_i32_0 = arith.constant 0 : i32
    return %arg0, %c0_i32 : i32, i32
  }
}

module attributes {stable_mosaic.version = 11 : i64} {
  func.func @_fused_matmul_kernel(%arg0: i32, %arg1: i32, %arg2: memref<64x128xbf16, #tpu.memory_space<vmem>>, %arg3: memref<128x128xbf16, #tpu.memory_space<vmem>>, %arg4: memref<1x128xf32, #tpu.memory_space<vmem>>, %arg5: memref<1x128xf32, #tpu.memory_space<vmem>>, %arg6: memref<64x128xbf16, #tpu.memory_space<vmem>>, %arg7: memref<64x128xbf16, #tpu.memory_space<vmem>>, %arg8: memref<64x128xf32, #tpu.memory_space<vmem>>) attributes {dimension_semantics = [#tpu.dimension_semantics<parallel>, #tpu.dimension_semantics<arbitrary>], iteration_bounds = array<i64: 2, 1>, scalar_prefetch = 0 : i64, scratch_operands = 1 : i64, tpu.core_type = #tpu.core_type<tc>, window_params = [{transform_indices = @transform_0, window_bounds = array<i64: 64, 128>}, {transform_indices = @transform_1, window_bounds = array<i64: 128, 128>}, {pipeline_mode = #tpu.pipeline_mode<synchronous>, transform_indices = @transform_2, window_bounds = array<i64: 1, 128>}, {pipeline_mode = #tpu.pipeline_mode<synchronous>, transform_indices = @transform_3, window_bounds = array<i64: 1, 128>}, {transform_indices = @transform_4, window_bounds = array<i64: 64, 128>}, {transform_indices = @transform_5, window_bounds = array<i64: 64, 128>}]} {
    %c0_i32 = arith.constant 0 : i32
    %0 = arith.cmpi eq, %arg1, %c0_i32 : i32
    %1 = arith.extui %0 : i1 to i32
    %c0_i32_0 = arith.constant 0 : i32
    %2 = arith.cmpi ne, %1, %c0_i32_0 : i32
    scf.if %2 {
      %cst_10 = arith.constant 0.000000e+00 : f32
      %12 = vector.broadcast %cst_10 : f32 to vector<64x128xf32>
      %c0_11 = arith.constant 0 : index
      %c0_12 = arith.constant 0 : index
      %13 = vector.load %arg8[%c0_11, %c0_12] : memref<64x128xf32, #tpu.memory_space<vmem>>, vector<64x128xf32>
      tpu.vector_store %arg8[%c0_11, %c0_12], %12 {strides = array<i32>} : memref<64x128xf32, #tpu.memory_space<vmem>>, vector<64x128xf32>,
    } else {
    }
    %c0 = arith.constant 0 : index
    %c0_1 = arith.constant 0 : index
    %3 = vector.load %arg8[%c0, %c0_1] : memref<64x128xf32, #tpu.memory_space<vmem>>, vector<64x128xf32>
    %c0_2 = arith.constant 0 : index
    %c0_3 = arith.constant 0 : index
    %4 = vector.load %arg2[%c0_2, %c0_3] : memref<64x128xbf16, #tpu.memory_space<vmem>>, vector<64x128xbf16>
    %c0_4 = arith.constant 0 : index
    %c0_5 = arith.constant 0 : index
    %5 = vector.load %arg3[%c0_4, %c0_5] : memref<128x128xbf16, #tpu.memory_space<vmem>>, vector<128x128xbf16>
    %cst = arith.constant dense<0.000000e+00> : vector<64x128xf32>
    %6 = tpu.matmul %4, %5, %cst {dimension_numbers = #tpu.dot_dimension_numbers<[1], [0], [0], [1], [0, 0, 1, 1], [], []>} : vector<64x128xbf16>, vector<128x128xbf16>, vector<64x128xf32> -> vector<64x128xf32>
    %7 = arith.addf %3, %6 : vector<64x128xf32>
    %c0_6 = arith.constant 0 : index
    %c0_7 = arith.constant 0 : index
    %8 = vector.load %arg8[%c0_6, %c0_7] : memref<64x128xf32, #tpu.memory_space<vmem>>, vector<64x128xf32>
    tpu.vector_store %arg8[%c0_6, %c0_7], %7 {strides = array<i32>} : memref<64x128xf32, #tpu.memory_space<vmem>>, vector<64x128xf32>,
    %c0_i32_8 = arith.constant 0 : i32
    %9 = arith.cmpi eq, %arg1, %c0_i32_8 : i32
    %10 = arith.extui %9 : i1 to i32
    %c0_i32_9 = arith.constant 0 : i32
    %11 = arith.cmpi ne, %10, %c0_i32_9 : i32
    scf.if %11 {
      %c0_10 = arith.constant 0 : index
      %c0_11 = arith.constant 0 : index
      %12 = vector.load %arg8[%c0_10, %c0_11] : memref<64x128xf32, #tpu.memory_space<vmem>>, vector<64x128xf32>
      %c0_12 = arith.constant 0 : index
      %c0_13 = arith.constant 0 : index
      %13 = vector.load %arg4[%c0_12, %c0_13] : memref<1x128xf32, #tpu.memory_space<vmem>>, vector<1x128xf32>
      %14 = vector.broadcast %13 : vector<1x128xf32> to vector<64x128xf32>
      %15 = arith.mulf %12, %14 : vector<64x128xf32>
      %c0_14 = arith.constant 0 : index
      %c0_15 = arith.constant 0 : index
      %16 = vector.load %arg5[%c0_14, %c0_15] : memref<1x128xf32, #tpu.memory_space<vmem>>, vector<1x128xf32>
      %17 = vector.broadcast %16 : vector<1x128xf32> to vector<64x128xf32>
      %18 = arith.addf %15, %17 : vector<64x128xf32>
      %c0_16 = arith.constant 0 : index
      %c0_17 = arith.constant 0 : index
      %19 = vector.load %arg6[%c0_16, %c0_17] : memref<64x128xbf16, #tpu.memory_space<vmem>>, vector<64x128xbf16>
      %20 = arith.extf %19 : vector<64x128xbf16> to vector<64x128xf32>
      %21 = arith.addf %18, %20 : vector<64x128xf32>
      %cst_18 = arith.constant 0.000000e+00 : f32
      %22 = vector.broadcast %cst_18 : f32 to vector<64x128xf32>
      %23 = arith.maximumf %21, %22 : vector<64x128xf32>
      %24 = arith.truncf %23 : vector<64x128xf32> to vector<64x128xbf16>
      %c0_19 = arith.constant 0 : index
      %c0_20 = arith.constant 0 : index
      %25 = vector.load %arg7[%c0_19, %c0_20] : memref<64x128xbf16, #tpu.memory_space<vmem>>, vector<64x128xbf16>
      tpu.vector_store %arg7[%c0_19, %c0_20], %24 {strides = array<i32>} : memref<64x128xbf16, #tpu.memory_space<vmem>>, vector<64x128xbf16>,
    } else {
    }
    return
  }
  func.func @transform_0(%arg0: i32, %arg1: i32) -> (i32, i32) {
    %c0_i32 = arith.constant 0 : i32
    return %arg0, %arg1 : i32, i32
  }
  func.func @transform_1(%arg0: i32, %arg1: i32) -> (i32, i32) {
    %c0_i32 = arith.constant 0 : i32
    %c0_i32_0 = arith.constant 0 : i32
    return %arg1, %c0_i32 : i32, i32
  }
  func.func @transform_2(%arg0: i32, %arg1: i32) -> (i32, i32) {
    %c0_i32 = arith.constant 0 : i32
    %c0_i32_0 = arith.constant 0 : i32
    %c0_i32_1 = arith.constant 0 : i32
    return %c0_i32, %c0_i32_0 : i32, i32
  }
  func.func @transform_3(%arg0: i32, %arg1: i32) -> (i32, i32) {
    %c0_i32 = arith.constant 0 : i32
    %c0_i32_0 = arith.constant 0 : i32
    %c0_i32_1 = arith.constant 0 : i32
    return %c0_i32, %c0_i32_0 : i32, i32
  }
  func.func @transform_4(%arg0: i32, %arg1: i32) -> (i32, i32) {
    %c0_i32 = arith.constant 0 : i32
    %c0_i32_0 = arith.constant 0 : i32
    return %arg0, %c0_i32 : i32, i32
  }
  func.func @transform_5(%arg0: i32, %arg1: i32) -> (i32, i32) {
    %c0_i32 = arith.constant 0 : i32
    %c0_i32_0 = arith.constant 0 : i32
    return %arg0, %c0_i32 : i32, i32
  }
}

module attributes {stable_mosaic.version = 11 : i64} {
  func.func @_fused_matmul_kernel(%arg0: i32, %arg1: i32, %arg2: memref<64x384xbf16, #tpu.memory_space<vmem>>, %arg3: memref<384x128xbf16, #tpu.memory_space<vmem>>, %arg4: memref<1x128xf32, #tpu.memory_space<vmem>>, %arg5: memref<1x128xf32, #tpu.memory_space<vmem>>, %arg6: memref<64x128xbf16, #tpu.memory_space<vmem>>, %arg7: memref<64x128xf32, #tpu.memory_space<vmem>>) attributes {dimension_semantics = [#tpu.dimension_semantics<parallel>, #tpu.dimension_semantics<arbitrary>], iteration_bounds = array<i64: 2, 3>, scalar_prefetch = 0 : i64, scratch_operands = 1 : i64, tpu.core_type = #tpu.core_type<tc>, window_params = [{transform_indices = @transform_0, window_bounds = array<i64: 64, 384>}, {transform_indices = @transform_1, window_bounds = array<i64: 384, 128>}, {pipeline_mode = #tpu.pipeline_mode<synchronous>, transform_indices = @transform_2, window_bounds = array<i64: 1, 128>}, {pipeline_mode = #tpu.pipeline_mode<synchronous>, transform_indices = @transform_3, window_bounds = array<i64: 1, 128>}, {transform_indices = @transform_4, window_bounds = array<i64: 64, 128>}]} {
    %c0_i32 = arith.constant 0 : i32
    %0 = arith.cmpi eq, %arg1, %c0_i32 : i32
    %1 = arith.extui %0 : i1 to i32
    %c0_i32_0 = arith.constant 0 : i32
    %2 = arith.cmpi ne, %1, %c0_i32_0 : i32
    scf.if %2 {
      %cst_9 = arith.constant 0.000000e+00 : f32
      %12 = vector.broadcast %cst_9 : f32 to vector<64x128xf32>
      %c0_10 = arith.constant 0 : index
      %c0_11 = arith.constant 0 : index
      %13 = vector.load %arg7[%c0_10, %c0_11] : memref<64x128xf32, #tpu.memory_space<vmem>>, vector<64x128xf32>
      tpu.vector_store %arg7[%c0_10, %c0_11], %12 {strides = array<i32>} : memref<64x128xf32, #tpu.memory_space<vmem>>, vector<64x128xf32>,
    } else {
    }
    %c0 = arith.constant 0 : index
    %c0_1 = arith.constant 0 : index
    %3 = vector.load %arg7[%c0, %c0_1] : memref<64x128xf32, #tpu.memory_space<vmem>>, vector<64x128xf32>
    %c0_2 = arith.constant 0 : index
    %c0_3 = arith.constant 0 : index
    %4 = vector.load %arg2[%c0_2, %c0_3] : memref<64x384xbf16, #tpu.memory_space<vmem>>, vector<64x384xbf16>
    %c0_4 = arith.constant 0 : index
    %c0_5 = arith.constant 0 : index
    %5 = vector.load %arg3[%c0_4, %c0_5] : memref<384x128xbf16, #tpu.memory_space<vmem>>, vector<384x128xbf16>
    %cst = arith.constant dense<0.000000e+00> : vector<64x128xf32>
    %6 = tpu.matmul %4, %5, %cst {dimension_numbers = #tpu.dot_dimension_numbers<[1], [0], [0], [1], [0, 0, 1, 1], [], []>} : vector<64x384xbf16>, vector<384x128xbf16>, vector<64x128xf32> -> vector<64x128xf32>
    %7 = arith.addf %3, %6 : vector<64x128xf32>
    %c0_6 = arith.constant 0 : index
    %c0_7 = arith.constant 0 : index
    %8 = vector.load %arg7[%c0_6, %c0_7] : memref<64x128xf32, #tpu.memory_space<vmem>>, vector<64x128xf32>
    tpu.vector_store %arg7[%c0_6, %c0_7], %7 {strides = array<i32>} : memref<64x128xf32, #tpu.memory_space<vmem>>, vector<64x128xf32>,
    %c2_i32 = arith.constant 2 : i32
    %9 = arith.cmpi eq, %arg1, %c2_i32 : i32
    %10 = arith.extui %9 : i1 to i32
    %c0_i32_8 = arith.constant 0 : i32
    %11 = arith.cmpi ne, %10, %c0_i32_8 : i32
    scf.if %11 {
      %c0_9 = arith.constant 0 : index
      %c0_10 = arith.constant 0 : index
      %12 = vector.load %arg7[%c0_9, %c0_10] : memref<64x128xf32, #tpu.memory_space<vmem>>, vector<64x128xf32>
      %c0_11 = arith.constant 0 : index
      %c0_12 = arith.constant 0 : index
      %13 = vector.load %arg4[%c0_11, %c0_12] : memref<1x128xf32, #tpu.memory_space<vmem>>, vector<1x128xf32>
      %14 = vector.broadcast %13 : vector<1x128xf32> to vector<64x128xf32>
      %15 = arith.mulf %12, %14 : vector<64x128xf32>
      %c0_13 = arith.constant 0 : index
      %c0_14 = arith.constant 0 : index
      %16 = vector.load %arg5[%c0_13, %c0_14] : memref<1x128xf32, #tpu.memory_space<vmem>>, vector<1x128xf32>
      %17 = vector.broadcast %16 : vector<1x128xf32> to vector<64x128xf32>
      %18 = arith.addf %15, %17 : vector<64x128xf32>
      %cst_15 = arith.constant 0.000000e+00 : f32
      %19 = vector.broadcast %cst_15 : f32 to vector<64x128xf32>
      %20 = arith.maximumf %18, %19 : vector<64x128xf32>
      %21 = arith.truncf %20 : vector<64x128xf32> to vector<64x128xbf16>
      %c0_16 = arith.constant 0 : index
      %c0_17 = arith.constant 0 : index
      %22 = vector.load %arg6[%c0_16, %c0_17] : memref<64x128xbf16, #tpu.memory_space<vmem>>, vector<64x128xbf16>
      tpu.vector_store %arg6[%c0_16, %c0_17], %21 {strides = array<i32>} : memref<64x128xbf16, #tpu.memory_space<vmem>>, vector<64x128xbf16>,
    } else {
    }
    return
  }
  func.func @transform_0(%arg0: i32, %arg1: i32) -> (i32, i32) {
    %c0_i32 = arith.constant 0 : i32
    return %arg0, %arg1 : i32, i32
  }
  func.func @transform_1(%arg0: i32, %arg1: i32) -> (i32, i32) {
    %c0_i32 = arith.constant 0 : i32
    %c0_i32_0 = arith.constant 0 : i32
    return %arg1, %c0_i32 : i32, i32
  }
  func.func @transform_2(%arg0: i32, %arg1: i32) -> (i32, i32) {
    %c0_i32 = arith.constant 0 : i32
    %c0_i32_0 = arith.constant 0 : i32
    %c0_i32_1 = arith.constant 0 : i32
    return %c0_i32, %c0_i32_0 : i32, i32
  }
  func.func @transform_3(%arg0: i32, %arg1: i32) -> (i32, i32) {
    %c0_i32 = arith.constant 0 : i32
    %c0_i32_0 = arith.constant 0 : i32
    %c0_i32_1 = arith.constant 0 : i32
    return %c0_i32, %c0_i32_0 : i32, i32
  }
  func.func @transform_4(%arg0: i32, %arg1: i32) -> (i32, i32) {
    %c0_i32 = arith.constant 0 : i32
    %c0_i32_0 = arith.constant 0 : i32
    return %arg0, %c0_i32 : i32, i32
  }
}

module attributes {stable_mosaic.version = 11 : i64} {
  func.func @_fused_matmul_kernel(%arg0: i32, %arg1: i32, %arg2: memref<16x384xbf16, #tpu.memory_space<vmem>>, %arg3: memref<384x128xbf16, #tpu.memory_space<vmem>>, %arg4: memref<1x128xf32, #tpu.memory_space<vmem>>, %arg5: memref<1x128xf32, #tpu.memory_space<vmem>>, %arg6: memref<16x128xbf16, #tpu.memory_space<vmem>>, %arg7: memref<16x128xf32, #tpu.memory_space<vmem>>) attributes {dimension_semantics = [#tpu.dimension_semantics<parallel>, #tpu.dimension_semantics<arbitrary>], iteration_bounds = array<i64: 2, 3>, scalar_prefetch = 0 : i64, scratch_operands = 1 : i64, tpu.core_type = #tpu.core_type<tc>, window_params = [{transform_indices = @transform_0, window_bounds = array<i64: 16, 384>}, {transform_indices = @transform_1, window_bounds = array<i64: 384, 128>}, {pipeline_mode = #tpu.pipeline_mode<synchronous>, transform_indices = @transform_2, window_bounds = array<i64: 1, 128>}, {pipeline_mode = #tpu.pipeline_mode<synchronous>, transform_indices = @transform_3, window_bounds = array<i64: 1, 128>}, {transform_indices = @transform_4, window_bounds = array<i64: 16, 128>}]} {
    %c0_i32 = arith.constant 0 : i32
    %0 = arith.cmpi eq, %arg1, %c0_i32 : i32
    %1 = arith.extui %0 : i1 to i32
    %c0_i32_0 = arith.constant 0 : i32
    %2 = arith.cmpi ne, %1, %c0_i32_0 : i32
    scf.if %2 {
      %cst_9 = arith.constant 0.000000e+00 : f32
      %12 = vector.broadcast %cst_9 : f32 to vector<16x128xf32>
      %c0_10 = arith.constant 0 : index
      %c0_11 = arith.constant 0 : index
      %13 = vector.load %arg7[%c0_10, %c0_11] : memref<16x128xf32, #tpu.memory_space<vmem>>, vector<16x128xf32>
      tpu.vector_store %arg7[%c0_10, %c0_11], %12 {strides = array<i32>} : memref<16x128xf32, #tpu.memory_space<vmem>>, vector<16x128xf32>,
    } else {
    }
    %c0 = arith.constant 0 : index
    %c0_1 = arith.constant 0 : index
    %3 = vector.load %arg7[%c0, %c0_1] : memref<16x128xf32, #tpu.memory_space<vmem>>, vector<16x128xf32>
    %c0_2 = arith.constant 0 : index
    %c0_3 = arith.constant 0 : index
    %4 = vector.load %arg2[%c0_2, %c0_3] : memref<16x384xbf16, #tpu.memory_space<vmem>>, vector<16x384xbf16>
    %c0_4 = arith.constant 0 : index
    %c0_5 = arith.constant 0 : index
    %5 = vector.load %arg3[%c0_4, %c0_5] : memref<384x128xbf16, #tpu.memory_space<vmem>>, vector<384x128xbf16>
    %cst = arith.constant dense<0.000000e+00> : vector<16x128xf32>
    %6 = tpu.matmul %4, %5, %cst {dimension_numbers = #tpu.dot_dimension_numbers<[1], [0], [0], [1], [0, 0, 1, 1], [], []>} : vector<16x384xbf16>, vector<384x128xbf16>, vector<16x128xf32> -> vector<16x128xf32>
    %7 = arith.addf %3, %6 : vector<16x128xf32>
    %c0_6 = arith.constant 0 : index
    %c0_7 = arith.constant 0 : index
    %8 = vector.load %arg7[%c0_6, %c0_7] : memref<16x128xf32, #tpu.memory_space<vmem>>, vector<16x128xf32>
    tpu.vector_store %arg7[%c0_6, %c0_7], %7 {strides = array<i32>} : memref<16x128xf32, #tpu.memory_space<vmem>>, vector<16x128xf32>,
    %c2_i32 = arith.constant 2 : i32
    %9 = arith.cmpi eq, %arg1, %c2_i32 : i32
    %10 = arith.extui %9 : i1 to i32
    %c0_i32_8 = arith.constant 0 : i32
    %11 = arith.cmpi ne, %10, %c0_i32_8 : i32
    scf.if %11 {
      %c0_9 = arith.constant 0 : index
      %c0_10 = arith.constant 0 : index
      %12 = vector.load %arg7[%c0_9, %c0_10] : memref<16x128xf32, #tpu.memory_space<vmem>>, vector<16x128xf32>
      %c0_11 = arith.constant 0 : index
      %c0_12 = arith.constant 0 : index
      %13 = vector.load %arg4[%c0_11, %c0_12] : memref<1x128xf32, #tpu.memory_space<vmem>>, vector<1x128xf32>
      %14 = vector.broadcast %13 : vector<1x128xf32> to vector<16x128xf32>
      %15 = arith.mulf %12, %14 : vector<16x128xf32>
      %c0_13 = arith.constant 0 : index
      %c0_14 = arith.constant 0 : index
      %16 = vector.load %arg5[%c0_13, %c0_14] : memref<1x128xf32, #tpu.memory_space<vmem>>, vector<1x128xf32>
      %17 = vector.broadcast %16 : vector<1x128xf32> to vector<16x128xf32>
      %18 = arith.addf %15, %17 : vector<16x128xf32>
      %cst_15 = arith.constant 0.000000e+00 : f32
      %19 = vector.broadcast %cst_15 : f32 to vector<16x128xf32>
      %20 = arith.maximumf %18, %19 : vector<16x128xf32>
      %21 = arith.truncf %20 : vector<16x128xf32> to vector<16x128xbf16>
      %c0_16 = arith.constant 0 : index
      %c0_17 = arith.constant 0 : index
      %22 = vector.load %arg6[%c0_16, %c0_17] : memref<16x128xbf16, #tpu.memory_space<vmem>>, vector<16x128xbf16>
      tpu.vector_store %arg6[%c0_16, %c0_17], %21 {strides = array<i32>} : memref<16x128xbf16, #tpu.memory_space<vmem>>, vector<16x128xbf16>,
    } else {
    }
    return
  }
  func.func @transform_0(%arg0: i32, %arg1: i32) -> (i32, i32) {
    %c0_i32 = arith.constant 0 : i32
    return %arg0, %arg1 : i32, i32
  }
  func.func @transform_1(%arg0: i32, %arg1: i32) -> (i32, i32) {
    %c0_i32 = arith.constant 0 : i32
    %c0_i32_0 = arith.constant 0 : i32
    return %arg1, %c0_i32 : i32, i32
  }
  func.func @transform_2(%arg0: i32, %arg1: i32) -> (i32, i32) {
    %c0_i32 = arith.constant 0 : i32
    %c0_i32_0 = arith.constant 0 : i32
    %c0_i32_1 = arith.constant 0 : i32
    return %c0_i32, %c0_i32_0 : i32, i32
  }
  func.func @transform_3(%arg0: i32, %arg1: i32) -> (i32, i32) {
    %c0_i32 = arith.constant 0 : i32
    %c0_i32_0 = arith.constant 0 : i32
    %c0_i32_1 = arith.constant 0 : i32
    return %c0_i32, %c0_i32_0 : i32, i32
  }
  func.func @transform_4(%arg0: i32, %arg1: i32) -> (i32, i32) {
    %c0_i32 = arith.constant 0 : i32
    %c0_i32_0 = arith.constant 0 : i32
    return %arg0, %c0_i32 : i32, i32
  }
}

module attributes {stable_mosaic.version = 11 : i64} {
  func.func @_fused_matmul_kernel(%arg0: i32, %arg1: i32, %arg2: memref<16x128xbf16, #tpu.memory_space<vmem>>, %arg3: memref<128x128xbf16, #tpu.memory_space<vmem>>, %arg4: memref<1x128xf32, #tpu.memory_space<vmem>>, %arg5: memref<1x128xf32, #tpu.memory_space<vmem>>, %arg6: memref<16x128xbf16, #tpu.memory_space<vmem>>, %arg7: memref<16x128xbf16, #tpu.memory_space<vmem>>, %arg8: memref<16x128xf32, #tpu.memory_space<vmem>>) attributes {dimension_semantics = [#tpu.dimension_semantics<parallel>, #tpu.dimension_semantics<arbitrary>], iteration_bounds = array<i64: 2, 1>, scalar_prefetch = 0 : i64, scratch_operands = 1 : i64, tpu.core_type = #tpu.core_type<tc>, window_params = [{transform_indices = @transform_0, window_bounds = array<i64: 16, 128>}, {transform_indices = @transform_1, window_bounds = array<i64: 128, 128>}, {pipeline_mode = #tpu.pipeline_mode<synchronous>, transform_indices = @transform_2, window_bounds = array<i64: 1, 128>}, {pipeline_mode = #tpu.pipeline_mode<synchronous>, transform_indices = @transform_3, window_bounds = array<i64: 1, 128>}, {transform_indices = @transform_4, window_bounds = array<i64: 16, 128>}, {transform_indices = @transform_5, window_bounds = array<i64: 16, 128>}]} {
    %c0_i32 = arith.constant 0 : i32
    %0 = arith.cmpi eq, %arg1, %c0_i32 : i32
    %1 = arith.extui %0 : i1 to i32
    %c0_i32_0 = arith.constant 0 : i32
    %2 = arith.cmpi ne, %1, %c0_i32_0 : i32
    scf.if %2 {
      %cst_10 = arith.constant 0.000000e+00 : f32
      %12 = vector.broadcast %cst_10 : f32 to vector<16x128xf32>
      %c0_11 = arith.constant 0 : index
      %c0_12 = arith.constant 0 : index
      %13 = vector.load %arg8[%c0_11, %c0_12] : memref<16x128xf32, #tpu.memory_space<vmem>>, vector<16x128xf32>
      tpu.vector_store %arg8[%c0_11, %c0_12], %12 {strides = array<i32>} : memref<16x128xf32, #tpu.memory_space<vmem>>, vector<16x128xf32>,
    } else {
    }
    %c0 = arith.constant 0 : index
    %c0_1 = arith.constant 0 : index
    %3 = vector.load %arg8[%c0, %c0_1] : memref<16x128xf32, #tpu.memory_space<vmem>>, vector<16x128xf32>
    %c0_2 = arith.constant 0 : index
    %c0_3 = arith.constant 0 : index
    %4 = vector.load %arg2[%c0_2, %c0_3] : memref<16x128xbf16, #tpu.memory_space<vmem>>, vector<16x128xbf16>
    %c0_4 = arith.constant 0 : index
    %c0_5 = arith.constant 0 : index
    %5 = vector.load %arg3[%c0_4, %c0_5] : memref<128x128xbf16, #tpu.memory_space<vmem>>, vector<128x128xbf16>
    %cst = arith.constant dense<0.000000e+00> : vector<16x128xf32>
    %6 = tpu.matmul %4, %5, %cst {dimension_numbers = #tpu.dot_dimension_numbers<[1], [0], [0], [1], [0, 0, 1, 1], [], []>} : vector<16x128xbf16>, vector<128x128xbf16>, vector<16x128xf32> -> vector<16x128xf32>
    %7 = arith.addf %3, %6 : vector<16x128xf32>
    %c0_6 = arith.constant 0 : index
    %c0_7 = arith.constant 0 : index
    %8 = vector.load %arg8[%c0_6, %c0_7] : memref<16x128xf32, #tpu.memory_space<vmem>>, vector<16x128xf32>
    tpu.vector_store %arg8[%c0_6, %c0_7], %7 {strides = array<i32>} : memref<16x128xf32, #tpu.memory_space<vmem>>, vector<16x128xf32>,
    %c0_i32_8 = arith.constant 0 : i32
    %9 = arith.cmpi eq, %arg1, %c0_i32_8 : i32
    %10 = arith.extui %9 : i1 to i32
    %c0_i32_9 = arith.constant 0 : i32
    %11 = arith.cmpi ne, %10, %c0_i32_9 : i32
    scf.if %11 {
      %c0_10 = arith.constant 0 : index
      %c0_11 = arith.constant 0 : index
      %12 = vector.load %arg8[%c0_10, %c0_11] : memref<16x128xf32, #tpu.memory_space<vmem>>, vector<16x128xf32>
      %c0_12 = arith.constant 0 : index
      %c0_13 = arith.constant 0 : index
      %13 = vector.load %arg4[%c0_12, %c0_13] : memref<1x128xf32, #tpu.memory_space<vmem>>, vector<1x128xf32>
      %14 = vector.broadcast %13 : vector<1x128xf32> to vector<16x128xf32>
      %15 = arith.mulf %12, %14 : vector<16x128xf32>
      %c0_14 = arith.constant 0 : index
      %c0_15 = arith.constant 0 : index
      %16 = vector.load %arg5[%c0_14, %c0_15] : memref<1x128xf32, #tpu.memory_space<vmem>>, vector<1x128xf32>
      %17 = vector.broadcast %16 : vector<1x128xf32> to vector<16x128xf32>
      %18 = arith.addf %15, %17 : vector<16x128xf32>
      %c0_16 = arith.constant 0 : index
      %c0_17 = arith.constant 0 : index
      %19 = vector.load %arg6[%c0_16, %c0_17] : memref<16x128xbf16, #tpu.memory_space<vmem>>, vector<16x128xbf16>
      %20 = arith.extf %19 : vector<16x128xbf16> to vector<16x128xf32>
      %21 = arith.addf %18, %20 : vector<16x128xf32>
      %cst_18 = arith.constant 0.000000e+00 : f32
      %22 = vector.broadcast %cst_18 : f32 to vector<16x128xf32>
      %23 = arith.maximumf %21, %22 : vector<16x128xf32>
      %24 = arith.truncf %23 : vector<16x128xf32> to vector<16x128xbf16>
      %c0_19 = arith.constant 0 : index
      %c0_20 = arith.constant 0 : index
      %25 = vector.load %arg7[%c0_19, %c0_20] : memref<16x128xbf16, #tpu.memory_space<vmem>>, vector<16x128xbf16>
      tpu.vector_store %arg7[%c0_19, %c0_20], %24 {strides = array<i32>} : memref<16x128xbf16, #tpu.memory_space<vmem>>, vector<16x128xbf16>,
    } else {
    }
    return
  }
  func.func @transform_0(%arg0: i32, %arg1: i32) -> (i32, i32) {
    %c0_i32 = arith.constant 0 : i32
    return %arg0, %arg1 : i32, i32
  }
  func.func @transform_1(%arg0: i32, %arg1: i32) -> (i32, i32) {
    %c0_i32 = arith.constant 0 : i32
    %c0_i32_0 = arith.constant 0 : i32
    return %arg1, %c0_i32 : i32, i32
  }
  func.func @transform_2(%arg0: i32, %arg1: i32) -> (i32, i32) {
    %c0_i32 = arith.constant 0 : i32
    %c0_i32_0 = arith.constant 0 : i32
    %c0_i32_1 = arith.constant 0 : i32
    return %c0_i32, %c0_i32_0 : i32, i32
  }
  func.func @transform_3(%arg0: i32, %arg1: i32) -> (i32, i32) {
    %c0_i32 = arith.constant 0 : i32
    %c0_i32_0 = arith.constant 0 : i32
    %c0_i32_1 = arith.constant 0 : i32
    return %c0_i32, %c0_i32_0 : i32, i32
  }
  func.func @transform_4(%arg0: i32, %arg1: i32) -> (i32, i32) {
    %c0_i32 = arith.constant 0 : i32
    %c0_i32_0 = arith.constant 0 : i32
    return %arg0, %c0_i32 : i32, i32
  }
  func.func @transform_5(%arg0: i32, %arg1: i32) -> (i32, i32) {
    %c0_i32 = arith.constant 0 : i32
    %c0_i32_0 = arith.constant 0 : i32
    return %arg0, %c0_i32 : i32, i32
  }
}

module attributes {stable_mosaic.version = 11 : i64} {
  func.func @_fused_matmul_kernel(%arg0: i32, %arg1: i32, %arg2: memref<16x128xbf16, #tpu.memory_space<vmem>>, %arg3: memref<128x128xbf16, #tpu.memory_space<vmem>>, %arg4: memref<1x128xf32, #tpu.memory_space<vmem>>, %arg5: memref<1x128xf32, #tpu.memory_space<vmem>>, %arg6: memref<16x128xbf16, #tpu.memory_space<vmem>>, %arg7: memref<16x128xf32, #tpu.memory_space<vmem>>) attributes {dimension_semantics = [#tpu.dimension_semantics<parallel>, #tpu.dimension_semantics<arbitrary>], iteration_bounds = array<i64: 2, 1>, scalar_prefetch = 0 : i64, scratch_operands = 1 : i64, tpu.core_type = #tpu.core_type<tc>, window_params = [{transform_indices = @transform_0, window_bounds = array<i64: 16, 128>}, {transform_indices = @transform_1, window_bounds = array<i64: 128, 128>}, {pipeline_mode = #tpu.pipeline_mode<synchronous>, transform_indices = @transform_2, window_bounds = array<i64: 1, 128>}, {pipeline_mode = #tpu.pipeline_mode<synchronous>, transform_indices = @transform_3, window_bounds = array<i64: 1, 128>}, {transform_indices = @transform_4, window_bounds = array<i64: 16, 128>}]} {
    %c0_i32 = arith.constant 0 : i32
    %0 = arith.cmpi eq, %arg1, %c0_i32 : i32
    %1 = arith.extui %0 : i1 to i32
    %c0_i32_0 = arith.constant 0 : i32
    %2 = arith.cmpi ne, %1, %c0_i32_0 : i32
    scf.if %2 {
      %cst_10 = arith.constant 0.000000e+00 : f32
      %12 = vector.broadcast %cst_10 : f32 to vector<16x128xf32>
      %c0_11 = arith.constant 0 : index
      %c0_12 = arith.constant 0 : index
      %13 = vector.load %arg7[%c0_11, %c0_12] : memref<16x128xf32, #tpu.memory_space<vmem>>, vector<16x128xf32>
      tpu.vector_store %arg7[%c0_11, %c0_12], %12 {strides = array<i32>} : memref<16x128xf32, #tpu.memory_space<vmem>>, vector<16x128xf32>,
    } else {
    }
    %c0 = arith.constant 0 : index
    %c0_1 = arith.constant 0 : index
    %3 = vector.load %arg7[%c0, %c0_1] : memref<16x128xf32, #tpu.memory_space<vmem>>, vector<16x128xf32>
    %c0_2 = arith.constant 0 : index
    %c0_3 = arith.constant 0 : index
    %4 = vector.load %arg2[%c0_2, %c0_3] : memref<16x128xbf16, #tpu.memory_space<vmem>>, vector<16x128xbf16>
    %c0_4 = arith.constant 0 : index
    %c0_5 = arith.constant 0 : index
    %5 = vector.load %arg3[%c0_4, %c0_5] : memref<128x128xbf16, #tpu.memory_space<vmem>>, vector<128x128xbf16>
    %cst = arith.constant dense<0.000000e+00> : vector<16x128xf32>
    %6 = tpu.matmul %4, %5, %cst {dimension_numbers = #tpu.dot_dimension_numbers<[1], [0], [0], [1], [0, 0, 1, 1], [], []>} : vector<16x128xbf16>, vector<128x128xbf16>, vector<16x128xf32> -> vector<16x128xf32>
    %7 = arith.addf %3, %6 : vector<16x128xf32>
    %c0_6 = arith.constant 0 : index
    %c0_7 = arith.constant 0 : index
    %8 = vector.load %arg7[%c0_6, %c0_7] : memref<16x128xf32, #tpu.memory_space<vmem>>, vector<16x128xf32>
    tpu.vector_store %arg7[%c0_6, %c0_7], %7 {strides = array<i32>} : memref<16x128xf32, #tpu.memory_space<vmem>>, vector<16x128xf32>,
    %c0_i32_8 = arith.constant 0 : i32
    %9 = arith.cmpi eq, %arg1, %c0_i32_8 : i32
    %10 = arith.extui %9 : i1 to i32
    %c0_i32_9 = arith.constant 0 : i32
    %11 = arith.cmpi ne, %10, %c0_i32_9 : i32
    scf.if %11 {
      %c0_10 = arith.constant 0 : index
      %c0_11 = arith.constant 0 : index
      %12 = vector.load %arg7[%c0_10, %c0_11] : memref<16x128xf32, #tpu.memory_space<vmem>>, vector<16x128xf32>
      %c0_12 = arith.constant 0 : index
      %c0_13 = arith.constant 0 : index
      %13 = vector.load %arg4[%c0_12, %c0_13] : memref<1x128xf32, #tpu.memory_space<vmem>>, vector<1x128xf32>
      %14 = vector.broadcast %13 : vector<1x128xf32> to vector<16x128xf32>
      %15 = arith.mulf %12, %14 : vector<16x128xf32>
      %c0_14 = arith.constant 0 : index
      %c0_15 = arith.constant 0 : index
      %16 = vector.load %arg5[%c0_14, %c0_15] : memref<1x128xf32, #tpu.memory_space<vmem>>, vector<1x128xf32>
      %17 = vector.broadcast %16 : vector<1x128xf32> to vector<16x128xf32>
      %18 = arith.addf %15, %17 : vector<16x128xf32>
      %19 = arith.truncf %18 : vector<16x128xf32> to vector<16x128xbf16>
      %c0_16 = arith.constant 0 : index
      %c0_17 = arith.constant 0 : index
      %20 = vector.load %arg6[%c0_16, %c0_17] : memref<16x128xbf16, #tpu.memory_space<vmem>>, vector<16x128xbf16>
      tpu.vector_store %arg6[%c0_16, %c0_17], %19 {strides = array<i32>} : memref<16x128xbf16, #tpu.memory_space<vmem>>, vector<16x128xbf16>,
    } else {
    }
    return
  }
  func.func @transform_0(%arg0: i32, %arg1: i32) -> (i32, i32) {
    %c0_i32 = arith.constant 0 : i32
    return %arg0, %arg1 : i32, i32
  }
  func.func @transform_1(%arg0: i32, %arg1: i32) -> (i32, i32) {
    %c0_i32 = arith.constant 0 : i32
    %c0_i32_0 = arith.constant 0 : i32
    return %arg1, %c0_i32 : i32, i32
  }
  func.func @transform_2(%arg0: i32, %arg1: i32) -> (i32, i32) {
    %c0_i32 = arith.constant 0 : i32
    %c0_i32_0 = arith.constant 0 : i32
    %c0_i32_1 = arith.constant 0 : i32
    return %c0_i32, %c0_i32_0 : i32, i32
  }
  func.func @transform_3(%arg0: i32, %arg1: i32) -> (i32, i32) {
    %c0_i32 = arith.constant 0 : i32
    %c0_i32_0 = arith.constant 0 : i32
    %c0_i32_1 = arith.constant 0 : i32
    return %c0_i32, %c0_i32_0 : i32, i32
  }
  func.func @transform_4(%arg0: i32, %arg1: i32) -> (i32, i32) {
    %c0_i32 = arith.constant 0 : i32
    %c0_i32_0 = arith.constant 0 : i32
    return %arg0, %c0_i32 : i32, i32
  }
}

module attributes {stable_mosaic.version = 11 : i64} {
  func.func @_gap_kernel(%arg0: i32, %arg1: memref<1x16x128xbf16, #tpu.memory_space<vmem>>, %arg2: memref<1x1x128xf32, #tpu.memory_space<vmem>>) attributes {dimension_semantics = [#tpu.dimension_semantics<parallel>], iteration_bounds = array<i64: 2>, scalar_prefetch = 0 : i64, scratch_operands = 0 : i64, tpu.core_type = #tpu.core_type<tc>, window_params = [{transform_indices = @transform_0, window_bounds = array<i64: 1, 16, 128>}, {transform_indices = @transform_1, window_bounds = array<i64: 1, 1, 128>}]} {
    %c0 = arith.constant 0 : index
    %c0_0 = arith.constant 0 : index
    %c0_1 = arith.constant 0 : index
    %0 = vector.load %arg1[%c0, %c0_0, %c0_1] : memref<1x16x128xbf16, #tpu.memory_space<vmem>>, vector<1x16x128xbf16>
    %1 = arith.extf %0 : vector<1x16x128xbf16> to vector<1x16x128xf32>
    %cst = arith.constant dense<0.000000e+00> : vector<1x128xf32>
    %2 = vector.multi_reduction <add>, %1, %cst [1] : vector<1x16x128xf32> to vector<1x128xf32>
    %3 = vector.shape_cast %2 : vector<1x128xf32> to vector<1x1x128xf32>
    %cst_2 = arith.constant 1.600000e+01 : f32
    %4 = vector.broadcast %cst_2 : f32 to vector<1x1x128xf32>
    %5 = arith.divf %3, %4 : vector<1x1x128xf32>
    %c0_3 = arith.constant 0 : index
    %c0_4 = arith.constant 0 : index
    %c0_5 = arith.constant 0 : index
    %6 = vector.load %arg2[%c0_3, %c0_4, %c0_5] : memref<1x1x128xf32, #tpu.memory_space<vmem>>, vector<1x1x128xf32>
    tpu.vector_store %arg2[%c0_3, %c0_4, %c0_5], %5 {strides = array<i32>} : memref<1x1x128xf32, #tpu.memory_space<vmem>>, vector<1x1x128xf32>,
    return
  }
  func.func @transform_0(%arg0: i32) -> (i32, i32, i32) {
    %c0_i32 = arith.constant 0 : i32
    %c0_i32_0 = arith.constant 0 : i32
    %c0_i32_1 = arith.constant 0 : i32
    return %arg0, %c0_i32, %c0_i32_0 : i32, i32, i32
  }
  func.func @transform_1(%arg0: i32) -> (i32, i32, i32) {
    %c0_i32 = arith.constant 0 : i32
    %c0_i32_0 = arith.constant 0 : i32
    %c0_i32_1 = arith.constant 0 : i32
    return %arg0, %c0_i32, %c0_i32_0 : i32, i32, i32
  }
}

</mosaic_0001>

<llo_original>
// kernel: peft_rn_forward.12
$region0: #{peft_rn_forward.12}
  #allocation0 [shape = 'u32[]', space=smem, size = 0x4, offset = 0x4, fixed_abs, tag = 'smem constant byte address 0x4 - core index']
  #allocation1 [shape = 'u32[72,128]{1,0:T(1,128)}', space=vmem, size = 0x9000, scoped, tag = 'internal scratch']
  %s0 = inlined_call_operand.vmem [shape: bf16[128,128], index: 0, kind: input, shape index: {}]
  %s1 = inlined_call_operand.vmem [shape: bf16[128,128], index: 1, kind: input, shape index: {}]
  %s2 = inlined_call_operand.vmem [shape: bf16[128,128], index: 2, kind: input, shape index: {}]
  %s3 = inlined_call_operand.vmem [shape: bf16[128,128], index: 3, kind: input, shape index: {}]
  %s4 = inlined_call_operand.vmem [shape: bf16[128,128], index: 4, kind: input, shape index: {}]
  %s5 = inlined_call_operand.vmem [shape: bf16[128,128], index: 5, kind: input, shape index: {}]
  %s6 = inlined_call_operand.vmem [shape: bf16[128,128], index: 6, kind: input, shape index: {}]
  %s7 = inlined_call_operand.vmem [shape: bf16[128,128], index: 7, kind: input, shape index: {}]
  %s8 = inlined_call_operand.vmem [shape: bf16[128,128], index: 8, kind: input, shape index: {}]
  %s9 = inlined_call_operand.vmem [shape: bf16[128,128], index: 9, kind: output, shape index: {}]
  %s10 = sld [smem:[#allocation0]]
  $region69: #{peft_rn_forward.12} parent=0
    _
  %s12 = ssub.s32 1, %s10
  %s13 = scalar_select 0, %s12, %s10
  loop: start=0, step=1, limit=4
  $region2: #{peft_rn_forward.12} parent=0 // loop_pre_header
    _
  $region3: #{peft_rn_forward.12} parent=0 // loop_header
    %s15 = sphi 0, %s19
    %p16 = scmp.ge.s32.totalorder %s15, 4
    %s25 = sphi 0, %s27
    %s28 = sphi 0, %s25
    %s29 = sphi 0, %s28
    %s45 = sphi 0, %s29
    %s51 = sphi 0, %s53
    %s54 = sphi 0, %s51
    %s55 = sphi 0, %s54
    %s71 = sphi 0, %s55
    %s77 = sphi 0, %s79
    %s80 = sphi 0, %s77
    %s81 = sphi 0, %s80
    %s97 = sphi 0, %s81
    %s103 = sphi 0, %s105
    %s106 = sphi 0, %s103
    %s107 = sphi 0, %s106
    %s123 = sphi 0, %s107
    %s129 = sphi 0, %s131
    %s132 = sphi 0, %s129
    %s133 = sphi 0, %s132
    %s149 = sphi 0, %s133
    %s155 = sphi 0, %s157
    %s158 = sphi 0, %s155
    %s159 = sphi 0, %s158
    %s175 = sphi 0, %s159
    %s181 = sphi 0, %s183
    %s184 = sphi 0, %s181
    %s185 = sphi 0, %s184
    %s201 = sphi 0, %s185
    %s207 = sphi 0, %s209
    %s210 = sphi 0, %s207
    %s211 = sphi 0, %s210
    %s227 = sphi 0, %s211
    %s233 = sphi 0, %s235
    %s236 = sphi 0, %s233
    %s237 = sphi 0, %s236
    %s253 = sphi 0, %s237
    %s259 = sphi 0, %s261
    %s262 = sphi 0, %s259
    %s263 = sphi 0, %s262
    %s279 = sphi 0, %s263
  $region4: #{peft_rn_forward.12} parent=0 // loop_header_branch
    %18 = sbr.rel (%p16) target = $region8
  $region5: #{peft_rn_forward.12} parent=0 // loop_body
    %s20 = ssub.s32 %s15, 1
    %s21 = ssub.s32 %s15, 2
    %s22 = sadd.s32 %s15, 1
    %s23 = ssub.s32 %s15, %s22
    %p24 = scmp.eq.s32.totalorder %s23, 0
    %s26 = sadd.s32 %s25, 1
    %s27 = scalar_select %p24, %s25, %s26
    %p30 = pneg %p24
    %p31 = scmp.eq.s32.totalorder %s15, 1
    %p32 = por %p30, %p31
    %p33 = scmp.ne.s32.totalorder %s25, %s28
    %p34 = scmp.eq.s32.totalorder %s15, 0
    %p35 = por %p33, %p34
    %p36 = scmp.ne.s32.totalorder %s25, %s28
    %p37 = scmp.eq.s32.totalorder %s20, 1
    %p38 = por %p36, %p37
    %p39 = scmp.ne.s32.totalorder %s28, %s29
    %p40 = scmp.eq.s32.totalorder %s20, 0
    %p41 = por %p39, %p40
    %p42 = scmp.ne.s32.totalorder %s28, %s29
    %p43 = scmp.eq.s32.totalorder %s21, 1
    %p44 = por %p42, %p43
    %p46 = scmp.ne.s32.totalorder %s29, %s45
    %p47 = scmp.eq.s32.totalorder %s21, 0
    %p48 = por %p46, %p47
    %s49 = ssub.s32 %s15, %s22
    %p50 = scmp.eq.s32.totalorder %s49, 0
    %s52 = sadd.s32 %s51, 1
    %s53 = scalar_select %p50, %s51, %s52
    %p56 = pneg %p50
    %p57 = scmp.eq.s32.totalorder %s15, 1
    %p58 = por %p56, %p57
    %p59 = scmp.ne.s32.totalorder %s51, %s54
    %p60 = scmp.eq.s32.totalorder %s15, 0
    %p61 = por %p59, %p60
    %p62 = scmp.ne.s32.totalorder %s51, %s54
    %p63 = scmp.eq.s32.totalorder %s20, 1
    %p64 = por %p62, %p63
    %p65 = scmp.ne.s32.totalorder %s54, %s55
    %p66 = scmp.eq.s32.totalorder %s20, 0
    %p67 = por %p65, %p66
    %p68 = scmp.ne.s32.totalorder %s54, %s55
    %p69 = scmp.eq.s32.totalorder %s21, 1
    %p70 = por %p68, %p69
    %p72 = scmp.ne.s32.totalorder %s55, %s71
    %p73 = scmp.eq.s32.totalorder %s21, 0
    %p74 = por %p72, %p73
    %s75 = ssub.s32 %s15, %s22
    %p76 = scmp.eq.s32.totalorder %s75, 0
    %s78 = sadd.s32 %s77, 1
    %s79 = scalar_select %p76, %s77, %s78
    %p82 = pneg %p76
    %p83 = scmp.eq.s32.totalorder %s15, 1
    %p84 = por %p82, %p83
    %p85 = scmp.ne.s32.totalorder %s77, %s80
    %p86 = scmp.eq.s32.totalorder %s15, 0
    %p87 = por %p85, %p86
    %p88 = scmp.ne.s32.totalorder %s77, %s80
    %p89 = scmp.eq.s32.totalorder %s20, 1
    %p90 = por %p88, %p89
    %p91 = scmp.ne.s32.totalorder %s80, %s81
    %p92 = scmp.eq.s32.totalorder %s20, 0
    %p93 = por %p91, %p92
    %p94 = scmp.ne.s32.totalorder %s80, %s81
    %p95 = scmp.eq.s32.totalorder %s21, 1
    %p96 = por %p94, %p95
    %p98 = scmp.ne.s32.totalorder %s81, %s97
    %p99 = scmp.eq.s32.totalorder %s21, 0
    %p100 = por %p98, %p99
    %s101 = ssub.s32 %s15, %s22
    %p102 = scmp.eq.s32.totalorder %s101, 0
    %s104 = sadd.s32 %s103, 1
    %s105 = scalar_select %p102, %s103, %s104
    %p108 = pneg %p102
    %p109 = scmp.eq.s32.totalorder %s15, 1
    %p110 = por %p108, %p109
    %p111 = scmp.ne.s32.totalorder %s103, %s106
    %p112 = scmp.eq.s32.totalorder %s15, 0
    %p113 = por %p111, %p112
    %p114 = scmp.ne.s32.totalorder %s103, %s106
    %p115 = scmp.eq.s32.totalorder %s20, 1
    %p116 = por %p114, %p115
    %p117 = scmp.ne.s32.totalorder %s106, %s107
    %p118 = scmp.eq.s32.totalorder %s20, 0
    %p119 = por %p117, %p118
    %p120 = scmp.ne.s32.totalorder %s106, %s107
    %p121 = scmp.eq.s32.totalorder %s21, 1
    %p122 = por %p120, %p121
    %p124 = scmp.ne.s32.totalorder %s107, %s123
    %p125 = scmp.eq.s32.totalorder %s21, 0
    %p126 = por %p124, %p125
    %s127 = ssub.s32 %s15, %s22
    %p128 = scmp.eq.s32.totalorder %s127, 0
    %s130 = sadd.s32 %s129, 1
    %s131 = scalar_select %p128, %s129, %s130
    %p134 = pneg %p128
    %p135 = scmp.eq.s32.totalorder %s15, 1
    %p136 = por %p134, %p135
    %p137 = scmp.ne.s32.totalorder %s129, %s132
    %p138 = scmp.eq.s32.totalorder %s15, 0
    %p139 = por %p137, %p138
    %p140 = scmp.ne.s32.totalorder %s129, %s132
    %p141 = scmp.eq.s32.totalorder %s20, 1
    %p142 = por %p140, %p141
    %p143 = scmp.ne.s32.totalorder %s132, %s133
    %p144 = scmp.eq.s32.totalorder %s20, 0
    %p145 = por %p143, %p144
    %p146 = scmp.ne.s32.totalorder %s132, %s133
    %p147 = scmp.eq.s32.totalorder %s21, 1
    %p148 = por %p146, %p147
    %p150 = scmp.ne.s32.totalorder %s133, %s149
    %p151 = scmp.eq.s32.totalorder %s21, 0
    %p152 = por %p150, %p151
    %s153 = ssub.s32 %s15, %s22
    %p154 = scmp.eq.s32.totalorder %s153, 0
    %s156 = sadd.s32 %s155, 1
    %s157 = scalar_select %p154, %s155, %s156
    %p160 = pneg %p154
    %p161 = scmp.eq.s32.totalorder %s15, 1
    %p162 = por %p160, %p161
    %p163 = scmp.ne.s32.totalorder %s155, %s158
    %p164 = scmp.eq.s32.totalorder %s15, 0
    %p165 = por %p163, %p164
    %p166 = scmp.ne.s32.totalorder %s155, %s158
    %p167 = scmp.eq.s32.totalorder %s20, 1
    %p168 = por %p166, %p167
    %p169 = scmp.ne.s32.totalorder %s158, %s159
    %p170 = scmp.eq.s32.totalorder %s20, 0
    %p171 = por %p169, %p170
    %p172 = scmp.ne.s32.totalorder %s158, %s159
    %p173 = scmp.eq.s32.totalorder %s21, 1
    %p174 = por %p172, %p173
    %p176 = scmp.ne.s32.totalorder %s159, %s175
    %p177 = scmp.eq.s32.totalorder %s21, 0
    %p178 = por %p176, %p177
    %s179 = ssub.s32 %s15, %s22
    %p180 = scmp.eq.s32.totalorder %s179, 0
    %s182 = sadd.s32 %s181, 1
    %s183 = scalar_select %p180, %s181, %s182
    %p186 = pneg %p180
    %p187 = scmp.eq.s32.totalorder %s15, 1
    %p188 = por %p186, %p187
    %p189 = scmp.ne.s32.totalorder %s181, %s184
    %p190 = scmp.eq.s32.totalorder %s15, 0
    %p191 = por %p189, %p190
    %p192 = scmp.ne.s32.totalorder %s181, %s184
    %p193 = scmp.eq.s32.totalorder %s20, 1
    %p194 = por %p192, %p193
    %p195 = scmp.ne.s32.totalorder %s184, %s185
    %p196 = scmp.eq.s32.totalorder %s20, 0
    %p197 = por %p195, %p196
    %p198 = scmp.ne.s32.totalorder %s184, %s185
    %p199 = scmp.eq.s32.totalorder %s21, 1
    %p200 = por %p198, %p199
    %p202 = scmp.ne.s32.totalorder %s185, %s201
    %p203 = scmp.eq.s32.totalorder %s21, 0
    %p204 = por %p202, %p203
    %s205 = ssub.s32 %s15, %s22
    %p206 = scmp.eq.s32.totalorder %s205, 0
    %s208 = sadd.s32 %s207, 1
    %s209 = scalar_select %p206, %s207, %s208
    %p212 = pneg %p206
    %p213 = scmp.eq.s32.totalorder %s15, 1
    %p214 = por %p212, %p213
    %p215 = scmp.ne.s32.totalorder %s207, %s210
    %p216 = scmp.eq.s32.totalorder %s15, 0
    %p217 = por %p215, %p216
    %p218 = scmp.ne.s32.totalorder %s207, %s210
    %p219 = scmp.eq.s32.totalorder %s20, 1
    %p220 = por %p218, %p219
    %p221 = scmp.ne.s32.totalorder %s210, %s211
    %p222 = scmp.eq.s32.totalorder %s20, 0
    %p223 = por %p221, %p222
    %p224 = scmp.ne.s32.totalorder %s210, %s211
    %p225 = scmp.eq.s32.totalorder %s21, 1
    %p226 = por %p224, %p225
    %p228 = scmp.ne.s32.totalorder %s211, %s227
    %p229 = scmp.eq.s32.totalorder %s21, 0
    %p230 = por %p228, %p229
    %s231 = ssub.s32 %s15, %s22
    %p232 = scmp.eq.s32.totalorder %s231, 0
    %s234 = sadd.s32 %s233, 1
    %s235 = scalar_select %p232, %s233, %s234
    %p238 = pneg %p232
    %p239 = scmp.eq.s32.totalorder %s15, 1
    %p240 = por %p238, %p239
    %p241 = scmp.ne.s32.totalorder %s233, %s236
    %p242 = scmp.eq.s32.totalorder %s15, 0
    %p243 = por %p241, %p242
    %p244 = scmp.ne.s32.totalorder %s233, %s236
    %p245 = scmp.eq.s32.totalorder %s20, 1
    %p246 = por %p244, %p245
    %p247 = scmp.ne.s32.totalorder %s236, %s237
    %p248 = scmp.eq.s32.totalorder %s20, 0
    %p249 = por %p247, %p248
    %p250 = scmp.ne.s32.totalorder %s236, %s237
    %p251 = scmp.eq.s32.totalorder %s21, 1
    %p252 = por %p250, %p251
    %p254 = scmp.ne.s32.totalorder %s237, %s253
    %p255 = scmp.eq.s32.totalorder %s21, 0
    %p256 = por %p254, %p255
    %s257 = ssub.s32 %s15, %s22
    %p258 = scmp.eq.s32.totalorder %s257, 0
    %s260 = sadd.s32 %s259, 1
    %s261 = scalar_select %p258, %s259, %s260
    %p264 = pneg %p258
    %p265 = scmp.eq.s32.totalorder %s15, 1
    %p266 = por %p264, %p265
    %p267 = scmp.ne.s32.totalorder %s259, %s262
    %p268 = scmp.eq.s32.totalorder %s15, 0
    %p269 = por %p267, %p268
    %p270 = scmp.ne.s32.totalorder %s259, %s262
    %p271 = scmp.eq.s32.totalorder %s20, 1
    %p272 = por %p270, %p271
    %p273 = scmp.ne.s32.totalorder %s262, %s263
    %p274 = scmp.eq.s32.totalorder %s20, 0
    %p275 = por %p273, %p274
    %p276 = scmp.ne.s32.totalorder %s262, %s263
    %p277 = scmp.eq.s32.totalorder %s21, 1
    %p278 = por %p276, %p277
    %p280 = scmp.ne.s32.totalorder %s263, %s279
    %p281 = scmp.eq.s32.totalorder %s21, 0
    %p282 = por %p280, %p281
    %p283 = scmp.le.s32.totalorder 1, %s15
    %p284 = scmp.lt.s32.totalorder %s15, 3
    %p285 = pnand %p283, %p284
    %p286 = pneg %p285
    // Predicated region
    $region9: #{peft_rn_forward.12} parent=5 // pred_check
      _
    $region10: #{peft_rn_forward.12} parent=5 // pred_check_branch
      %288 = sbr.rel (%p285) target = $region12
    $region11: #{peft_rn_forward.12} parent=5 // pred_region
      %s289 = ssub.s32 %s15, 1
    $region12: #{peft_rn_forward.12} parent=5 // pred_fallthru
      _
    %p290 = scmp.lt.s32.totalorder %s15, 2
    // Predicated region
    $region13: #{peft_rn_forward.12} parent=5 // pred_check
      %p291 = pneg %p290
    $region14: #{peft_rn_forward.12} parent=5 // pred_check_branch
      %293 = sbr.rel (%p291) target = $region16
    $region15: #{peft_rn_forward.12} parent=5 // pred_region
      // Predicated region
      $region17: #{peft_rn_forward.12} parent=15 // pred_check
        %p294 = pneg %p35
      $region18: #{peft_rn_forward.12} parent=15 // pred_check_branch
        %296 = sbr.rel (%p294) target = $region20
      $region19: #{peft_rn_forward.12} parent=15 // pred_region
        %s297 = smul.u32 8, %s15
        %p298 = scmp.lt.s32.totalorder %s297, 15
        %s299 = scalar_select %p298, %s297, 15
        %s300 = smul.addr %s299, 4
        %s301 = scalar_lea.vmem %s0, %s300
        %s302 = smul.u32 8, %s15
      $region20: #{peft_rn_forward.12} parent=15 // pred_fallthru
        _
      // Predicated region
      $region21: #{peft_rn_forward.12} parent=15 // pred_check
        %p303 = pneg %p61
      $region22: #{peft_rn_forward.12} parent=15 // pred_check_branch
        %305 = sbr.rel (%p303) target = $region24
      $region23: #{peft_rn_forward.12} parent=15 // pred_region
        %s306 = smul.u32 8, %s15
        %p307 = scmp.lt.s32.totalorder %s306, 15
        %s308 = scalar_select %p307, %s306, 15
        %s309 = smul.addr %s308, 4
        %s310 = scalar_lea.vmem %s1, %s309
        %s311 = smul.u32 8, %s15
      $region24: #{peft_rn_forward.12} parent=15 // pred_fallthru
        _
      // Predicated region
      $region25: #{peft_rn_forward.12} parent=15 // pred_check
        %p312 = pneg %p87
      $region26: #{peft_rn_forward.12} parent=15 // pred_check_branch
        %314 = sbr.rel (%p312) target = $region28
      $region27: #{peft_rn_forward.12} parent=15 // pred_region
        %s315 = smul.u32 8, %s15
        %p316 = scmp.lt.s32.totalorder %s315, 15
        %s317 = scalar_select %p316, %s315, 15
        %s318 = smul.addr %s317, 4
        %s319 = scalar_lea.vmem %s2, %s318
        %s320 = smul.u32 8, %s15
      $region28: #{peft_rn_forward.12} parent=15 // pred_fallthru
        _
      // Predicated region
      $region29: #{peft_rn_forward.12} parent=15 // pred_check
        %p321 = pneg %p113
      $region30: #{peft_rn_forward.12} parent=15 // pred_check_branch
        %323 = sbr.rel (%p321) target = $region32
      $region31: #{peft_rn_forward.12} parent=15 // pred_region
        %s324 = smul.u32 8, %s15
        %p325 = scmp.lt.s32.totalorder %s324, 15
        %s326 = scalar_select %p325, %s324, 15
        %s327 = smul.addr %s326, 4
        %s328 = scalar_lea.vmem %s3, %s327
        %s329 = smul.u32 8, %s15
      $region32: #{peft_rn_forward.12} parent=15 // pred_fallthru
        _
      // Predicated region
      $region33: #{peft_rn_forward.12} parent=15 // pred_check
        %p330 = pneg %p139
      $region34: #{peft_rn_forward.12} parent=15 // pred_check_branch
        %332 = sbr.rel (%p330) target = $region36
      $region35: #{peft_rn_forward.12} parent=15 // pred_region
        %s333 = smul.u32 8, %s15
        %p334 = scmp.lt.s32.totalorder %s333, 15
        %s335 = scalar_select %p334, %s333, 15
        %s336 = smul.addr %s335, 4
        %s337 = scalar_lea.vmem %s4, %s336
        %s338 = smul.u32 8, %s15
      $region36: #{peft_rn_forward.12} parent=15 // pred_fallthru
        _
      // Predicated region
      $region37: #{peft_rn_forward.12} parent=15 // pred_check
        %p339 = pneg %p165
      $region38: #{peft_rn_forward.12} parent=15 // pred_check_branch
        %341 = sbr.rel (%p339) target = $region40
      $region39: #{peft_rn_forward.12} parent=15 // pred_region
        %s342 = smul.u32 8, %s15
        %p343 = scmp.lt.s32.totalorder %s342, 15
        %s344 = scalar_select %p343, %s342, 15
        %s345 = smul.addr %s344, 4
        %s346 = scalar_lea.vmem %s5, %s345
        %s347 = smul.u32 8, %s15
      $region40: #{peft_rn_forward.12} parent=15 // pred_fallthru
        _
      // Predicated region
      $region41: #{peft_rn_forward.12} parent=15 // pred_check
        %p348 = pneg %p191
      $region42: #{peft_rn_forward.12} parent=15 // pred_check_branch
        %350 = sbr.rel (%p348) target = $region44
      $region43: #{peft_rn_forward.12} parent=15 // pred_region
        %s351 = smul.u32 8, %s15
        %p352 = scmp.lt.s32.totalorder %s351, 15
        %s353 = scalar_select %p352, %s351, 15
        %s354 = smul.addr %s353, 4
        %s355 = scalar_lea.vmem %s6, %s354
        %s356 = smul.u32 8, %s15
      $region44: #{peft_rn_forward.12} parent=15 // pred_fallthru
        _
      // Predicated region
      $region45: #{peft_rn_forward.12} parent=15 // pred_check
        %p357 = pneg %p217
      $region46: #{peft_rn_forward.12} parent=15 // pred_check_branch
        %359 = sbr.rel (%p357) target = $region48
      $region47: #{peft_rn_forward.12} parent=15 // pred_region
        %s360 = smul.u32 8, %s15
        %p361 = scmp.lt.s32.totalorder %s360, 15
        %s362 = scalar_select %p361, %s360, 15
        %s363 = smul.addr %s362, 4
        %s364 = scalar_lea.vmem %s7, %s363
        %s365 = smul.u32 8, %s15
      $region48: #{peft_rn_forward.12} parent=15 // pred_fallthru
        _
      // Predicated region
      $region49: #{peft_rn_forward.12} parent=15 // pred_check
        %p366 = pneg %p243
      $region50: #{peft_rn_forward.12} parent=15 // pred_check_branch
        %368 = sbr.rel (%p366) target = $region52
      $region51: #{peft_rn_forward.12} parent=15 // pred_region
        %s369 = smul.u32 8, %s15
        %p370 = scmp.lt.s32.totalorder %s369, 15
        %s371 = scalar_select %p370, %s369, 15
        %s372 = smul.addr %s371, 4
        %s373 = scalar_lea.vmem %s8, %s372
        %s374 = smul.u32 8, %s15
      $region52: #{peft_rn_forward.12} parent=15 // pred_fallthru
        _
    $region16: #{peft_rn_forward.12} parent=5 // pred_fallthru
      _
    %p375 = scmp.le.s32.totalorder 1, %s15
    %p376 = scmp.lt.s32.totalorder %s15, 3
    %p377 = pnand %p375, %p376
    %p378 = pneg %p377
    // Predicated region
    $region53: #{peft_rn_forward.12} parent=5 // pred_check
      _
    $region54: #{peft_rn_forward.12} parent=5 // pred_check_branch
      %380 = sbr.rel (%p377) target = $region56
    $region55: #{peft_rn_forward.12} parent=5 // pred_region
      %s381 = ssub.s32 %s15, 1
      %s382 = smul.u32 8, %s20
      %p383 = scmp.lt.s32.totalorder %s382, 15
      %s384 = scalar_select %p383, %s382, 15
      %s385 = smul.addr %s384, 4
      %s386 = scalar_lea.vmem %s0, %s385
      %p387 = pneg %p41
      %p388 = pneg %p38
      %s389 = smul.u32 8, %s20
      %p390 = scmp.lt.s32.totalorder %s389, 15
      %s391 = scalar_select %p390, %s389, 15
      %s392 = smul.addr %s391, 4
      %s393 = scalar_lea.vmem %s1, %s392
      %p394 = pneg %p67
      %p395 = pneg %p64
      %s396 = smul.u32 8, %s20
      %p397 = scmp.lt.s32.totalorder %s396, 15
      %s398 = scalar_select %p397, %s396, 15
      %s399 = smul.addr %s398, 4
      %s400 = scalar_lea.vmem %s2, %s399
      %p401 = pneg %p93
      %p402 = pneg %p90
      %s403 = smul.u32 8, %s20
      %p404 = scmp.lt.s32.totalorder %s403, 15
      %s405 = scalar_select %p404, %s403, 15
      %s406 = smul.addr %s405, 4
      %s407 = scalar_lea.vmem %s3, %s406
      %p408 = pneg %p119
      %p409 = pneg %p116
      %s410 = smul.u32 8, %s20
      %p411 = scmp.lt.s32.totalorder %s410, 15
      %s412 = scalar_select %p411, %s410, 15
      %s413 = smul.addr %s412, 4
      %s414 = scalar_lea.vmem %s4, %s413
      %p415 = pneg %p145
      %p416 = pneg %p142
      %s417 = smul.u32 8, %s20
      %p418 = scmp.lt.s32.totalorder %s417, 15
      %s419 = scalar_select %p418, %s417, 15
      %s420 = smul.addr %s419, 4
      %s421 = scalar_lea.vmem %s5, %s420
      %p422 = pneg %p171
      %p423 = pneg %p168
      %s424 = smul.u32 8, %s20
      %p425 = scmp.lt.s32.totalorder %s424, 15
      %s426 = scalar_select %p425, %s424, 15
      %s427 = smul.addr %s426, 4
      %s428 = scalar_lea.vmem %s6, %s427
      %p429 = pneg %p197
      %p430 = pneg %p194
      %s431 = smul.u32 8, %s20
      %p432 = scmp.lt.s32.totalorder %s431, 15
      %s433 = scalar_select %p432, %s431, 15
      %s434 = smul.addr %s433, 4
      %s435 = scalar_lea.vmem %s7, %s434
      %p436 = pneg %p223
      %p437 = pneg %p220
      %s438 = smul.u32 8, %s20
      %p439 = scmp.lt.s32.totalorder %s438, 15
      %s440 = scalar_select %p439, %s438, 15
      %s441 = smul.addr %s440, 4
      %s442 = scalar_lea.vmem %s8, %s441
      %p443 = pneg %p249
      %p444 = pneg %p246
      %p445 = pneg %p275
      %p446 = pneg %p272
      %s447 = smul.u32 8, %s20
      %p448 = scmp.lt.s32.totalorder %s447, 15
      %s449 = scalar_select %p448, %s447, 15
      %s450 = smul.addr %s449, 4
      %s451 = scalar_lea.vmem %s9, %s450
      %s452 = smul.u32 8, %s20
      %p453 = scmp.lt.s32.totalorder %s452, 15
      %s454 = scalar_select %p453, %s452, 15
      %s455 = smul.addr %s454, 4
      %s456 = scalar_lea.vmem %s0, %s455
      %s457 = smul.u32 8, %s20
      %s458 = smul.u32 8, %s20
      %p459 = scmp.lt.s32.totalorder %s458, 15
      %s460 = scalar_select %p459, %s458, 15
      %s461 = smul.addr %s460, 4
      %s462 = scalar_lea.vmem %s1, %s461
      %s463 = smul.u32 8, %s20
      %s464 = smul.u32 8, %s20
      %p465 = scmp.lt.s32.totalorder %s464, 15
      %s466 = scalar_select %p465, %s464, 15
      %s467 = smul.addr %s466, 4
      %s468 = scalar_lea.vmem %s2, %s467
      %s469 = smul.u32 8, %s20
      %s470 = smul.u32 8, %s20
      %p471 = scmp.lt.s32.totalorder %s470, 15
      %s472 = scalar_select %p471, %s470, 15
      %s473 = smul.addr %s472, 4
      %s474 = scalar_lea.vmem %s3, %s473
      %s475 = smul.u32 8, %s20
      %s476 = smul.u32 8, %s20
      %p477 = scmp.lt.s32.totalorder %s476, 15
      %s478 = scalar_select %p477, %s476, 15
      %s479 = smul.addr %s478, 4
      %s480 = scalar_lea.vmem %s4, %s479
      %s481 = smul.u32 8, %s20
      %s482 = smul.u32 8, %s20
      %p483 = scmp.lt.s32.totalorder %s482, 15
      %s484 = scalar_select %p483, %s482, 15
      %s485 = smul.addr %s484, 4
      %s486 = scalar_lea.vmem %s5, %s485
      %s487 = smul.u32 8, %s20
      %s488 = smul.u32 8, %s20
      %p489 = scmp.lt.s32.totalorder %s488, 15
      %s490 = scalar_select %p489, %s488, 15
      %s491 = smul.addr %s490, 4
      %s492 = scalar_lea.vmem %s6, %s491
      %s493 = smul.u32 8, %s20
      %s494 = smul.u32 8, %s20
      %p495 = scmp.lt.s32.totalorder %s494, 15
      %s496 = scalar_select %p495, %s494, 15
      %s497 = smul.addr %s496, 4
      %s498 = scalar_lea.vmem %s7, %s497
      %s499 = smul.u32 8, %s20
      %s500 = smul.u32 8, %s20
      %p501 = scmp.lt.s32.totalorder %s500, 15
      %s502 = scalar_select %p501, %s500, 15
      %s503 = smul.addr %s502, 4
      %s504 = scalar_lea.vmem %s8, %s503
      %s505 = smul.u32 8, %s20
      %s506 = smul.u32 8, %s20
      %p507 = scmp.lt.s32.totalorder %s506, 15
      %s508 = scalar_select %p507, %s506, 15
      %s509 = smul.addr %s508, 4
      %s510 = scalar_lea.vmem %s9, %s509
      %s511 = smul.u32 8, %s20
      %v512 = vld [vmem:[%s456] sm:$0xf]
      %v513 = vld [vmem:[%s456 + $0x4] sm:$0xf]
      %v514 = vld [vmem:[%s456 + $0x8] sm:$0xf]
      %v515 = vld [vmem:[%s456 + $0xc] sm:$0xf]
      %v516 = vld [vmem:[%s456 + $0x10] sm:$0xf]
      %v517 = vld [vmem:[%s456 + $0x14] sm:$0xf]
      %v518 = vld [vmem:[%s456 + $0x18] sm:$0xf]
      %v519 = vld [vmem:[%s456 + $0x1c] sm:$0xf]
      %v520 = vunpack.c.l.bf16 %v512
      %v521 = vunpack.c.l.bf16 %v513
      %v522 = vunpack.c.l.bf16 %v514
      %v523 = vunpack.c.l.bf16 %v515
      %v524 = vunpack.c.l.bf16 %v516
      %v525 = vunpack.c.l.bf16 %v517
      %v526 = vunpack.c.l.bf16 %v518
      %v527 = vunpack.c.l.bf16 %v519
      %v528 = vld [vmem:[%s462] sm:$0xf]
      %v529 = vld [vmem:[%s462 + $0x4] sm:$0xf]
      %v530 = vld [vmem:[%s462 + $0x8] sm:$0xf]
      %v531 = vld [vmem:[%s462 + $0xc] sm:$0xf]
      %v532 = vld [vmem:[%s462 + $0x10] sm:$0xf]
      %v533 = vld [vmem:[%s462 + $0x14] sm:$0xf]
      %v534 = vld [vmem:[%s462 + $0x18] sm:$0xf]
      %v535 = vld [vmem:[%s462 + $0x1c] sm:$0xf]
      %v536 = vunpack.c.l.bf16 %v528
      %v537 = vunpack.c.l.bf16 %v529
      %v538 = vunpack.c.l.bf16 %v530
      %v539 = vunpack.c.l.bf16 %v531
      %v540 = vunpack.c.l.bf16 %v532
      %v541 = vunpack.c.l.bf16 %v533
      %v542 = vunpack.c.l.bf16 %v534
      %v543 = vunpack.c.l.bf16 %v535
      %v544 = vmax.f32 %v520, %v536
      %v545 = vmax.f32 %v521, %v537
      %v546 = vmax.f32 %v522, %v538
      %v547 = vmax.f32 %v523, %v539
      %v548 = vmax.f32 %v524, %v540
      %v549 = vmax.f32 %v525, %v541
      %v550 = vmax.f32 %v526, %v542
      %v551 = vmax.f32 %v527, %v543
      %v552 = vld [vmem:[%s468] sm:$0xf]
      %v553 = vld [vmem:[%s468 + $0x4] sm:$0xf]
      %v554 = vld [vmem:[%s468 + $0x8] sm:$0xf]
      %v555 = vld [vmem:[%s468 + $0xc] sm:$0xf]
      %v556 = vld [vmem:[%s468 + $0x10] sm:$0xf]
      %v557 = vld [vmem:[%s468 + $0x14] sm:$0xf]
      %v558 = vld [vmem:[%s468 + $0x18] sm:$0xf]
      %v559 = vld [vmem:[%s468 + $0x1c] sm:$0xf]
      %v560 = vunpack.c.l.bf16 %v552
      %v561 = vunpack.c.l.bf16 %v553
      %v562 = vunpack.c.l.bf16 %v554
      %v563 = vunpack.c.l.bf16 %v555
      %v564 = vunpack.c.l.bf16 %v556
      %v565 = vunpack.c.l.bf16 %v557
      %v566 = vunpack.c.l.bf16 %v558
      %v567 = vunpack.c.l.bf16 %v559
      %v568 = vmax.f32 %v544, %v560
      %v569 = vmax.f32 %v545, %v561
      %v570 = vmax.f32 %v546, %v562
      %v571 = vmax.f32 %v547, %v563
      %v572 = vmax.f32 %v548, %v564
      %v573 = vmax.f32 %v549, %v565
      %v574 = vmax.f32 %v550, %v566
      %v575 = vmax.f32 %v551, %v567
      %v576 = vld [vmem:[%s474] sm:$0xf]
      %v577 = vld [vmem:[%s474 + $0x4] sm:$0xf]
      %v578 = vld [vmem:[%s474 + $0x8] sm:$0xf]
      %v579 = vld [vmem:[%s474 + $0xc] sm:$0xf]
      %v580 = vld [vmem:[%s474 + $0x10] sm:$0xf]
      %v581 = vld [vmem:[%s474 + $0x14] sm:$0xf]
      %v582 = vld [vmem:[%s474 + $0x18] sm:$0xf]
      %v583 = vld [vmem:[%s474 + $0x1c] sm:$0xf]
      %v584 = vunpack.c.l.bf16 %v576
      %v585 = vunpack.c.l.bf16 %v577
      %v586 = vunpack.c.l.bf16 %v578
      %v587 = vunpack.c.l.bf16 %v579
      %v588 = vunpack.c.l.bf16 %v580
      %v589 = vunpack.c.l.bf16 %v581
      %v590 = vunpack.c.l.bf16 %v582
      %v591 = vunpack.c.l.bf16 %v583
      %v592 = vmax.f32 %v568, %v584
      %v593 = vmax.f32 %v569, %v585
      %v594 = vmax.f32 %v570, %v586
      %v595 = vmax.f32 %v571, %v587
      %v596 = vmax.f32 %v572, %v588
      %v597 = vmax.f32 %v573, %v589
      %v598 = vmax.f32 %v574, %v590
      %v599 = vmax.f32 %v575, %v591
      %v600 = vld [vmem:[%s480] sm:$0xf]
      %v601 = vld [vmem:[%s480 + $0x4] sm:$0xf]
      %v602 = vld [vmem:[%s480 + $0x8] sm:$0xf]
      %v603 = vld [vmem:[%s480 + $0xc] sm:$0xf]
      %v604 = vld [vmem:[%s480 + $0x10] sm:$0xf]
      %v605 = vld [vmem:[%s480 + $0x14] sm:$0xf]
      %v606 = vld [vmem:[%s480 + $0x18] sm:$0xf]
      %v607 = vld [vmem:[%s480 + $0x1c] sm:$0xf]
      %v608 = vunpack.c.l.bf16 %v600
      %v609 = vunpack.c.l.bf16 %v601
      %v610 = vunpack.c.l.bf16 %v602
      %v611 = vunpack.c.l.bf16 %v603
      %v612 = vunpack.c.l.bf16 %v604
      %v613 = vunpack.c.l.bf16 %v605
      %v614 = vunpack.c.l.bf16 %v606
      %v615 = vunpack.c.l.bf16 %v607
      %v616 = vmax.f32 %v592, %v608
      %v617 = vmax.f32 %v593, %v609
      %v618 = vmax.f32 %v594, %v610
      %v619 = vmax.f32 %v595, %v611
      %v620 = vmax.f32 %v596, %v612
      %v621 = vmax.f32 %v597, %v613
      %v622 = vmax.f32 %v598, %v614
      %v623 = vmax.f32 %v599, %v615
      %v624 = vld [vmem:[%s486] sm:$0xf]
      %v625 = vld [vmem:[%s486 + $0x4] sm:$0xf]
      %v626 = vld [vmem:[%s486 + $0x8] sm:$0xf]
      %v627 = vld [vmem:[%s486 + $0xc] sm:$0xf]
      %v628 = vld [vmem:[%s486 + $0x10] sm:$0xf]
      %v629 = vld [vmem:[%s486 + $0x14] sm:$0xf]
      %v630 = vld [vmem:[%s486 + $0x18] sm:$0xf]
      %v631 = vld [vmem:[%s486 + $0x1c] sm:$0xf]
      %v632 = vunpack.c.l.bf16 %v624
      %v633 = vunpack.c.l.bf16 %v625
      %v634 = vunpack.c.l.bf16 %v626
      %v635 = vunpack.c.l.bf16 %v627
      %v636 = vunpack.c.l.bf16 %v628
      %v637 = vunpack.c.l.bf16 %v629
      %v638 = vunpack.c.l.bf16 %v630
      %v639 = vunpack.c.l.bf16 %v631
      %v640 = vmax.f32 %v616, %v632
      %v641 = vmax.f32 %v617, %v633
      %v642 = vmax.f32 %v618, %v634
      %v643 = vmax.f32 %v619, %v635
      %v644 = vmax.f32 %v620, %v636
      %v645 = vmax.f32 %v621, %v637
      %v646 = vmax.f32 %v622, %v638
      %v647 = vmax.f32 %v623, %v639
      %v648 = vld [vmem:[%s492] sm:$0xf]
      %v649 = vld [vmem:[%s492 + $0x4] sm:$0xf]
      %v650 = vld [vmem:[%s492 + $0x8] sm:$0xf]
      %v651 = vld [vmem:[%s492 + $0xc] sm:$0xf]
      %v652 = vld [vmem:[%s492 + $0x10] sm:$0xf]
      %v653 = vld [vmem:[%s492 + $0x14] sm:$0xf]
      %v654 = vld [vmem:[%s492 + $0x18] sm:$0xf]
      %v655 = vld [vmem:[%s492 + $0x1c] sm:$0xf]
      %v656 = vunpack.c.l.bf16 %v648
      %v657 = vunpack.c.l.bf16 %v649
      %v658 = vunpack.c.l.bf16 %v650
      %v659 = vunpack.c.l.bf16 %v651
      %v660 = vunpack.c.l.bf16 %v652
      %v661 = vunpack.c.l.bf16 %v653
      %v662 = vunpack.c.l.bf16 %v654
      %v663 = vunpack.c.l.bf16 %v655
      %v664 = vmax.f32 %v640, %v656
      %v665 = vmax.f32 %v641, %v657
      %v666 = vmax.f32 %v642, %v658
      %v667 = vmax.f32 %v643, %v659
      %v668 = vmax.f32 %v644, %v660
      %v669 = vmax.f32 %v645, %v661
      %v670 = vmax.f32 %v646, %v662
      %v671 = vmax.f32 %v647, %v663
      %v672 = vld [vmem:[%s498] sm:$0xf]
      %v673 = vld [vmem:[%s498 + $0x4] sm:$0xf]
      %v674 = vld [vmem:[%s498 + $0x8] sm:$0xf]
      %v675 = vld [vmem:[%s498 + $0xc] sm:$0xf]
      %v676 = vld [vmem:[%s498 + $0x10] sm:$0xf]
      %v677 = vld [vmem:[%s498 + $0x14] sm:$0xf]
      %v678 = vld [vmem:[%s498 + $0x18] sm:$0xf]
      %v679 = vld [vmem:[%s498 + $0x1c] sm:$0xf]
      %v680 = vunpack.c.l.bf16 %v672
      %v681 = vunpack.c.l.bf16 %v673
      %v682 = vunpack.c.l.bf16 %v674
      %v683 = vunpack.c.l.bf16 %v675
      %v684 = vunpack.c.l.bf16 %v676
      %v685 = vunpack.c.l.bf16 %v677
      %v686 = vunpack.c.l.bf16 %v678
      %v687 = vunpack.c.l.bf16 %v679
      %v688 = vmax.f32 %v664, %v680
      %v689 = vmax.f32 %v665, %v681
      %v690 = vmax.f32 %v666, %v682
      %v691 = vmax.f32 %v667, %v683
      %v692 = vmax.f32 %v668, %v684
      %v693 = vmax.f32 %v669, %v685
      %v694 = vmax.f32 %v670, %v686
      %v695 = vmax.f32 %v671, %v687
      %v696 = vld [vmem:[%s504] sm:$0xf]
      %v697 = vld [vmem:[%s504 + $0x4] sm:$0xf]
      %v698 = vld [vmem:[%s504 + $0x8] sm:$0xf]
      %v699 = vld [vmem:[%s504 + $0xc] sm:$0xf]
      %v700 = vld [vmem:[%s504 + $0x10] sm:$0xf]
      %v701 = vld [vmem:[%s504 + $0x14] sm:$0xf]
      %v702 = vld [vmem:[%s504 + $0x18] sm:$0xf]
      %v703 = vld [vmem:[%s504 + $0x1c] sm:$0xf]
      %v704 = vunpack.c.l.bf16 %v696
      %v705 = vunpack.c.l.bf16 %v697
      %v706 = vunpack.c.l.bf16 %v698
      %v707 = vunpack.c.l.bf16 %v699
      %v708 = vunpack.c.l.bf16 %v700
      %v709 = vunpack.c.l.bf16 %v701
      %v710 = vunpack.c.l.bf16 %v702
      %v711 = vunpack.c.l.bf16 %v703
      %v712 = vmax.f32 %v688, %v704
      %v713 = vmax.f32 %v689, %v705
      %v714 = vmax.f32 %v690, %v706
      %v715 = vmax.f32 %v691, %v707
      %v716 = vmax.f32 %v692, %v708
      %v717 = vmax.f32 %v693, %v709
      %v718 = vmax.f32 %v694, %v710
      %v719 = vmax.f32 %v695, %v711
      %v720 = vpack.c.bf16 %v712, %v712
      %v721 = vpack.c.bf16 %v713, %v713
      %v722 = vpack.c.bf16 %v714, %v714
      %v723 = vpack.c.bf16 %v715, %v715
      %v724 = vpack.c.bf16 %v716, %v716
      %v725 = vpack.c.bf16 %v717, %v717
      %v726 = vpack.c.bf16 %v718, %v718
      %v727 = vpack.c.bf16 %v719, %v719
      %728 = vst [vmem:[%s510] sm:$0xf] %v720
      %729 = vst [vmem:[%s510 + $0x4] sm:$0xf] %v721
      %730 = vst [vmem:[%s510 + $0x8] sm:$0xf] %v722
      %731 = vst [vmem:[%s510 + $0xc] sm:$0xf] %v723
      %732 = vst [vmem:[%s510 + $0x10] sm:$0xf] %v724
      %733 = vst [vmem:[%s510 + $0x14] sm:$0xf] %v725
      %734 = vst [vmem:[%s510 + $0x18] sm:$0xf] %v726
      %735 = vst [vmem:[%s510 + $0x1c] sm:$0xf] %v727
      %s736 = smul.u32 8, %s20
      %p737 = scmp.lt.s32.totalorder %s736, 15
      %s738 = scalar_select %p737, %s736, 15
      %s739 = smul.addr %s738, 4
      %s740 = scalar_lea.vmem %s9, %s739
      // Predicated region
      $region57: #{peft_rn_forward.12} parent=55 // pred_check
        %p741 = pneg %p272
      $region58: #{peft_rn_forward.12} parent=55 // pred_check_branch
        %743 = sbr.rel (%p741) target = $region60
      $region59: #{peft_rn_forward.12} parent=55 // pred_region
        %s744 = smul.u32 8, %s20
      $region60: #{peft_rn_forward.12} parent=55 // pred_fallthru
        _
    $region56: #{peft_rn_forward.12} parent=5 // pred_fallthru
      _
    %p745 = scmp.le.s32.totalorder 2, %s15
    // Predicated region
    $region61: #{peft_rn_forward.12} parent=5 // pred_check
      %p746 = pneg %p745
    $region62: #{peft_rn_forward.12} parent=5 // pred_check_branch
      %748 = sbr.rel (%p746) target = $region64
    $region63: #{peft_rn_forward.12} parent=5 // pred_region
      %s749 = ssub.s32 %s15, 2
      // Predicated region
      $region65: #{peft_rn_forward.12} parent=63 // pred_check
        %p750 = pneg %p278
      $region66: #{peft_rn_forward.12} parent=63 // pred_check_branch
        %752 = sbr.rel (%p750) target = $region68
      $region67: #{peft_rn_forward.12} parent=63 // pred_region
        %s753 = smul.u32 8, %s21
        %p754 = scmp.lt.s32.totalorder %s753, 15
        %s755 = scalar_select %p754, %s753, 15
        %s756 = smul.addr %s755, 4
        %s757 = scalar_lea.vmem %s9, %s756
      $region68: #{peft_rn_forward.12} parent=63 // pred_fallthru
        _
    $region64: #{peft_rn_forward.12} parent=5 // pred_fallthru
      _
  $region6: #{peft_rn_forward.12} parent=0 // loop_footer
    %s19 = sadd.s32 1, %s15
  $region7: #{peft_rn_forward.12} parent=0 // loop_footer_branch
    %14 = sbr.rel target = $region3
  $region8: #{peft_rn_forward.12} parent=0 // loop_exit
    _

// kernel: peft_rn_forward.13
$region0: #{peft_rn_forward.13}
  #allocation0 [shape = 'u32[]', space=smem, size = 0x4, offset = 0x4, fixed_abs, tag = 'smem constant byte address 0x4 - core index']
  #allocation1 [shape = 'u32[72,128]{1,0:T(1,128)}', space=vmem, size = 0x9000, scoped, tag = 'internal scratch']
  #allocation2 [shape = 'f32[64,128]{1,0:T(8,128)}', space=vmem, size = 0x8000, scoped, tag = 'scratch operand']
  %s0 = inlined_call_operand.vmem [shape: bf16[128,128], index: 0, kind: input, shape index: {}]
  %s1 = inlined_call_operand.vmem [shape: bf16[128,128], index: 1, kind: input, shape index: {}]
  %s2 = inlined_call_operand.vmem [shape: f32[1,128], index: 2, kind: input, shape index: {}]
  %s3 = inlined_call_operand.vmem [shape: f32[1,128], index: 3, kind: input, shape index: {}]
  %s4 = inlined_call_operand.vmem [shape: bf16[128,128], index: 4, kind: output, shape index: {}]
  %s5 = sld [smem:[#allocation0]]
  $region57: #{peft_rn_forward.13} parent=0
    _
  %s7 = ssub.s32 1, %s5
  %s8 = scalar_select 0, %s7, %s5
  loop: start=0, step=1, limit=4
  $region2: #{peft_rn_forward.13} parent=0 // loop_pre_header
    _
  $region3: #{peft_rn_forward.13} parent=0 // loop_header
    %s10 = sphi 0, %s14
    %p11 = scmp.ge.s32.totalorder %s10, 4
    %s17 = sphi 0, %s29
    %s18 = sphi 0, %s25
    %s19 = sphi 0, %s17
    %s20 = sphi 0, %s18
    %s21 = sphi 0, %s19
    %s22 = sphi 0, %s20
    %s34 = sphi 0, %s36
    %s37 = sphi 0, %s34
    %s38 = sphi 0, %s37
    %s54 = sphi 0, %s38
    %s60 = sphi 0, %s62
    %s63 = sphi 0, %s60
    %s64 = sphi 0, %s63
    %s80 = sphi 0, %s64
    %s84 = sphi 0, %s84
    %s86 = sphi 0, %s84
    %s87 = sphi 0, %s86
    %s101 = sphi 0, %s87
    %s105 = sphi 0, %s105
    %s107 = sphi 0, %s105
    %s108 = sphi 0, %s107
    %s122 = sphi 0, %s108
    %s128 = sphi 0, %s130
    %s131 = sphi 0, %s128
    %s132 = sphi 0, %s131
    %s148 = sphi 0, %s132
  $region4: #{peft_rn_forward.13} parent=0 // loop_header_branch
    %13 = sbr.rel (%p11) target = $region8
  $region5: #{peft_rn_forward.13} parent=0 // loop_body
    %s15 = ssub.s32 %s10, 1
    %s16 = ssub.s32 %s10, 2
    %s23 = sadd.s32 1, %s18
    %p24 = scmp.ge.s32.totalorder %s23, 1
    %s25 = scalar_select %p24, 0, %s23
    %s26 = sadd.s32 1, %s17
    %s27 = scalar_select %p24, %s26, %s17
    %p28 = scmp.ge.s32.totalorder %s27, 2
    %s29 = scalar_select %p28, 0, %s27
    %s30 = ssub.s32 %s17, %s29
    %s31 = ssub.s32 %s18, %s25
    %s32 = sor.u32 %s30, %s31
    %p33 = scmp.eq.s32.totalorder %s32, 0
    %s35 = sadd.s32 %s34, 1
    %s36 = scalar_select %p33, %s34, %s35
    %p39 = pneg %p33
    %p40 = scmp.eq.s32.totalorder %s10, 1
    %p41 = por %p39, %p40
    %p42 = scmp.ne.s32.totalorder %s34, %s37
    %p43 = scmp.eq.s32.totalorder %s10, 0
    %p44 = por %p42, %p43
    %p45 = scmp.ne.s32.totalorder %s34, %s37
    %p46 = scmp.eq.s32.totalorder %s15, 1
    %p47 = por %p45, %p46
    %p48 = scmp.ne.s32.totalorder %s37, %s38
    %p49 = scmp.eq.s32.totalorder %s15, 0
    %p50 = por %p48, %p49
    %p51 = scmp.ne.s32.totalorder %s37, %s38
    %p52 = scmp.eq.s32.totalorder %s16, 1
    %p53 = por %p51, %p52
    %p55 = scmp.ne.s32.totalorder %s38, %s54
    %p56 = scmp.eq.s32.totalorder %s16, 0
    %p57 = por %p55, %p56
    %s58 = ssub.s32 %s18, %s25
    %p59 = scmp.eq.s32.totalorder %s58, 0
    %s61 = sadd.s32 %s60, 1
    %s62 = scalar_select %p59, %s60, %s61
    %p65 = pneg %p59
    %p66 = scmp.eq.s32.totalorder %s10, 1
    %p67 = por %p65, %p66
    %p68 = scmp.ne.s32.totalorder %s60, %s63
    %p69 = scmp.eq.s32.totalorder %s10, 0
    %p70 = por %p68, %p69
    %p71 = scmp.ne.s32.totalorder %s60, %s63
    %p72 = scmp.eq.s32.totalorder %s15, 1
    %p73 = por %p71, %p72
    %p74 = scmp.ne.s32.totalorder %s63, %s64
    %p75 = scmp.eq.s32.totalorder %s15, 0
    %p76 = por %p74, %p75
    %p77 = scmp.ne.s32.totalorder %s63, %s64
    %p78 = scmp.eq.s32.totalorder %s16, 1
    %p79 = por %p77, %p78
    %p81 = scmp.ne.s32.totalorder %s64, %s80
    %p82 = scmp.eq.s32.totalorder %s16, 0
    %p83 = por %p81, %p82
    %s85 = sadd.s32 %s84, 1
    %p88 = scmp.eq.s32.totalorder %s10, 1
    %p89 = scmp.ne.s32.totalorder %s84, %s86
    %p90 = scmp.eq.s32.totalorder %s10, 0
    %p91 = por %p89, %p90
    %p92 = scmp.ne.s32.totalorder %s84, %s86
    %p93 = scmp.eq.s32.totalorder %s15, 1
    %p94 = por %p92, %p93
    %p95 = scmp.ne.s32.totalorder %s86, %s87
    %p96 = scmp.eq.s32.totalorder %s15, 0
    %p97 = por %p95, %p96
    %p98 = scmp.ne.s32.totalorder %s86, %s87
    %p99 = scmp.eq.s32.totalorder %s16, 1
    %p100 = por %p98, %p99
    %p102 = scmp.ne.s32.totalorder %s87, %s101
    %p103 = scmp.eq.s32.totalorder %s16, 0
    %p104 = por %p102, %p103
    %s106 = sadd.s32 %s105, 1
    %p109 = scmp.eq.s32.totalorder %s10, 1
    %p110 = scmp.ne.s32.totalorder %s105, %s107
    %p111 = scmp.eq.s32.totalorder %s10, 0
    %p112 = por %p110, %p111
    %p113 = scmp.ne.s32.totalorder %s105, %s107
    %p114 = scmp.eq.s32.totalorder %s15, 1
    %p115 = por %p113, %p114
    %p116 = scmp.ne.s32.totalorder %s107, %s108
    %p117 = scmp.eq.s32.totalorder %s15, 0
    %p118 = por %p116, %p117
    %p119 = scmp.ne.s32.totalorder %s107, %s108
    %p120 = scmp.eq.s32.totalorder %s16, 1
    %p121 = por %p119, %p120
    %p123 = scmp.ne.s32.totalorder %s108, %s122
    %p124 = scmp.eq.s32.totalorder %s16, 0
    %p125 = por %p123, %p124
    %s126 = ssub.s32 %s17, %s29
    %p127 = scmp.eq.s32.totalorder %s126, 0
    %s129 = sadd.s32 %s128, 1
    %s130 = scalar_select %p127, %s128, %s129
    %p133 = pneg %p127
    %p134 = scmp.eq.s32.totalorder %s10, 1
    %p135 = por %p133, %p134
    %p136 = scmp.ne.s32.totalorder %s128, %s131
    %p137 = scmp.eq.s32.totalorder %s10, 0
    %p138 = por %p136, %p137
    %p139 = scmp.ne.s32.totalorder %s128, %s131
    %p140 = scmp.eq.s32.totalorder %s15, 1
    %p141 = por %p139, %p140
    %p142 = scmp.ne.s32.totalorder %s131, %s132
    %p143 = scmp.eq.s32.totalorder %s15, 0
    %p144 = por %p142, %p143
    %p145 = scmp.ne.s32.totalorder %s131, %s132
    %p146 = scmp.eq.s32.totalorder %s16, 1
    %p147 = por %p145, %p146
    %p149 = scmp.ne.s32.totalorder %s132, %s148
    %p150 = scmp.eq.s32.totalorder %s16, 0
    %p151 = por %p149, %p150
    %p152 = scmp.le.s32.totalorder 1, %s10
    %p153 = scmp.lt.s32.totalorder %s10, 3
    %p154 = pnand %p152, %p153
    %p155 = pneg %p154
    // Predicated region
    $region9: #{peft_rn_forward.13} parent=5 // pred_check
      _
    $region10: #{peft_rn_forward.13} parent=5 // pred_check_branch
      %157 = sbr.rel (%p154) target = $region12
    $region11: #{peft_rn_forward.13} parent=5 // pred_region
      %s158 = ssub.s32 %s10, 1
      // Predicated region
      $region13: #{peft_rn_forward.13} parent=11 // pred_check
        %p159 = pneg %p76
      $region14: #{peft_rn_forward.13} parent=11 // pred_check_branch
        %161 = sbr.rel (%p159) target = $region16
      $region15: #{peft_rn_forward.13} parent=11 // pred_region
        %s162 = smul.u32 16, %s20
        %p163 = scmp.lt.s32.totalorder %s162, 15
        %s164 = scalar_select %p163, %s162, 15
        %s165 = smul.addr %s164, 4
        %s166 = scalar_lea.vmem %s1, %s165
        %s167 = smul.u32 16, %s20
      $region16: #{peft_rn_forward.13} parent=11 // pred_fallthru
        _
      // Predicated region
      $region17: #{peft_rn_forward.13} parent=11 // pred_check
        %p168 = pneg %p97
      $region18: #{peft_rn_forward.13} parent=11 // pred_check_branch
        %170 = sbr.rel (%p168) target = $region20
      $region19: #{peft_rn_forward.13} parent=11 // pred_region
        _
      $region20: #{peft_rn_forward.13} parent=11 // pred_fallthru
        _
      // Predicated region
      $region21: #{peft_rn_forward.13} parent=11 // pred_check
        %p171 = pneg %p118
      $region22: #{peft_rn_forward.13} parent=11 // pred_check_branch
        %173 = sbr.rel (%p171) target = $region24
      $region23: #{peft_rn_forward.13} parent=11 // pred_region
        _
      $region24: #{peft_rn_forward.13} parent=11 // pred_fallthru
        _
    $region12: #{peft_rn_forward.13} parent=5 // pred_fallthru
      _
    %p174 = scmp.lt.s32.totalorder %s10, 2
    // Predicated region
    $region25: #{peft_rn_forward.13} parent=5 // pred_check
      %p175 = pneg %p174
    $region26: #{peft_rn_forward.13} parent=5 // pred_check_branch
      %177 = sbr.rel (%p175) target = $region28
    $region27: #{peft_rn_forward.13} parent=5 // pred_region
      // Predicated region
      $region29: #{peft_rn_forward.13} parent=27 // pred_check
        %p178 = pneg %p44
      $region30: #{peft_rn_forward.13} parent=27 // pred_check_branch
        %180 = sbr.rel (%p178) target = $region32
      $region31: #{peft_rn_forward.13} parent=27 // pred_region
        %s181 = smul.u32 8, %s17
        %p182 = scmp.lt.s32.totalorder %s181, 15
        %s183 = scalar_select %p182, %s181, 15
        %p184 = scmp.lt.s32.totalorder %s18, 0
        %s185 = scalar_select %p184, %s18, 0
        %s186 = sadd.s32 %s185, %s183
        %s187 = smul.addr %s186, 4
        %s188 = scalar_lea.vmem %s0, %s187
        %s189 = smul.u32 8, %s17
      $region32: #{peft_rn_forward.13} parent=27 // pred_fallthru
        _
    $region28: #{peft_rn_forward.13} parent=5 // pred_fallthru
      _
    %p190 = scmp.le.s32.totalorder 1, %s10
    %p191 = scmp.lt.s32.totalorder %s10, 3
    %p192 = pnand %p190, %p191
    %p193 = pneg %p192
    // Predicated region
    $region33: #{peft_rn_forward.13} parent=5 // pred_check
      _
    $region34: #{peft_rn_forward.13} parent=5 // pred_check_branch
      %195 = sbr.rel (%p192) target = $region36
    $region35: #{peft_rn_forward.13} parent=5 // pred_region
      %s196 = ssub.s32 %s10, 1
      %s197 = smul.u32 8, %s19
      %p198 = scmp.lt.s32.totalorder %s197, 15
      %s199 = scalar_select %p198, %s197, 15
      %p200 = scmp.lt.s32.totalorder %s20, 0
      %s201 = scalar_select %p200, %s20, 0
      %s202 = sadd.s32 %s201, %s199
      %s203 = smul.addr %s202, 4
      %s204 = scalar_lea.vmem %s0, %s203
      %p205 = pneg %p50
      %p206 = pneg %p47
      %s207 = smul.u32 16, %s20
      %p208 = scmp.lt.s32.totalorder %s207, 15
      %s209 = scalar_select %p208, %s207, 15
      %s210 = smul.addr %s209, 4
      %s211 = scalar_lea.vmem %s1, %s210
      %p212 = pneg %p76
      %p213 = pneg %p73
      %p214 = pneg %p97
      %p215 = pneg %p94
      %p216 = pneg %p118
      %p217 = pneg %p115
      %p218 = pneg %p144
      %p219 = pneg %p141
      %s220 = smul.u32 8, %s19
      %p221 = scmp.lt.s32.totalorder %s220, 15
      %s222 = scalar_select %p221, %s220, 15
      %s223 = smul.addr %s222, 4
      %s224 = scalar_lea.vmem %s4, %s223
      %s225 = smul.u32 8, %s19
      %p226 = scmp.lt.s32.totalorder %s225, 15
      %s227 = scalar_select %p226, %s225, 15
      %p228 = scmp.lt.s32.totalorder %s20, 0
      %s229 = scalar_select %p228, %s20, 0
      %s230 = sadd.s32 %s229, %s227
      %s231 = smul.addr %s230, 4
      %s232 = scalar_lea.vmem %s0, %s231
      %s233 = smul.u32 8, %s19
      %s234 = smul.u32 16, %s20
      %p235 = scmp.lt.s32.totalorder %s234, 15
      %s236 = scalar_select %p235, %s234, 15
      %s237 = smul.addr %s236, 4
      %s238 = scalar_lea.vmem %s1, %s237
      %s239 = smul.u32 16, %s20
      %s240 = smul.u32 8, %s19
      %p241 = scmp.lt.s32.totalorder %s240, 15
      %s242 = scalar_select %p241, %s240, 15
      %s243 = smul.addr %s242, 4
      %s244 = scalar_lea.vmem %s4, %s243
      %s245 = smul.u32 8, %s19
      %p246 = scmp.eq.s32.totalorder %s20, 0
      // Predicated region
      $region37: #{peft_rn_forward.13} parent=35 // pred_check
        %p247 = pneg %p246
      $region38: #{peft_rn_forward.13} parent=35 // pred_check_branch
        %249 = sbr.rel (%p247) target = $region40
      $region39: #{peft_rn_forward.13} parent=35 // pred_region
        %250 = vst [vmem:[#allocation2] sm:$0xff] 0.0
        %251 = vst [vmem:[#allocation2 + $0x8] sm:$0xff] 0.0
        %252 = vst [vmem:[#allocation2 + $0x10] sm:$0xff] 0.0
        %253 = vst [vmem:[#allocation2 + $0x18] sm:$0xff] 0.0
        %254 = vst [vmem:[#allocation2 + $0x20] sm:$0xff] 0.0
        %255 = vst [vmem:[#allocation2 + $0x28] sm:$0xff] 0.0
        %256 = vst [vmem:[#allocation2 + $0x30] sm:$0xff] 0.0
        %257 = vst [vmem:[#allocation2 + $0x38] sm:$0xff] 0.0
      $region40: #{peft_rn_forward.13} parent=35 // pred_fallthru
        _
      %v258 = vld [vmem:[#allocation2] sm:$0xff]
      %v259 = vld [vmem:[#allocation2 + $0x8] sm:$0xff]
      %v260 = vld [vmem:[#allocation2 + $0x10] sm:$0xff]
      %v261 = vld [vmem:[#allocation2 + $0x18] sm:$0xff]
      %v262 = vld [vmem:[#allocation2 + $0x20] sm:$0xff]
      %v263 = vld [vmem:[#allocation2 + $0x28] sm:$0xff]
      %v264 = vld [vmem:[#allocation2 + $0x30] sm:$0xff]
      %v265 = vld [vmem:[#allocation2 + $0x38] sm:$0xff]
      %v266 = vld [vmem:[%s232] sm:$0xf]
      %v267 = vld [vmem:[%s232 + $0x4] sm:$0xf]
      %v268 = vld [vmem:[%s232 + $0x8] sm:$0xf]
      %v269 = vld [vmem:[%s232 + $0xc] sm:$0xf]
      %v270 = vld [vmem:[%s232 + $0x10] sm:$0xf]
      %v271 = vld [vmem:[%s232 + $0x14] sm:$0xf]
      %v272 = vld [vmem:[%s232 + $0x18] sm:$0xf]
      %v273 = vld [vmem:[%s232 + $0x1c] sm:$0xf]
      %v274 = vld [vmem:[%s238] sm:$0xf]
      %v275 = vld [vmem:[%s238 + $0x4] sm:$0xf]
      %v276 = vld [vmem:[%s238 + $0x8] sm:$0xf]
      %v277 = vld [vmem:[%s238 + $0xc] sm:$0xf]
      %v278 = vld [vmem:[%s238 + $0x10] sm:$0xf]
      %v279 = vld [vmem:[%s238 + $0x14] sm:$0xf]
      %v280 = vld [vmem:[%s238 + $0x18] sm:$0xf]
      %v281 = vld [vmem:[%s238 + $0x1c] sm:$0xf]
      %v282 = vld [vmem:[%s238 + $0x20] sm:$0xf]
      %v283 = vld [vmem:[%s238 + $0x24] sm:$0xf]
      %v284 = vld [vmem:[%s238 + $0x28] sm:$0xf]
      %v285 = vld [vmem:[%s238 + $0x2c] sm:$0xf]
      %v286 = vld [vmem:[%s238 + $0x30] sm:$0xf]
      %v287 = vld [vmem:[%s238 + $0x34] sm:$0xf]
      %v288 = vld [vmem:[%s238 + $0x38] sm:$0xf]
      %v289 = vld [vmem:[%s238 + $0x3c] sm:$0xf]
      %v298 = vunpack.c.l.b16 %v266
      %v299 = vunpack.c.l.b16 %v267
      %v300 = vunpack.c.l.b16 %v268
      %v301 = vunpack.c.l.b16 %v269
      %v302 = vunpack.c.l.b16 %v270
      %v303 = vunpack.c.l.b16 %v271
      %v304 = vunpack.c.l.b16 %v272
      %v305 = vunpack.c.l.b16 %v273
      %v306 = vpack.c.b16 %v299, %v298
      %v307 = vpack.c.b16 %v301, %v300
      %v308 = vpack.c.b16 %v303, %v302
      %v309 = vpack.c.b16 %v305, %v304
      %v330 = vunpack.c.l.b16 %v274
      %v331 = vunpack.c.l.b16 %v275
      %v332 = vunpack.c.l.b16 %v276
      %v333 = vunpack.c.l.b16 %v277
      %v334 = vunpack.c.l.b16 %v278
      %v335 = vunpack.c.l.b16 %v279
      %v336 = vunpack.c.l.b16 %v280
      %v337 = vunpack.c.l.b16 %v281
      %v338 = vunpack.c.l.b16 %v282
      %v339 = vunpack.c.l.b16 %v283
      %v340 = vunpack.c.l.b16 %v284
      %v341 = vunpack.c.l.b16 %v285
      %v342 = vunpack.c.l.b16 %v286
      %v343 = vunpack.c.l.b16 %v287
      %v344 = vunpack.c.l.b16 %v288
      %v345 = vunpack.c.l.b16 %v289
      %v346 = vpack.c.b16 %v331, %v330
      %v347 = vpack.c.b16 %v333, %v332
      %v348 = vpack.c.b16 %v335, %v334
      %v349 = vpack.c.b16 %v337, %v336
      %v350 = vpack.c.b16 %v339, %v338
      %v351 = vpack.c.b16 %v341, %v340
      %v352 = vpack.c.b16 %v343, %v342
      %v353 = vpack.c.b16 %v345, %v344
      %362 = vmatpush.bf16.msra.mxu0 %v353
      %363 = vmatpush.bf16.msra.mxu0 %v352
      %364 = vmatpush.bf16.msra.mxu0 %v351
      %365 = vmatpush.bf16.msra.mxu0 %v350
      %366 = vmatpush.bf16.msra.mxu0 %v349
      %367 = vmatpush.bf16.msra.mxu0 %v348
      %368 = vmatpush.bf16.msra.mxu0 %v347
      %369 = vmatpush.bf16.msra.mxu0 %v346
      %370 = vmatmul.bf16.gmra.mxu0 %v306
      %v371 = vpop.f32.mrf.mxu0
      %v372 = vadd.f32 0.0, %v371
      %v373 = vpop.f32.mrf.mxu0
      %v374 = vadd.f32 0.0, %v373
      %375 = vmatmul.bf16.gmra.mxu0 %v307
      %v376 = vpop.f32.mrf.mxu0
      %v377 = vadd.f32 0.0, %v376
      %v378 = vpop.f32.mrf.mxu0
      %v379 = vadd.f32 0.0, %v378
      %380 = vmatmul.bf16.gmra.mxu0 %v308
      %v381 = vpop.f32.mrf.mxu0
      %v382 = vadd.f32 0.0, %v381
      %v383 = vpop.f32.mrf.mxu0
      %v384 = vadd.f32 0.0, %v383
      %385 = vmatmul.bf16.gmra.mxu0 %v309
      %v386 = vpop.f32.mrf.mxu0
      %v387 = vadd.f32 0.0, %v386
      %v388 = vpop.f32.mrf.mxu0
      %v389 = vadd.f32 0.0, %v388
      %390 = vdwg.mxu0
      %v391 = vadd.f32 %v258, %v372
      %v392 = vadd.f32 %v259, %v374
      %v393 = vadd.f32 %v260, %v377
      %v394 = vadd.f32 %v261, %v379
      %v395 = vadd.f32 %v262, %v382
      %v396 = vadd.f32 %v263, %v384
      %v397 = vadd.f32 %v264, %v387
      %v398 = vadd.f32 %v265, %v389
      %399 = vst [vmem:[#allocation2] sm:$0xff] %v391
      %400 = vst [vmem:[#allocation2 + $0x8] sm:$0xff] %v392
      %401 = vst [vmem:[#allocation2 + $0x10] sm:$0xff] %v393
      %402 = vst [vmem:[#allocation2 + $0x18] sm:$0xff] %v394
      %403 = vst [vmem:[#allocation2 + $0x20] sm:$0xff] %v395
      %404 = vst [vmem:[#allocation2 + $0x28] sm:$0xff] %v396
      %405 = vst [vmem:[#allocation2 + $0x30] sm:$0xff] %v397
      %406 = vst [vmem:[#allocation2 + $0x38] sm:$0xff] %v398
      // Predicated region
      $region41: #{peft_rn_forward.13} parent=35 // pred_check
        %p407 = pneg %p246
      $region42: #{peft_rn_forward.13} parent=35 // pred_check_branch
        %409 = sbr.rel (%p407) target = $region44
      $region43: #{peft_rn_forward.13} parent=35 // pred_region
        %v410 = vld [vmem:[#allocation2] sm:$0xff]
        %v411 = vld [vmem:[#allocation2 + $0x8] sm:$0xff]
        %v412 = vld [vmem:[#allocation2 + $0x10] sm:$0xff]
        %v413 = vld [vmem:[#allocation2 + $0x18] sm:$0xff]
        %v414 = vld [vmem:[#allocation2 + $0x20] sm:$0xff]
        %v415 = vld [vmem:[#allocation2 + $0x28] sm:$0xff]
        %v416 = vld [vmem:[#allocation2 + $0x30] sm:$0xff]
        %v417 = vld [vmem:[#allocation2 + $0x38] sm:$0xff]
        %v418 = vld [vmem:[%s2] sm:$0x1]
        %v420 = vperm.slane %v418, 0
        %v422 = vmul.f32 %v410, %v420
        %v423 = vmul.f32 %v411, %v420
        %v424 = vmul.f32 %v412, %v420
        %v425 = vmul.f32 %v413, %v420
        %v426 = vmul.f32 %v414, %v420
        %v427 = vmul.f32 %v415, %v420
        %v428 = vmul.f32 %v416, %v420
        %v429 = vmul.f32 %v417, %v420
        %v430 = vld [vmem:[%s3] sm:$0x1]
        %v432 = vperm.slane %v430, 0
        %v434 = vadd.f32 %v422, %v432
        %v435 = vadd.f32 %v423, %v432
        %v436 = vadd.f32 %v424, %v432
        %v437 = vadd.f32 %v425, %v432
        %v438 = vadd.f32 %v426, %v432
        %v439 = vadd.f32 %v427, %v432
        %v440 = vadd.f32 %v428, %v432
        %v441 = vadd.f32 %v429, %v432
        %v442 = vmax.f32 %v434, 0.0
        %v443 = vmax.f32 %v435, 0.0
        %v444 = vmax.f32 %v436, 0.0
        %v445 = vmax.f32 %v437, 0.0
        %v446 = vmax.f32 %v438, 0.0
        %v447 = vmax.f32 %v439, 0.0
        %v448 = vmax.f32 %v440, 0.0
        %v449 = vmax.f32 %v441, 0.0
        %v450 = vpack.c.bf16 %v442, %v442
        %v451 = vpack.c.bf16 %v443, %v443
        %v452 = vpack.c.bf16 %v444, %v444
        %v453 = vpack.c.bf16 %v445, %v445
        %v454 = vpack.c.bf16 %v446, %v446
        %v455 = vpack.c.bf16 %v447, %v447
        %v456 = vpack.c.bf16 %v448, %v448
        %v457 = vpack.c.bf16 %v449, %v449
        %458 = vst [vmem:[%s244] sm:$0xf] %v450
        %459 = vst [vmem:[%s244 + $0x4] sm:$0xf] %v451
        %460 = vst [vmem:[%s244 + $0x8] sm:$0xf] %v452
        %461 = vst [vmem:[%s244 + $0xc] sm:$0xf] %v453
        %462 = vst [vmem:[%s244 + $0x10] sm:$0xf] %v454
        %463 = vst [vmem:[%s244 + $0x14] sm:$0xf] %v455
        %464 = vst [vmem:[%s244 + $0x18] sm:$0xf] %v456
        %465 = vst [vmem:[%s244 + $0x1c] sm:$0xf] %v457
      $region44: #{peft_rn_forward.13} parent=35 // pred_fallthru
        _
      %s466 = smul.u32 8, %s19
      %p467 = scmp.lt.s32.totalorder %s466, 15
      %s468 = scalar_select %p467, %s466, 15
      %s469 = smul.addr %s468, 4
      %s470 = scalar_lea.vmem %s4, %s469
      // Predicated region
      $region45: #{peft_rn_forward.13} parent=35 // pred_check
        %p471 = pneg %p141
      $region46: #{peft_rn_forward.13} parent=35 // pred_check_branch
        %473 = sbr.rel (%p471) target = $region48
      $region47: #{peft_rn_forward.13} parent=35 // pred_region
        %s474 = smul.u32 8, %s19
      $region48: #{peft_rn_forward.13} parent=35 // pred_fallthru
        _
    $region36: #{peft_rn_forward.13} parent=5 // pred_fallthru
      _
    %p475 = scmp.le.s32.totalorder 2, %s10
    // Predicated region
    $region49: #{peft_rn_forward.13} parent=5 // pred_check
      %p476 = pneg %p475
    $region50: #{peft_rn_forward.13} parent=5 // pred_check_branch
      %478 = sbr.rel (%p476) target = $region52
    $region51: #{peft_rn_forward.13} parent=5 // pred_region
      %s479 = ssub.s32 %s10, 2
      // Predicated region
      $region53: #{peft_rn_forward.13} parent=51 // pred_check
        %p480 = pneg %p147
      $region54: #{peft_rn_forward.13} parent=51 // pred_check_branch
        %482 = sbr.rel (%p480) target = $region56
      $region55: #{peft_rn_forward.13} parent=51 // pred_region
        %s483 = smul.u32 8, %s21
        %p484 = scmp.lt.s32.totalorder %s483, 15
        %s485 = scalar_select %p484, %s483, 15
        %s486 = smul.addr %s485, 4
        %s487 = scalar_lea.vmem %s4, %s486
      $region56: #{peft_rn_forward.13} parent=51 // pred_fallthru
        _
    $region52: #{peft_rn_forward.13} parent=5 // pred_fallthru
      _
  $region6: #{peft_rn_forward.13} parent=0 // loop_footer
    %s14 = sadd.s32 1, %s10
  $region7: #{peft_rn_forward.13} parent=0 // loop_footer_branch
    %9 = sbr.rel target = $region3
  $region8: #{peft_rn_forward.13} parent=0 // loop_exit
    _

// kernel: peft_rn_forward.11
$region0: #{peft_rn_forward.11}
  #allocation0 [shape = 'u32[]', space=smem, size = 0x4, offset = 0x4, fixed_abs, tag = 'smem constant byte address 0x4 - core index']
  #allocation1 [shape = 'u32[72,128]{1,0:T(1,128)}', space=vmem, size = 0x9000, scoped, tag = 'internal scratch']
  #allocation2 [shape = 'f32[256,128]{1,0:T(8,128)}', space=vmem, size = 0x20000, scoped, tag = 'scratch operand']
  %s0 = inlined_call_operand.vmem [shape: bf16[512,256], index: 0, kind: input, shape index: {}]
  %s1 = inlined_call_operand.vmem [shape: bf16[256,128], index: 1, kind: input, shape index: {}]
  %s2 = inlined_call_operand.vmem [shape: f32[1,128], index: 2, kind: input, shape index: {}]
  %s3 = inlined_call_operand.vmem [shape: f32[1,128], index: 3, kind: input, shape index: {}]
  %s4 = inlined_call_operand.vmem [shape: bf16[512,128], index: 4, kind: output, shape index: {}]
  %s5 = sld [smem:[#allocation0]]
  $region57: #{peft_rn_forward.11} parent=0
    _
  %s7 = ssub.s32 1, %s5
  %s8 = scalar_select 0, %s7, %s5
  loop: start=0, step=1, limit=4
  $region2: #{peft_rn_forward.11} parent=0 // loop_pre_header
    _
  $region3: #{peft_rn_forward.11} parent=0 // loop_header
    %s10 = sphi 0, %s14
    %p11 = scmp.ge.s32.totalorder %s10, 4
    %s17 = sphi 0, %s29
    %s18 = sphi 0, %s25
    %s19 = sphi 0, %s17
    %s20 = sphi 0, %s18
    %s21 = sphi 0, %s19
    %s22 = sphi 0, %s20
    %s34 = sphi 0, %s36
    %s37 = sphi 0, %s34
    %s38 = sphi 0, %s37
    %s54 = sphi 0, %s38
    %s60 = sphi 0, %s62
    %s63 = sphi 0, %s60
    %s64 = sphi 0, %s63
    %s80 = sphi 0, %s64
    %s84 = sphi 0, %s84
    %s86 = sphi 0, %s84
    %s87 = sphi 0, %s86
    %s101 = sphi 0, %s87
    %s105 = sphi 0, %s105
    %s107 = sphi 0, %s105
    %s108 = sphi 0, %s107
    %s122 = sphi 0, %s108
    %s128 = sphi 0, %s130
    %s131 = sphi 0, %s128
    %s132 = sphi 0, %s131
    %s148 = sphi 0, %s132
  $region4: #{peft_rn_forward.11} parent=0 // loop_header_branch
    %13 = sbr.rel (%p11) target = $region8
  $region5: #{peft_rn_forward.11} parent=0 // loop_body
    %s15 = ssub.s32 %s10, 1
    %s16 = ssub.s32 %s10, 2
    %s23 = sadd.s32 1, %s18
    %p24 = scmp.ge.s32.totalorder %s23, 1
    %s25 = scalar_select %p24, 0, %s23
    %s26 = sadd.s32 1, %s17
    %s27 = scalar_select %p24, %s26, %s17
    %p28 = scmp.ge.s32.totalorder %s27, 2
    %s29 = scalar_select %p28, 0, %s27
    %s30 = ssub.s32 %s17, %s29
    %s31 = ssub.s32 %s18, %s25
    %s32 = sor.u32 %s30, %s31
    %p33 = scmp.eq.s32.totalorder %s32, 0
    %s35 = sadd.s32 %s34, 1
    %s36 = scalar_select %p33, %s34, %s35
    %p39 = pneg %p33
    %p40 = scmp.eq.s32.totalorder %s10, 1
    %p41 = por %p39, %p40
    %p42 = scmp.ne.s32.totalorder %s34, %s37
    %p43 = scmp.eq.s32.totalorder %s10, 0
    %p44 = por %p42, %p43
    %p45 = scmp.ne.s32.totalorder %s34, %s37
    %p46 = scmp.eq.s32.totalorder %s15, 1
    %p47 = por %p45, %p46
    %p48 = scmp.ne.s32.totalorder %s37, %s38
    %p49 = scmp.eq.s32.totalorder %s15, 0
    %p50 = por %p48, %p49
    %p51 = scmp.ne.s32.totalorder %s37, %s38
    %p52 = scmp.eq.s32.totalorder %s16, 1
    %p53 = por %p51, %p52
    %p55 = scmp.ne.s32.totalorder %s38, %s54
    %p56 = scmp.eq.s32.totalorder %s16, 0
    %p57 = por %p55, %p56
    %s58 = ssub.s32 %s18, %s25
    %p59 = scmp.eq.s32.totalorder %s58, 0
    %s61 = sadd.s32 %s60, 1
    %s62 = scalar_select %p59, %s60, %s61
    %p65 = pneg %p59
    %p66 = scmp.eq.s32.totalorder %s10, 1
    %p67 = por %p65, %p66
    %p68 = scmp.ne.s32.totalorder %s60, %s63
    %p69 = scmp.eq.s32.totalorder %s10, 0
    %p70 = por %p68, %p69
    %p71 = scmp.ne.s32.totalorder %s60, %s63
    %p72 = scmp.eq.s32.totalorder %s15, 1
    %p73 = por %p71, %p72
    %p74 = scmp.ne.s32.totalorder %s63, %s64
    %p75 = scmp.eq.s32.totalorder %s15, 0
    %p76 = por %p74, %p75
    %p77 = scmp.ne.s32.totalorder %s63, %s64
    %p78 = scmp.eq.s32.totalorder %s16, 1
    %p79 = por %p77, %p78
    %p81 = scmp.ne.s32.totalorder %s64, %s80
    %p82 = scmp.eq.s32.totalorder %s16, 0
    %p83 = por %p81, %p82
    %s85 = sadd.s32 %s84, 1
    %p88 = scmp.eq.s32.totalorder %s10, 1
    %p89 = scmp.ne.s32.totalorder %s84, %s86
    %p90 = scmp.eq.s32.totalorder %s10, 0
    %p91 = por %p89, %p90
    %p92 = scmp.ne.s32.totalorder %s84, %s86
    %p93 = scmp.eq.s32.totalorder %s15, 1
    %p94 = por %p92, %p93
    %p95 = scmp.ne.s32.totalorder %s86, %s87
    %p96 = scmp.eq.s32.totalorder %s15, 0
    %p97 = por %p95, %p96
    %p98 = scmp.ne.s32.totalorder %s86, %s87
    %p99 = scmp.eq.s32.totalorder %s16, 1
    %p100 = por %p98, %p99
    %p102 = scmp.ne.s32.totalorder %s87, %s101
    %p103 = scmp.eq.s32.totalorder %s16, 0
    %p104 = por %p102, %p103
    %s106 = sadd.s32 %s105, 1
    %p109 = scmp.eq.s32.totalorder %s10, 1
    %p110 = scmp.ne.s32.totalorder %s105, %s107
    %p111 = scmp.eq.s32.totalorder %s10, 0
    %p112 = por %p110, %p111
    %p113 = scmp.ne.s32.totalorder %s105, %s107
    %p114 = scmp.eq.s32.totalorder %s15, 1
    %p115 = por %p113, %p114
    %p116 = scmp.ne.s32.totalorder %s107, %s108
    %p117 = scmp.eq.s32.totalorder %s15, 0
    %p118 = por %p116, %p117
    %p119 = scmp.ne.s32.totalorder %s107, %s108
    %p120 = scmp.eq.s32.totalorder %s16, 1
    %p121 = por %p119, %p120
    %p123 = scmp.ne.s32.totalorder %s108, %s122
    %p124 = scmp.eq.s32.totalorder %s16, 0
    %p125 = por %p123, %p124
    %s126 = ssub.s32 %s17, %s29
    %p127 = scmp.eq.s32.totalorder %s126, 0
    %s129 = sadd.s32 %s128, 1
    %s130 = scalar_select %p127, %s128, %s129
    %p133 = pneg %p127
    %p134 = scmp.eq.s32.totalorder %s10, 1
    %p135 = por %p133, %p134
    %p136 = scmp.ne.s32.totalorder %s128, %s131
    %p137 = scmp.eq.s32.totalorder %s10, 0
    %p138 = por %p136, %p137
    %p139 = scmp.ne.s32.totalorder %s128, %s131
    %p140 = scmp.eq.s32.totalorder %s15, 1
    %p141 = por %p139, %p140
    %p142 = scmp.ne.s32.totalorder %s131, %s132
    %p143 = scmp.eq.s32.totalorder %s15, 0
    %p144 = por %p142, %p143
    %p145 = scmp.ne.s32.totalorder %s131, %s132
    %p146 = scmp.eq.s32.totalorder %s16, 1
    %p147 = por %p145, %p146
    %p149 = scmp.ne.s32.totalorder %s132, %s148
    %p150 = scmp.eq.s32.totalorder %s16, 0
    %p151 = por %p149, %p150
    %p152 = scmp.le.s32.totalorder 1, %s10
    %p153 = scmp.lt.s32.totalorder %s10, 3
    %p154 = pnand %p152, %p153
    %p155 = pneg %p154
    // Predicated region
    $region9: #{peft_rn_forward.11} parent=5 // pred_check
      _
    $region10: #{peft_rn_forward.11} parent=5 // pred_check_branch
      %157 = sbr.rel (%p154) target = $region12
    $region11: #{peft_rn_forward.11} parent=5 // pred_region
      %s158 = ssub.s32 %s10, 1
      // Predicated region
      $region13: #{peft_rn_forward.11} parent=11 // pred_check
        %p159 = pneg %p76
      $region14: #{peft_rn_forward.11} parent=11 // pred_check_branch
        %161 = sbr.rel (%p159) target = $region16
      $region15: #{peft_rn_forward.11} parent=11 // pred_region
        %s162 = smul.u32 32, %s20
        %p163 = scmp.lt.s32.totalorder %s162, 31
        %s164 = scalar_select %p163, %s162, 31
        %s165 = smul.addr %s164, 4
        %s166 = scalar_lea.vmem %s1, %s165
        %s167 = smul.u32 32, %s20
      $region16: #{peft_rn_forward.11} parent=11 // pred_fallthru
        _
      // Predicated region
      $region17: #{peft_rn_forward.11} parent=11 // pred_check
        %p168 = pneg %p97
      $region18: #{peft_rn_forward.11} parent=11 // pred_check_branch
        %170 = sbr.rel (%p168) target = $region20
      $region19: #{peft_rn_forward.11} parent=11 // pred_region
        _
      $region20: #{peft_rn_forward.11} parent=11 // pred_fallthru
        _
      // Predicated region
      $region21: #{peft_rn_forward.11} parent=11 // pred_check
        %p171 = pneg %p118
      $region22: #{peft_rn_forward.11} parent=11 // pred_check_branch
        %173 = sbr.rel (%p171) target = $region24
      $region23: #{peft_rn_forward.11} parent=11 // pred_region
        _
      $region24: #{peft_rn_forward.11} parent=11 // pred_fallthru
        _
    $region12: #{peft_rn_forward.11} parent=5 // pred_fallthru
      _
    %p174 = scmp.lt.s32.totalorder %s10, 2
    // Predicated region
    $region25: #{peft_rn_forward.11} parent=5 // pred_check
      %p175 = pneg %p174
    $region26: #{peft_rn_forward.11} parent=5 // pred_check_branch
      %177 = sbr.rel (%p175) target = $region28
    $region27: #{peft_rn_forward.11} parent=5 // pred_region
      // Predicated region
      $region29: #{peft_rn_forward.11} parent=27 // pred_check
        %p178 = pneg %p44
      $region30: #{peft_rn_forward.11} parent=27 // pred_check_branch
        %180 = sbr.rel (%p178) target = $region32
      $region31: #{peft_rn_forward.11} parent=27 // pred_region
        %s181 = smul.u32 32, %s17
        %s182 = smul.u32 2, %s18
        %p183 = scmp.lt.s32.totalorder %s181, 63
        %s184 = scalar_select %p183, %s181, 63
        %p185 = scmp.lt.s32.totalorder %s182, 1
        %s186 = scalar_select %p185, %s182, 1
        %s187 = smul.addr %s184, 2
        %s188 = sadd.s32 %s186, %s187
        %s189 = smul.addr %s188, 4
        %s190 = scalar_lea.vmem %s0, %s189
        %s191 = smul.u32 32, %s17
        %s192 = smul.u32 2, %s18
      $region32: #{peft_rn_forward.11} parent=27 // pred_fallthru
        _
    $region28: #{peft_rn_forward.11} parent=5 // pred_fallthru
      _
    %p193 = scmp.le.s32.totalorder 1, %s10
    %p194 = scmp.lt.s32.totalorder %s10, 3
    %p195 = pnand %p193, %p194
    %p196 = pneg %p195
    // Predicated region
    $region33: #{peft_rn_forward.11} parent=5 // pred_check
      _
    $region34: #{peft_rn_forward.11} parent=5 // pred_check_branch
      %198 = sbr.rel (%p195) target = $region36
    $region35: #{peft_rn_forward.11} parent=5 // pred_region
      %s199 = ssub.s32 %s10, 1
      %s200 = smul.u32 32, %s19
      %s201 = smul.u32 2, %s20
      %p202 = scmp.lt.s32.totalorder %s200, 63
      %s203 = scalar_select %p202, %s200, 63
      %p204 = scmp.lt.s32.totalorder %s201, 1
      %s205 = scalar_select %p204, %s201, 1
      %s206 = smul.addr %s203, 2
      %s207 = sadd.s32 %s205, %s206
      %s208 = smul.addr %s207, 4
      %s209 = scalar_lea.vmem %s0, %s208
      %p210 = pneg %p50
      %p211 = pneg %p47
      %s212 = smul.u32 32, %s20
      %p213 = scmp.lt.s32.totalorder %s212, 31
      %s214 = scalar_select %p213, %s212, 31
      %s215 = smul.addr %s214, 4
      %s216 = scalar_lea.vmem %s1, %s215
      %p217 = pneg %p76
      %p218 = pneg %p73
      %p219 = pneg %p97
      %p220 = pneg %p94
      %p221 = pneg %p118
      %p222 = pneg %p115
      %p223 = pneg %p144
      %p224 = pneg %p141
      %s225 = smul.u32 32, %s19
      %p226 = scmp.lt.s32.totalorder %s225, 63
      %s227 = scalar_select %p226, %s225, 63
      %s228 = smul.addr %s227, 4
      %s229 = scalar_lea.vmem %s4, %s228
      %s230 = smul.u32 32, %s19
      %s231 = smul.u32 2, %s20
      %p232 = scmp.lt.s32.totalorder %s230, 63
      %s233 = scalar_select %p232, %s230, 63
      %p234 = scmp.lt.s32.totalorder %s231, 1
      %s235 = scalar_select %p234, %s231, 1
      %s236 = smul.addr %s233, 2
      %s237 = sadd.s32 %s235, %s236
      %s238 = smul.addr %s237, 4
      %s239 = scalar_lea.vmem %s0, %s238
      %s240 = smul.u32 32, %s19
      %s241 = smul.u32 2, %s20
      %s242 = smul.u32 32, %s20
      %p243 = scmp.lt.s32.totalorder %s242, 31
      %s244 = scalar_select %p243, %s242, 31
      %s245 = smul.addr %s244, 4
      %s246 = scalar_lea.vmem %s1, %s245
      %s247 = smul.u32 32, %s20
      %s248 = smul.u32 32, %s19
      %p249 = scmp.lt.s32.totalorder %s248, 63
      %s250 = scalar_select %p249, %s248, 63
      %s251 = smul.addr %s250, 4
      %s252 = scalar_lea.vmem %s4, %s251
      %s253 = smul.u32 32, %s19
      %p254 = scmp.eq.s32.totalorder %s20, 0
      // Predicated region
      $region37: #{peft_rn_forward.11} parent=35 // pred_check
        %p255 = pneg %p254
      $region38: #{peft_rn_forward.11} parent=35 // pred_check_branch
        %257 = sbr.rel (%p255) target = $region40
      $region39: #{peft_rn_forward.11} parent=35 // pred_region
        %258 = vst [vmem:[#allocation2] sm:$0xff] 0.0
        %259 = vst [vmem:[#allocation2 + $0x8] sm:$0xff] 0.0
        %260 = vst [vmem:[#allocation2 + $0x10] sm:$0xff] 0.0
        %261 = vst [vmem:[#allocation2 + $0x18] sm:$0xff] 0.0
        %262 = vst [vmem:[#allocation2 + $0x20] sm:$0xff] 0.0
        %263 = vst [vmem:[#allocation2 + $0x28] sm:$0xff] 0.0
        %264 = vst [vmem:[#allocation2 + $0x30] sm:$0xff] 0.0
        %265 = vst [vmem:[#allocation2 + $0x38] sm:$0xff] 0.0
        %266 = vst [vmem:[#allocation2 + $0x40] sm:$0xff] 0.0
        %267 = vst [vmem:[#allocation2 + $0x48] sm:$0xff] 0.0
        %268 = vst [vmem:[#allocation2 + $0x50] sm:$0xff] 0.0
        %269 = vst [vmem:[#allocation2 + $0x58] sm:$0xff] 0.0
        %270 = vst [vmem:[#allocation2 + $0x60] sm:$0xff] 0.0
        %271 = vst [vmem:[#allocation2 + $0x68] sm:$0xff] 0.0
        %272 = vst [vmem:[#allocation2 + $0x70] sm:$0xff] 0.0
        %273 = vst [vmem:[#allocation2 + $0x78] sm:$0xff] 0.0
        %274 = vst [vmem:[#allocation2 + $0x80] sm:$0xff] 0.0
        %275 = vst [vmem:[#allocation2 + $0x88] sm:$0xff] 0.0
        %276 = vst [vmem:[#allocation2 + $0x90] sm:$0xff] 0.0
        %277 = vst [vmem:[#allocation2 + $0x98] sm:$0xff] 0.0
        %278 = vst [vmem:[#allocation2 + $0xa0] sm:$0xff] 0.0
        %279 = vst [vmem:[#allocation2 + $0xa8] sm:$0xff] 0.0
        %280 = vst [vmem:[#allocation2 + $0xb0] sm:$0xff] 0.0
        %281 = vst [vmem:[#allocation2 + $0xb8] sm:$0xff] 0.0
        %282 = vst [vmem:[#allocation2 + $0xc0] sm:$0xff] 0.0
        %283 = vst [vmem:[#allocation2 + $0xc8] sm:$0xff] 0.0
        %284 = vst [vmem:[#allocation2 + $0xd0] sm:$0xff] 0.0
        %285 = vst [vmem:[#allocation2 + $0xd8] sm:$0xff] 0.0
        %286 = vst [vmem:[#allocation2 + $0xe0] sm:$0xff] 0.0
        %287 = vst [vmem:[#allocation2 + $0xe8] sm:$0xff] 0.0
        %288 = vst [vmem:[#allocation2 + $0xf0] sm:$0xff] 0.0
        %289 = vst [vmem:[#allocation2 + $0xf8] sm:$0xff] 0.0
      $region40: #{peft_rn_forward.11} parent=35 // pred_fallthru
        _
      %v290 = vld [vmem:[#allocation2] sm:$0xff]
      %v291 = vld [vmem:[#allocation2 + $0x8] sm:$0xff]
      %v292 = vld [vmem:[#allocation2 + $0x10] sm:$0xff]
      %v293 = vld [vmem:[#allocation2 + $0x18] sm:$0xff]
      %v294 = vld [vmem:[#allocation2 + $0x20] sm:$0xff]
      %v295 = vld [vmem:[#allocation2 + $0x28] sm:$0xff]
      %v296 = vld [vmem:[#allocation2 + $0x30] sm:$0xff]
      %v297 = vld [vmem:[#allocation2 + $0x38] sm:$0xff]
      %v298 = vld [vmem:[#allocation2 + $0x40] sm:$0xff]
      %v299 = vld [vmem:[#allocation2 + $0x48] sm:$0xff]
      %v300 = vld [vmem:[#allocation2 + $0x50] sm:$0xff]
      %v301 = vld [vmem:[#allocation2 + $0x58] sm:$0xff]
      %v302 = vld [vmem:[#allocation2 + $0x60] sm:$0xff]
      %v303 = vld [vmem:[#allocation2 + $0x68] sm:$0xff]
      %v304 = vld [vmem:[#allocation2 + $0x70] sm:$0xff]
      %v305 = vld [vmem:[#allocation2 + $0x78] sm:$0xff]
      %v306 = vld [vmem:[#allocation2 + $0x80] sm:$0xff]
      %v307 = vld [vmem:[#allocation2 + $0x88] sm:$0xff]
      %v308 = vld [vmem:[#allocation2 + $0x90] sm:$0xff]
      %v309 = vld [vmem:[#allocation2 + $0x98] sm:$0xff]
      %v310 = vld [vmem:[#allocation2 + $0xa0] sm:$0xff]
      %v311 = vld [vmem:[#allocation2 + $0xa8] sm:$0xff]
      %v312 = vld [vmem:[#allocation2 + $0xb0] sm:$0xff]
      %v313 = vld [vmem:[#allocation2 + $0xb8] sm:$0xff]
      %v314 = vld [vmem:[#allocation2 + $0xc0] sm:$0xff]
      %v315 = vld [vmem:[#allocation2 + $0xc8] sm:$0xff]
      %v316 = vld [vmem:[#allocation2 + $0xd0] sm:$0xff]
      %v317 = vld [vmem:[#allocation2 + $0xd8] sm:$0xff]
      %v318 = vld [vmem:[#allocation2 + $0xe0] sm:$0xff]
      %v319 = vld [vmem:[#allocation2 + $0xe8] sm:$0xff]
      %v320 = vld [vmem:[#allocation2 + $0xf0] sm:$0xff]
      %v321 = vld [vmem:[#allocation2 + $0xf8] sm:$0xff]
      %v322 = vld [vmem:[%s239] sm:$0xff]
      %v323 = vld [vmem:[%s239 + $0x8] sm:$0xff]
      %v324 = vld [vmem:[%s239 + $0x10] sm:$0xff]
      %v325 = vld [vmem:[%s239 + $0x18] sm:$0xff]
      %v326 = vld [vmem:[%s239 + $0x20] sm:$0xff]
      %v327 = vld [vmem:[%s239 + $0x28] sm:$0xff]
      %v328 = vld [vmem:[%s239 + $0x30] sm:$0xff]
      %v329 = vld [vmem:[%s239 + $0x38] sm:$0xff]
      %v330 = vld [vmem:[%s239 + $0x40] sm:$0xff]
      %v331 = vld [vmem:[%s239 + $0x48] sm:$0xff]
      %v332 = vld [vmem:[%s239 + $0x50] sm:$0xff]
      %v333 = vld [vmem:[%s239 + $0x58] sm:$0xff]
      %v334 = vld [vmem:[%s239 + $0x60] sm:$0xff]
      %v335 = vld [vmem:[%s239 + $0x68] sm:$0xff]
      %v336 = vld [vmem:[%s239 + $0x70] sm:$0xff]
      %v337 = vld [vmem:[%s239 + $0x78] sm:$0xff]
      %v338 = vld [vmem:[%s239 + $0x80] sm:$0xff]
      %v339 = vld [vmem:[%s239 + $0x88] sm:$0xff]
      %v340 = vld [vmem:[%s239 + $0x90] sm:$0xff]
      %v341 = vld [vmem:[%s239 + $0x98] sm:$0xff]
      %v342 = vld [vmem:[%s239 + $0xa0] sm:$0xff]
      %v343 = vld [vmem:[%s239 + $0xa8] sm:$0xff]
      %v344 = vld [vmem:[%s239 + $0xb0] sm:$0xff]
      %v345 = vld [vmem:[%s239 + $0xb8] sm:$0xff]
      %v346 = vld [vmem:[%s239 + $0xc0] sm:$0xff]
      %v347 = vld [vmem:[%s239 + $0xc8] sm:$0xff]
      %v348 = vld [vmem:[%s239 + $0xd0] sm:$0xff]
      %v349 = vld [vmem:[%s239 + $0xd8] sm:$0xff]
      %v350 = vld [vmem:[%s239 + $0xe0] sm:$0xff]
      %v351 = vld [vmem:[%s239 + $0xe8] sm:$0xff]
      %v352 = vld [vmem:[%s239 + $0xf0] sm:$0xff]
      %v353 = vld [vmem:[%s239 + $0xf8] sm:$0xff]
      %v354 = vld [vmem:[%s246] sm:$0xf]
      %v355 = vld [vmem:[%s246 + $0x4] sm:$0xf]
      %v356 = vld [vmem:[%s246 + $0x8] sm:$0xf]
      %v357 = vld [vmem:[%s246 + $0xc] sm:$0xf]
      %v358 = vld [vmem:[%s246 + $0x10] sm:$0xf]
      %v359 = vld [vmem:[%s246 + $0x14] sm:$0xf]
      %v360 = vld [vmem:[%s246 + $0x18] sm:$0xf]
      %v361 = vld [vmem:[%s246 + $0x1c] sm:$0xf]
      %v362 = vld [vmem:[%s246 + $0x20] sm:$0xf]
      %v363 = vld [vmem:[%s246 + $0x24] sm:$0xf]
      %v364 = vld [vmem:[%s246 + $0x28] sm:$0xf]
      %v365 = vld [vmem:[%s246 + $0x2c] sm:$0xf]
      %v366 = vld [vmem:[%s246 + $0x30] sm:$0xf]
      %v367 = vld [vmem:[%s246 + $0x34] sm:$0xf]
      %v368 = vld [vmem:[%s246 + $0x38] sm:$0xf]
      %v369 = vld [vmem:[%s246 + $0x3c] sm:$0xf]
      %v370 = vld [vmem:[%s246 + $0x40] sm:$0xf]
      %v371 = vld [vmem:[%s246 + $0x44] sm:$0xf]
      %v372 = vld [vmem:[%s246 + $0x48] sm:$0xf]
      %v373 = vld [vmem:[%s246 + $0x4c] sm:$0xf]
      %v374 = vld [vmem:[%s246 + $0x50] sm:$0xf]
      %v375 = vld [vmem:[%s246 + $0x54] sm:$0xf]
      %v376 = vld [vmem:[%s246 + $0x58] sm:$0xf]
      %v377 = vld [vmem:[%s246 + $0x5c] sm:$0xf]
      %v378 = vld [vmem:[%s246 + $0x60] sm:$0xf]
      %v379 = vld [vmem:[%s246 + $0x64] sm:$0xf]
      %v380 = vld [vmem:[%s246 + $0x68] sm:$0xf]
      %v381 = vld [vmem:[%s246 + $0x6c] sm:$0xf]
      %v382 = vld [vmem:[%s246 + $0x70] sm:$0xf]
      %v383 = vld [vmem:[%s246 + $0x74] sm:$0xf]
      %v384 = vld [vmem:[%s246 + $0x78] sm:$0xf]
      %v385 = vld [vmem:[%s246 + $0x7c] sm:$0xf]
      %v418 = vunpack.c.l.b16 %v322
      %v419 = vunpack.c.h.b16 %v322
      %v420 = vunpack.c.l.b16 %v323
      %v421 = vunpack.c.h.b16 %v323
      %v422 = vunpack.c.l.b16 %v324
      %v423 = vunpack.c.h.b16 %v324
      %v424 = vunpack.c.l.b16 %v325
      %v425 = vunpack.c.h.b16 %v325
      %v426 = vunpack.c.l.b16 %v326
      %v427 = vunpack.c.h.b16 %v326
      %v428 = vunpack.c.l.b16 %v327
      %v429 = vunpack.c.h.b16 %v327
      %v430 = vunpack.c.l.b16 %v328
      %v431 = vunpack.c.h.b16 %v328
      %v432 = vunpack.c.l.b16 %v329
      %v433 = vunpack.c.h.b16 %v329
      %v434 = vunpack.c.l.b16 %v330
      %v435 = vunpack.c.h.b16 %v330
      %v436 = vunpack.c.l.b16 %v331
      %v437 = vunpack.c.h.b16 %v331
      %v438 = vunpack.c.l.b16 %v332
      %v439 = vunpack.c.h.b16 %v332
      %v440 = vunpack.c.l.b16 %v333
      %v441 = vunpack.c.h.b16 %v333
      %v442 = vunpack.c.l.b16 %v334
      %v443 = vunpack.c.h.b16 %v334
      %v444 = vunpack.c.l.b16 %v335
      %v445 = vunpack.c.h.b16 %v335
      %v446 = vunpack.c.l.b16 %v336
      %v447 = vunpack.c.h.b16 %v336
      %v448 = vunpack.c.l.b16 %v337
      %v449 = vunpack.c.h.b16 %v337
      %v450 = vunpack.c.l.b16 %v338
      %v451 = vunpack.c.h.b16 %v338
      %v452 = vunpack.c.l.b16 %v339
      %v453 = vunpack.c.h.b16 %v339
      %v454 = vunpack.c.l.b16 %v340
      %v455 = vunpack.c.h.b16 %v340
      %v456 = vunpack.c.l.b16 %v341
      %v457 = vunpack.c.h.b16 %v341
      %v458 = vunpack.c.l.b16 %v342
      %v459 = vunpack.c.h.b16 %v342
      %v460 = vunpack.c.l.b16 %v343
      %v461 = vunpack.c.h.b16 %v343
      %v462 = vunpack.c.l.b16 %v344
      %v463 = vunpack.c.h.b16 %v344
      %v464 = vunpack.c.l.b16 %v345
      %v465 = vunpack.c.h.b16 %v345
      %v466 = vunpack.c.l.b16 %v346
      %v467 = vunpack.c.h.b16 %v346
      %v468 = vunpack.c.l.b16 %v347
      %v469 = vunpack.c.h.b16 %v347
      %v470 = vunpack.c.l.b16 %v348
      %v471 = vunpack.c.h.b16 %v348
      %v472 = vunpack.c.l.b16 %v349
      %v473 = vunpack.c.h.b16 %v349
      %v474 = vunpack.c.l.b16 %v350
      %v475 = vunpack.c.h.b16 %v350
      %v476 = vunpack.c.l.b16 %v351
      %v477 = vunpack.c.h.b16 %v351
      %v478 = vunpack.c.l.b16 %v352
      %v479 = vunpack.c.h.b16 %v352
      %v480 = vunpack.c.l.b16 %v353
      %v481 = vunpack.c.h.b16 %v353
      %v482 = vpack.c.b16 %v420, %v418
      %v483 = vpack.c.b16 %v421, %v419
      %v484 = vpack.c.b16 %v424, %v422
      %v485 = vpack.c.b16 %v425, %v423
      %v486 = vpack.c.b16 %v428, %v426
      %v487 = vpack.c.b16 %v429, %v427
      %v488 = vpack.c.b16 %v432, %v430
      %v489 = vpack.c.b16 %v433, %v431
      %v490 = vpack.c.b16 %v436, %v434
      %v491 = vpack.c.b16 %v437, %v435
      %v492 = vpack.c.b16 %v440, %v438
      %v493 = vpack.c.b16 %v441, %v439
      %v494 = vpack.c.b16 %v444, %v442
      %v495 = vpack.c.b16 %v445, %v443
      %v496 = vpack.c.b16 %v448, %v446
      %v497 = vpack.c.b16 %v449, %v447
      %v498 = vpack.c.b16 %v452, %v450
      %v499 = vpack.c.b16 %v453, %v451
      %v500 = vpack.c.b16 %v456, %v454
      %v501 = vpack.c.b16 %v457, %v455
      %v502 = vpack.c.b16 %v460, %v458
      %v503 = vpack.c.b16 %v461, %v459
      %v504 = vpack.c.b16 %v464, %v462
      %v505 = vpack.c.b16 %v465, %v463
      %v506 = vpack.c.b16 %v468, %v466
      %v507 = vpack.c.b16 %v469, %v467
      %v508 = vpack.c.b16 %v472, %v470
      %v509 = vpack.c.b16 %v473, %v471
      %v510 = vpack.c.b16 %v476, %v474
      %v511 = vpack.c.b16 %v477, %v475
      %v512 = vpack.c.b16 %v480, %v478
      %v513 = vpack.c.b16 %v481, %v479
      %v578 = vunpack.c.l.b16 %v354
      %v579 = vunpack.c.l.b16 %v355
      %v580 = vunpack.c.l.b16 %v356
      %v581 = vunpack.c.l.b16 %v357
      %v582 = vunpack.c.l.b16 %v358
      %v583 = vunpack.c.l.b16 %v359
      %v584 = vunpack.c.l.b16 %v360
      %v585 = vunpack.c.l.b16 %v361
      %v586 = vunpack.c.l.b16 %v362
      %v587 = vunpack.c.l.b16 %v363
      %v588 = vunpack.c.l.b16 %v364
      %v589 = vunpack.c.l.b16 %v365
      %v590 = vunpack.c.l.b16 %v366
      %v591 = vunpack.c.l.b16 %v367
      %v592 = vunpack.c.l.b16 %v368
      %v593 = vunpack.c.l.b16 %v369
      %v594 = vunpack.c.l.b16 %v370
      %v595 = vunpack.c.l.b16 %v371
      %v596 = vunpack.c.l.b16 %v372
      %v597 = vunpack.c.l.b16 %v373
      %v598 = vunpack.c.l.b16 %v374
      %v599 = vunpack.c.l.b16 %v375
      %v600 = vunpack.c.l.b16 %v376
      %v601 = vunpack.c.l.b16 %v377
      %v602 = vunpack.c.l.b16 %v378
      %v603 = vunpack.c.l.b16 %v379
      %v604 = vunpack.c.l.b16 %v380
      %v605 = vunpack.c.l.b16 %v381
      %v606 = vunpack.c.l.b16 %v382
      %v607 = vunpack.c.l.b16 %v383
      %v608 = vunpack.c.l.b16 %v384
      %v609 = vunpack.c.l.b16 %v385
      %v610 = vpack.c.b16 %v579, %v578
      %v611 = vpack.c.b16 %v581, %v580
      %v612 = vpack.c.b16 %v583, %v582
      %v613 = vpack.c.b16 %v585, %v584
      %v614 = vpack.c.b16 %v587, %v586
      %v615 = vpack.c.b16 %v589, %v588
      %v616 = vpack.c.b16 %v591, %v590
      %v617 = vpack.c.b16 %v593, %v592
      %v618 = vpack.c.b16 %v595, %v594
      %v619 = vpack.c.b16 %v597, %v596
      %v620 = vpack.c.b16 %v599, %v598
      %v621 = vpack.c.b16 %v601, %v600
      %v622 = vpack.c.b16 %v603, %v602
      %v623 = vpack.c.b16 %v605, %v604
      %v624 = vpack.c.b16 %v607, %v606
      %v625 = vpack.c.b16 %v609, %v608
      %642 = vmatpush.bf16.msra.mxu0 %v617
      %643 = vmatpush.bf16.msra.mxu0 %v616
      %644 = vmatpush.bf16.msra.mxu0 %v615
      %645 = vmatpush.bf16.msra.mxu0 %v614
      %646 = vmatpush.bf16.msra.mxu0 %v613
      %647 = vmatpush.bf16.msra.mxu0 %v612
      %648 = vmatpush.bf16.msra.mxu0 %v611
      %649 = vmatpush.bf16.msra.mxu0 %v610
      %650 = vmatmul.bf16.gmra.mxu0 %v482
      %v651 = vpop.f32.mrf.mxu0
      %v652 = vadd.f32 0.0, %v651
      %v653 = vpop.f32.mrf.mxu0
      %v654 = vadd.f32 0.0, %v653
      %655 = vmatmul.bf16.gmra.mxu0 %v484
      %v656 = vpop.f32.mrf.mxu0
      %v657 = vadd.f32 0.0, %v656
      %v658 = vpop.f32.mrf.mxu0
      %v659 = vadd.f32 0.0, %v658
      %660 = vmatmul.bf16.gmra.mxu0 %v486
      %v661 = vpop.f32.mrf.mxu0
      %v662 = vadd.f32 0.0, %v661
      %v663 = vpop.f32.mrf.mxu0
      %v664 = vadd.f32 0.0, %v663
      %665 = vmatmul.bf16.gmra.mxu0 %v488
      %v666 = vpop.f32.mrf.mxu0
      %v667 = vadd.f32 0.0, %v666
      %v668 = vpop.f32.mrf.mxu0
      %v669 = vadd.f32 0.0, %v668
      %670 = vmatmul.bf16.gmra.mxu0 %v490
      %v671 = vpop.f32.mrf.mxu0
      %v672 = vadd.f32 0.0, %v671
      %v673 = vpop.f32.mrf.mxu0
      %v674 = vadd.f32 0.0, %v673
      %675 = vmatmul.bf16.gmra.mxu0 %v492
      %v676 = vpop.f32.mrf.mxu0
      %v677 = vadd.f32 0.0, %v676
      %v678 = vpop.f32.mrf.mxu0
      %v679 = vadd.f32 0.0, %v678
      %680 = vmatmul.bf16.gmra.mxu0 %v494
      %v681 = vpop.f32.mrf.mxu0
      %v682 = vadd.f32 0.0, %v681
      %v683 = vpop.f32.mrf.mxu0
      %v684 = vadd.f32 0.0, %v683
      %685 = vmatmul.bf16.gmra.mxu0 %v496
      %v686 = vpop.f32.mrf.mxu0
      %v687 = vadd.f32 0.0, %v686
      %v688 = vpop.f32.mrf.mxu0
      %v689 = vadd.f32 0.0, %v688
      %690 = vmatmul.bf16.gmra.mxu0 %v498
      %v691 = vpop.f32.mrf.mxu0
      %v692 = vadd.f32 0.0, %v691
      %v693 = vpop.f32.mrf.mxu0
      %v694 = vadd.f32 0.0, %v693
      %695 = vmatmul.bf16.gmra.mxu0 %v500
      %v696 = vpop.f32.mrf.mxu0
      %v697 = vadd.f32 0.0, %v696
      %v698 = vpop.f32.mrf.mxu0
      %v699 = vadd.f32 0.0, %v698
      %700 = vmatmul.bf16.gmra.mxu0 %v502
      %v701 = vpop.f32.mrf.mxu0
      %v702 = vadd.f32 0.0, %v701
      %v703 = vpop.f32.mrf.mxu0
      %v704 = vadd.f32 0.0, %v703
      %705 = vmatmul.bf16.gmra.mxu0 %v504
      %v706 = vpop.f32.mrf.mxu0
      %v707 = vadd.f32 0.0, %v706
      %v708 = vpop.f32.mrf.mxu0
      %v709 = vadd.f32 0.0, %v708
      %710 = vmatmul.bf16.gmra.mxu0 %v506
      %v711 = vpop.f32.mrf.mxu0
      %v712 = vadd.f32 0.0, %v711
      %v713 = vpop.f32.mrf.mxu0
      %v714 = vadd.f32 0.0, %v713
      %715 = vmatmul.bf16.gmra.mxu0 %v508
      %v716 = vpop.f32.mrf.mxu0
      %v717 = vadd.f32 0.0, %v716
      %v718 = vpop.f32.mrf.mxu0
      %v719 = vadd.f32 0.0, %v718
      %720 = vmatmul.bf16.gmra.mxu0 %v510
      %v721 = vpop.f32.mrf.mxu0
      %v722 = vadd.f32 0.0, %v721
      %v723 = vpop.f32.mrf.mxu0
      %v724 = vadd.f32 0.0, %v723
      %725 = vmatmul.bf16.gmra.mxu0 %v512
      %v726 = vpop.f32.mrf.mxu0
      %v727 = vadd.f32 0.0, %v726
      %v728 = vpop.f32.mrf.mxu0
      %v729 = vadd.f32 0.0, %v728
      %730 = vdwg.mxu0
      %731 = vmatpush.bf16.msra.mxu0 %v625
      %732 = vmatpush.bf16.msra.mxu0 %v624
      %733 = vmatpush.bf16.msra.mxu0 %v623
      %734 = vmatpush.bf16.msra.mxu0 %v622
      %735 = vmatpush.bf16.msra.mxu0 %v621
      %736 = vmatpush.bf16.msra.mxu0 %v620
      %737 = vmatpush.bf16.msra.mxu0 %v619
      %738 = vmatpush.bf16.msra.mxu0 %v618
      %739 = vmatmul.bf16.gmra.mxu0 %v483
      %v740 = vpop.f32.mrf.mxu0
      %v741 = vadd.f32 %v652, %v740
      %v742 = vpop.f32.mrf.mxu0
      %v743 = vadd.f32 %v654, %v742
      %744 = vmatmul.bf16.gmra.mxu0 %v485
      %v745 = vpop.f32.mrf.mxu0
      %v746 = vadd.f32 %v657, %v745
      %v747 = vpop.f32.mrf.mxu0
      %v748 = vadd.f32 %v659, %v747
      %749 = vmatmul.bf16.gmra.mxu0 %v487
      %v750 = vpop.f32.mrf.mxu0
      %v751 = vadd.f32 %v662, %v750
      %v752 = vpop.f32.mrf.mxu0
      %v753 = vadd.f32 %v664, %v752
      %754 = vmatmul.bf16.gmra.mxu0 %v489
      %v755 = vpop.f32.mrf.mxu0
      %v756 = vadd.f32 %v667, %v755
      %v757 = vpop.f32.mrf.mxu0
      %v758 = vadd.f32 %v669, %v757
      %759 = vmatmul.bf16.gmra.mxu0 %v491
      %v760 = vpop.f32.mrf.mxu0
      %v761 = vadd.f32 %v672, %v760
      %v762 = vpop.f32.mrf.mxu0
      %v763 = vadd.f32 %v674, %v762
      %764 = vmatmul.bf16.gmra.mxu0 %v493
      %v765 = vpop.f32.mrf.mxu0
      %v766 = vadd.f32 %v677, %v765
      %v767 = vpop.f32.mrf.mxu0
      %v768 = vadd.f32 %v679, %v767
      %769 = vmatmul.bf16.gmra.mxu0 %v495
      %v770 = vpop.f32.mrf.mxu0
      %v771 = vadd.f32 %v682, %v770
      %v772 = vpop.f32.mrf.mxu0
      %v773 = vadd.f32 %v684, %v772
      %774 = vmatmul.bf16.gmra.mxu0 %v497
      %v775 = vpop.f32.mrf.mxu0
      %v776 = vadd.f32 %v687, %v775
      %v777 = vpop.f32.mrf.mxu0
      %v778 = vadd.f32 %v689, %v777
      %779 = vmatmul.bf16.gmra.mxu0 %v499
      %v780 = vpop.f32.mrf.mxu0
      %v781 = vadd.f32 %v692, %v780
      %v782 = vpop.f32.mrf.mxu0
      %v783 = vadd.f32 %v694, %v782
      %784 = vmatmul.bf16.gmra.mxu0 %v501
      %v785 = vpop.f32.mrf.mxu0
      %v786 = vadd.f32 %v697, %v785
      %v787 = vpop.f32.mrf.mxu0
      %v788 = vadd.f32 %v699, %v787
      %789 = vmatmul.bf16.gmra.mxu0 %v503
      %v790 = vpop.f32.mrf.mxu0
      %v791 = vadd.f32 %v702, %v790
      %v792 = vpop.f32.mrf.mxu0
      %v793 = vadd.f32 %v704, %v792
      %794 = vmatmul.bf16.gmra.mxu0 %v505
      %v795 = vpop.f32.mrf.mxu0
      %v796 = vadd.f32 %v707, %v795
      %v797 = vpop.f32.mrf.mxu0
      %v798 = vadd.f32 %v709, %v797
      %799 = vmatmul.bf16.gmra.mxu0 %v507
      %v800 = vpop.f32.mrf.mxu0
      %v801 = vadd.f32 %v712, %v800
      %v802 = vpop.f32.mrf.mxu0
      %v803 = vadd.f32 %v714, %v802
      %804 = vmatmul.bf16.gmra.mxu0 %v509
      %v805 = vpop.f32.mrf.mxu0
      %v806 = vadd.f32 %v717, %v805
      %v807 = vpop.f32.mrf.mxu0
      %v808 = vadd.f32 %v719, %v807
      %809 = vmatmul.bf16.gmra.mxu0 %v511
      %v810 = vpop.f32.mrf.mxu0
      %v811 = vadd.f32 %v722, %v810
      %v812 = vpop.f32.mrf.mxu0
      %v813 = vadd.f32 %v724, %v812
      %814 = vmatmul.bf16.gmra.mxu0 %v513
      %v815 = vpop.f32.mrf.mxu0
      %v816 = vadd.f32 %v727, %v815
      %v817 = vpop.f32.mrf.mxu0
      %v818 = vadd.f32 %v729, %v817
      %819 = vdwg.mxu0
      %v820 = vadd.f32 %v290, %v741
      %v821 = vadd.f32 %v291, %v743
      %v822 = vadd.f32 %v292, %v746
      %v823 = vadd.f32 %v293, %v748
      %v824 = vadd.f32 %v294, %v751
      %v825 = vadd.f32 %v295, %v753
      %v826 = vadd.f32 %v296, %v756
      %v827 = vadd.f32 %v297, %v758
      %v828 = vadd.f32 %v298, %v761
      %v829 = vadd.f32 %v299, %v763
      %v830 = vadd.f32 %v300, %v766
      %v831 = vadd.f32 %v301, %v768
      %v832 = vadd.f32 %v302, %v771
      %v833 = vadd.f32 %v303, %v773
      %v834 = vadd.f32 %v304, %v776
      %v835 = vadd.f32 %v305, %v778
      %v836 = vadd.f32 %v306, %v781
      %v837 = vadd.f32 %v307, %v783
      %v838 = vadd.f32 %v308, %v786
      %v839 = vadd.f32 %v309, %v788
      %v840 = vadd.f32 %v310, %v791
      %v841 = vadd.f32 %v311, %v793
      %v842 = vadd.f32 %v312, %v796
      %v843 = vadd.f32 %v313, %v798
      %v844 = vadd.f32 %v314, %v801
      %v845 = vadd.f32 %v315, %v803
      %v846 = vadd.f32 %v316, %v806
      %v847 = vadd.f32 %v317, %v808
      %v848 = vadd.f32 %v318, %v811
      %v849 = vadd.f32 %v319, %v813
      %v850 = vadd.f32 %v320, %v816
      %v851 = vadd.f32 %v321, %v818
      %852 = vst [vmem:[#allocation2] sm:$0xff] %v820
      %853 = vst [vmem:[#allocation2 + $0x8] sm:$0xff] %v821
      %854 = vst [vmem:[#allocation2 + $0x10] sm:$0xff] %v822
      %855 = vst [vmem:[#allocation2 + $0x18] sm:$0xff] %v823
      %856 = vst [vmem:[#allocation2 + $0x20] sm:$0xff] %v824
      %857 = vst [vmem:[#allocation2 + $0x28] sm:$0xff] %v825
      %858 = vst [vmem:[#allocation2 + $0x30] sm:$0xff] %v826
      %859 = vst [vmem:[#allocation2 + $0x38] sm:$0xff] %v827
      %860 = vst [vmem:[#allocation2 + $0x40] sm:$0xff] %v828
      %861 = vst [vmem:[#allocation2 + $0x48] sm:$0xff] %v829
      %862 = vst [vmem:[#allocation2 + $0x50] sm:$0xff] %v830
      %863 = vst [vmem:[#allocation2 + $0x58] sm:$0xff] %v831
      %864 = vst [vmem:[#allocation2 + $0x60] sm:$0xff] %v832
      %865 = vst [vmem:[#allocation2 + $0x68] sm:$0xff] %v833
      %866 = vst [vmem:[#allocation2 + $0x70] sm:$0xff] %v834
      %867 = vst [vmem:[#allocation2 + $0x78] sm:$0xff] %v835
      %868 = vst [vmem:[#allocation2 + $0x80] sm:$0xff] %v836
      %869 = vst [vmem:[#allocation2 + $0x88] sm:$0xff] %v837
      %870 = vst [vmem:[#allocation2 + $0x90] sm:$0xff] %v838
      %871 = vst [vmem:[#allocation2 + $0x98] sm:$0xff] %v839
      %872 = vst [vmem:[#allocation2 + $0xa0] sm:$0xff] %v840
      %873 = vst [vmem:[#allocation2 + $0xa8] sm:$0xff] %v841
      %874 = vst [vmem:[#allocation2 + $0xb0] sm:$0xff] %v842
      %875 = vst [vmem:[#allocation2 + $0xb8] sm:$0xff] %v843
      %876 = vst [vmem:[#allocation2 + $0xc0] sm:$0xff] %v844
      %877 = vst [vmem:[#allocation2 + $0xc8] sm:$0xff] %v845
      %878 = vst [vmem:[#allocation2 + $0xd0] sm:$0xff] %v846
      %879 = vst [vmem:[#allocation2 + $0xd8] sm:$0xff] %v847
      %880 = vst [vmem:[#allocation2 + $0xe0] sm:$0xff] %v848
      %881 = vst [vmem:[#allocation2 + $0xe8] sm:$0xff] %v849
      %882 = vst [vmem:[#allocation2 + $0xf0] sm:$0xff] %v850
      %883 = vst [vmem:[#allocation2 + $0xf8] sm:$0xff] %v851
      // Predicated region
      $region41: #{peft_rn_forward.11} parent=35 // pred_check
        %p884 = pneg %p254
      $region42: #{peft_rn_forward.11} parent=35 // pred_check_branch
        %886 = sbr.rel (%p884) target = $region44
      $region43: #{peft_rn_forward.11} parent=35 // pred_region
        %v887 = vld [vmem:[#allocation2] sm:$0xff]
        %v888 = vld [vmem:[#allocation2 + $0x8] sm:$0xff]
        %v889 = vld [vmem:[#allocation2 + $0x10] sm:$0xff]
        %v890 = vld [vmem:[#allocation2 + $0x18] sm:$0xff]
        %v891 = vld [vmem:[#allocation2 + $0x20] sm:$0xff]
        %v892 = vld [vmem:[#allocation2 + $0x28] sm:$0xff]
        %v893 = vld [vmem:[#allocation2 + $0x30] sm:$0xff]
        %v894 = vld [vmem:[#allocation2 + $0x38] sm:$0xff]
        %v895 = vld [vmem:[#allocation2 + $0x40] sm:$0xff]
        %v896 = vld [vmem:[#allocation2 + $0x48] sm:$0xff]
        %v897 = vld [vmem:[#allocation2 + $0x50] sm:$0xff]
        %v898 = vld [vmem:[#allocation2 + $0x58] sm:$0xff]
        %v899 = vld [vmem:[#allocation2 + $0x60] sm:$0xff]
        %v900 = vld [vmem:[#allocation2 + $0x68] sm:$0xff]
        %v901 = vld [vmem:[#allocation2 + $0x70] sm:$0xff]
        %v902 = vld [vmem:[#allocation2 + $0x78] sm:$0xff]
        %v903 = vld [vmem:[#allocation2 + $0x80] sm:$0xff]
        %v904 = vld [vmem:[#allocation2 + $0x88] sm:$0xff]
        %v905 = vld [vmem:[#allocation2 + $0x90] sm:$0xff]
        %v906 = vld [vmem:[#allocation2 + $0x98] sm:$0xff]
        %v907 = vld [vmem:[#allocation2 + $0xa0] sm:$0xff]
        %v908 = vld [vmem:[#allocation2 + $0xa8] sm:$0xff]
        %v909 = vld [vmem:[#allocation2 + $0xb0] sm:$0xff]
        %v910 = vld [vmem:[#allocation2 + $0xb8] sm:$0xff]
        %v911 = vld [vmem:[#allocation2 + $0xc0] sm:$0xff]
        %v912 = vld [vmem:[#allocation2 + $0xc8] sm:$0xff]
        %v913 = vld [vmem:[#allocation2 + $0xd0] sm:$0xff]
        %v914 = vld [vmem:[#allocation2 + $0xd8] sm:$0xff]
        %v915 = vld [vmem:[#allocation2 + $0xe0] sm:$0xff]
        %v916 = vld [vmem:[#allocation2 + $0xe8] sm:$0xff]
        %v917 = vld [vmem:[#allocation2 + $0xf0] sm:$0xff]
        %v918 = vld [vmem:[#allocation2 + $0xf8] sm:$0xff]
        %v919 = vld [vmem:[%s2] sm:$0x1]
        %v921 = vperm.slane %v919, 0
        %v923 = vmul.f32 %v887, %v921
        %v924 = vmul.f32 %v888, %v921
        %v925 = vmul.f32 %v889, %v921
        %v926 = vmul.f32 %v890, %v921
        %v927 = vmul.f32 %v891, %v921
        %v928 = vmul.f32 %v892, %v921
        %v929 = vmul.f32 %v893, %v921
        %v930 = vmul.f32 %v894, %v921
        %v931 = vmul.f32 %v895, %v921
        %v932 = vmul.f32 %v896, %v921
        %v933 = vmul.f32 %v897, %v921
        %v934 = vmul.f32 %v898, %v921
        %v935 = vmul.f32 %v899, %v921
        %v936 = vmul.f32 %v900, %v921
        %v937 = vmul.f32 %v901, %v921
        %v938 = vmul.f32 %v902, %v921
        %v939 = vmul.f32 %v903, %v921
        %v940 = vmul.f32 %v904, %v921
        %v941 = vmul.f32 %v905, %v921
        %v942 = vmul.f32 %v906, %v921
        %v943 = vmul.f32 %v907, %v921
        %v944 = vmul.f32 %v908, %v921
        %v945 = vmul.f32 %v909, %v921
        %v946 = vmul.f32 %v910, %v921
        %v947 = vmul.f32 %v911, %v921
        %v948 = vmul.f32 %v912, %v921
        %v949 = vmul.f32 %v913, %v921
        %v950 = vmul.f32 %v914, %v921
        %v951 = vmul.f32 %v915, %v921
        %v952 = vmul.f32 %v916, %v921
        %v953 = vmul.f32 %v917, %v921
        %v954 = vmul.f32 %v918, %v921
        %v955 = vld [vmem:[%s3] sm:$0x1]
        %v957 = vperm.slane %v955, 0
        %v959 = vadd.f32 %v923, %v957
        %v960 = vadd.f32 %v924, %v957
        %v961 = vadd.f32 %v925, %v957
        %v962 = vadd.f32 %v926, %v957
        %v963 = vadd.f32 %v927, %v957
        %v964 = vadd.f32 %v928, %v957
        %v965 = vadd.f32 %v929, %v957
        %v966 = vadd.f32 %v930, %v957
        %v967 = vadd.f32 %v931, %v957
        %v968 = vadd.f32 %v932, %v957
        %v969 = vadd.f32 %v933, %v957
        %v970 = vadd.f32 %v934, %v957
        %v971 = vadd.f32 %v935, %v957
        %v972 = vadd.f32 %v936, %v957
        %v973 = vadd.f32 %v937, %v957
        %v974 = vadd.f32 %v938, %v957
        %v975 = vadd.f32 %v939, %v957
        %v976 = vadd.f32 %v940, %v957
        %v977 = vadd.f32 %v941, %v957
        %v978 = vadd.f32 %v942, %v957
        %v979 = vadd.f32 %v943, %v957
        %v980 = vadd.f32 %v944, %v957
        %v981 = vadd.f32 %v945, %v957
        %v982 = vadd.f32 %v946, %v957
        %v983 = vadd.f32 %v947, %v957
        %v984 = vadd.f32 %v948, %v957
        %v985 = vadd.f32 %v949, %v957
        %v986 = vadd.f32 %v950, %v957
        %v987 = vadd.f32 %v951, %v957
        %v988 = vadd.f32 %v952, %v957
        %v989 = vadd.f32 %v953, %v957
        %v990 = vadd.f32 %v954, %v957
        %v991 = vmax.f32 %v959, 0.0
        %v992 = vmax.f32 %v960, 0.0
        %v993 = vmax.f32 %v961, 0.0
        %v994 = vmax.f32 %v962, 0.0
        %v995 = vmax.f32 %v963, 0.0
        %v996 = vmax.f32 %v964, 0.0
        %v997 = vmax.f32 %v965, 0.0
        %v998 = vmax.f32 %v966, 0.0
        %v999 = vmax.f32 %v967, 0.0
        %v1000 = vmax.f32 %v968, 0.0
        %v1001 = vmax.f32 %v969, 0.0
        %v1002 = vmax.f32 %v970, 0.0
        %v1003 = vmax.f32 %v971, 0.0
        %v1004 = vmax.f32 %v972, 0.0
        %v1005 = vmax.f32 %v973, 0.0
        %v1006 = vmax.f32 %v974, 0.0
        %v1007 = vmax.f32 %v975, 0.0
        %v1008 = vmax.f32 %v976, 0.0
        %v1009 = vmax.f32 %v977, 0.0
        %v1010 = vmax.f32 %v978, 0.0
        %v1011 = vmax.f32 %v979, 0.0
        %v1012 = vmax.f32 %v980, 0.0
        %v1013 = vmax.f32 %v981, 0.0
        %v1014 = vmax.f32 %v982, 0.0
        %v1015 = vmax.f32 %v983, 0.0
        %v1016 = vmax.f32 %v984, 0.0
        %v1017 = vmax.f32 %v985, 0.0
        %v1018 = vmax.f32 %v986, 0.0
        %v1019 = vmax.f32 %v987, 0.0
        %v1020 = vmax.f32 %v988, 0.0
        %v1021 = vmax.f32 %v989, 0.0
        %v1022 = vmax.f32 %v990, 0.0
        %v1023 = vpack.c.bf16 %v991, %v991
        %v1024 = vpack.c.bf16 %v992, %v992
        %v1025 = vpack.c.bf16 %v993, %v993
        %v1026 = vpack.c.bf16 %v994, %v994
        %v1027 = vpack.c.bf16 %v995, %v995
        %v1028 = vpack.c.bf16 %v996, %v996
        %v1029 = vpack.c.bf16 %v997, %v997
        %v1030 = vpack.c.bf16 %v998, %v998
        %v1031 = vpack.c.bf16 %v999, %v999
        %v1032 = vpack.c.bf16 %v1000, %v1000
        %v1033 = vpack.c.bf16 %v1001, %v1001
        %v1034 = vpack.c.bf16 %v1002, %v1002
        %v1035 = vpack.c.bf16 %v1003, %v1003
        %v1036 = vpack.c.bf16 %v1004, %v1004
        %v1037 = vpack.c.bf16 %v1005, %v1005
        %v1038 = vpack.c.bf16 %v1006, %v1006
        %v1039 = vpack.c.bf16 %v1007, %v1007
        %v1040 = vpack.c.bf16 %v1008, %v1008
        %v1041 = vpack.c.bf16 %v1009, %v1009
        %v1042 = vpack.c.bf16 %v1010, %v1010
        %v1043 = vpack.c.bf16 %v1011, %v1011
        %v1044 = vpack.c.bf16 %v1012, %v1012
        %v1045 = vpack.c.bf16 %v1013, %v1013
        %v1046 = vpack.c.bf16 %v1014, %v1014
        %v1047 = vpack.c.bf16 %v1015, %v1015
        %v1048 = vpack.c.bf16 %v1016, %v1016
        %v1049 = vpack.c.bf16 %v1017, %v1017
        %v1050 = vpack.c.bf16 %v1018, %v1018
        %v1051 = vpack.c.bf16 %v1019, %v1019
        %v1052 = vpack.c.bf16 %v1020, %v1020
        %v1053 = vpack.c.bf16 %v1021, %v1021
        %v1054 = vpack.c.bf16 %v1022, %v1022
        %1055 = vst [vmem:[%s252] sm:$0xf] %v1023
        %1056 = vst [vmem:[%s252 + $0x4] sm:$0xf] %v1024
        %1057 = vst [vmem:[%s252 + $0x8] sm:$0xf] %v1025
        %1058 = vst [vmem:[%s252 + $0xc] sm:$0xf] %v1026
        %1059 = vst [vmem:[%s252 + $0x10] sm:$0xf] %v1027
        %1060 = vst [vmem:[%s252 + $0x14] sm:$0xf] %v1028
        %1061 = vst [vmem:[%s252 + $0x18] sm:$0xf] %v1029
        %1062 = vst [vmem:[%s252 + $0x1c] sm:$0xf] %v1030
        %1063 = vst [vmem:[%s252 + $0x20] sm:$0xf] %v1031
        %1064 = vst [vmem:[%s252 + $0x24] sm:$0xf] %v1032
        %1065 = vst [vmem:[%s252 + $0x28] sm:$0xf] %v1033
        %1066 = vst [vmem:[%s252 + $0x2c] sm:$0xf] %v1034
        %1067 = vst [vmem:[%s252 + $0x30] sm:$0xf] %v1035
        %1068 = vst [vmem:[%s252 + $0x34] sm:$0xf] %v1036
        %1069 = vst [vmem:[%s252 + $0x38] sm:$0xf] %v1037
        %1070 = vst [vmem:[%s252 + $0x3c] sm:$0xf] %v1038
        %1071 = vst [vmem:[%s252 + $0x40] sm:$0xf] %v1039
        %1072 = vst [vmem:[%s252 + $0x44] sm:$0xf] %v1040
        %1073 = vst [vmem:[%s252 + $0x48] sm:$0xf] %v1041
        %1074 = vst [vmem:[%s252 + $0x4c] sm:$0xf] %v1042
        %1075 = vst [vmem:[%s252 + $0x50] sm:$0xf] %v1043
        %1076 = vst [vmem:[%s252 + $0x54] sm:$0xf] %v1044
        %1077 = vst [vmem:[%s252 + $0x58] sm:$0xf] %v1045
        %1078 = vst [vmem:[%s252 + $0x5c] sm:$0xf] %v1046
        %1079 = vst [vmem:[%s252 + $0x60] sm:$0xf] %v1047
        %1080 = vst [vmem:[%s252 + $0x64] sm:$0xf] %v1048
        %1081 = vst [vmem:[%s252 + $0x68] sm:$0xf] %v1049
        %1082 = vst [vmem:[%s252 + $0x6c] sm:$0xf] %v1050
        %1083 = vst [vmem:[%s252 + $0x70] sm:$0xf] %v1051
        %1084 = vst [vmem:[%s252 + $0x74] sm:$0xf] %v1052
        %1085 = vst [vmem:[%s252 + $0x78] sm:$0xf] %v1053
        %1086 = vst [vmem:[%s252 + $0x7c] sm:$0xf] %v1054
      $region44: #{peft_rn_forward.11} parent=35 // pred_fallthru
        _
      %s1087 = smul.u32 32, %s19
      %p1088 = scmp.lt.s32.totalorder %s1087, 63
      %s1089 = scalar_select %p1088, %s1087, 63
      %s1090 = smul.addr %s1089, 4
      %s1091 = scalar_lea.vmem %s4, %s1090
      // Predicated region
      $region45: #{peft_rn_forward.11} parent=35 // pred_check
        %p1092 = pneg %p141
      $region46: #{peft_rn_forward.11} parent=35 // pred_check_branch
        %1094 = sbr.rel (%p1092) target = $region48
      $region47: #{peft_rn_forward.11} parent=35 // pred_region
        %s1095 = smul.u32 32, %s19
      $region48: #{peft_rn_forward.11} parent=35 // pred_fallthru
        _
    $region36: #{peft_rn_forward.11} parent=5 // pred_fallthru
      _
    %p1096 = scmp.le.s32.totalorder 2, %s10
    // Predicated region
    $region49: #{peft_rn_forward.11} parent=5 // pred_check
      %p1097 = pneg %p1096
    $region50: #{peft_rn_forward.11} parent=5 // pred_check_branch
      %1099 = sbr.rel (%p1097) target = $region52
    $region51: #{peft_rn_forward.11} parent=5 // pred_region
      %s1100 = ssub.s32 %s10, 2
      // Predicated region
      $region53: #{peft_rn_forward.11} parent=51 // pred_check
        %p1101 = pneg %p147
      $region54: #{peft_rn_forward.11} parent=51 // pred_check_branch
        %1103 = sbr.rel (%p1101) target = $region56
      $region55: #{peft_rn_forward.11} parent=51 // pred_region
        %s1104 = smul.u32 32, %s21
        %p1105 = scmp.lt.s32.totalorder %s1104, 63
        %s1106 = scalar_select %p1105, %s1104, 63
        %s1107 = smul.addr %s1106, 4
        %s1108 = scalar_lea.vmem %s4, %s1107
      $region56: #{peft_rn_forward.11} parent=51 // pred_fallthru
        _
    $region52: #{peft_rn_forward.11} parent=5 // pred_fallthru
      _
  $region6: #{peft_rn_forward.11} parent=0 // loop_footer
    %s14 = sadd.s32 1, %s10
  $region7: #{peft_rn_forward.11} parent=0 // loop_footer_branch
    %9 = sbr.rel target = $region3
  $region8: #{peft_rn_forward.11} parent=0 // loop_exit
    _

// kernel: peft_rn_forward.15
$region0: #{peft_rn_forward.15}
  #allocation0 [shape = 'u32[]', space=smem, size = 0x4, offset = 0x4, fixed_abs, tag = 'smem constant byte address 0x4 - core index']
  #allocation1 [shape = 'u32[72,128]{1,0:T(1,128)}', space=vmem, size = 0x9000, scoped, tag = 'internal scratch']
  #allocation2 [shape = 'f32[64,128]{1,0:T(8,128)}', space=vmem, size = 0x8000, scoped, tag = 'scratch operand']
  %s0 = inlined_call_operand.vmem [shape: bf16[128,128], index: 0, kind: input, shape index: {}]
  %s1 = inlined_call_operand.vmem [shape: bf16[128,128], index: 1, kind: input, shape index: {}]
  %s2 = inlined_call_operand.vmem [shape: f32[1,128], index: 2, kind: input, shape index: {}]
  %s3 = inlined_call_operand.vmem [shape: f32[1,128], index: 3, kind: input, shape index: {}]
  %s4 = inlined_call_operand.vmem [shape: bf16[128,128], index: 4, kind: output, shape index: {}]
  %s5 = sld [smem:[#allocation0]]
  $region57: #{peft_rn_forward.15} parent=0
    _
  %s7 = ssub.s32 1, %s5
  %s8 = scalar_select 0, %s7, %s5
  loop: start=0, step=1, limit=4
  $region2: #{peft_rn_forward.15} parent=0 // loop_pre_header
    _
  $region3: #{peft_rn_forward.15} parent=0 // loop_header
    %s10 = sphi 0, %s14
    %p11 = scmp.ge.s32.totalorder %s10, 4
    %s17 = sphi 0, %s29
    %s18 = sphi 0, %s25
    %s19 = sphi 0, %s17
    %s20 = sphi 0, %s18
    %s21 = sphi 0, %s19
    %s22 = sphi 0, %s20
    %s34 = sphi 0, %s36
    %s37 = sphi 0, %s34
    %s38 = sphi 0, %s37
    %s54 = sphi 0, %s38
    %s60 = sphi 0, %s62
    %s63 = sphi 0, %s60
    %s64 = sphi 0, %s63
    %s80 = sphi 0, %s64
    %s84 = sphi 0, %s84
    %s86 = sphi 0, %s84
    %s87 = sphi 0, %s86
    %s101 = sphi 0, %s87
    %s105 = sphi 0, %s105
    %s107 = sphi 0, %s105
    %s108 = sphi 0, %s107
    %s122 = sphi 0, %s108
    %s128 = sphi 0, %s130
    %s131 = sphi 0, %s128
    %s132 = sphi 0, %s131
    %s148 = sphi 0, %s132
  $region4: #{peft_rn_forward.15} parent=0 // loop_header_branch
    %13 = sbr.rel (%p11) target = $region8
  $region5: #{peft_rn_forward.15} parent=0 // loop_body
    %s15 = ssub.s32 %s10, 1
    %s16 = ssub.s32 %s10, 2
    %s23 = sadd.s32 1, %s18
    %p24 = scmp.ge.s32.totalorder %s23, 1
    %s25 = scalar_select %p24, 0, %s23
    %s26 = sadd.s32 1, %s17
    %s27 = scalar_select %p24, %s26, %s17
    %p28 = scmp.ge.s32.totalorder %s27, 2
    %s29 = scalar_select %p28, 0, %s27
    %s30 = ssub.s32 %s17, %s29
    %s31 = ssub.s32 %s18, %s25
    %s32 = sor.u32 %s30, %s31
    %p33 = scmp.eq.s32.totalorder %s32, 0
    %s35 = sadd.s32 %s34, 1
    %s36 = scalar_select %p33, %s34, %s35
    %p39 = pneg %p33
    %p40 = scmp.eq.s32.totalorder %s10, 1
    %p41 = por %p39, %p40
    %p42 = scmp.ne.s32.totalorder %s34, %s37
    %p43 = scmp.eq.s32.totalorder %s10, 0
    %p44 = por %p42, %p43
    %p45 = scmp.ne.s32.totalorder %s34, %s37
    %p46 = scmp.eq.s32.totalorder %s15, 1
    %p47 = por %p45, %p46
    %p48 = scmp.ne.s32.totalorder %s37, %s38
    %p49 = scmp.eq.s32.totalorder %s15, 0
    %p50 = por %p48, %p49
    %p51 = scmp.ne.s32.totalorder %s37, %s38
    %p52 = scmp.eq.s32.totalorder %s16, 1
    %p53 = por %p51, %p52
    %p55 = scmp.ne.s32.totalorder %s38, %s54
    %p56 = scmp.eq.s32.totalorder %s16, 0
    %p57 = por %p55, %p56
    %s58 = ssub.s32 %s18, %s25
    %p59 = scmp.eq.s32.totalorder %s58, 0
    %s61 = sadd.s32 %s60, 1
    %s62 = scalar_select %p59, %s60, %s61
    %p65 = pneg %p59
    %p66 = scmp.eq.s32.totalorder %s10, 1
    %p67 = por %p65, %p66
    %p68 = scmp.ne.s32.totalorder %s60, %s63
    %p69 = scmp.eq.s32.totalorder %s10, 0
    %p70 = por %p68, %p69
    %p71 = scmp.ne.s32.totalorder %s60, %s63
    %p72 = scmp.eq.s32.totalorder %s15, 1
    %p73 = por %p71, %p72
    %p74 = scmp.ne.s32.totalorder %s63, %s64
    %p75 = scmp.eq.s32.totalorder %s15, 0
    %p76 = por %p74, %p75
    %p77 = scmp.ne.s32.totalorder %s63, %s64
    %p78 = scmp.eq.s32.totalorder %s16, 1
    %p79 = por %p77, %p78
    %p81 = scmp.ne.s32.totalorder %s64, %s80
    %p82 = scmp.eq.s32.totalorder %s16, 0
    %p83 = por %p81, %p82
    %s85 = sadd.s32 %s84, 1
    %p88 = scmp.eq.s32.totalorder %s10, 1
    %p89 = scmp.ne.s32.totalorder %s84, %s86
    %p90 = scmp.eq.s32.totalorder %s10, 0
    %p91 = por %p89, %p90
    %p92 = scmp.ne.s32.totalorder %s84, %s86
    %p93 = scmp.eq.s32.totalorder %s15, 1
    %p94 = por %p92, %p93
    %p95 = scmp.ne.s32.totalorder %s86, %s87
    %p96 = scmp.eq.s32.totalorder %s15, 0
    %p97 = por %p95, %p96
    %p98 = scmp.ne.s32.totalorder %s86, %s87
    %p99 = scmp.eq.s32.totalorder %s16, 1
    %p100 = por %p98, %p99
    %p102 = scmp.ne.s32.totalorder %s87, %s101
    %p103 = scmp.eq.s32.totalorder %s16, 0
    %p104 = por %p102, %p103
    %s106 = sadd.s32 %s105, 1
    %p109 = scmp.eq.s32.totalorder %s10, 1
    %p110 = scmp.ne.s32.totalorder %s105, %s107
    %p111 = scmp.eq.s32.totalorder %s10, 0
    %p112 = por %p110, %p111
    %p113 = scmp.ne.s32.totalorder %s105, %s107
    %p114 = scmp.eq.s32.totalorder %s15, 1
    %p115 = por %p113, %p114
    %p116 = scmp.ne.s32.totalorder %s107, %s108
    %p117 = scmp.eq.s32.totalorder %s15, 0
    %p118 = por %p116, %p117
    %p119 = scmp.ne.s32.totalorder %s107, %s108
    %p120 = scmp.eq.s32.totalorder %s16, 1
    %p121 = por %p119, %p120
    %p123 = scmp.ne.s32.totalorder %s108, %s122
    %p124 = scmp.eq.s32.totalorder %s16, 0
    %p125 = por %p123, %p124
    %s126 = ssub.s32 %s17, %s29
    %p127 = scmp.eq.s32.totalorder %s126, 0
    %s129 = sadd.s32 %s128, 1
    %s130 = scalar_select %p127, %s128, %s129
    %p133 = pneg %p127
    %p134 = scmp.eq.s32.totalorder %s10, 1
    %p135 = por %p133, %p134
    %p136 = scmp.ne.s32.totalorder %s128, %s131
    %p137 = scmp.eq.s32.totalorder %s10, 0
    %p138 = por %p136, %p137
    %p139 = scmp.ne.s32.totalorder %s128, %s131
    %p140 = scmp.eq.s32.totalorder %s15, 1
    %p141 = por %p139, %p140
    %p142 = scmp.ne.s32.totalorder %s131, %s132
    %p143 = scmp.eq.s32.totalorder %s15, 0
    %p144 = por %p142, %p143
    %p145 = scmp.ne.s32.totalorder %s131, %s132
    %p146 = scmp.eq.s32.totalorder %s16, 1
    %p147 = por %p145, %p146
    %p149 = scmp.ne.s32.totalorder %s132, %s148
    %p150 = scmp.eq.s32.totalorder %s16, 0
    %p151 = por %p149, %p150
    %p152 = scmp.le.s32.totalorder 1, %s10
    %p153 = scmp.lt.s32.totalorder %s10, 3
    %p154 = pnand %p152, %p153
    %p155 = pneg %p154
    // Predicated region
    $region9: #{peft_rn_forward.15} parent=5 // pred_check
      _
    $region10: #{peft_rn_forward.15} parent=5 // pred_check_branch
      %157 = sbr.rel (%p154) target = $region12
    $region11: #{peft_rn_forward.15} parent=5 // pred_region
      %s158 = ssub.s32 %s10, 1
      // Predicated region
      $region13: #{peft_rn_forward.15} parent=11 // pred_check
        %p159 = pneg %p76
      $region14: #{peft_rn_forward.15} parent=11 // pred_check_branch
        %161 = sbr.rel (%p159) target = $region16
      $region15: #{peft_rn_forward.15} parent=11 // pred_region
        %s162 = smul.u32 16, %s20
        %p163 = scmp.lt.s32.totalorder %s162, 15
        %s164 = scalar_select %p163, %s162, 15
        %s165 = smul.addr %s164, 4
        %s166 = scalar_lea.vmem %s1, %s165
        %s167 = smul.u32 16, %s20
      $region16: #{peft_rn_forward.15} parent=11 // pred_fallthru
        _
      // Predicated region
      $region17: #{peft_rn_forward.15} parent=11 // pred_check
        %p168 = pneg %p97
      $region18: #{peft_rn_forward.15} parent=11 // pred_check_branch
        %170 = sbr.rel (%p168) target = $region20
      $region19: #{peft_rn_forward.15} parent=11 // pred_region
        _
      $region20: #{peft_rn_forward.15} parent=11 // pred_fallthru
        _
      // Predicated region
      $region21: #{peft_rn_forward.15} parent=11 // pred_check
        %p171 = pneg %p118
      $region22: #{peft_rn_forward.15} parent=11 // pred_check_branch
        %173 = sbr.rel (%p171) target = $region24
      $region23: #{peft_rn_forward.15} parent=11 // pred_region
        _
      $region24: #{peft_rn_forward.15} parent=11 // pred_fallthru
        _
    $region12: #{peft_rn_forward.15} parent=5 // pred_fallthru
      _
    %p174 = scmp.lt.s32.totalorder %s10, 2
    // Predicated region
    $region25: #{peft_rn_forward.15} parent=5 // pred_check
      %p175 = pneg %p174
    $region26: #{peft_rn_forward.15} parent=5 // pred_check_branch
      %177 = sbr.rel (%p175) target = $region28
    $region27: #{peft_rn_forward.15} parent=5 // pred_region
      // Predicated region
      $region29: #{peft_rn_forward.15} parent=27 // pred_check
        %p178 = pneg %p44
      $region30: #{peft_rn_forward.15} parent=27 // pred_check_branch
        %180 = sbr.rel (%p178) target = $region32
      $region31: #{peft_rn_forward.15} parent=27 // pred_region
        %s181 = smul.u32 8, %s17
        %p182 = scmp.lt.s32.totalorder %s181, 15
        %s183 = scalar_select %p182, %s181, 15
        %p184 = scmp.lt.s32.totalorder %s18, 0
        %s185 = scalar_select %p184, %s18, 0
        %s186 = sadd.s32 %s185, %s183
        %s187 = smul.addr %s186, 4
        %s188 = scalar_lea.vmem %s0, %s187
        %s189 = smul.u32 8, %s17
      $region32: #{peft_rn_forward.15} parent=27 // pred_fallthru
        _
    $region28: #{peft_rn_forward.15} parent=5 // pred_fallthru
      _
    %p190 = scmp.le.s32.totalorder 1, %s10
    %p191 = scmp.lt.s32.totalorder %s10, 3
    %p192 = pnand %p190, %p191
    %p193 = pneg %p192
    // Predicated region
    $region33: #{peft_rn_forward.15} parent=5 // pred_check
      _
    $region34: #{peft_rn_forward.15} parent=5 // pred_check_branch
      %195 = sbr.rel (%p192) target = $region36
    $region35: #{peft_rn_forward.15} parent=5 // pred_region
      %s196 = ssub.s32 %s10, 1
      %s197 = smul.u32 8, %s19
      %p198 = scmp.lt.s32.totalorder %s197, 15
      %s199 = scalar_select %p198, %s197, 15
      %p200 = scmp.lt.s32.totalorder %s20, 0
      %s201 = scalar_select %p200, %s20, 0
      %s202 = sadd.s32 %s201, %s199
      %s203 = smul.addr %s202, 4
      %s204 = scalar_lea.vmem %s0, %s203
      %p205 = pneg %p50
      %p206 = pneg %p47
      %s207 = smul.u32 16, %s20
      %p208 = scmp.lt.s32.totalorder %s207, 15
      %s209 = scalar_select %p208, %s207, 15
      %s210 = smul.addr %s209, 4
      %s211 = scalar_lea.vmem %s1, %s210
      %p212 = pneg %p76
      %p213 = pneg %p73
      %p214 = pneg %p97
      %p215 = pneg %p94
      %p216 = pneg %p118
      %p217 = pneg %p115
      %p218 = pneg %p144
      %p219 = pneg %p141
      %s220 = smul.u32 8, %s19
      %p221 = scmp.lt.s32.totalorder %s220, 15
      %s222 = scalar_select %p221, %s220, 15
      %s223 = smul.addr %s222, 4
      %s224 = scalar_lea.vmem %s4, %s223
      %s225 = smul.u32 8, %s19
      %p226 = scmp.lt.s32.totalorder %s225, 15
      %s227 = scalar_select %p226, %s225, 15
      %p228 = scmp.lt.s32.totalorder %s20, 0
      %s229 = scalar_select %p228, %s20, 0
      %s230 = sadd.s32 %s229, %s227
      %s231 = smul.addr %s230, 4
      %s232 = scalar_lea.vmem %s0, %s231
      %s233 = smul.u32 8, %s19
      %s234 = smul.u32 16, %s20
      %p235 = scmp.lt.s32.totalorder %s234, 15
      %s236 = scalar_select %p235, %s234, 15
      %s237 = smul.addr %s236, 4
      %s238 = scalar_lea.vmem %s1, %s237
      %s239 = smul.u32 16, %s20
      %s240 = smul.u32 8, %s19
      %p241 = scmp.lt.s32.totalorder %s240, 15
      %s242 = scalar_select %p241, %s240, 15
      %s243 = smul.addr %s242, 4
      %s244 = scalar_lea.vmem %s4, %s243
      %s245 = smul.u32 8, %s19
      %p246 = scmp.eq.s32.totalorder %s20, 0
      // Predicated region
      $region37: #{peft_rn_forward.15} parent=35 // pred_check
        %p247 = pneg %p246
      $region38: #{peft_rn_forward.15} parent=35 // pred_check_branch
        %249 = sbr.rel (%p247) target = $region40
      $region39: #{peft_rn_forward.15} parent=35 // pred_region
        %250 = vst [vmem:[#allocation2] sm:$0xff] 0.0
        %251 = vst [vmem:[#allocation2 + $0x8] sm:$0xff] 0.0
        %252 = vst [vmem:[#allocation2 + $0x10] sm:$0xff] 0.0
        %253 = vst [vmem:[#allocation2 + $0x18] sm:$0xff] 0.0
        %254 = vst [vmem:[#allocation2 + $0x20] sm:$0xff] 0.0
        %255 = vst [vmem:[#allocation2 + $0x28] sm:$0xff] 0.0
        %256 = vst [vmem:[#allocation2 + $0x30] sm:$0xff] 0.0
        %257 = vst [vmem:[#allocation2 + $0x38] sm:$0xff] 0.0
      $region40: #{peft_rn_forward.15} parent=35 // pred_fallthru
        _
      %v258 = vld [vmem:[#allocation2] sm:$0xff]
      %v259 = vld [vmem:[#allocation2 + $0x8] sm:$0xff]
      %v260 = vld [vmem:[#allocation2 + $0x10] sm:$0xff]
      %v261 = vld [vmem:[#allocation2 + $0x18] sm:$0xff]
      %v262 = vld [vmem:[#allocation2 + $0x20] sm:$0xff]
      %v263 = vld [vmem:[#allocation2 + $0x28] sm:$0xff]
      %v264 = vld [vmem:[#allocation2 + $0x30] sm:$0xff]
      %v265 = vld [vmem:[#allocation2 + $0x38] sm:$0xff]
      %v266 = vld [vmem:[%s232] sm:$0xf]
      %v267 = vld [vmem:[%s232 + $0x4] sm:$0xf]
      %v268 = vld [vmem:[%s232 + $0x8] sm:$0xf]
      %v269 = vld [vmem:[%s232 + $0xc] sm:$0xf]
      %v270 = vld [vmem:[%s232 + $0x10] sm:$0xf]
      %v271 = vld [vmem:[%s232 + $0x14] sm:$0xf]
      %v272 = vld [vmem:[%s232 + $0x18] sm:$0xf]
      %v273 = vld [vmem:[%s232 + $0x1c] sm:$0xf]
      %v274 = vld [vmem:[%s238] sm:$0xf]
      %v275 = vld [vmem:[%s238 + $0x4] sm:$0xf]
      %v276 = vld [vmem:[%s238 + $0x8] sm:$0xf]
      %v277 = vld [vmem:[%s238 + $0xc] sm:$0xf]
      %v278 = vld [vmem:[%s238 + $0x10] sm:$0xf]
      %v279 = vld [vmem:[%s238 + $0x14] sm:$0xf]
      %v280 = vld [vmem:[%s238 + $0x18] sm:$0xf]
      %v281 = vld [vmem:[%s238 + $0x1c] sm:$0xf]
      %v282 = vld [vmem:[%s238 + $0x20] sm:$0xf]
      %v283 = vld [vmem:[%s238 + $0x24] sm:$0xf]
      %v284 = vld [vmem:[%s238 + $0x28] sm:$0xf]
      %v285 = vld [vmem:[%s238 + $0x2c] sm:$0xf]
      %v286 = vld [vmem:[%s238 + $0x30] sm:$0xf]
      %v287 = vld [vmem:[%s238 + $0x34] sm:$0xf]
      %v288 = vld [vmem:[%s238 + $0x38] sm:$0xf]
      %v289 = vld [vmem:[%s238 + $0x3c] sm:$0xf]
      %v298 = vunpack.c.l.b16 %v266
      %v299 = vunpack.c.l.b16 %v267
      %v300 = vunpack.c.l.b16 %v268
      %v301 = vunpack.c.l.b16 %v269
      %v302 = vunpack.c.l.b16 %v270
      %v303 = vunpack.c.l.b16 %v271
      %v304 = vunpack.c.l.b16 %v272
      %v305 = vunpack.c.l.b16 %v273
      %v306 = vpack.c.b16 %v299, %v298
      %v307 = vpack.c.b16 %v301, %v300
      %v308 = vpack.c.b16 %v303, %v302
      %v309 = vpack.c.b16 %v305, %v304
      %v330 = vunpack.c.l.b16 %v274
      %v331 = vunpack.c.l.b16 %v275
      %v332 = vunpack.c.l.b16 %v276
      %v333 = vunpack.c.l.b16 %v277
      %v334 = vunpack.c.l.b16 %v278
      %v335 = vunpack.c.l.b16 %v279
      %v336 = vunpack.c.l.b16 %v280
      %v337 = vunpack.c.l.b16 %v281
      %v338 = vunpack.c.l.b16 %v282
      %v339 = vunpack.c.l.b16 %v283
      %v340 = vunpack.c.l.b16 %v284
      %v341 = vunpack.c.l.b16 %v285
      %v342 = vunpack.c.l.b16 %v286
      %v343 = vunpack.c.l.b16 %v287
      %v344 = vunpack.c.l.b16 %v288
      %v345 = vunpack.c.l.b16 %v289
      %v346 = vpack.c.b16 %v331, %v330
      %v347 = vpack.c.b16 %v333, %v332
      %v348 = vpack.c.b16 %v335, %v334
      %v349 = vpack.c.b16 %v337, %v336
      %v350 = vpack.c.b16 %v339, %v338
      %v351 = vpack.c.b16 %v341, %v340
      %v352 = vpack.c.b16 %v343, %v342
      %v353 = vpack.c.b16 %v345, %v344
      %362 = vmatpush.bf16.msra.mxu0 %v353
      %363 = vmatpush.bf16.msra.mxu0 %v352
      %364 = vmatpush.bf16.msra.mxu0 %v351
      %365 = vmatpush.bf16.msra.mxu0 %v350
      %366 = vmatpush.bf16.msra.mxu0 %v349
      %367 = vmatpush.bf16.msra.mxu0 %v348
      %368 = vmatpush.bf16.msra.mxu0 %v347
      %369 = vmatpush.bf16.msra.mxu0 %v346
      %370 = vmatmul.bf16.gmra.mxu0 %v306
      %v371 = vpop.f32.mrf.mxu0
      %v372 = vadd.f32 0.0, %v371
      %v373 = vpop.f32.mrf.mxu0
      %v374 = vadd.f32 0.0, %v373
      %375 = vmatmul.bf16.gmra.mxu0 %v307
      %v376 = vpop.f32.mrf.mxu0
      %v377 = vadd.f32 0.0, %v376
      %v378 = vpop.f32.mrf.mxu0
      %v379 = vadd.f32 0.0, %v378
      %380 = vmatmul.bf16.gmra.mxu0 %v308
      %v381 = vpop.f32.mrf.mxu0
      %v382 = vadd.f32 0.0, %v381
      %v383 = vpop.f32.mrf.mxu0
      %v384 = vadd.f32 0.0, %v383
      %385 = vmatmul.bf16.gmra.mxu0 %v309
      %v386 = vpop.f32.mrf.mxu0
      %v387 = vadd.f32 0.0, %v386
      %v388 = vpop.f32.mrf.mxu0
      %v389 = vadd.f32 0.0, %v388
      %390 = vdwg.mxu0
      %v391 = vadd.f32 %v258, %v372
      %v392 = vadd.f32 %v259, %v374
      %v393 = vadd.f32 %v260, %v377
      %v394 = vadd.f32 %v261, %v379
      %v395 = vadd.f32 %v262, %v382
      %v396 = vadd.f32 %v263, %v384
      %v397 = vadd.f32 %v264, %v387
      %v398 = vadd.f32 %v265, %v389
      %399 = vst [vmem:[#allocation2] sm:$0xff] %v391
      %400 = vst [vmem:[#allocation2 + $0x8] sm:$0xff] %v392
      %401 = vst [vmem:[#allocation2 + $0x10] sm:$0xff] %v393
      %402 = vst [vmem:[#allocation2 + $0x18] sm:$0xff] %v394
      %403 = vst [vmem:[#allocation2 + $0x20] sm:$0xff] %v395
      %404 = vst [vmem:[#allocation2 + $0x28] sm:$0xff] %v396
      %405 = vst [vmem:[#allocation2 + $0x30] sm:$0xff] %v397
      %406 = vst [vmem:[#allocation2 + $0x38] sm:$0xff] %v398
      // Predicated region
      $region41: #{peft_rn_forward.15} parent=35 // pred_check
        %p407 = pneg %p246
      $region42: #{peft_rn_forward.15} parent=35 // pred_check_branch
        %409 = sbr.rel (%p407) target = $region44
      $region43: #{peft_rn_forward.15} parent=35 // pred_region
        %v410 = vld [vmem:[#allocation2] sm:$0xff]
        %v411 = vld [vmem:[#allocation2 + $0x8] sm:$0xff]
        %v412 = vld [vmem:[#allocation2 + $0x10] sm:$0xff]
        %v413 = vld [vmem:[#allocation2 + $0x18] sm:$0xff]
        %v414 = vld [vmem:[#allocation2 + $0x20] sm:$0xff]
        %v415 = vld [vmem:[#allocation2 + $0x28] sm:$0xff]
        %v416 = vld [vmem:[#allocation2 + $0x30] sm:$0xff]
        %v417 = vld [vmem:[#allocation2 + $0x38] sm:$0xff]
        %v418 = vld [vmem:[%s2] sm:$0x1]
        %v420 = vperm.slane %v418, 0
        %v422 = vmul.f32 %v410, %v420
        %v423 = vmul.f32 %v411, %v420
        %v424 = vmul.f32 %v412, %v420
        %v425 = vmul.f32 %v413, %v420
        %v426 = vmul.f32 %v414, %v420
        %v427 = vmul.f32 %v415, %v420
        %v428 = vmul.f32 %v416, %v420
        %v429 = vmul.f32 %v417, %v420
        %v430 = vld [vmem:[%s3] sm:$0x1]
        %v432 = vperm.slane %v430, 0
        %v434 = vadd.f32 %v422, %v432
        %v435 = vadd.f32 %v423, %v432
        %v436 = vadd.f32 %v424, %v432
        %v437 = vadd.f32 %v425, %v432
        %v438 = vadd.f32 %v426, %v432
        %v439 = vadd.f32 %v427, %v432
        %v440 = vadd.f32 %v428, %v432
        %v441 = vadd.f32 %v429, %v432
        %v442 = vpack.c.bf16 %v434, %v434
        %v443 = vpack.c.bf16 %v435, %v435
        %v444 = vpack.c.bf16 %v436, %v436
        %v445 = vpack.c.bf16 %v437, %v437
        %v446 = vpack.c.bf16 %v438, %v438
        %v447 = vpack.c.bf16 %v439, %v439
        %v448 = vpack.c.bf16 %v440, %v440
        %v449 = vpack.c.bf16 %v441, %v441
        %450 = vst [vmem:[%s244] sm:$0xf] %v442
        %451 = vst [vmem:[%s244 + $0x4] sm:$0xf] %v443
        %452 = vst [vmem:[%s244 + $0x8] sm:$0xf] %v444
        %453 = vst [vmem:[%s244 + $0xc] sm:$0xf] %v445
        %454 = vst [vmem:[%s244 + $0x10] sm:$0xf] %v446
        %455 = vst [vmem:[%s244 + $0x14] sm:$0xf] %v447
        %456 = vst [vmem:[%s244 + $0x18] sm:$0xf] %v448
        %457 = vst [vmem:[%s244 + $0x1c] sm:$0xf] %v449
      $region44: #{peft_rn_forward.15} parent=35 // pred_fallthru
        _
      %s458 = smul.u32 8, %s19
      %p459 = scmp.lt.s32.totalorder %s458, 15
      %s460 = scalar_select %p459, %s458, 15
      %s461 = smul.addr %s460, 4
      %s462 = scalar_lea.vmem %s4, %s461
      // Predicated region
      $region45: #{peft_rn_forward.15} parent=35 // pred_check
        %p463 = pneg %p141
      $region46: #{peft_rn_forward.15} parent=35 // pred_check_branch
        %465 = sbr.rel (%p463) target = $region48
      $region47: #{peft_rn_forward.15} parent=35 // pred_region
        %s466 = smul.u32 8, %s19
      $region48: #{peft_rn_forward.15} parent=35 // pred_fallthru
        _
    $region36: #{peft_rn_forward.15} parent=5 // pred_fallthru
      _
    %p467 = scmp.le.s32.totalorder 2, %s10
    // Predicated region
    $region49: #{peft_rn_forward.15} parent=5 // pred_check
      %p468 = pneg %p467
    $region50: #{peft_rn_forward.15} parent=5 // pred_check_branch
      %470 = sbr.rel (%p468) target = $region52
    $region51: #{peft_rn_forward.15} parent=5 // pred_region
      %s471 = ssub.s32 %s10, 2
      // Predicated region
      $region53: #{peft_rn_forward.15} parent=51 // pred_check
        %p472 = pneg %p147
      $region54: #{peft_rn_forward.15} parent=51 // pred_check_branch
        %474 = sbr.rel (%p472) target = $region56
      $region55: #{peft_rn_forward.15} parent=51 // pred_region
        %s475 = smul.u32 8, %s21
        %p476 = scmp.lt.s32.totalorder %s475, 15
        %s477 = scalar_select %p476, %s475, 15
        %s478 = smul.addr %s477, 4
        %s479 = scalar_lea.vmem %s4, %s478
      $region56: #{peft_rn_forward.15} parent=51 // pred_fallthru
        _
    $region52: #{peft_rn_forward.15} parent=5 // pred_fallthru
      _
  $region6: #{peft_rn_forward.15} parent=0 // loop_footer
    %s14 = sadd.s32 1, %s10
  $region7: #{peft_rn_forward.15} parent=0 // loop_footer_branch
    %9 = sbr.rel target = $region3
  $region8: #{peft_rn_forward.15} parent=0 // loop_exit
    _

// kernel: peft_rn_forward.16
$region0: #{peft_rn_forward.16}
  #allocation0 [shape = 'u32[]', space=smem, size = 0x4, offset = 0x4, fixed_abs, tag = 'smem constant byte address 0x4 - core index']
  #allocation1 [shape = 'u32[72,128]{1,0:T(1,128)}', space=vmem, size = 0x9000, scoped, tag = 'internal scratch']
  #allocation2 [shape = 'f32[64,128]{1,0:T(8,128)}', space=vmem, size = 0x8000, scoped, tag = 'scratch operand']
  %s0 = inlined_call_operand.vmem [shape: bf16[128,128], index: 0, kind: input, shape index: {}]
  %s1 = inlined_call_operand.vmem [shape: bf16[128,128], index: 1, kind: input, shape index: {}]
  %s2 = inlined_call_operand.vmem [shape: f32[1,128], index: 2, kind: input, shape index: {}]
  %s3 = inlined_call_operand.vmem [shape: f32[1,128], index: 3, kind: input, shape index: {}]
  %s4 = inlined_call_operand.vmem [shape: bf16[128,128], index: 4, kind: input, shape index: {}]
  %s5 = inlined_call_operand.vmem [shape: bf16[128,128], index: 5, kind: output, shape index: {}]
  %s6 = sld [smem:[#allocation0]]
  $region61: #{peft_rn_forward.16} parent=0
    _
  %s8 = ssub.s32 1, %s6
  %s9 = scalar_select 0, %s8, %s6
  loop: start=0, step=1, limit=4
  $region2: #{peft_rn_forward.16} parent=0 // loop_pre_header
    _
  $region3: #{peft_rn_forward.16} parent=0 // loop_header
    %s11 = sphi 0, %s15
    %p12 = scmp.ge.s32.totalorder %s11, 4
    %s18 = sphi 0, %s30
    %s19 = sphi 0, %s26
    %s20 = sphi 0, %s18
    %s21 = sphi 0, %s19
    %s22 = sphi 0, %s20
    %s23 = sphi 0, %s21
    %s35 = sphi 0, %s37
    %s38 = sphi 0, %s35
    %s39 = sphi 0, %s38
    %s55 = sphi 0, %s39
    %s61 = sphi 0, %s63
    %s64 = sphi 0, %s61
    %s65 = sphi 0, %s64
    %s81 = sphi 0, %s65
    %s85 = sphi 0, %s85
    %s87 = sphi 0, %s85
    %s88 = sphi 0, %s87
    %s102 = sphi 0, %s88
    %s106 = sphi 0, %s106
    %s108 = sphi 0, %s106
    %s109 = sphi 0, %s108
    %s123 = sphi 0, %s109
    %s129 = sphi 0, %s131
    %s132 = sphi 0, %s129
    %s133 = sphi 0, %s132
    %s149 = sphi 0, %s133
    %s155 = sphi 0, %s157
    %s158 = sphi 0, %s155
    %s159 = sphi 0, %s158
    %s175 = sphi 0, %s159
  $region4: #{peft_rn_forward.16} parent=0 // loop_header_branch
    %14 = sbr.rel (%p12) target = $region8
  $region5: #{peft_rn_forward.16} parent=0 // loop_body
    %s16 = ssub.s32 %s11, 1
    %s17 = ssub.s32 %s11, 2
    %s24 = sadd.s32 1, %s19
    %p25 = scmp.ge.s32.totalorder %s24, 1
    %s26 = scalar_select %p25, 0, %s24
    %s27 = sadd.s32 1, %s18
    %s28 = scalar_select %p25, %s27, %s18
    %p29 = scmp.ge.s32.totalorder %s28, 2
    %s30 = scalar_select %p29, 0, %s28
    %s31 = ssub.s32 %s18, %s30
    %s32 = ssub.s32 %s19, %s26
    %s33 = sor.u32 %s31, %s32
    %p34 = scmp.eq.s32.totalorder %s33, 0
    %s36 = sadd.s32 %s35, 1
    %s37 = scalar_select %p34, %s35, %s36
    %p40 = pneg %p34
    %p41 = scmp.eq.s32.totalorder %s11, 1
    %p42 = por %p40, %p41
    %p43 = scmp.ne.s32.totalorder %s35, %s38
    %p44 = scmp.eq.s32.totalorder %s11, 0
    %p45 = por %p43, %p44
    %p46 = scmp.ne.s32.totalorder %s35, %s38
    %p47 = scmp.eq.s32.totalorder %s16, 1
    %p48 = por %p46, %p47
    %p49 = scmp.ne.s32.totalorder %s38, %s39
    %p50 = scmp.eq.s32.totalorder %s16, 0
    %p51 = por %p49, %p50
    %p52 = scmp.ne.s32.totalorder %s38, %s39
    %p53 = scmp.eq.s32.totalorder %s17, 1
    %p54 = por %p52, %p53
    %p56 = scmp.ne.s32.totalorder %s39, %s55
    %p57 = scmp.eq.s32.totalorder %s17, 0
    %p58 = por %p56, %p57
    %s59 = ssub.s32 %s19, %s26
    %p60 = scmp.eq.s32.totalorder %s59, 0
    %s62 = sadd.s32 %s61, 1
    %s63 = scalar_select %p60, %s61, %s62
    %p66 = pneg %p60
    %p67 = scmp.eq.s32.totalorder %s11, 1
    %p68 = por %p66, %p67
    %p69 = scmp.ne.s32.totalorder %s61, %s64
    %p70 = scmp.eq.s32.totalorder %s11, 0
    %p71 = por %p69, %p70
    %p72 = scmp.ne.s32.totalorder %s61, %s64
    %p73 = scmp.eq.s32.totalorder %s16, 1
    %p74 = por %p72, %p73
    %p75 = scmp.ne.s32.totalorder %s64, %s65
    %p76 = scmp.eq.s32.totalorder %s16, 0
    %p77 = por %p75, %p76
    %p78 = scmp.ne.s32.totalorder %s64, %s65
    %p79 = scmp.eq.s32.totalorder %s17, 1
    %p80 = por %p78, %p79
    %p82 = scmp.ne.s32.totalorder %s65, %s81
    %p83 = scmp.eq.s32.totalorder %s17, 0
    %p84 = por %p82, %p83
    %s86 = sadd.s32 %s85, 1
    %p89 = scmp.eq.s32.totalorder %s11, 1
    %p90 = scmp.ne.s32.totalorder %s85, %s87
    %p91 = scmp.eq.s32.totalorder %s11, 0
    %p92 = por %p90, %p91
    %p93 = scmp.ne.s32.totalorder %s85, %s87
    %p94 = scmp.eq.s32.totalorder %s16, 1
    %p95 = por %p93, %p94
    %p96 = scmp.ne.s32.totalorder %s87, %s88
    %p97 = scmp.eq.s32.totalorder %s16, 0
    %p98 = por %p96, %p97
    %p99 = scmp.ne.s32.totalorder %s87, %s88
    %p100 = scmp.eq.s32.totalorder %s17, 1
    %p101 = por %p99, %p100
    %p103 = scmp.ne.s32.totalorder %s88, %s102
    %p104 = scmp.eq.s32.totalorder %s17, 0
    %p105 = por %p103, %p104
    %s107 = sadd.s32 %s106, 1
    %p110 = scmp.eq.s32.totalorder %s11, 1
    %p111 = scmp.ne.s32.totalorder %s106, %s108
    %p112 = scmp.eq.s32.totalorder %s11, 0
    %p113 = por %p111, %p112
    %p114 = scmp.ne.s32.totalorder %s106, %s108
    %p115 = scmp.eq.s32.totalorder %s16, 1
    %p116 = por %p114, %p115
    %p117 = scmp.ne.s32.totalorder %s108, %s109
    %p118 = scmp.eq.s32.totalorder %s16, 0
    %p119 = por %p117, %p118
    %p120 = scmp.ne.s32.totalorder %s108, %s109
    %p121 = scmp.eq.s32.totalorder %s17, 1
    %p122 = por %p120, %p121
    %p124 = scmp.ne.s32.totalorder %s109, %s123
    %p125 = scmp.eq.s32.totalorder %s17, 0
    %p126 = por %p124, %p125
    %s127 = ssub.s32 %s18, %s30
    %p128 = scmp.eq.s32.totalorder %s127, 0
    %s130 = sadd.s32 %s129, 1
    %s131 = scalar_select %p128, %s129, %s130
    %p134 = pneg %p128
    %p135 = scmp.eq.s32.totalorder %s11, 1
    %p136 = por %p134, %p135
    %p137 = scmp.ne.s32.totalorder %s129, %s132
    %p138 = scmp.eq.s32.totalorder %s11, 0
    %p139 = por %p137, %p138
    %p140 = scmp.ne.s32.totalorder %s129, %s132
    %p141 = scmp.eq.s32.totalorder %s16, 1
    %p142 = por %p140, %p141
    %p143 = scmp.ne.s32.totalorder %s132, %s133
    %p144 = scmp.eq.s32.totalorder %s16, 0
    %p145 = por %p143, %p144
    %p146 = scmp.ne.s32.totalorder %s132, %s133
    %p147 = scmp.eq.s32.totalorder %s17, 1
    %p148 = por %p146, %p147
    %p150 = scmp.ne.s32.totalorder %s133, %s149
    %p151 = scmp.eq.s32.totalorder %s17, 0
    %p152 = por %p150, %p151
    %s153 = ssub.s32 %s18, %s30
    %p154 = scmp.eq.s32.totalorder %s153, 0
    %s156 = sadd.s32 %s155, 1
    %s157 = scalar_select %p154, %s155, %s156
    %p160 = pneg %p154
    %p161 = scmp.eq.s32.totalorder %s11, 1
    %p162 = por %p160, %p161
    %p163 = scmp.ne.s32.totalorder %s155, %s158
    %p164 = scmp.eq.s32.totalorder %s11, 0
    %p165 = por %p163, %p164
    %p166 = scmp.ne.s32.totalorder %s155, %s158
    %p167 = scmp.eq.s32.totalorder %s16, 1
    %p168 = por %p166, %p167
    %p169 = scmp.ne.s32.totalorder %s158, %s159
    %p170 = scmp.eq.s32.totalorder %s16, 0
    %p171 = por %p169, %p170
    %p172 = scmp.ne.s32.totalorder %s158, %s159
    %p173 = scmp.eq.s32.totalorder %s17, 1
    %p174 = por %p172, %p173
    %p176 = scmp.ne.s32.totalorder %s159, %s175
    %p177 = scmp.eq.s32.totalorder %s17, 0
    %p178 = por %p176, %p177
    %p179 = scmp.le.s32.totalorder 1, %s11
    %p180 = scmp.lt.s32.totalorder %s11, 3
    %p181 = pnand %p179, %p180
    %p182 = pneg %p181
    // Predicated region
    $region9: #{peft_rn_forward.16} parent=5 // pred_check
      _
    $region10: #{peft_rn_forward.16} parent=5 // pred_check_branch
      %184 = sbr.rel (%p181) target = $region12
    $region11: #{peft_rn_forward.16} parent=5 // pred_region
      %s185 = ssub.s32 %s11, 1
      // Predicated region
      $region13: #{peft_rn_forward.16} parent=11 // pred_check
        %p186 = pneg %p77
      $region14: #{peft_rn_forward.16} parent=11 // pred_check_branch
        %188 = sbr.rel (%p186) target = $region16
      $region15: #{peft_rn_forward.16} parent=11 // pred_region
        %s189 = smul.u32 16, %s21
        %p190 = scmp.lt.s32.totalorder %s189, 15
        %s191 = scalar_select %p190, %s189, 15
        %s192 = smul.addr %s191, 4
        %s193 = scalar_lea.vmem %s1, %s192
        %s194 = smul.u32 16, %s21
      $region16: #{peft_rn_forward.16} parent=11 // pred_fallthru
        _
      // Predicated region
      $region17: #{peft_rn_forward.16} parent=11 // pred_check
        %p195 = pneg %p98
      $region18: #{peft_rn_forward.16} parent=11 // pred_check_branch
        %197 = sbr.rel (%p195) target = $region20
      $region19: #{peft_rn_forward.16} parent=11 // pred_region
        _
      $region20: #{peft_rn_forward.16} parent=11 // pred_fallthru
        _
      // Predicated region
      $region21: #{peft_rn_forward.16} parent=11 // pred_check
        %p198 = pneg %p119
      $region22: #{peft_rn_forward.16} parent=11 // pred_check_branch
        %200 = sbr.rel (%p198) target = $region24
      $region23: #{peft_rn_forward.16} parent=11 // pred_region
        _
      $region24: #{peft_rn_forward.16} parent=11 // pred_fallthru
        _
    $region12: #{peft_rn_forward.16} parent=5 // pred_fallthru
      _
    %p201 = scmp.lt.s32.totalorder %s11, 2
    // Predicated region
    $region25: #{peft_rn_forward.16} parent=5 // pred_check
      %p202 = pneg %p201
    $region26: #{peft_rn_forward.16} parent=5 // pred_check_branch
      %204 = sbr.rel (%p202) target = $region28
    $region27: #{peft_rn_forward.16} parent=5 // pred_region
      // Predicated region
      $region29: #{peft_rn_forward.16} parent=27 // pred_check
        %p205 = pneg %p45
      $region30: #{peft_rn_forward.16} parent=27 // pred_check_branch
        %207 = sbr.rel (%p205) target = $region32
      $region31: #{peft_rn_forward.16} parent=27 // pred_region
        %s208 = smul.u32 8, %s18
        %p209 = scmp.lt.s32.totalorder %s208, 15
        %s210 = scalar_select %p209, %s208, 15
        %p211 = scmp.lt.s32.totalorder %s19, 0
        %s212 = scalar_select %p211, %s19, 0
        %s213 = sadd.s32 %s212, %s210
        %s214 = smul.addr %s213, 4
        %s215 = scalar_lea.vmem %s0, %s214
        %s216 = smul.u32 8, %s18
      $region32: #{peft_rn_forward.16} parent=27 // pred_fallthru
        _
      // Predicated region
      $region33: #{peft_rn_forward.16} parent=27 // pred_check
        %p217 = pneg %p139
      $region34: #{peft_rn_forward.16} parent=27 // pred_check_branch
        %219 = sbr.rel (%p217) target = $region36
      $region35: #{peft_rn_forward.16} parent=27 // pred_region
        %s220 = smul.u32 8, %s18
        %p221 = scmp.lt.s32.totalorder %s220, 15
        %s222 = scalar_select %p221, %s220, 15
        %s223 = smul.addr %s222, 4
        %s224 = scalar_lea.vmem %s4, %s223
        %s225 = smul.u32 8, %s18
      $region36: #{peft_rn_forward.16} parent=27 // pred_fallthru
        _
    $region28: #{peft_rn_forward.16} parent=5 // pred_fallthru
      _
    %p226 = scmp.le.s32.totalorder 1, %s11
    %p227 = scmp.lt.s32.totalorder %s11, 3
    %p228 = pnand %p226, %p227
    %p229 = pneg %p228
    // Predicated region
    $region37: #{peft_rn_forward.16} parent=5 // pred_check
      _
    $region38: #{peft_rn_forward.16} parent=5 // pred_check_branch
      %231 = sbr.rel (%p228) target = $region40
    $region39: #{peft_rn_forward.16} parent=5 // pred_region
      %s232 = ssub.s32 %s11, 1
      %s233 = smul.u32 8, %s20
      %p234 = scmp.lt.s32.totalorder %s233, 15
      %s235 = scalar_select %p234, %s233, 15
      %p236 = scmp.lt.s32.totalorder %s21, 0
      %s237 = scalar_select %p236, %s21, 0
      %s238 = sadd.s32 %s237, %s235
      %s239 = smul.addr %s238, 4
      %s240 = scalar_lea.vmem %s0, %s239
      %p241 = pneg %p51
      %p242 = pneg %p48
      %s243 = smul.u32 16, %s21
      %p244 = scmp.lt.s32.totalorder %s243, 15
      %s245 = scalar_select %p244, %s243, 15
      %s246 = smul.addr %s245, 4
      %s247 = scalar_lea.vmem %s1, %s246
      %p248 = pneg %p77
      %p249 = pneg %p74
      %p250 = pneg %p98
      %p251 = pneg %p95
      %p252 = pneg %p119
      %p253 = pneg %p116
      %s254 = smul.u32 8, %s20
      %p255 = scmp.lt.s32.totalorder %s254, 15
      %s256 = scalar_select %p255, %s254, 15
      %s257 = smul.addr %s256, 4
      %s258 = scalar_lea.vmem %s4, %s257
      %p259 = pneg %p145
      %p260 = pneg %p142
      %p261 = pneg %p171
      %p262 = pneg %p168
      %s263 = smul.u32 8, %s20
      %p264 = scmp.lt.s32.totalorder %s263, 15
      %s265 = scalar_select %p264, %s263, 15
      %s266 = smul.addr %s265, 4
      %s267 = scalar_lea.vmem %s5, %s266
      %s268 = smul.u32 8, %s20
      %p269 = scmp.lt.s32.totalorder %s268, 15
      %s270 = scalar_select %p269, %s268, 15
      %p271 = scmp.lt.s32.totalorder %s21, 0
      %s272 = scalar_select %p271, %s21, 0
      %s273 = sadd.s32 %s272, %s270
      %s274 = smul.addr %s273, 4
      %s275 = scalar_lea.vmem %s0, %s274
      %s276 = smul.u32 8, %s20
      %s277 = smul.u32 16, %s21
      %p278 = scmp.lt.s32.totalorder %s277, 15
      %s279 = scalar_select %p278, %s277, 15
      %s280 = smul.addr %s279, 4
      %s281 = scalar_lea.vmem %s1, %s280
      %s282 = smul.u32 16, %s21
      %s283 = smul.u32 8, %s20
      %p284 = scmp.lt.s32.totalorder %s283, 15
      %s285 = scalar_select %p284, %s283, 15
      %s286 = smul.addr %s285, 4
      %s287 = scalar_lea.vmem %s4, %s286
      %s288 = smul.u32 8, %s20
      %s289 = smul.u32 8, %s20
      %p290 = scmp.lt.s32.totalorder %s289, 15
      %s291 = scalar_select %p290, %s289, 15
      %s292 = smul.addr %s291, 4
      %s293 = scalar_lea.vmem %s5, %s292
      %s294 = smul.u32 8, %s20
      %p295 = scmp.eq.s32.totalorder %s21, 0
      // Predicated region
      $region41: #{peft_rn_forward.16} parent=39 // pred_check
        %p296 = pneg %p295
      $region42: #{peft_rn_forward.16} parent=39 // pred_check_branch
        %298 = sbr.rel (%p296) target = $region44
      $region43: #{peft_rn_forward.16} parent=39 // pred_region
        %299 = vst [vmem:[#allocation2] sm:$0xff] 0.0
        %300 = vst [vmem:[#allocation2 + $0x8] sm:$0xff] 0.0
        %301 = vst [vmem:[#allocation2 + $0x10] sm:$0xff] 0.0
        %302 = vst [vmem:[#allocation2 + $0x18] sm:$0xff] 0.0
        %303 = vst [vmem:[#allocation2 + $0x20] sm:$0xff] 0.0
        %304 = vst [vmem:[#allocation2 + $0x28] sm:$0xff] 0.0
        %305 = vst [vmem:[#allocation2 + $0x30] sm:$0xff] 0.0
        %306 = vst [vmem:[#allocation2 + $0x38] sm:$0xff] 0.0
      $region44: #{peft_rn_forward.16} parent=39 // pred_fallthru
        _
      %v307 = vld [vmem:[#allocation2] sm:$0xff]
      %v308 = vld [vmem:[#allocation2 + $0x8] sm:$0xff]
      %v309 = vld [vmem:[#allocation2 + $0x10] sm:$0xff]
      %v310 = vld [vmem:[#allocation2 + $0x18] sm:$0xff]
      %v311 = vld [vmem:[#allocation2 + $0x20] sm:$0xff]
      %v312 = vld [vmem:[#allocation2 + $0x28] sm:$0xff]
      %v313 = vld [vmem:[#allocation2 + $0x30] sm:$0xff]
      %v314 = vld [vmem:[#allocation2 + $0x38] sm:$0xff]
      %v315 = vld [vmem:[%s275] sm:$0xf]
      %v316 = vld [vmem:[%s275 + $0x4] sm:$0xf]
      %v317 = vld [vmem:[%s275 + $0x8] sm:$0xf]
      %v318 = vld [vmem:[%s275 + $0xc] sm:$0xf]
      %v319 = vld [vmem:[%s275 + $0x10] sm:$0xf]
      %v320 = vld [vmem:[%s275 + $0x14] sm:$0xf]
      %v321 = vld [vmem:[%s275 + $0x18] sm:$0xf]
      %v322 = vld [vmem:[%s275 + $0x1c] sm:$0xf]
      %v323 = vld [vmem:[%s281] sm:$0xf]
      %v324 = vld [vmem:[%s281 + $0x4] sm:$0xf]
      %v325 = vld [vmem:[%s281 + $0x8] sm:$0xf]
      %v326 = vld [vmem:[%s281 + $0xc] sm:$0xf]
      %v327 = vld [vmem:[%s281 + $0x10] sm:$0xf]
      %v328 = vld [vmem:[%s281 + $0x14] sm:$0xf]
      %v329 = vld [vmem:[%s281 + $0x18] sm:$0xf]
      %v330 = vld [vmem:[%s281 + $0x1c] sm:$0xf]
      %v331 = vld [vmem:[%s281 + $0x20] sm:$0xf]
      %v332 = vld [vmem:[%s281 + $0x24] sm:$0xf]
      %v333 = vld [vmem:[%s281 + $0x28] sm:$0xf]
      %v334 = vld [vmem:[%s281 + $0x2c] sm:$0xf]
      %v335 = vld [vmem:[%s281 + $0x30] sm:$0xf]
      %v336 = vld [vmem:[%s281 + $0x34] sm:$0xf]
      %v337 = vld [vmem:[%s281 + $0x38] sm:$0xf]
      %v338 = vld [vmem:[%s281 + $0x3c] sm:$0xf]
      %v347 = vunpack.c.l.b16 %v315
      %v348 = vunpack.c.l.b16 %v316
      %v349 = vunpack.c.l.b16 %v317
      %v350 = vunpack.c.l.b16 %v318
      %v351 = vunpack.c.l.b16 %v319
      %v352 = vunpack.c.l.b16 %v320
      %v353 = vunpack.c.l.b16 %v321
      %v354 = vunpack.c.l.b16 %v322
      %v355 = vpack.c.b16 %v348, %v347
      %v356 = vpack.c.b16 %v350, %v349
      %v357 = vpack.c.b16 %v352, %v351
      %v358 = vpack.c.b16 %v354, %v353
      %v379 = vunpack.c.l.b16 %v323
      %v380 = vunpack.c.l.b16 %v324
      %v381 = vunpack.c.l.b16 %v325
      %v382 = vunpack.c.l.b16 %v326
      %v383 = vunpack.c.l.b16 %v327
      %v384 = vunpack.c.l.b16 %v328
      %v385 = vunpack.c.l.b16 %v329
      %v386 = vunpack.c.l.b16 %v330
      %v387 = vunpack.c.l.b16 %v331
      %v388 = vunpack.c.l.b16 %v332
      %v389 = vunpack.c.l.b16 %v333
      %v390 = vunpack.c.l.b16 %v334
      %v391 = vunpack.c.l.b16 %v335
      %v392 = vunpack.c.l.b16 %v336
      %v393 = vunpack.c.l.b16 %v337
      %v394 = vunpack.c.l.b16 %v338
      %v395 = vpack.c.b16 %v380, %v379
      %v396 = vpack.c.b16 %v382, %v381
      %v397 = vpack.c.b16 %v384, %v383
      %v398 = vpack.c.b16 %v386, %v385
      %v399 = vpack.c.b16 %v388, %v387
      %v400 = vpack.c.b16 %v390, %v389
      %v401 = vpack.c.b16 %v392, %v391
      %v402 = vpack.c.b16 %v394, %v393
      %411 = vmatpush.bf16.msra.mxu0 %v402
      %412 = vmatpush.bf16.msra.mxu0 %v401
      %413 = vmatpush.bf16.msra.mxu0 %v400
      %414 = vmatpush.bf16.msra.mxu0 %v399
      %415 = vmatpush.bf16.msra.mxu0 %v398
      %416 = vmatpush.bf16.msra.mxu0 %v397
      %417 = vmatpush.bf16.msra.mxu0 %v396
      %418 = vmatpush.bf16.msra.mxu0 %v395
      %419 = vmatmul.bf16.gmra.mxu0 %v355
      %v420 = vpop.f32.mrf.mxu0
      %v421 = vadd.f32 0.0, %v420
      %v422 = vpop.f32.mrf.mxu0
      %v423 = vadd.f32 0.0, %v422
      %424 = vmatmul.bf16.gmra.mxu0 %v356
      %v425 = vpop.f32.mrf.mxu0
      %v426 = vadd.f32 0.0, %v425
      %v427 = vpop.f32.mrf.mxu0
      %v428 = vadd.f32 0.0, %v427
      %429 = vmatmul.bf16.gmra.mxu0 %v357
      %v430 = vpop.f32.mrf.mxu0
      %v431 = vadd.f32 0.0, %v430
      %v432 = vpop.f32.mrf.mxu0
      %v433 = vadd.f32 0.0, %v432
      %434 = vmatmul.bf16.gmra.mxu0 %v358
      %v435 = vpop.f32.mrf.mxu0
      %v436 = vadd.f32 0.0, %v435
      %v437 = vpop.f32.mrf.mxu0
      %v438 = vadd.f32 0.0, %v437
      %439 = vdwg.mxu0
      %v440 = vadd.f32 %v307, %v421
      %v441 = vadd.f32 %v308, %v423
      %v442 = vadd.f32 %v309, %v426
      %v443 = vadd.f32 %v310, %v428
      %v444 = vadd.f32 %v311, %v431
      %v445 = vadd.f32 %v312, %v433
      %v446 = vadd.f32 %v313, %v436
      %v447 = vadd.f32 %v314, %v438
      %448 = vst [vmem:[#allocation2] sm:$0xff] %v440
      %449 = vst [vmem:[#allocation2 + $0x8] sm:$0xff] %v441
      %450 = vst [vmem:[#allocation2 + $0x10] sm:$0xff] %v442
      %451 = vst [vmem:[#allocation2 + $0x18] sm:$0xff] %v443
      %452 = vst [vmem:[#allocation2 + $0x20] sm:$0xff] %v444
      %453 = vst [vmem:[#allocation2 + $0x28] sm:$0xff] %v445
      %454 = vst [vmem:[#allocation2 + $0x30] sm:$0xff] %v446
      %455 = vst [vmem:[#allocation2 + $0x38] sm:$0xff] %v447
      // Predicated region
      $region45: #{peft_rn_forward.16} parent=39 // pred_check
        %p456 = pneg %p295
      $region46: #{peft_rn_forward.16} parent=39 // pred_check_branch
        %458 = sbr.rel (%p456) target = $region48
      $region47: #{peft_rn_forward.16} parent=39 // pred_region
        %v459 = vld [vmem:[#allocation2] sm:$0xff]
        %v460 = vld [vmem:[#allocation2 + $0x8] sm:$0xff]
        %v461 = vld [vmem:[#allocation2 + $0x10] sm:$0xff]
        %v462 = vld [vmem:[#allocation2 + $0x18] sm:$0xff]
        %v463 = vld [vmem:[#allocation2 + $0x20] sm:$0xff]
        %v464 = vld [vmem:[#allocation2 + $0x28] sm:$0xff]
        %v465 = vld [vmem:[#allocation2 + $0x30] sm:$0xff]
        %v466 = vld [vmem:[#allocation2 + $0x38] sm:$0xff]
        %v467 = vld [vmem:[%s2] sm:$0x1]
        %v469 = vperm.slane %v467, 0
        %v471 = vmul.f32 %v459, %v469
        %v472 = vmul.f32 %v460, %v469
        %v473 = vmul.f32 %v461, %v469
        %v474 = vmul.f32 %v462, %v469
        %v475 = vmul.f32 %v463, %v469
        %v476 = vmul.f32 %v464, %v469
        %v477 = vmul.f32 %v465, %v469
        %v478 = vmul.f32 %v466, %v469
        %v479 = vld [vmem:[%s3] sm:$0x1]
        %v481 = vperm.slane %v479, 0
        %v483 = vadd.f32 %v471, %v481
        %v484 = vadd.f32 %v472, %v481
        %v485 = vadd.f32 %v473, %v481
        %v486 = vadd.f32 %v474, %v481
        %v487 = vadd.f32 %v475, %v481
        %v488 = vadd.f32 %v476, %v481
        %v489 = vadd.f32 %v477, %v481
        %v490 = vadd.f32 %v478, %v481
        %v491 = vld [vmem:[%s287] sm:$0xf]
        %v492 = vld [vmem:[%s287 + $0x4] sm:$0xf]
        %v493 = vld [vmem:[%s287 + $0x8] sm:$0xf]
        %v494 = vld [vmem:[%s287 + $0xc] sm:$0xf]
        %v495 = vld [vmem:[%s287 + $0x10] sm:$0xf]
        %v496 = vld [vmem:[%s287 + $0x14] sm:$0xf]
        %v497 = vld [vmem:[%s287 + $0x18] sm:$0xf]
        %v498 = vld [vmem:[%s287 + $0x1c] sm:$0xf]
        %v499 = vunpack.c.l.bf16 %v491
        %v500 = vunpack.c.l.bf16 %v492
        %v501 = vunpack.c.l.bf16 %v493
        %v502 = vunpack.c.l.bf16 %v494
        %v503 = vunpack.c.l.bf16 %v495
        %v504 = vunpack.c.l.bf16 %v496
        %v505 = vunpack.c.l.bf16 %v497
        %v506 = vunpack.c.l.bf16 %v498
        %v507 = vadd.f32 %v483, %v499
        %v508 = vadd.f32 %v484, %v500
        %v509 = vadd.f32 %v485, %v501
        %v510 = vadd.f32 %v486, %v502
        %v511 = vadd.f32 %v487, %v503
        %v512 = vadd.f32 %v488, %v504
        %v513 = vadd.f32 %v489, %v505
        %v514 = vadd.f32 %v490, %v506
        %v515 = vmax.f32 %v507, 0.0
        %v516 = vmax.f32 %v508, 0.0
        %v517 = vmax.f32 %v509, 0.0
        %v518 = vmax.f32 %v510, 0.0
        %v519 = vmax.f32 %v511, 0.0
        %v520 = vmax.f32 %v512, 0.0
        %v521 = vmax.f32 %v513, 0.0
        %v522 = vmax.f32 %v514, 0.0
        %v523 = vpack.c.bf16 %v515, %v515
        %v524 = vpack.c.bf16 %v516, %v516
        %v525 = vpack.c.bf16 %v517, %v517
        %v526 = vpack.c.bf16 %v518, %v518
        %v527 = vpack.c.bf16 %v519, %v519
        %v528 = vpack.c.bf16 %v520, %v520
        %v529 = vpack.c.bf16 %v521, %v521
        %v530 = vpack.c.bf16 %v522, %v522
        %531 = vst [vmem:[%s293] sm:$0xf] %v523
        %532 = vst [vmem:[%s293 + $0x4] sm:$0xf] %v524
        %533 = vst [vmem:[%s293 + $0x8] sm:$0xf] %v525
        %534 = vst [vmem:[%s293 + $0xc] sm:$0xf] %v526
        %535 = vst [vmem:[%s293 + $0x10] sm:$0xf] %v527
        %536 = vst [vmem:[%s293 + $0x14] sm:$0xf] %v528
        %537 = vst [vmem:[%s293 + $0x18] sm:$0xf] %v529
        %538 = vst [vmem:[%s293 + $0x1c] sm:$0xf] %v530
      $region48: #{peft_rn_forward.16} parent=39 // pred_fallthru
        _
      %s539 = smul.u32 8, %s20
      %p540 = scmp.lt.s32.totalorder %s539, 15
      %s541 = scalar_select %p540, %s539, 15
      %s542 = smul.addr %s541, 4
      %s543 = scalar_lea.vmem %s5, %s542
      // Predicated region
      $region49: #{peft_rn_forward.16} parent=39 // pred_check
        %p544 = pneg %p168
      $region50: #{peft_rn_forward.16} parent=39 // pred_check_branch
        %546 = sbr.rel (%p544) target = $region52
      $region51: #{peft_rn_forward.16} parent=39 // pred_region
        %s547 = smul.u32 8, %s20
      $region52: #{peft_rn_forward.16} parent=39 // pred_fallthru
        _
    $region40: #{peft_rn_forward.16} parent=5 // pred_fallthru
      _
    %p548 = scmp.le.s32.totalorder 2, %s11
    // Predicated region
    $region53: #{peft_rn_forward.16} parent=5 // pred_check
      %p549 = pneg %p548
    $region54: #{peft_rn_forward.16} parent=5 // pred_check_branch
      %551 = sbr.rel (%p549) target = $region56
    $region55: #{peft_rn_forward.16} parent=5 // pred_region
      %s552 = ssub.s32 %s11, 2
      // Predicated region
      $region57: #{peft_rn_forward.16} parent=55 // pred_check
        %p553 = pneg %p174
      $region58: #{peft_rn_forward.16} parent=55 // pred_check_branch
        %555 = sbr.rel (%p553) target = $region60
      $region59: #{peft_rn_forward.16} parent=55 // pred_region
        %s556 = smul.u32 8, %s22
        %p557 = scmp.lt.s32.totalorder %s556, 15
        %s558 = scalar_select %p557, %s556, 15
        %s559 = smul.addr %s558, 4
        %s560 = scalar_lea.vmem %s5, %s559
      $region60: #{peft_rn_forward.16} parent=55 // pred_fallthru
        _
    $region56: #{peft_rn_forward.16} parent=5 // pred_fallthru
      _
  $region6: #{peft_rn_forward.16} parent=0 // loop_footer
    %s15 = sadd.s32 1, %s11
  $region7: #{peft_rn_forward.16} parent=0 // loop_footer_branch
    %10 = sbr.rel target = $region3
  $region8: #{peft_rn_forward.16} parent=0 // loop_exit
    _

// kernel: peft_rn_forward.14
$region0: #{peft_rn_forward.14}
  #allocation0 [shape = 'u32[]', space=smem, size = 0x4, offset = 0x4, fixed_abs, tag = 'smem constant byte address 0x4 - core index']
  #allocation1 [shape = 'u32[72,128]{1,0:T(1,128)}', space=vmem, size = 0x9000, scoped, tag = 'internal scratch']
  #allocation2 [shape = 'f32[64,128]{1,0:T(8,128)}', space=vmem, size = 0x8000, scoped, tag = 'scratch operand']
  %s0 = inlined_call_operand.vmem [shape: bf16[128,1152], index: 0, kind: input, shape index: {}]
  %s1 = inlined_call_operand.vmem [shape: bf16[1152,128], index: 1, kind: input, shape index: {}]
  %s2 = inlined_call_operand.vmem [shape: f32[1,128], index: 2, kind: input, shape index: {}]
  %s3 = inlined_call_operand.vmem [shape: f32[1,128], index: 3, kind: input, shape index: {}]
  %s4 = inlined_call_operand.vmem [shape: bf16[128,128], index: 4, kind: output, shape index: {}]
  %s5 = sld [smem:[#allocation0]]
  $region83: #{peft_rn_forward.14} parent=0
    _
  %s7 = ssub.s32 1, %s5
  %s8 = scalar_select 0, %s7, %s5
  $region1: #{peft_rn_forward.14} parent=0
    #allocation3 [shape = 'u8[98304]{0}', space=vmem, size = 0x18000, scoped, tag = 'input window, operand 0']
    loop: start=0, step=1, limit=8
    $region2: #{peft_rn_forward.14} parent=1 // loop_pre_header
      _
    $region3: #{peft_rn_forward.14} parent=1 // loop_header
      %s10 = sphi 0, %s14
      %p11 = scmp.ge.s32.totalorder %s10, 8
      %s17 = sphi 0, %s29
      %s18 = sphi 0, %s25
      %s19 = sphi 0, %s17
      %s20 = sphi 0, %s18
      %s21 = sphi 0, %s19
      %s22 = sphi 0, %s20
      %s34 = sphi 0, %s36
      %s37 = sphi 0, %s34
      %s38 = sphi 0, %s37
      %s54 = sphi 0, %s38
      %s60 = sphi 0, %s62
      %s63 = sphi 0, %s60
      %s64 = sphi 0, %s63
      %s80 = sphi 0, %s64
      %s84 = sphi 0, %s84
      %s86 = sphi 0, %s84
      %s87 = sphi 0, %s86
      %s101 = sphi 0, %s87
      %s105 = sphi 0, %s105
      %s107 = sphi 0, %s105
      %s108 = sphi 0, %s107
      %s122 = sphi 0, %s108
      %s128 = sphi 0, %s130
      %s131 = sphi 0, %s128
      %s132 = sphi 0, %s131
      %s148 = sphi 0, %s132
    $region4: #{peft_rn_forward.14} parent=1 // loop_header_branch
      %13 = sbr.rel (%p11) target = $region8
    $region5: #{peft_rn_forward.14} parent=1 // loop_body
      %s15 = ssub.s32 %s10, 1
      %s16 = ssub.s32 %s10, 2
      %s23 = sadd.s32 1, %s18
      %p24 = scmp.ge.s32.totalorder %s23, 3
      %s25 = scalar_select %p24, 0, %s23
      %s26 = sadd.s32 1, %s17
      %s27 = scalar_select %p24, %s26, %s17
      %p28 = scmp.ge.s32.totalorder %s27, 2
      %s29 = scalar_select %p28, 0, %s27
      %s30 = ssub.s32 %s17, %s29
      %s31 = ssub.s32 %s18, %s25
      %s32 = sor.u32 %s30, %s31
      %p33 = scmp.eq.s32.totalorder %s32, 0
      %s35 = sadd.s32 %s34, 1
      %s36 = scalar_select %p33, %s34, %s35
      %p39 = pneg %p33
      %p40 = scmp.eq.s32.totalorder %s10, 5
      %p41 = por %p39, %p40
      %p42 = scmp.ne.s32.totalorder %s34, %s37
      %p43 = scmp.eq.s32.totalorder %s10, 0
      %p44 = por %p42, %p43
      %p45 = scmp.ne.s32.totalorder %s34, %s37
      %p46 = scmp.eq.s32.totalorder %s15, 5
      %p47 = por %p45, %p46
      %p48 = scmp.ne.s32.totalorder %s37, %s38
      %p49 = scmp.eq.s32.totalorder %s15, 0
      %p50 = por %p48, %p49
      %p51 = scmp.ne.s32.totalorder %s37, %s38
      %p52 = scmp.eq.s32.totalorder %s16, 5
      %p53 = por %p51, %p52
      %p55 = scmp.ne.s32.totalorder %s38, %s54
      %p56 = scmp.eq.s32.totalorder %s16, 0
      %p57 = por %p55, %p56
      %s58 = ssub.s32 %s18, %s25
      %p59 = scmp.eq.s32.totalorder %s58, 0
      %s61 = sadd.s32 %s60, 1
      %s62 = scalar_select %p59, %s60, %s61
      %p65 = pneg %p59
      %p66 = scmp.eq.s32.totalorder %s10, 5
      %p67 = por %p65, %p66
      %p68 = scmp.ne.s32.totalorder %s60, %s63
      %p69 = scmp.eq.s32.totalorder %s10, 0
      %p70 = por %p68, %p69
      %p71 = scmp.ne.s32.totalorder %s60, %s63
      %p72 = scmp.eq.s32.totalorder %s15, 5
      %p73 = por %p71, %p72
      %p74 = scmp.ne.s32.totalorder %s63, %s64
      %p75 = scmp.eq.s32.totalorder %s15, 0
      %p76 = por %p74, %p75
      %p77 = scmp.ne.s32.totalorder %s63, %s64
      %p78 = scmp.eq.s32.totalorder %s16, 5
      %p79 = por %p77, %p78
      %p81 = scmp.ne.s32.totalorder %s64, %s80
      %p82 = scmp.eq.s32.totalorder %s16, 0
      %p83 = por %p81, %p82
      %s85 = sadd.s32 %s84, 1
      %p88 = scmp.eq.s32.totalorder %s10, 5
      %p89 = scmp.ne.s32.totalorder %s84, %s86
      %p90 = scmp.eq.s32.totalorder %s10, 0
      %p91 = por %p89, %p90
      %p92 = scmp.ne.s32.totalorder %s84, %s86
      %p93 = scmp.eq.s32.totalorder %s15, 5
      %p94 = por %p92, %p93
      %p95 = scmp.ne.s32.totalorder %s86, %s87
      %p96 = scmp.eq.s32.totalorder %s15, 0
      %p97 = por %p95, %p96
      %p98 = scmp.ne.s32.totalorder %s86, %s87
      %p99 = scmp.eq.s32.totalorder %s16, 5
      %p100 = por %p98, %p99
      %p102 = scmp.ne.s32.totalorder %s87, %s101
      %p103 = scmp.eq.s32.totalorder %s16, 0
      %p104 = por %p102, %p103
      %s106 = sadd.s32 %s105, 1
      %p109 = scmp.eq.s32.totalorder %s10, 5
      %p110 = scmp.ne.s32.totalorder %s105, %s107
      %p111 = scmp.eq.s32.totalorder %s10, 0
      %p112 = por %p110, %p111
      %p113 = scmp.ne.s32.totalorder %s105, %s107
      %p114 = scmp.eq.s32.totalorder %s15, 5
      %p115 = por %p113, %p114
      %p116 = scmp.ne.s32.totalorder %s107, %s108
      %p117 = scmp.eq.s32.totalorder %s15, 0
      %p118 = por %p116, %p117
      %p119 = scmp.ne.s32.totalorder %s107, %s108
      %p120 = scmp.eq.s32.totalorder %s16, 5
      %p121 = por %p119, %p120
      %p123 = scmp.ne.s32.totalorder %s108, %s122
      %p124 = scmp.eq.s32.totalorder %s16, 0
      %p125 = por %p123, %p124
      %s126 = ssub.s32 %s17, %s29
      %p127 = scmp.eq.s32.totalorder %s126, 0
      %s129 = sadd.s32 %s128, 1
      %s130 = scalar_select %p127, %s128, %s129
      %p133 = pneg %p127
      %p134 = scmp.eq.s32.totalorder %s10, 5
      %p135 = por %p133, %p134
      %p136 = scmp.ne.s32.totalorder %s128, %s131
      %p137 = scmp.eq.s32.totalorder %s10, 0
      %p138 = por %p136, %p137
      %p139 = scmp.ne.s32.totalorder %s128, %s131
      %p140 = scmp.eq.s32.totalorder %s15, 5
      %p141 = por %p139, %p140
      %p142 = scmp.ne.s32.totalorder %s131, %s132
      %p143 = scmp.eq.s32.totalorder %s15, 0
      %p144 = por %p142, %p143
      %p145 = scmp.ne.s32.totalorder %s131, %s132
      %p146 = scmp.eq.s32.totalorder %s16, 5
      %p147 = por %p145, %p146
      %p149 = scmp.ne.s32.totalorder %s132, %s148
      %p150 = scmp.eq.s32.totalorder %s16, 0
      %p151 = por %p149, %p150
      %p152 = scmp.le.s32.totalorder 1, %s10
      %p153 = scmp.lt.s32.totalorder %s10, 7
      %p154 = pnand %p152, %p153
      %p155 = pneg %p154
      // Predicated region
      $region9: #{peft_rn_forward.14} parent=5 // pred_check
        _
      $region10: #{peft_rn_forward.14} parent=5 // pred_check_branch
        %157 = sbr.rel (%p154) target = $region12
      $region11: #{peft_rn_forward.14} parent=5 // pred_region
        %s158 = ssub.s32 %s10, 1
        // Predicated region
        $region13: #{peft_rn_forward.14} parent=11 // pred_check
          %p159 = pneg %p97
        $region14: #{peft_rn_forward.14} parent=11 // pred_check_branch
          %161 = sbr.rel (%p159) target = $region16
        $region15: #{peft_rn_forward.14} parent=11 // pred_region
          _
        $region16: #{peft_rn_forward.14} parent=11 // pred_fallthru
          _
        // Predicated region
        $region17: #{peft_rn_forward.14} parent=11 // pred_check
          %p162 = pneg %p118
        $region18: #{peft_rn_forward.14} parent=11 // pred_check_branch
          %164 = sbr.rel (%p162) target = $region20
        $region19: #{peft_rn_forward.14} parent=11 // pred_region
          _
        $region20: #{peft_rn_forward.14} parent=11 // pred_fallthru
          _
      $region12: #{peft_rn_forward.14} parent=5 // pred_fallthru
        _
      %p165 = scmp.lt.s32.totalorder %s10, 6
      // Predicated region
      $region21: #{peft_rn_forward.14} parent=5 // pred_check
        %p166 = pneg %p165
      $region22: #{peft_rn_forward.14} parent=5 // pred_check_branch
        %168 = sbr.rel (%p166) target = $region24
      $region23: #{peft_rn_forward.14} parent=5 // pred_region
        // Predicated region
        $region25: #{peft_rn_forward.14} parent=23 // pred_check
          %p169 = pneg %p44
        $region26: #{peft_rn_forward.14} parent=23 // pred_check_branch
          %171 = sbr.rel (%p169) target = $region28
        $region27: #{peft_rn_forward.14} parent=23 // pred_region
          %s172 = sand.u32 %s34, 1
          %s173 = sand.u32 %s34, 1
          %s174 = smul.addr %s173, 96
          %s175 = scalar_lea.vmem [#allocation3], %s174
          %s176 = smul.u32 8, %s17
          %s177 = smul.u32 3, %s18
          %s178 = smul.addr %s176, 9
          %s179 = sadd.s32 %s177, %s178
          %s180 = smul.addr %s179, 4
          %s181 = scalar_lea.vmem %s0, %s180
          // Predicated region
          $region29: #{peft_rn_forward.14} parent=27 // pred_check
            _
          $region30: #{peft_rn_forward.14} parent=27 // pred_check_branch
            %183 = sbr.rel (0) target = $region32
          $region31: #{peft_rn_forward.14} parent=27 // pred_region
            // Predicated region
            $region33: #{peft_rn_forward.14} parent=31 // pred_check
              _
            $region34: #{peft_rn_forward.14} parent=31 // pred_check_branch
              %185 = sbr.rel (0) target = $region36
            $region35: #{peft_rn_forward.14} parent=31 // pred_region
              %s186 = scalar_lea.vmem %s181, 8
              %s187 = scalar_lea.vmem %s175, 8 [#allocation3]
              loop: start=0, step=1, limit=1
              $region37: #{peft_rn_forward.14} parent=35 // loop_pre_header
                _
              $region38: #{peft_rn_forward.14} parent=35 // loop_header
                %s189 = sphi 0, %s193
                %p190 = scmp.ge.s32.totalorder %s189, 1
                %s194 = sphi %s181, %s181
                %s195 = sphi %s175, %s175
              $region39: #{peft_rn_forward.14} parent=35 // loop_header_branch
                %192 = sbr.rel (%p190) target = $region43
              $region40: #{peft_rn_forward.14} parent=35 // loop_body
                %v196 = vld [vmem:[%s194] sm:$0xff]
                %197 = vst [vmem:[%s195] sm:$0xff] %v196
                %v198 = vld [vmem:[%s194 + $0x24] sm:$0xff]
                %199 = vst [vmem:[%s195 + $0xc] sm:$0xff] %v198
                %v200 = vld [vmem:[%s194 + $0x48] sm:$0xff]
                %201 = vst [vmem:[%s195 + $0x18] sm:$0xff] %v200
                %v202 = vld [vmem:[%s194 + $0x6c] sm:$0xff]
                %203 = vst [vmem:[%s195 + $0x24] sm:$0xff] %v202
                %v204 = vld [vmem:[%s194 + $0x90] sm:$0xff]
                %205 = vst [vmem:[%s195 + $0x30] sm:$0xff] %v204
                %v206 = vld [vmem:[%s194 + $0xb4] sm:$0xff]
                %207 = vst [vmem:[%s195 + $0x3c] sm:$0xff] %v206
                %v208 = vld [vmem:[%s194 + $0xd8] sm:$0xff]
                %209 = vst [vmem:[%s195 + $0x48] sm:$0xff] %v208
                %v210 = vld [vmem:[%s194 + $0xfc] sm:$0xff]
                %211 = vst [vmem:[%s195 + $0x54] sm:$0xff] %v210
              $region41: #{peft_rn_forward.14} parent=35 // loop_footer
                %s193 = sadd.s32 1, %s189
              $region42: #{peft_rn_forward.14} parent=35 // loop_footer_branch
                %188 = sbr.rel target = $region38
              $region43: #{peft_rn_forward.14} parent=35 // loop_exit
                _
              %s213 = ssub.s32 16, 1
              loop: start=0, step=1, limit=1
              $region44: #{peft_rn_forward.14} parent=35 // loop_pre_header
                _
              $region45: #{peft_rn_forward.14} parent=35 // loop_header
                %s215 = sphi 0, %s219
                %p216 = scmp.ge.s32.totalorder %s215, 1
                %s220 = sphi %s186, %s186
                %s221 = sphi %s187, %s187
              $region46: #{peft_rn_forward.14} parent=35 // loop_header_branch
                %218 = sbr.rel (%p216) target = $region50
              $region47: #{peft_rn_forward.14} parent=35 // loop_body
                %v222 = vld [vmem:[%s220] sm:%s213]
                %223 = vst [vmem:[%s221] sm:%s213] %v222
                %v224 = vld [vmem:[%s220 + $0x24] sm:%s213]
                %225 = vst [vmem:[%s221 + $0xc] sm:%s213] %v224
                %v226 = vld [vmem:[%s220 + $0x48] sm:%s213]
                %227 = vst [vmem:[%s221 + $0x18] sm:%s213] %v226
                %v228 = vld [vmem:[%s220 + $0x6c] sm:%s213]
                %229 = vst [vmem:[%s221 + $0x24] sm:%s213] %v228
                %v230 = vld [vmem:[%s220 + $0x90] sm:%s213]
                %231 = vst [vmem:[%s221 + $0x30] sm:%s213] %v230
                %v232 = vld [vmem:[%s220 + $0xb4] sm:%s213]
                %233 = vst [vmem:[%s221 + $0x3c] sm:%s213] %v232
                %v234 = vld [vmem:[%s220 + $0xd8] sm:%s213]
                %235 = vst [vmem:[%s221 + $0x48] sm:%s213] %v234
                %v236 = vld [vmem:[%s220 + $0xfc] sm:%s213]
                %237 = vst [vmem:[%s221 + $0x54] sm:%s213] %v236
              $region48: #{peft_rn_forward.14} parent=35 // loop_footer
                %s219 = sadd.s32 1, %s215
              $region49: #{peft_rn_forward.14} parent=35 // loop_footer_branch
                %214 = sbr.rel target = $region45
              $region50: #{peft_rn_forward.14} parent=35 // loop_exit
                _
            $region36: #{peft_rn_forward.14} parent=31 // pred_fallthru
              _
          $region32: #{peft_rn_forward.14} parent=27 // pred_fallthru
            _
          %238 = vnop
        $region28: #{peft_rn_forward.14} parent=23 // pred_fallthru
          _
        // Predicated region
        $region51: #{peft_rn_forward.14} parent=23 // pred_check
          %p239 = pneg %p70
        $region52: #{peft_rn_forward.14} parent=23 // pred_check_branch
          %241 = sbr.rel (%p239) target = $region54
        $region53: #{peft_rn_forward.14} parent=23 // pred_region
          %s242 = smul.u32 48, %s18
          %p243 = scmp.lt.s32.totalorder %s242, 143
          %s244 = scalar_select %p243, %s242, 143
          %s245 = smul.addr %s244, 4
          %s246 = scalar_lea.vmem %s1, %s245
          %s247 = smul.u32 48, %s18
        $region54: #{peft_rn_forward.14} parent=23 // pred_fallthru
          _
      $region24: #{peft_rn_forward.14} parent=5 // pred_fallthru
        _
      %p248 = scmp.le.s32.totalorder 1, %s10
      %p249 = scmp.lt.s32.totalorder %s10, 7
      %p250 = pnand %p248, %p249
      %p251 = pneg %p250
      // Predicated region
      $region55: #{peft_rn_forward.14} parent=5 // pred_check
        _
      $region56: #{peft_rn_forward.14} parent=5 // pred_check_branch
        %253 = sbr.rel (%p250) target = $region58
      $region57: #{peft_rn_forward.14} parent=5 // pred_region
        %s254 = ssub.s32 %s10, 1
        %s255 = sand.u32 %s37, 1
        %s256 = sand.u32 %s37, 1
        %s257 = smul.addr %s256, 96
        %s258 = scalar_lea.vmem [#allocation3], %s257
        // Predicated region
        $region59: #{peft_rn_forward.14} parent=57 // pred_check
          %p259 = pneg %p50
        $region60: #{peft_rn_forward.14} parent=57 // pred_check_branch
          %261 = sbr.rel (%p259) target = $region62
        $region61: #{peft_rn_forward.14} parent=57 // pred_region
          _
        $region62: #{peft_rn_forward.14} parent=57 // pred_fallthru
          _
        %s262 = sand.u32 %s37, 1
        %s263 = sand.u32 %s37, 1
        %s264 = smul.addr %s263, 96
        %s265 = scalar_lea.vmem [#allocation3], %s264
        %p266 = pneg %p50
        %p267 = pneg %p47
        %s268 = smul.u32 48, %s20
        %p269 = scmp.lt.s32.totalorder %s268, 143
        %s270 = scalar_select %p269, %s268, 143
        %s271 = smul.addr %s270, 4
        %s272 = scalar_lea.vmem %s1, %s271
        %p273 = pneg %p76
        %p274 = pneg %p73
        %p275 = pneg %p97
        %p276 = pneg %p94
        %p277 = pneg %p118
        %p278 = pneg %p115
        %p279 = pneg %p144
        %p280 = pneg %p141
        %s281 = smul.u32 8, %s19
        %p282 = scmp.lt.s32.totalorder %s281, 15
        %s283 = scalar_select %p282, %s281, 15
        %s284 = smul.addr %s283, 4
        %s285 = scalar_lea.vmem %s4, %s284
        %s286 = smul.u32 8, %s19
        %s287 = smul.u32 3, %s20
        %s288 = smul.u32 48, %s20
        %p289 = scmp.lt.s32.totalorder %s288, 143
        %s290 = scalar_select %p289, %s288, 143
        %s291 = smul.addr %s290, 4
        %s292 = scalar_lea.vmem %s1, %s291
        %s293 = smul.u32 48, %s20
        %s294 = smul.u32 8, %s19
        %p295 = scmp.lt.s32.totalorder %s294, 15
        %s296 = scalar_select %p295, %s294, 15
        %s297 = smul.addr %s296, 4
        %s298 = scalar_lea.vmem %s4, %s297
        %s299 = smul.u32 8, %s19
        %p300 = scmp.eq.s32.totalorder %s20, 0
        // Predicated region
        $region63: #{peft_rn_forward.14} parent=57 // pred_check
          %p301 = pneg %p300
        $region64: #{peft_rn_forward.14} parent=57 // pred_check_branch
          %303 = sbr.rel (%p301) target = $region66
        $region65: #{peft_rn_forward.14} parent=57 // pred_region
          %304 = vst [vmem:[#allocation2] sm:$0xff] 0.0
          %305 = vst [vmem:[#allocation2 + $0x8] sm:$0xff] 0.0
          %306 = vst [vmem:[#allocation2 + $0x10] sm:$0xff] 0.0
          %307 = vst [vmem:[#allocation2 + $0x18] sm:$0xff] 0.0
          %308 = vst [vmem:[#allocation2 + $0x20] sm:$0xff] 0.0
          %309 = vst [vmem:[#allocation2 + $0x28] sm:$0xff] 0.0
          %310 = vst [vmem:[#allocation2 + $0x30] sm:$0xff] 0.0
          %311 = vst [vmem:[#allocation2 + $0x38] sm:$0xff] 0.0
        $region66: #{peft_rn_forward.14} parent=57 // pred_fallthru
          _
        %v312 = vld [vmem:[#allocation2] sm:$0xff]
        %v313 = vld [vmem:[#allocation2 + $0x8] sm:$0xff]
        %v314 = vld [vmem:[#allocation2 + $0x10] sm:$0xff]
        %v315 = vld [vmem:[#allocation2 + $0x18] sm:$0xff]
        %v316 = vld [vmem:[#allocation2 + $0x20] sm:$0xff]
        %v317 = vld [vmem:[#allocation2 + $0x28] sm:$0xff]
        %v318 = vld [vmem:[#allocation2 + $0x30] sm:$0xff]
        %v319 = vld [vmem:[#allocation2 + $0x38] sm:$0xff]
        %v320 = vld [vmem:[%s258] sm:$0xff]
        %v321 = vld [vmem:[%s258 + $0x8] sm:$0xf]
        %v322 = vld [vmem:[%s258 + $0xc] sm:$0xff]
        %v323 = vld [vmem:[%s258 + $0x14] sm:$0xf]
        %v324 = vld [vmem:[%s258 + $0x18] sm:$0xff]
        %v325 = vld [vmem:[%s258 + $0x20] sm:$0xf]
        %v326 = vld [vmem:[%s258 + $0x24] sm:$0xff]
        %v327 = vld [vmem:[%s258 + $0x2c] sm:$0xf]
        %v328 = vld [vmem:[%s258 + $0x30] sm:$0xff]
        %v329 = vld [vmem:[%s258 + $0x38] sm:$0xf]
        %v330 = vld [vmem:[%s258 + $0x3c] sm:$0xff]
        %v331 = vld [vmem:[%s258 + $0x44] sm:$0xf]
        %v332 = vld [vmem:[%s258 + $0x48] sm:$0xff]
        %v333 = vld [vmem:[%s258 + $0x50] sm:$0xf]
        %v334 = vld [vmem:[%s258 + $0x54] sm:$0xff]
        %v335 = vld [vmem:[%s258 + $0x5c] sm:$0xf]
        %v336 = vld [vmem:[%s292] sm:$0xf]
        %v337 = vld [vmem:[%s292 + $0x4] sm:$0xf]
        %v338 = vld [vmem:[%s292 + $0x8] sm:$0xf]
        %v339 = vld [vmem:[%s292 + $0xc] sm:$0xf]
        %v340 = vld [vmem:[%s292 + $0x10] sm:$0xf]
        %v341 = vld [vmem:[%s292 + $0x14] sm:$0xf]
        %v342 = vld [vmem:[%s292 + $0x18] sm:$0xf]
        %v343 = vld [vmem:[%s292 + $0x1c] sm:$0xf]
        %v344 = vld [vmem:[%s292 + $0x20] sm:$0xf]
        %v345 = vld [vmem:[%s292 + $0x24] sm:$0xf]
        %v346 = vld [vmem:[%s292 + $0x28] sm:$0xf]
        %v347 = vld [vmem:[%s292 + $0x2c] sm:$0xf]
        %v348 = vld [vmem:[%s292 + $0x30] sm:$0xf]
        %v349 = vld [vmem:[%s292 + $0x34] sm:$0xf]
        %v350 = vld [vmem:[%s292 + $0x38] sm:$0xf]
        %v351 = vld [vmem:[%s292 + $0x3c] sm:$0xf]
        %v352 = vld [vmem:[%s292 + $0x40] sm:$0xf]
        %v353 = vld [vmem:[%s292 + $0x44] sm:$0xf]
        %v354 = vld [vmem:[%s292 + $0x48] sm:$0xf]
        %v355 = vld [vmem:[%s292 + $0x4c] sm:$0xf]
        %v356 = vld [vmem:[%s292 + $0x50] sm:$0xf]
        %v357 = vld [vmem:[%s292 + $0x54] sm:$0xf]
        %v358 = vld [vmem:[%s292 + $0x58] sm:$0xf]
        %v359 = vld [vmem:[%s292 + $0x5c] sm:$0xf]
        %v360 = vld [vmem:[%s292 + $0x60] sm:$0xf]
        %v361 = vld [vmem:[%s292 + $0x64] sm:$0xf]
        %v362 = vld [vmem:[%s292 + $0x68] sm:$0xf]
        %v363 = vld [vmem:[%s292 + $0x6c] sm:$0xf]
        %v364 = vld [vmem:[%s292 + $0x70] sm:$0xf]
        %v365 = vld [vmem:[%s292 + $0x74] sm:$0xf]
        %v366 = vld [vmem:[%s292 + $0x78] sm:$0xf]
        %v367 = vld [vmem:[%s292 + $0x7c] sm:$0xf]
        %v368 = vld [vmem:[%s292 + $0x80] sm:$0xf]
        %v369 = vld [vmem:[%s292 + $0x84] sm:$0xf]
        %v370 = vld [vmem:[%s292 + $0x88] sm:$0xf]
        %v371 = vld [vmem:[%s292 + $0x8c] sm:$0xf]
        %v372 = vld [vmem:[%s292 + $0x90] sm:$0xf]
        %v373 = vld [vmem:[%s292 + $0x94] sm:$0xf]
        %v374 = vld [vmem:[%s292 + $0x98] sm:$0xf]
        %v375 = vld [vmem:[%s292 + $0x9c] sm:$0xf]
        %v376 = vld [vmem:[%s292 + $0xa0] sm:$0xf]
        %v377 = vld [vmem:[%s292 + $0xa4] sm:$0xf]
        %v378 = vld [vmem:[%s292 + $0xa8] sm:$0xf]
        %v379 = vld [vmem:[%s292 + $0xac] sm:$0xf]
        %v380 = vld [vmem:[%s292 + $0xb0] sm:$0xf]
        %v381 = vld [vmem:[%s292 + $0xb4] sm:$0xf]
        %v382 = vld [vmem:[%s292 + $0xb8] sm:$0xf]
        %v383 = vld [vmem:[%s292 + $0xbc] sm:$0xf]
        %v400 = vunpack.c.l.b16 %v320
        %v401 = vunpack.c.h.b16 %v320
        %v402 = vunpack.c.l.b16 %v321
        %v403 = vunpack.c.l.b16 %v322
        %v404 = vunpack.c.h.b16 %v322
        %v405 = vunpack.c.l.b16 %v323
        %v406 = vunpack.c.l.b16 %v324
        %v407 = vunpack.c.h.b16 %v324
        %v408 = vunpack.c.l.b16 %v325
        %v409 = vunpack.c.l.b16 %v326
        %v410 = vunpack.c.h.b16 %v326
        %v411 = vunpack.c.l.b16 %v327
        %v412 = vunpack.c.l.b16 %v328
        %v413 = vunpack.c.h.b16 %v328
        %v414 = vunpack.c.l.b16 %v329
        %v415 = vunpack.c.l.b16 %v330
        %v416 = vunpack.c.h.b16 %v330
        %v417 = vunpack.c.l.b16 %v331
        %v418 = vunpack.c.l.b16 %v332
        %v419 = vunpack.c.h.b16 %v332
        %v420 = vunpack.c.l.b16 %v333
        %v421 = vunpack.c.l.b16 %v334
        %v422 = vunpack.c.h.b16 %v334
        %v423 = vunpack.c.l.b16 %v335
        %v424 = vpack.c.b16 %v403, %v400
        %v425 = vpack.c.b16 %v404, %v401
        %v426 = vpack.c.b16 %v405, %v402
        %v427 = vpack.c.b16 %v409, %v406
        %v428 = vpack.c.b16 %v410, %v407
        %v429 = vpack.c.b16 %v411, %v408
        %v430 = vpack.c.b16 %v415, %v412
        %v431 = vpack.c.b16 %v416, %v413
        %v432 = vpack.c.b16 %v417, %v414
        %v433 = vpack.c.b16 %v421, %v418
        %v434 = vpack.c.b16 %v422, %v419
        %v435 = vpack.c.b16 %v423, %v420
        %v496 = vunpack.c.l.b16 %v336
        %v497 = vunpack.c.l.b16 %v337
        %v498 = vunpack.c.l.b16 %v338
        %v499 = vunpack.c.l.b16 %v339
        %v500 = vunpack.c.l.b16 %v340
        %v501 = vunpack.c.l.b16 %v341
        %v502 = vunpack.c.l.b16 %v342
        %v503 = vunpack.c.l.b16 %v343
        %v504 = vunpack.c.l.b16 %v344
        %v505 = vunpack.c.l.b16 %v345
        %v506 = vunpack.c.l.b16 %v346
        %v507 = vunpack.c.l.b16 %v347
        %v508 = vunpack.c.l.b16 %v348
        %v509 = vunpack.c.l.b16 %v349
        %v510 = vunpack.c.l.b16 %v350
        %v511 = vunpack.c.l.b16 %v351
        %v512 = vunpack.c.l.b16 %v352
        %v513 = vunpack.c.l.b16 %v353
        %v514 = vunpack.c.l.b16 %v354
        %v515 = vunpack.c.l.b16 %v355
        %v516 = vunpack.c.l.b16 %v356
        %v517 = vunpack.c.l.b16 %v357
        %v518 = vunpack.c.l.b16 %v358
        %v519 = vunpack.c.l.b16 %v359
        %v520 = vunpack.c.l.b16 %v360
        %v521 = vunpack.c.l.b16 %v361
        %v522 = vunpack.c.l.b16 %v362
        %v523 = vunpack.c.l.b16 %v363
        %v524 = vunpack.c.l.b16 %v364
        %v525 = vunpack.c.l.b16 %v365
        %v526 = vunpack.c.l.b16 %v366
        %v527 = vunpack.c.l.b16 %v367
        %v528 = vunpack.c.l.b16 %v368
        %v529 = vunpack.c.l.b16 %v369
        %v530 = vunpack.c.l.b16 %v370
        %v531 = vunpack.c.l.b16 %v371
        %v532 = vunpack.c.l.b16 %v372
        %v533 = vunpack.c.l.b16 %v373
        %v534 = vunpack.c.l.b16 %v374
        %v535 = vunpack.c.l.b16 %v375
        %v536 = vunpack.c.l.b16 %v376
        %v537 = vunpack.c.l.b16 %v377
        %v538 = vunpack.c.l.b16 %v378
        %v539 = vunpack.c.l.b16 %v379
        %v540 = vunpack.c.l.b16 %v380
        %v541 = vunpack.c.l.b16 %v381
        %v542 = vunpack.c.l.b16 %v382
        %v543 = vunpack.c.l.b16 %v383
        %v544 = vpack.c.b16 %v497, %v496
        %v545 = vpack.c.b16 %v499, %v498
        %v546 = vpack.c.b16 %v501, %v500
        %v547 = vpack.c.b16 %v503, %v502
        %v548 = vpack.c.b16 %v505, %v504
        %v549 = vpack.c.b16 %v507, %v506
        %v550 = vpack.c.b16 %v509, %v508
        %v551 = vpack.c.b16 %v511, %v510
        %v552 = vpack.c.b16 %v513, %v512
        %v553 = vpack.c.b16 %v515, %v514
        %v554 = vpack.c.b16 %v517, %v516
        %v555 = vpack.c.b16 %v519, %v518
        %v556 = vpack.c.b16 %v521, %v520
        %v557 = vpack.c.b16 %v523, %v522
        %v558 = vpack.c.b16 %v525, %v524
        %v559 = vpack.c.b16 %v527, %v526
        %v560 = vpack.c.b16 %v529, %v528
        %v561 = vpack.c.b16 %v531, %v530
        %v562 = vpack.c.b16 %v533, %v532
        %v563 = vpack.c.b16 %v535, %v534
        %v564 = vpack.c.b16 %v537, %v536
        %v565 = vpack.c.b16 %v539, %v538
        %v566 = vpack.c.b16 %v541, %v540
        %v567 = vpack.c.b16 %v543, %v542
        %592 = vmatpush.bf16.msra.mxu0 %v551
        %593 = vmatpush.bf16.msra.mxu0 %v550
        %594 = vmatpush.bf16.msra.mxu0 %v549
        %595 = vmatpush.bf16.msra.mxu0 %v548
        %596 = vmatpush.bf16.msra.mxu0 %v547
        %597 = vmatpush.bf16.msra.mxu0 %v546
        %598 = vmatpush.bf16.msra.mxu0 %v545
        %599 = vmatpush.bf16.msra.mxu0 %v544
        %600 = vmatmul.bf16.gmra.mxu0 %v424
        %v601 = vpop.f32.mrf.mxu0
        %v602 = vadd.f32 0.0, %v601
        %v603 = vpop.f32.mrf.mxu0
        %v604 = vadd.f32 0.0, %v603
        %605 = vmatmul.bf16.gmra.mxu0 %v427
        %v606 = vpop.f32.mrf.mxu0
        %v607 = vadd.f32 0.0, %v606
        %v608 = vpop.f32.mrf.mxu0
        %v609 = vadd.f32 0.0, %v608
        %610 = vmatmul.bf16.gmra.mxu0 %v430
        %v611 = vpop.f32.mrf.mxu0
        %v612 = vadd.f32 0.0, %v611
        %v613 = vpop.f32.mrf.mxu0
        %v614 = vadd.f32 0.0, %v613
        %615 = vmatmul.bf16.gmra.mxu0 %v433
        %v616 = vpop.f32.mrf.mxu0
        %v617 = vadd.f32 0.0, %v616
        %v618 = vpop.f32.mrf.mxu0
        %v619 = vadd.f32 0.0, %v618
        %620 = vdwg.mxu0
        %621 = vmatpush.bf16.msra.mxu0 %v559
        %622 = vmatpush.bf16.msra.mxu0 %v558
        %623 = vmatpush.bf16.msra.mxu0 %v557
        %624 = vmatpush.bf16.msra.mxu0 %v556
        %625 = vmatpush.bf16.msra.mxu0 %v555
        %626 = vmatpush.bf16.msra.mxu0 %v554
        %627 = vmatpush.bf16.msra.mxu0 %v553
        %628 = vmatpush.bf16.msra.mxu0 %v552
        %629 = vmatmul.bf16.gmra.mxu0 %v425
        %v630 = vpop.f32.mrf.mxu0
        %v631 = vadd.f32 %v602, %v630
        %v632 = vpop.f32.mrf.mxu0
        %v633 = vadd.f32 %v604, %v632
        %634 = vmatmul.bf16.gmra.mxu0 %v428
        %v635 = vpop.f32.mrf.mxu0
        %v636 = vadd.f32 %v607, %v635
        %v637 = vpop.f32.mrf.mxu0
        %v638 = vadd.f32 %v609, %v637
        %639 = vmatmul.bf16.gmra.mxu0 %v431
        %v640 = vpop.f32.mrf.mxu0
        %v641 = vadd.f32 %v612, %v640
        %v642 = vpop.f32.mrf.mxu0
        %v643 = vadd.f32 %v614, %v642
        %644 = vmatmul.bf16.gmra.mxu0 %v434
        %v645 = vpop.f32.mrf.mxu0
        %v646 = vadd.f32 %v617, %v645
        %v647 = vpop.f32.mrf.mxu0
        %v648 = vadd.f32 %v619, %v647
        %649 = vdwg.mxu0
        %650 = vmatpush.bf16.msra.mxu0 %v567
        %651 = vmatpush.bf16.msra.mxu0 %v566
        %652 = vmatpush.bf16.msra.mxu0 %v565
        %653 = vmatpush.bf16.msra.mxu0 %v564
        %654 = vmatpush.bf16.msra.mxu0 %v563
        %655 = vmatpush.bf16.msra.mxu0 %v562
        %656 = vmatpush.bf16.msra.mxu0 %v561
        %657 = vmatpush.bf16.msra.mxu0 %v560
        %658 = vmatmul.bf16.gmra.mxu0 %v426
        %v659 = vpop.f32.mrf.mxu0
        %v660 = vadd.f32 %v631, %v659
        %v661 = vpop.f32.mrf.mxu0
        %v662 = vadd.f32 %v633, %v661
        %663 = vmatmul.bf16.gmra.mxu0 %v429
        %v664 = vpop.f32.mrf.mxu0
        %v665 = vadd.f32 %v636, %v664
        %v666 = vpop.f32.mrf.mxu0
        %v667 = vadd.f32 %v638, %v666
        %668 = vmatmul.bf16.gmra.mxu0 %v432
        %v669 = vpop.f32.mrf.mxu0
        %v670 = vadd.f32 %v641, %v669
        %v671 = vpop.f32.mrf.mxu0
        %v672 = vadd.f32 %v643, %v671
        %673 = vmatmul.bf16.gmra.mxu0 %v435
        %v674 = vpop.f32.mrf.mxu0
        %v675 = vadd.f32 %v646, %v674
        %v676 = vpop.f32.mrf.mxu0
        %v677 = vadd.f32 %v648, %v676
        %678 = vdwg.mxu0
        %v679 = vadd.f32 %v312, %v660
        %v680 = vadd.f32 %v313, %v662
        %v681 = vadd.f32 %v314, %v665
        %v682 = vadd.f32 %v315, %v667
        %v683 = vadd.f32 %v316, %v670
        %v684 = vadd.f32 %v317, %v672
        %v685 = vadd.f32 %v318, %v675
        %v686 = vadd.f32 %v319, %v677
        %687 = vst [vmem:[#allocation2] sm:$0xff] %v679
        %688 = vst [vmem:[#allocation2 + $0x8] sm:$0xff] %v680
        %689 = vst [vmem:[#allocation2 + $0x10] sm:$0xff] %v681
        %690 = vst [vmem:[#allocation2 + $0x18] sm:$0xff] %v682
        %691 = vst [vmem:[#allocation2 + $0x20] sm:$0xff] %v683
        %692 = vst [vmem:[#allocation2 + $0x28] sm:$0xff] %v684
        %693 = vst [vmem:[#allocation2 + $0x30] sm:$0xff] %v685
        %694 = vst [vmem:[#allocation2 + $0x38] sm:$0xff] %v686
        %p695 = scmp.eq.s32.totalorder %s20, 2
        // Predicated region
        $region67: #{peft_rn_forward.14} parent=57 // pred_check
          %p696 = pneg %p695
        $region68: #{peft_rn_forward.14} parent=57 // pred_check_branch
          %698 = sbr.rel (%p696) target = $region70
        $region69: #{peft_rn_forward.14} parent=57 // pred_region
          %v699 = vld [vmem:[#allocation2] sm:$0xff]
          %v700 = vld [vmem:[#allocation2 + $0x8] sm:$0xff]
          %v701 = vld [vmem:[#allocation2 + $0x10] sm:$0xff]
          %v702 = vld [vmem:[#allocation2 + $0x18] sm:$0xff]
          %v703 = vld [vmem:[#allocation2 + $0x20] sm:$0xff]
          %v704 = vld [vmem:[#allocation2 + $0x28] sm:$0xff]
          %v705 = vld [vmem:[#allocation2 + $0x30] sm:$0xff]
          %v706 = vld [vmem:[#allocation2 + $0x38] sm:$0xff]
          %v707 = vld [vmem:[%s2] sm:$0x1]
          %v709 = vperm.slane %v707, 0
          %v711 = vmul.f32 %v699, %v709
          %v712 = vmul.f32 %v700, %v709
          %v713 = vmul.f32 %v701, %v709
          %v714 = vmul.f32 %v702, %v709
          %v715 = vmul.f32 %v703, %v709
          %v716 = vmul.f32 %v704, %v709
          %v717 = vmul.f32 %v705, %v709
          %v718 = vmul.f32 %v706, %v709
          %v719 = vld [vmem:[%s3] sm:$0x1]
          %v721 = vperm.slane %v719, 0
          %v723 = vadd.f32 %v711, %v721
          %v724 = vadd.f32 %v712, %v721
          %v725 = vadd.f32 %v713, %v721
          %v726 = vadd.f32 %v714, %v721
          %v727 = vadd.f32 %v715, %v721
          %v728 = vadd.f32 %v716, %v721
          %v729 = vadd.f32 %v717, %v721
          %v730 = vadd.f32 %v718, %v721
          %v731 = vmax.f32 %v723, 0.0
          %v732 = vmax.f32 %v724, 0.0
          %v733 = vmax.f32 %v725, 0.0
          %v734 = vmax.f32 %v726, 0.0
          %v735 = vmax.f32 %v727, 0.0
          %v736 = vmax.f32 %v728, 0.0
          %v737 = vmax.f32 %v729, 0.0
          %v738 = vmax.f32 %v730, 0.0
          %v739 = vpack.c.bf16 %v731, %v731
          %v740 = vpack.c.bf16 %v732, %v732
          %v741 = vpack.c.bf16 %v733, %v733
          %v742 = vpack.c.bf16 %v734, %v734
          %v743 = vpack.c.bf16 %v735, %v735
          %v744 = vpack.c.bf16 %v736, %v736
          %v745 = vpack.c.bf16 %v737, %v737
          %v746 = vpack.c.bf16 %v738, %v738
          %747 = vst [vmem:[%s298] sm:$0xf] %v739
          %748 = vst [vmem:[%s298 + $0x4] sm:$0xf] %v740
          %749 = vst [vmem:[%s298 + $0x8] sm:$0xf] %v741
          %750 = vst [vmem:[%s298 + $0xc] sm:$0xf] %v742
          %751 = vst [vmem:[%s298 + $0x10] sm:$0xf] %v743
          %752 = vst [vmem:[%s298 + $0x14] sm:$0xf] %v744
          %753 = vst [vmem:[%s298 + $0x18] sm:$0xf] %v745
          %754 = vst [vmem:[%s298 + $0x1c] sm:$0xf] %v746
        $region70: #{peft_rn_forward.14} parent=57 // pred_fallthru
          _
        %s755 = smul.u32 8, %s19
        %p756 = scmp.lt.s32.totalorder %s755, 15
        %s757 = scalar_select %p756, %s755, 15
        %s758 = smul.addr %s757, 4
        %s759 = scalar_lea.vmem %s4, %s758
        // Predicated region
        $region71: #{peft_rn_forward.14} parent=57 // pred_check
          %p760 = pneg %p141
        $region72: #{peft_rn_forward.14} parent=57 // pred_check_branch
          %762 = sbr.rel (%p760) target = $region74
        $region73: #{peft_rn_forward.14} parent=57 // pred_region
          %s763 = smul.u32 8, %s19
        $region74: #{peft_rn_forward.14} parent=57 // pred_fallthru
          _
      $region58: #{peft_rn_forward.14} parent=5 // pred_fallthru
        _
      %p764 = scmp.le.s32.totalorder 2, %s10
      // Predicated region
      $region75: #{peft_rn_forward.14} parent=5 // pred_check
        %p765 = pneg %p764
      $region76: #{peft_rn_forward.14} parent=5 // pred_check_branch
        %767 = sbr.rel (%p765) target = $region78
      $region77: #{peft_rn_forward.14} parent=5 // pred_region
        %s768 = ssub.s32 %s10, 2
        // Predicated region
        $region79: #{peft_rn_forward.14} parent=77 // pred_check
          %p769 = pneg %p147
        $region80: #{peft_rn_forward.14} parent=77 // pred_check_branch
          %771 = sbr.rel (%p769) target = $region82
        $region81: #{peft_rn_forward.14} parent=77 // pred_region
          %s772 = smul.u32 8, %s21
          %p773 = scmp.lt.s32.totalorder %s772, 15
          %s774 = scalar_select %p773, %s772, 15
          %s775 = smul.addr %s774, 4
          %s776 = scalar_lea.vmem %s4, %s775
        $region82: #{peft_rn_forward.14} parent=77 // pred_fallthru
          _
      $region78: #{peft_rn_forward.14} parent=5 // pred_fallthru
        _
    $region6: #{peft_rn_forward.14} parent=1 // loop_footer
      %s14 = sadd.s32 1, %s10
    $region7: #{peft_rn_forward.14} parent=1 // loop_footer_branch
      %9 = sbr.rel target = $region3
    $region8: #{peft_rn_forward.14} parent=1 // loop_exit
      _

// kernel: peft_rn_forward.18
$region0: #{peft_rn_forward.18}
  #allocation0 [shape = 'u32[]', space=smem, size = 0x4, offset = 0x4, fixed_abs, tag = 'smem constant byte address 0x4 - core index']
  #allocation1 [shape = 'u32[72,128]{1,0:T(1,128)}', space=vmem, size = 0x9000, scoped, tag = 'internal scratch']
  #allocation2 [shape = 'f32[16,128]{1,0:T(8,128)}', space=vmem, size = 0x2000, scoped, tag = 'scratch operand']
  %s0 = inlined_call_operand.vmem [shape: bf16[32,1152], index: 0, kind: input, shape index: {}]
  %s1 = inlined_call_operand.vmem [shape: bf16[1152,128], index: 1, kind: input, shape index: {}]
  %s2 = inlined_call_operand.vmem [shape: f32[1,128], index: 2, kind: input, shape index: {}]
  %s3 = inlined_call_operand.vmem [shape: f32[1,128], index: 3, kind: input, shape index: {}]
  %s4 = inlined_call_operand.vmem [shape: bf16[32,128], index: 4, kind: output, shape index: {}]
  %s5 = sld [smem:[#allocation0]]
  $region83: #{peft_rn_forward.18} parent=0
    _
  %s7 = ssub.s32 1, %s5
  %s8 = scalar_select 0, %s7, %s5
  $region1: #{peft_rn_forward.18} parent=0
    #allocation3 [shape = 'u8[24576]{0}', space=vmem, size = 0x6000, scoped, tag = 'input window, operand 0']
    loop: start=0, step=1, limit=8
    $region2: #{peft_rn_forward.18} parent=1 // loop_pre_header
      _
    $region3: #{peft_rn_forward.18} parent=1 // loop_header
      %s10 = sphi 0, %s14
      %p11 = scmp.ge.s32.totalorder %s10, 8
      %s17 = sphi 0, %s29
      %s18 = sphi 0, %s25
      %s19 = sphi 0, %s17
      %s20 = sphi 0, %s18
      %s21 = sphi 0, %s19
      %s22 = sphi 0, %s20
      %s34 = sphi 0, %s36
      %s37 = sphi 0, %s34
      %s38 = sphi 0, %s37
      %s54 = sphi 0, %s38
      %s60 = sphi 0, %s62
      %s63 = sphi 0, %s60
      %s64 = sphi 0, %s63
      %s80 = sphi 0, %s64
      %s84 = sphi 0, %s84
      %s86 = sphi 0, %s84
      %s87 = sphi 0, %s86
      %s101 = sphi 0, %s87
      %s105 = sphi 0, %s105
      %s107 = sphi 0, %s105
      %s108 = sphi 0, %s107
      %s122 = sphi 0, %s108
      %s128 = sphi 0, %s130
      %s131 = sphi 0, %s128
      %s132 = sphi 0, %s131
      %s148 = sphi 0, %s132
    $region4: #{peft_rn_forward.18} parent=1 // loop_header_branch
      %13 = sbr.rel (%p11) target = $region8
    $region5: #{peft_rn_forward.18} parent=1 // loop_body
      %s15 = ssub.s32 %s10, 1
      %s16 = ssub.s32 %s10, 2
      %s23 = sadd.s32 1, %s18
      %p24 = scmp.ge.s32.totalorder %s23, 3
      %s25 = scalar_select %p24, 0, %s23
      %s26 = sadd.s32 1, %s17
      %s27 = scalar_select %p24, %s26, %s17
      %p28 = scmp.ge.s32.totalorder %s27, 2
      %s29 = scalar_select %p28, 0, %s27
      %s30 = ssub.s32 %s17, %s29
      %s31 = ssub.s32 %s18, %s25
      %s32 = sor.u32 %s30, %s31
      %p33 = scmp.eq.s32.totalorder %s32, 0
      %s35 = sadd.s32 %s34, 1
      %s36 = scalar_select %p33, %s34, %s35
      %p39 = pneg %p33
      %p40 = scmp.eq.s32.totalorder %s10, 5
      %p41 = por %p39, %p40
      %p42 = scmp.ne.s32.totalorder %s34, %s37
      %p43 = scmp.eq.s32.totalorder %s10, 0
      %p44 = por %p42, %p43
      %p45 = scmp.ne.s32.totalorder %s34, %s37
      %p46 = scmp.eq.s32.totalorder %s15, 5
      %p47 = por %p45, %p46
      %p48 = scmp.ne.s32.totalorder %s37, %s38
      %p49 = scmp.eq.s32.totalorder %s15, 0
      %p50 = por %p48, %p49
      %p51 = scmp.ne.s32.totalorder %s37, %s38
      %p52 = scmp.eq.s32.totalorder %s16, 5
      %p53 = por %p51, %p52
      %p55 = scmp.ne.s32.totalorder %s38, %s54
      %p56 = scmp.eq.s32.totalorder %s16, 0
      %p57 = por %p55, %p56
      %s58 = ssub.s32 %s18, %s25
      %p59 = scmp.eq.s32.totalorder %s58, 0
      %s61 = sadd.s32 %s60, 1
      %s62 = scalar_select %p59, %s60, %s61
      %p65 = pneg %p59
      %p66 = scmp.eq.s32.totalorder %s10, 5
      %p67 = por %p65, %p66
      %p68 = scmp.ne.s32.totalorder %s60, %s63
      %p69 = scmp.eq.s32.totalorder %s10, 0
      %p70 = por %p68, %p69
      %p71 = scmp.ne.s32.totalorder %s60, %s63
      %p72 = scmp.eq.s32.totalorder %s15, 5
      %p73 = por %p71, %p72
      %p74 = scmp.ne.s32.totalorder %s63, %s64
      %p75 = scmp.eq.s32.totalorder %s15, 0
      %p76 = por %p74, %p75
      %p77 = scmp.ne.s32.totalorder %s63, %s64
      %p78 = scmp.eq.s32.totalorder %s16, 5
      %p79 = por %p77, %p78
      %p81 = scmp.ne.s32.totalorder %s64, %s80
      %p82 = scmp.eq.s32.totalorder %s16, 0
      %p83 = por %p81, %p82
      %s85 = sadd.s32 %s84, 1
      %p88 = scmp.eq.s32.totalorder %s10, 5
      %p89 = scmp.ne.s32.totalorder %s84, %s86
      %p90 = scmp.eq.s32.totalorder %s10, 0
      %p91 = por %p89, %p90
      %p92 = scmp.ne.s32.totalorder %s84, %s86
      %p93 = scmp.eq.s32.totalorder %s15, 5
      %p94 = por %p92, %p93
      %p95 = scmp.ne.s32.totalorder %s86, %s87
      %p96 = scmp.eq.s32.totalorder %s15, 0
      %p97 = por %p95, %p96
      %p98 = scmp.ne.s32.totalorder %s86, %s87
      %p99 = scmp.eq.s32.totalorder %s16, 5
      %p100 = por %p98, %p99
      %p102 = scmp.ne.s32.totalorder %s87, %s101
      %p103 = scmp.eq.s32.totalorder %s16, 0
      %p104 = por %p102, %p103
      %s106 = sadd.s32 %s105, 1
      %p109 = scmp.eq.s32.totalorder %s10, 5
      %p110 = scmp.ne.s32.totalorder %s105, %s107
      %p111 = scmp.eq.s32.totalorder %s10, 0
      %p112 = por %p110, %p111
      %p113 = scmp.ne.s32.totalorder %s105, %s107
      %p114 = scmp.eq.s32.totalorder %s15, 5
      %p115 = por %p113, %p114
      %p116 = scmp.ne.s32.totalorder %s107, %s108
      %p117 = scmp.eq.s32.totalorder %s15, 0
      %p118 = por %p116, %p117
      %p119 = scmp.ne.s32.totalorder %s107, %s108
      %p120 = scmp.eq.s32.totalorder %s16, 5
      %p121 = por %p119, %p120
      %p123 = scmp.ne.s32.totalorder %s108, %s122
      %p124 = scmp.eq.s32.totalorder %s16, 0
      %p125 = por %p123, %p124
      %s126 = ssub.s32 %s17, %s29
      %p127 = scmp.eq.s32.totalorder %s126, 0
      %s129 = sadd.s32 %s128, 1
      %s130 = scalar_select %p127, %s128, %s129
      %p133 = pneg %p127
      %p134 = scmp.eq.s32.totalorder %s10, 5
      %p135 = por %p133, %p134
      %p136 = scmp.ne.s32.totalorder %s128, %s131
      %p137 = scmp.eq.s32.totalorder %s10, 0
      %p138 = por %p136, %p137
      %p139 = scmp.ne.s32.totalorder %s128, %s131
      %p140 = scmp.eq.s32.totalorder %s15, 5
      %p141 = por %p139, %p140
      %p142 = scmp.ne.s32.totalorder %s131, %s132
      %p143 = scmp.eq.s32.totalorder %s15, 0
      %p144 = por %p142, %p143
      %p145 = scmp.ne.s32.totalorder %s131, %s132
      %p146 = scmp.eq.s32.totalorder %s16, 5
      %p147 = por %p145, %p146
      %p149 = scmp.ne.s32.totalorder %s132, %s148
      %p150 = scmp.eq.s32.totalorder %s16, 0
      %p151 = por %p149, %p150
      %p152 = scmp.le.s32.totalorder 1, %s10
      %p153 = scmp.lt.s32.totalorder %s10, 7
      %p154 = pnand %p152, %p153
      %p155 = pneg %p154
      // Predicated region
      $region9: #{peft_rn_forward.18} parent=5 // pred_check
        _
      $region10: #{peft_rn_forward.18} parent=5 // pred_check_branch
        %157 = sbr.rel (%p154) target = $region12
      $region11: #{peft_rn_forward.18} parent=5 // pred_region
        %s158 = ssub.s32 %s10, 1
        // Predicated region
        $region13: #{peft_rn_forward.18} parent=11 // pred_check
          %p159 = pneg %p97
        $region14: #{peft_rn_forward.18} parent=11 // pred_check_branch
          %161 = sbr.rel (%p159) target = $region16
        $region15: #{peft_rn_forward.18} parent=11 // pred_region
          _
        $region16: #{peft_rn_forward.18} parent=11 // pred_fallthru
          _
        // Predicated region
        $region17: #{peft_rn_forward.18} parent=11 // pred_check
          %p162 = pneg %p118
        $region18: #{peft_rn_forward.18} parent=11 // pred_check_branch
          %164 = sbr.rel (%p162) target = $region20
        $region19: #{peft_rn_forward.18} parent=11 // pred_region
          _
        $region20: #{peft_rn_forward.18} parent=11 // pred_fallthru
          _
      $region12: #{peft_rn_forward.18} parent=5 // pred_fallthru
        _
      %p165 = scmp.lt.s32.totalorder %s10, 6
      // Predicated region
      $region21: #{peft_rn_forward.18} parent=5 // pred_check
        %p166 = pneg %p165
      $region22: #{peft_rn_forward.18} parent=5 // pred_check_branch
        %168 = sbr.rel (%p166) target = $region24
      $region23: #{peft_rn_forward.18} parent=5 // pred_region
        // Predicated region
        $region25: #{peft_rn_forward.18} parent=23 // pred_check
          %p169 = pneg %p44
        $region26: #{peft_rn_forward.18} parent=23 // pred_check_branch
          %171 = sbr.rel (%p169) target = $region28
        $region27: #{peft_rn_forward.18} parent=23 // pred_region
          %s172 = sand.u32 %s34, 1
          %s173 = sand.u32 %s34, 1
          %s174 = smul.addr %s173, 24
          %s175 = scalar_lea.vmem [#allocation3], %s174
          %s176 = smul.u32 2, %s17
          %s177 = smul.u32 3, %s18
          %s178 = smul.addr %s176, 9
          %s179 = sadd.s32 %s177, %s178
          %s180 = smul.addr %s179, 4
          %s181 = scalar_lea.vmem %s0, %s180
          // Predicated region
          $region29: #{peft_rn_forward.18} parent=27 // pred_check
            _
          $region30: #{peft_rn_forward.18} parent=27 // pred_check_branch
            %183 = sbr.rel (0) target = $region32
          $region31: #{peft_rn_forward.18} parent=27 // pred_region
            // Predicated region
            $region33: #{peft_rn_forward.18} parent=31 // pred_check
              _
            $region34: #{peft_rn_forward.18} parent=31 // pred_check_branch
              %185 = sbr.rel (0) target = $region36
            $region35: #{peft_rn_forward.18} parent=31 // pred_region
              %s186 = scalar_lea.vmem %s181, 8
              %s187 = scalar_lea.vmem %s175, 8 [#allocation3]
              loop: start=0, step=1, limit=1
              $region37: #{peft_rn_forward.18} parent=35 // loop_pre_header
                _
              $region38: #{peft_rn_forward.18} parent=35 // loop_header
                %s189 = sphi 0, %s193
                %p190 = scmp.ge.s32.totalorder %s189, 1
                %s194 = sphi %s181, %s181
                %s195 = sphi %s175, %s175
              $region39: #{peft_rn_forward.18} parent=35 // loop_header_branch
                %192 = sbr.rel (%p190) target = $region43
              $region40: #{peft_rn_forward.18} parent=35 // loop_body
                %v196 = vld [vmem:[%s194] sm:$0xff]
                %197 = vst [vmem:[%s195] sm:$0xff] %v196
                %v198 = vld [vmem:[%s194 + $0x24] sm:$0xff]
                %199 = vst [vmem:[%s195 + $0xc] sm:$0xff] %v198
              $region41: #{peft_rn_forward.18} parent=35 // loop_footer
                %s193 = sadd.s32 1, %s189
              $region42: #{peft_rn_forward.18} parent=35 // loop_footer_branch
                %188 = sbr.rel target = $region38
              $region43: #{peft_rn_forward.18} parent=35 // loop_exit
                _
              %s201 = ssub.s32 16, 1
              loop: start=0, step=1, limit=1
              $region44: #{peft_rn_forward.18} parent=35 // loop_pre_header
                _
              $region45: #{peft_rn_forward.18} parent=35 // loop_header
                %s203 = sphi 0, %s207
                %p204 = scmp.ge.s32.totalorder %s203, 1
                %s208 = sphi %s186, %s186
                %s209 = sphi %s187, %s187
              $region46: #{peft_rn_forward.18} parent=35 // loop_header_branch
                %206 = sbr.rel (%p204) target = $region50
              $region47: #{peft_rn_forward.18} parent=35 // loop_body
                %v210 = vld [vmem:[%s208] sm:%s201]
                %211 = vst [vmem:[%s209] sm:%s201] %v210
                %v212 = vld [vmem:[%s208 + $0x24] sm:%s201]
                %213 = vst [vmem:[%s209 + $0xc] sm:%s201] %v212
              $region48: #{peft_rn_forward.18} parent=35 // loop_footer
                %s207 = sadd.s32 1, %s203
              $region49: #{peft_rn_forward.18} parent=35 // loop_footer_branch
                %202 = sbr.rel target = $region45
              $region50: #{peft_rn_forward.18} parent=35 // loop_exit
                _
            $region36: #{peft_rn_forward.18} parent=31 // pred_fallthru
              _
          $region32: #{peft_rn_forward.18} parent=27 // pred_fallthru
            _
          %214 = vnop
        $region28: #{peft_rn_forward.18} parent=23 // pred_fallthru
          _
        // Predicated region
        $region51: #{peft_rn_forward.18} parent=23 // pred_check
          %p215 = pneg %p70
        $region52: #{peft_rn_forward.18} parent=23 // pred_check_branch
          %217 = sbr.rel (%p215) target = $region54
        $region53: #{peft_rn_forward.18} parent=23 // pred_region
          %s218 = smul.u32 48, %s18
          %p219 = scmp.lt.s32.totalorder %s218, 143
          %s220 = scalar_select %p219, %s218, 143
          %s221 = smul.addr %s220, 4
          %s222 = scalar_lea.vmem %s1, %s221
          %s223 = smul.u32 48, %s18
        $region54: #{peft_rn_forward.18} parent=23 // pred_fallthru
          _
      $region24: #{peft_rn_forward.18} parent=5 // pred_fallthru
        _
      %p224 = scmp.le.s32.totalorder 1, %s10
      %p225 = scmp.lt.s32.totalorder %s10, 7
      %p226 = pnand %p224, %p225
      %p227 = pneg %p226
      // Predicated region
      $region55: #{peft_rn_forward.18} parent=5 // pred_check
        _
      $region56: #{peft_rn_forward.18} parent=5 // pred_check_branch
        %229 = sbr.rel (%p226) target = $region58
      $region57: #{peft_rn_forward.18} parent=5 // pred_region
        %s230 = ssub.s32 %s10, 1
        %s231 = sand.u32 %s37, 1
        %s232 = sand.u32 %s37, 1
        %s233 = smul.addr %s232, 24
        %s234 = scalar_lea.vmem [#allocation3], %s233
        // Predicated region
        $region59: #{peft_rn_forward.18} parent=57 // pred_check
          %p235 = pneg %p50
        $region60: #{peft_rn_forward.18} parent=57 // pred_check_branch
          %237 = sbr.rel (%p235) target = $region62
        $region61: #{peft_rn_forward.18} parent=57 // pred_region
          _
        $region62: #{peft_rn_forward.18} parent=57 // pred_fallthru
          _
        %s238 = sand.u32 %s37, 1
        %s239 = sand.u32 %s37, 1
        %s240 = smul.addr %s239, 24
        %s241 = scalar_lea.vmem [#allocation3], %s240
        %p242 = pneg %p50
        %p243 = pneg %p47
        %s244 = smul.u32 48, %s20
        %p245 = scmp.lt.s32.totalorder %s244, 143
        %s246 = scalar_select %p245, %s244, 143
        %s247 = smul.addr %s246, 4
        %s248 = scalar_lea.vmem %s1, %s247
        %p249 = pneg %p76
        %p250 = pneg %p73
        %p251 = pneg %p97
        %p252 = pneg %p94
        %p253 = pneg %p118
        %p254 = pneg %p115
        %p255 = pneg %p144
        %p256 = pneg %p141
        %s257 = smul.u32 2, %s19
        %p258 = scmp.lt.s32.totalorder %s257, 3
        %s259 = scalar_select %p258, %s257, 3
        %s260 = smul.addr %s259, 4
        %s261 = scalar_lea.vmem %s4, %s260
        %s262 = smul.u32 2, %s19
        %s263 = smul.u32 3, %s20
        %s264 = smul.u32 48, %s20
        %p265 = scmp.lt.s32.totalorder %s264, 143
        %s266 = scalar_select %p265, %s264, 143
        %s267 = smul.addr %s266, 4
        %s268 = scalar_lea.vmem %s1, %s267
        %s269 = smul.u32 48, %s20
        %s270 = smul.u32 2, %s19
        %p271 = scmp.lt.s32.totalorder %s270, 3
        %s272 = scalar_select %p271, %s270, 3
        %s273 = smul.addr %s272, 4
        %s274 = scalar_lea.vmem %s4, %s273
        %s275 = smul.u32 2, %s19
        %p276 = scmp.eq.s32.totalorder %s20, 0
        // Predicated region
        $region63: #{peft_rn_forward.18} parent=57 // pred_check
          %p277 = pneg %p276
        $region64: #{peft_rn_forward.18} parent=57 // pred_check_branch
          %279 = sbr.rel (%p277) target = $region66
        $region65: #{peft_rn_forward.18} parent=57 // pred_region
          %280 = vst [vmem:[#allocation2] sm:$0xff] 0.0
          %281 = vst [vmem:[#allocation2 + $0x8] sm:$0xff] 0.0
        $region66: #{peft_rn_forward.18} parent=57 // pred_fallthru
          _
        %v282 = vld [vmem:[#allocation2] sm:$0xff]
        %v283 = vld [vmem:[#allocation2 + $0x8] sm:$0xff]
        %v284 = vld [vmem:[%s234] sm:$0xff]
        %v285 = vld [vmem:[%s234 + $0x8] sm:$0xf]
        %v286 = vld [vmem:[%s234 + $0xc] sm:$0xff]
        %v287 = vld [vmem:[%s234 + $0x14] sm:$0xf]
        %v288 = vld [vmem:[%s268] sm:$0xf]
        %v289 = vld [vmem:[%s268 + $0x4] sm:$0xf]
        %v290 = vld [vmem:[%s268 + $0x8] sm:$0xf]
        %v291 = vld [vmem:[%s268 + $0xc] sm:$0xf]
        %v292 = vld [vmem:[%s268 + $0x10] sm:$0xf]
        %v293 = vld [vmem:[%s268 + $0x14] sm:$0xf]
        %v294 = vld [vmem:[%s268 + $0x18] sm:$0xf]
        %v295 = vld [vmem:[%s268 + $0x1c] sm:$0xf]
        %v296 = vld [vmem:[%s268 + $0x20] sm:$0xf]
        %v297 = vld [vmem:[%s268 + $0x24] sm:$0xf]
        %v298 = vld [vmem:[%s268 + $0x28] sm:$0xf]
        %v299 = vld [vmem:[%s268 + $0x2c] sm:$0xf]
        %v300 = vld [vmem:[%s268 + $0x30] sm:$0xf]
        %v301 = vld [vmem:[%s268 + $0x34] sm:$0xf]
        %v302 = vld [vmem:[%s268 + $0x38] sm:$0xf]
        %v303 = vld [vmem:[%s268 + $0x3c] sm:$0xf]
        %v304 = vld [vmem:[%s268 + $0x40] sm:$0xf]
        %v305 = vld [vmem:[%s268 + $0x44] sm:$0xf]
        %v306 = vld [vmem:[%s268 + $0x48] sm:$0xf]
        %v307 = vld [vmem:[%s268 + $0x4c] sm:$0xf]
        %v308 = vld [vmem:[%s268 + $0x50] sm:$0xf]
        %v309 = vld [vmem:[%s268 + $0x54] sm:$0xf]
        %v310 = vld [vmem:[%s268 + $0x58] sm:$0xf]
        %v311 = vld [vmem:[%s268 + $0x5c] sm:$0xf]
        %v312 = vld [vmem:[%s268 + $0x60] sm:$0xf]
        %v313 = vld [vmem:[%s268 + $0x64] sm:$0xf]
        %v314 = vld [vmem:[%s268 + $0x68] sm:$0xf]
        %v315 = vld [vmem:[%s268 + $0x6c] sm:$0xf]
        %v316 = vld [vmem:[%s268 + $0x70] sm:$0xf]
        %v317 = vld [vmem:[%s268 + $0x74] sm:$0xf]
        %v318 = vld [vmem:[%s268 + $0x78] sm:$0xf]
        %v319 = vld [vmem:[%s268 + $0x7c] sm:$0xf]
        %v320 = vld [vmem:[%s268 + $0x80] sm:$0xf]
        %v321 = vld [vmem:[%s268 + $0x84] sm:$0xf]
        %v322 = vld [vmem:[%s268 + $0x88] sm:$0xf]
        %v323 = vld [vmem:[%s268 + $0x8c] sm:$0xf]
        %v324 = vld [vmem:[%s268 + $0x90] sm:$0xf]
        %v325 = vld [vmem:[%s268 + $0x94] sm:$0xf]
        %v326 = vld [vmem:[%s268 + $0x98] sm:$0xf]
        %v327 = vld [vmem:[%s268 + $0x9c] sm:$0xf]
        %v328 = vld [vmem:[%s268 + $0xa0] sm:$0xf]
        %v329 = vld [vmem:[%s268 + $0xa4] sm:$0xf]
        %v330 = vld [vmem:[%s268 + $0xa8] sm:$0xf]
        %v331 = vld [vmem:[%s268 + $0xac] sm:$0xf]
        %v332 = vld [vmem:[%s268 + $0xb0] sm:$0xf]
        %v333 = vld [vmem:[%s268 + $0xb4] sm:$0xf]
        %v334 = vld [vmem:[%s268 + $0xb8] sm:$0xf]
        %v335 = vld [vmem:[%s268 + $0xbc] sm:$0xf]
        %v340 = vunpack.c.l.b16 %v284
        %v341 = vunpack.c.h.b16 %v284
        %v342 = vunpack.c.l.b16 %v285
        %v343 = vunpack.c.l.b16 %v286
        %v344 = vunpack.c.h.b16 %v286
        %v345 = vunpack.c.l.b16 %v287
        %v346 = vpack.c.b16 %v343, %v340
        %v347 = vpack.c.b16 %v344, %v341
        %v348 = vpack.c.b16 %v345, %v342
        %v400 = vunpack.c.l.b16 %v288
        %v401 = vunpack.c.l.b16 %v289
        %v402 = vunpack.c.l.b16 %v290
        %v403 = vunpack.c.l.b16 %v291
        %v404 = vunpack.c.l.b16 %v292
        %v405 = vunpack.c.l.b16 %v293
        %v406 = vunpack.c.l.b16 %v294
        %v407 = vunpack.c.l.b16 %v295
        %v408 = vunpack.c.l.b16 %v296
        %v409 = vunpack.c.l.b16 %v297
        %v410 = vunpack.c.l.b16 %v298
        %v411 = vunpack.c.l.b16 %v299
        %v412 = vunpack.c.l.b16 %v300
        %v413 = vunpack.c.l.b16 %v301
        %v414 = vunpack.c.l.b16 %v302
        %v415 = vunpack.c.l.b16 %v303
        %v416 = vunpack.c.l.b16 %v304
        %v417 = vunpack.c.l.b16 %v305
        %v418 = vunpack.c.l.b16 %v306
        %v419 = vunpack.c.l.b16 %v307
        %v420 = vunpack.c.l.b16 %v308
        %v421 = vunpack.c.l.b16 %v309
        %v422 = vunpack.c.l.b16 %v310
        %v423 = vunpack.c.l.b16 %v311
        %v424 = vunpack.c.l.b16 %v312
        %v425 = vunpack.c.l.b16 %v313
        %v426 = vunpack.c.l.b16 %v314
        %v427 = vunpack.c.l.b16 %v315
        %v428 = vunpack.c.l.b16 %v316
        %v429 = vunpack.c.l.b16 %v317
        %v430 = vunpack.c.l.b16 %v318
        %v431 = vunpack.c.l.b16 %v319
        %v432 = vunpack.c.l.b16 %v320
        %v433 = vunpack.c.l.b16 %v321
        %v434 = vunpack.c.l.b16 %v322
        %v435 = vunpack.c.l.b16 %v323
        %v436 = vunpack.c.l.b16 %v324
        %v437 = vunpack.c.l.b16 %v325
        %v438 = vunpack.c.l.b16 %v326
        %v439 = vunpack.c.l.b16 %v327
        %v440 = vunpack.c.l.b16 %v328
        %v441 = vunpack.c.l.b16 %v329
        %v442 = vunpack.c.l.b16 %v330
        %v443 = vunpack.c.l.b16 %v331
        %v444 = vunpack.c.l.b16 %v332
        %v445 = vunpack.c.l.b16 %v333
        %v446 = vunpack.c.l.b16 %v334
        %v447 = vunpack.c.l.b16 %v335
        %v448 = vpack.c.b16 %v401, %v400
        %v449 = vpack.c.b16 %v403, %v402
        %v450 = vpack.c.b16 %v405, %v404
        %v451 = vpack.c.b16 %v407, %v406
        %v452 = vpack.c.b16 %v409, %v408
        %v453 = vpack.c.b16 %v411, %v410
        %v454 = vpack.c.b16 %v413, %v412
        %v455 = vpack.c.b16 %v415, %v414
        %v456 = vpack.c.b16 %v417, %v416
        %v457 = vpack.c.b16 %v419, %v418
        %v458 = vpack.c.b16 %v421, %v420
        %v459 = vpack.c.b16 %v423, %v422
        %v460 = vpack.c.b16 %v425, %v424
        %v461 = vpack.c.b16 %v427, %v426
        %v462 = vpack.c.b16 %v429, %v428
        %v463 = vpack.c.b16 %v431, %v430
        %v464 = vpack.c.b16 %v433, %v432
        %v465 = vpack.c.b16 %v435, %v434
        %v466 = vpack.c.b16 %v437, %v436
        %v467 = vpack.c.b16 %v439, %v438
        %v468 = vpack.c.b16 %v441, %v440
        %v469 = vpack.c.b16 %v443, %v442
        %v470 = vpack.c.b16 %v445, %v444
        %v471 = vpack.c.b16 %v447, %v446
        %496 = vmatpush.bf16.msra.mxu0 %v455
        %497 = vmatpush.bf16.msra.mxu0 %v454
        %498 = vmatpush.bf16.msra.mxu0 %v453
        %499 = vmatpush.bf16.msra.mxu0 %v452
        %500 = vmatpush.bf16.msra.mxu0 %v451
        %501 = vmatpush.bf16.msra.mxu0 %v450
        %502 = vmatpush.bf16.msra.mxu0 %v449
        %503 = vmatpush.bf16.msra.mxu0 %v448
        %504 = vmatmul.bf16.gmra.mxu0 %v346
        %v505 = vpop.f32.mrf.mxu0
        %v506 = vadd.f32 0.0, %v505
        %v507 = vpop.f32.mrf.mxu0
        %v508 = vadd.f32 0.0, %v507
        %509 = vdwg.mxu0
        %510 = vmatpush.bf16.msra.mxu0 %v463
        %511 = vmatpush.bf16.msra.mxu0 %v462
        %512 = vmatpush.bf16.msra.mxu0 %v461
        %513 = vmatpush.bf16.msra.mxu0 %v460
        %514 = vmatpush.bf16.msra.mxu0 %v459
        %515 = vmatpush.bf16.msra.mxu0 %v458
        %516 = vmatpush.bf16.msra.mxu0 %v457
        %517 = vmatpush.bf16.msra.mxu0 %v456
        %518 = vmatmul.bf16.gmra.mxu0 %v347
        %v519 = vpop.f32.mrf.mxu0
        %v520 = vadd.f32 %v506, %v519
        %v521 = vpop.f32.mrf.mxu0
        %v522 = vadd.f32 %v508, %v521
        %523 = vdwg.mxu0
        %524 = vmatpush.bf16.msra.mxu0 %v471
        %525 = vmatpush.bf16.msra.mxu0 %v470
        %526 = vmatpush.bf16.msra.mxu0 %v469
        %527 = vmatpush.bf16.msra.mxu0 %v468
        %528 = vmatpush.bf16.msra.mxu0 %v467
        %529 = vmatpush.bf16.msra.mxu0 %v466
        %530 = vmatpush.bf16.msra.mxu0 %v465
        %531 = vmatpush.bf16.msra.mxu0 %v464
        %532 = vmatmul.bf16.gmra.mxu0 %v348
        %v533 = vpop.f32.mrf.mxu0
        %v534 = vadd.f32 %v520, %v533
        %v535 = vpop.f32.mrf.mxu0
        %v536 = vadd.f32 %v522, %v535
        %537 = vdwg.mxu0
        %v538 = vadd.f32 %v282, %v534
        %v539 = vadd.f32 %v283, %v536
        %540 = vst [vmem:[#allocation2] sm:$0xff] %v538
        %541 = vst [vmem:[#allocation2 + $0x8] sm:$0xff] %v539
        %p542 = scmp.eq.s32.totalorder %s20, 2
        // Predicated region
        $region67: #{peft_rn_forward.18} parent=57 // pred_check
          %p543 = pneg %p542
        $region68: #{peft_rn_forward.18} parent=57 // pred_check_branch
          %545 = sbr.rel (%p543) target = $region70
        $region69: #{peft_rn_forward.18} parent=57 // pred_region
          %v546 = vld [vmem:[#allocation2] sm:$0xff]
          %v547 = vld [vmem:[#allocation2 + $0x8] sm:$0xff]
          %v548 = vld [vmem:[%s2] sm:$0x1]
          %v550 = vperm.slane %v548, 0
          %v552 = vmul.f32 %v546, %v550
          %v553 = vmul.f32 %v547, %v550
          %v554 = vld [vmem:[%s3] sm:$0x1]
          %v556 = vperm.slane %v554, 0
          %v558 = vadd.f32 %v552, %v556
          %v559 = vadd.f32 %v553, %v556
          %v560 = vmax.f32 %v558, 0.0
          %v561 = vmax.f32 %v559, 0.0
          %v562 = vpack.c.bf16 %v560, %v560
          %v563 = vpack.c.bf16 %v561, %v561
          %564 = vst [vmem:[%s274] sm:$0xf] %v562
          %565 = vst [vmem:[%s274 + $0x4] sm:$0xf] %v563
        $region70: #{peft_rn_forward.18} parent=57 // pred_fallthru
          _
        %s566 = smul.u32 2, %s19
        %p567 = scmp.lt.s32.totalorder %s566, 3
        %s568 = scalar_select %p567, %s566, 3
        %s569 = smul.addr %s568, 4
        %s570 = scalar_lea.vmem %s4, %s569
        // Predicated region
        $region71: #{peft_rn_forward.18} parent=57 // pred_check
          %p571 = pneg %p141
        $region72: #{peft_rn_forward.18} parent=57 // pred_check_branch
          %573 = sbr.rel (%p571) target = $region74
        $region73: #{peft_rn_forward.18} parent=57 // pred_region
          %s574 = smul.u32 2, %s19
        $region74: #{peft_rn_forward.18} parent=57 // pred_fallthru
          _
      $region58: #{peft_rn_forward.18} parent=5 // pred_fallthru
        _
      %p575 = scmp.le.s32.totalorder 2, %s10
      // Predicated region
      $region75: #{peft_rn_forward.18} parent=5 // pred_check
        %p576 = pneg %p575
      $region76: #{peft_rn_forward.18} parent=5 // pred_check_branch
        %578 = sbr.rel (%p576) target = $region78
      $region77: #{peft_rn_forward.18} parent=5 // pred_region
        %s579 = ssub.s32 %s10, 2
        // Predicated region
        $region79: #{peft_rn_forward.18} parent=77 // pred_check
          %p580 = pneg %p147
        $region80: #{peft_rn_forward.18} parent=77 // pred_check_branch
          %582 = sbr.rel (%p580) target = $region82
        $region81: #{peft_rn_forward.18} parent=77 // pred_region
          %s583 = smul.u32 2, %s21
          %p584 = scmp.lt.s32.totalorder %s583, 3
          %s585 = scalar_select %p584, %s583, 3
          %s586 = smul.addr %s585, 4
          %s587 = scalar_lea.vmem %s4, %s586
        $region82: #{peft_rn_forward.18} parent=77 // pred_fallthru
          _
      $region78: #{peft_rn_forward.18} parent=5 // pred_fallthru
        _
    $region6: #{peft_rn_forward.18} parent=1 // loop_footer
      %s14 = sadd.s32 1, %s10
    $region7: #{peft_rn_forward.18} parent=1 // loop_footer_branch
      %9 = sbr.rel target = $region3
    $region8: #{peft_rn_forward.18} parent=1 // loop_exit
      _

// kernel: peft_rn_forward.20
$region0: #{peft_rn_forward.20}
  #allocation0 [shape = 'u32[]', space=smem, size = 0x4, offset = 0x4, fixed_abs, tag = 'smem constant byte address 0x4 - core index']
  #allocation1 [shape = 'u32[72,128]{1,0:T(1,128)}', space=vmem, size = 0x9000, scoped, tag = 'internal scratch']
  #allocation2 [shape = 'f32[16,128]{1,0:T(8,128)}', space=vmem, size = 0x2000, scoped, tag = 'scratch operand']
  %s0 = inlined_call_operand.vmem [shape: bf16[32,128], index: 0, kind: input, shape index: {}]
  %s1 = inlined_call_operand.vmem [shape: bf16[128,128], index: 1, kind: input, shape index: {}]
  %s2 = inlined_call_operand.vmem [shape: f32[1,128], index: 2, kind: input, shape index: {}]
  %s3 = inlined_call_operand.vmem [shape: f32[1,128], index: 3, kind: input, shape index: {}]
  %s4 = inlined_call_operand.vmem [shape: bf16[32,128], index: 4, kind: input, shape index: {}]
  %s5 = inlined_call_operand.vmem [shape: bf16[32,128], index: 5, kind: output, shape index: {}]
  %s6 = sld [smem:[#allocation0]]
  $region61: #{peft_rn_forward.20} parent=0
    _
  %s8 = ssub.s32 1, %s6
  %s9 = scalar_select 0, %s8, %s6
  loop: start=0, step=1, limit=4
  $region2: #{peft_rn_forward.20} parent=0 // loop_pre_header
    _
  $region3: #{peft_rn_forward.20} parent=0 // loop_header
    %s11 = sphi 0, %s15
    %p12 = scmp.ge.s32.totalorder %s11, 4
    %s18 = sphi 0, %s30
    %s19 = sphi 0, %s26
    %s20 = sphi 0, %s18
    %s21 = sphi 0, %s19
    %s22 = sphi 0, %s20
    %s23 = sphi 0, %s21
    %s35 = sphi 0, %s37
    %s38 = sphi 0, %s35
    %s39 = sphi 0, %s38
    %s55 = sphi 0, %s39
    %s61 = sphi 0, %s63
    %s64 = sphi 0, %s61
    %s65 = sphi 0, %s64
    %s81 = sphi 0, %s65
    %s85 = sphi 0, %s85
    %s87 = sphi 0, %s85
    %s88 = sphi 0, %s87
    %s102 = sphi 0, %s88
    %s106 = sphi 0, %s106
    %s108 = sphi 0, %s106
    %s109 = sphi 0, %s108
    %s123 = sphi 0, %s109
    %s129 = sphi 0, %s131
    %s132 = sphi 0, %s129
    %s133 = sphi 0, %s132
    %s149 = sphi 0, %s133
    %s155 = sphi 0, %s157
    %s158 = sphi 0, %s155
    %s159 = sphi 0, %s158
    %s175 = sphi 0, %s159
  $region4: #{peft_rn_forward.20} parent=0 // loop_header_branch
    %14 = sbr.rel (%p12) target = $region8
  $region5: #{peft_rn_forward.20} parent=0 // loop_body
    %s16 = ssub.s32 %s11, 1
    %s17 = ssub.s32 %s11, 2
    %s24 = sadd.s32 1, %s19
    %p25 = scmp.ge.s32.totalorder %s24, 1
    %s26 = scalar_select %p25, 0, %s24
    %s27 = sadd.s32 1, %s18
    %s28 = scalar_select %p25, %s27, %s18
    %p29 = scmp.ge.s32.totalorder %s28, 2
    %s30 = scalar_select %p29, 0, %s28
    %s31 = ssub.s32 %s18, %s30
    %s32 = ssub.s32 %s19, %s26
    %s33 = sor.u32 %s31, %s32
    %p34 = scmp.eq.s32.totalorder %s33, 0
    %s36 = sadd.s32 %s35, 1
    %s37 = scalar_select %p34, %s35, %s36
    %p40 = pneg %p34
    %p41 = scmp.eq.s32.totalorder %s11, 1
    %p42 = por %p40, %p41
    %p43 = scmp.ne.s32.totalorder %s35, %s38
    %p44 = scmp.eq.s32.totalorder %s11, 0
    %p45 = por %p43, %p44
    %p46 = scmp.ne.s32.totalorder %s35, %s38
    %p47 = scmp.eq.s32.totalorder %s16, 1
    %p48 = por %p46, %p47
    %p49 = scmp.ne.s32.totalorder %s38, %s39
    %p50 = scmp.eq.s32.totalorder %s16, 0
    %p51 = por %p49, %p50
    %p52 = scmp.ne.s32.totalorder %s38, %s39
    %p53 = scmp.eq.s32.totalorder %s17, 1
    %p54 = por %p52, %p53
    %p56 = scmp.ne.s32.totalorder %s39, %s55
    %p57 = scmp.eq.s32.totalorder %s17, 0
    %p58 = por %p56, %p57
    %s59 = ssub.s32 %s19, %s26
    %p60 = scmp.eq.s32.totalorder %s59, 0
    %s62 = sadd.s32 %s61, 1
    %s63 = scalar_select %p60, %s61, %s62
    %p66 = pneg %p60
    %p67 = scmp.eq.s32.totalorder %s11, 1
    %p68 = por %p66, %p67
    %p69 = scmp.ne.s32.totalorder %s61, %s64
    %p70 = scmp.eq.s32.totalorder %s11, 0
    %p71 = por %p69, %p70
    %p72 = scmp.ne.s32.totalorder %s61, %s64
    %p73 = scmp.eq.s32.totalorder %s16, 1
    %p74 = por %p72, %p73
    %p75 = scmp.ne.s32.totalorder %s64, %s65
    %p76 = scmp.eq.s32.totalorder %s16, 0
    %p77 = por %p75, %p76
    %p78 = scmp.ne.s32.totalorder %s64, %s65
    %p79 = scmp.eq.s32.totalorder %s17, 1
    %p80 = por %p78, %p79
    %p82 = scmp.ne.s32.totalorder %s65, %s81
    %p83 = scmp.eq.s32.totalorder %s17, 0
    %p84 = por %p82, %p83
    %s86 = sadd.s32 %s85, 1
    %p89 = scmp.eq.s32.totalorder %s11, 1
    %p90 = scmp.ne.s32.totalorder %s85, %s87
    %p91 = scmp.eq.s32.totalorder %s11, 0
    %p92 = por %p90, %p91
    %p93 = scmp.ne.s32.totalorder %s85, %s87
    %p94 = scmp.eq.s32.totalorder %s16, 1
    %p95 = por %p93, %p94
    %p96 = scmp.ne.s32.totalorder %s87, %s88
    %p97 = scmp.eq.s32.totalorder %s16, 0
    %p98 = por %p96, %p97
    %p99 = scmp.ne.s32.totalorder %s87, %s88
    %p100 = scmp.eq.s32.totalorder %s17, 1
    %p101 = por %p99, %p100
    %p103 = scmp.ne.s32.totalorder %s88, %s102
    %p104 = scmp.eq.s32.totalorder %s17, 0
    %p105 = por %p103, %p104
    %s107 = sadd.s32 %s106, 1
    %p110 = scmp.eq.s32.totalorder %s11, 1
    %p111 = scmp.ne.s32.totalorder %s106, %s108
    %p112 = scmp.eq.s32.totalorder %s11, 0
    %p113 = por %p111, %p112
    %p114 = scmp.ne.s32.totalorder %s106, %s108
    %p115 = scmp.eq.s32.totalorder %s16, 1
    %p116 = por %p114, %p115
    %p117 = scmp.ne.s32.totalorder %s108, %s109
    %p118 = scmp.eq.s32.totalorder %s16, 0
    %p119 = por %p117, %p118
    %p120 = scmp.ne.s32.totalorder %s108, %s109
    %p121 = scmp.eq.s32.totalorder %s17, 1
    %p122 = por %p120, %p121
    %p124 = scmp.ne.s32.totalorder %s109, %s123
    %p125 = scmp.eq.s32.totalorder %s17, 0
    %p126 = por %p124, %p125
    %s127 = ssub.s32 %s18, %s30
    %p128 = scmp.eq.s32.totalorder %s127, 0
    %s130 = sadd.s32 %s129, 1
    %s131 = scalar_select %p128, %s129, %s130
    %p134 = pneg %p128
    %p135 = scmp.eq.s32.totalorder %s11, 1
    %p136 = por %p134, %p135
    %p137 = scmp.ne.s32.totalorder %s129, %s132
    %p138 = scmp.eq.s32.totalorder %s11, 0
    %p139 = por %p137, %p138
    %p140 = scmp.ne.s32.totalorder %s129, %s132
    %p141 = scmp.eq.s32.totalorder %s16, 1
    %p142 = por %p140, %p141
    %p143 = scmp.ne.s32.totalorder %s132, %s133
    %p144 = scmp.eq.s32.totalorder %s16, 0
    %p145 = por %p143, %p144
    %p146 = scmp.ne.s32.totalorder %s132, %s133
    %p147 = scmp.eq.s32.totalorder %s17, 1
    %p148 = por %p146, %p147
    %p150 = scmp.ne.s32.totalorder %s133, %s149
    %p151 = scmp.eq.s32.totalorder %s17, 0
    %p152 = por %p150, %p151
    %s153 = ssub.s32 %s18, %s30
    %p154 = scmp.eq.s32.totalorder %s153, 0
    %s156 = sadd.s32 %s155, 1
    %s157 = scalar_select %p154, %s155, %s156
    %p160 = pneg %p154
    %p161 = scmp.eq.s32.totalorder %s11, 1
    %p162 = por %p160, %p161
    %p163 = scmp.ne.s32.totalorder %s155, %s158
    %p164 = scmp.eq.s32.totalorder %s11, 0
    %p165 = por %p163, %p164
    %p166 = scmp.ne.s32.totalorder %s155, %s158
    %p167 = scmp.eq.s32.totalorder %s16, 1
    %p168 = por %p166, %p167
    %p169 = scmp.ne.s32.totalorder %s158, %s159
    %p170 = scmp.eq.s32.totalorder %s16, 0
    %p171 = por %p169, %p170
    %p172 = scmp.ne.s32.totalorder %s158, %s159
    %p173 = scmp.eq.s32.totalorder %s17, 1
    %p174 = por %p172, %p173
    %p176 = scmp.ne.s32.totalorder %s159, %s175
    %p177 = scmp.eq.s32.totalorder %s17, 0
    %p178 = por %p176, %p177
    %p179 = scmp.le.s32.totalorder 1, %s11
    %p180 = scmp.lt.s32.totalorder %s11, 3
    %p181 = pnand %p179, %p180
    %p182 = pneg %p181
    // Predicated region
    $region9: #{peft_rn_forward.20} parent=5 // pred_check
      _
    $region10: #{peft_rn_forward.20} parent=5 // pred_check_branch
      %184 = sbr.rel (%p181) target = $region12
    $region11: #{peft_rn_forward.20} parent=5 // pred_region
      %s185 = ssub.s32 %s11, 1
      // Predicated region
      $region13: #{peft_rn_forward.20} parent=11 // pred_check
        %p186 = pneg %p77
      $region14: #{peft_rn_forward.20} parent=11 // pred_check_branch
        %188 = sbr.rel (%p186) target = $region16
      $region15: #{peft_rn_forward.20} parent=11 // pred_region
        %s189 = smul.u32 16, %s21
        %p190 = scmp.lt.s32.totalorder %s189, 15
        %s191 = scalar_select %p190, %s189, 15
        %s192 = smul.addr %s191, 4
        %s193 = scalar_lea.vmem %s1, %s192
        %s194 = smul.u32 16, %s21
      $region16: #{peft_rn_forward.20} parent=11 // pred_fallthru
        _
      // Predicated region
      $region17: #{peft_rn_forward.20} parent=11 // pred_check
        %p195 = pneg %p98
      $region18: #{peft_rn_forward.20} parent=11 // pred_check_branch
        %197 = sbr.rel (%p195) target = $region20
      $region19: #{peft_rn_forward.20} parent=11 // pred_region
        _
      $region20: #{peft_rn_forward.20} parent=11 // pred_fallthru
        _
      // Predicated region
      $region21: #{peft_rn_forward.20} parent=11 // pred_check
        %p198 = pneg %p119
      $region22: #{peft_rn_forward.20} parent=11 // pred_check_branch
        %200 = sbr.rel (%p198) target = $region24
      $region23: #{peft_rn_forward.20} parent=11 // pred_region
        _
      $region24: #{peft_rn_forward.20} parent=11 // pred_fallthru
        _
    $region12: #{peft_rn_forward.20} parent=5 // pred_fallthru
      _
    %p201 = scmp.lt.s32.totalorder %s11, 2
    // Predicated region
    $region25: #{peft_rn_forward.20} parent=5 // pred_check
      %p202 = pneg %p201
    $region26: #{peft_rn_forward.20} parent=5 // pred_check_branch
      %204 = sbr.rel (%p202) target = $region28
    $region27: #{peft_rn_forward.20} parent=5 // pred_region
      // Predicated region
      $region29: #{peft_rn_forward.20} parent=27 // pred_check
        %p205 = pneg %p45
      $region30: #{peft_rn_forward.20} parent=27 // pred_check_branch
        %207 = sbr.rel (%p205) target = $region32
      $region31: #{peft_rn_forward.20} parent=27 // pred_region
        %s208 = smul.u32 2, %s18
        %p209 = scmp.lt.s32.totalorder %s208, 3
        %s210 = scalar_select %p209, %s208, 3
        %p211 = scmp.lt.s32.totalorder %s19, 0
        %s212 = scalar_select %p211, %s19, 0
        %s213 = sadd.s32 %s212, %s210
        %s214 = smul.addr %s213, 4
        %s215 = scalar_lea.vmem %s0, %s214
        %s216 = smul.u32 2, %s18
      $region32: #{peft_rn_forward.20} parent=27 // pred_fallthru
        _
      // Predicated region
      $region33: #{peft_rn_forward.20} parent=27 // pred_check
        %p217 = pneg %p139
      $region34: #{peft_rn_forward.20} parent=27 // pred_check_branch
        %219 = sbr.rel (%p217) target = $region36
      $region35: #{peft_rn_forward.20} parent=27 // pred_region
        %s220 = smul.u32 2, %s18
        %p221 = scmp.lt.s32.totalorder %s220, 3
        %s222 = scalar_select %p221, %s220, 3
        %s223 = smul.addr %s222, 4
        %s224 = scalar_lea.vmem %s4, %s223
        %s225 = smul.u32 2, %s18
      $region36: #{peft_rn_forward.20} parent=27 // pred_fallthru
        _
    $region28: #{peft_rn_forward.20} parent=5 // pred_fallthru
      _
    %p226 = scmp.le.s32.totalorder 1, %s11
    %p227 = scmp.lt.s32.totalorder %s11, 3
    %p228 = pnand %p226, %p227
    %p229 = pneg %p228
    // Predicated region
    $region37: #{peft_rn_forward.20} parent=5 // pred_check
      _
    $region38: #{peft_rn_forward.20} parent=5 // pred_check_branch
      %231 = sbr.rel (%p228) target = $region40
    $region39: #{peft_rn_forward.20} parent=5 // pred_region
      %s232 = ssub.s32 %s11, 1
      %s233 = smul.u32 2, %s20
      %p234 = scmp.lt.s32.totalorder %s233, 3
      %s235 = scalar_select %p234, %s233, 3
      %p236 = scmp.lt.s32.totalorder %s21, 0
      %s237 = scalar_select %p236, %s21, 0
      %s238 = sadd.s32 %s237, %s235
      %s239 = smul.addr %s238, 4
      %s240 = scalar_lea.vmem %s0, %s239
      %p241 = pneg %p51
      %p242 = pneg %p48
      %s243 = smul.u32 16, %s21
      %p244 = scmp.lt.s32.totalorder %s243, 15
      %s245 = scalar_select %p244, %s243, 15
      %s246 = smul.addr %s245, 4
      %s247 = scalar_lea.vmem %s1, %s246
      %p248 = pneg %p77
      %p249 = pneg %p74
      %p250 = pneg %p98
      %p251 = pneg %p95
      %p252 = pneg %p119
      %p253 = pneg %p116
      %s254 = smul.u32 2, %s20
      %p255 = scmp.lt.s32.totalorder %s254, 3
      %s256 = scalar_select %p255, %s254, 3
      %s257 = smul.addr %s256, 4
      %s258 = scalar_lea.vmem %s4, %s257
      %p259 = pneg %p145
      %p260 = pneg %p142
      %p261 = pneg %p171
      %p262 = pneg %p168
      %s263 = smul.u32 2, %s20
      %p264 = scmp.lt.s32.totalorder %s263, 3
      %s265 = scalar_select %p264, %s263, 3
      %s266 = smul.addr %s265, 4
      %s267 = scalar_lea.vmem %s5, %s266
      %s268 = smul.u32 2, %s20
      %p269 = scmp.lt.s32.totalorder %s268, 3
      %s270 = scalar_select %p269, %s268, 3
      %p271 = scmp.lt.s32.totalorder %s21, 0
      %s272 = scalar_select %p271, %s21, 0
      %s273 = sadd.s32 %s272, %s270
      %s274 = smul.addr %s273, 4
      %s275 = scalar_lea.vmem %s0, %s274
      %s276 = smul.u32 2, %s20
      %s277 = smul.u32 16, %s21
      %p278 = scmp.lt.s32.totalorder %s277, 15
      %s279 = scalar_select %p278, %s277, 15
      %s280 = smul.addr %s279, 4
      %s281 = scalar_lea.vmem %s1, %s280
      %s282 = smul.u32 16, %s21
      %s283 = smul.u32 2, %s20
      %p284 = scmp.lt.s32.totalorder %s283, 3
      %s285 = scalar_select %p284, %s283, 3
      %s286 = smul.addr %s285, 4
      %s287 = scalar_lea.vmem %s4, %s286
      %s288 = smul.u32 2, %s20
      %s289 = smul.u32 2, %s20
      %p290 = scmp.lt.s32.totalorder %s289, 3
      %s291 = scalar_select %p290, %s289, 3
      %s292 = smul.addr %s291, 4
      %s293 = scalar_lea.vmem %s5, %s292
      %s294 = smul.u32 2, %s20
      %p295 = scmp.eq.s32.totalorder %s21, 0
      // Predicated region
      $region41: #{peft_rn_forward.20} parent=39 // pred_check
        %p296 = pneg %p295
      $region42: #{peft_rn_forward.20} parent=39 // pred_check_branch
        %298 = sbr.rel (%p296) target = $region44
      $region43: #{peft_rn_forward.20} parent=39 // pred_region
        %299 = vst [vmem:[#allocation2] sm:$0xff] 0.0
        %300 = vst [vmem:[#allocation2 + $0x8] sm:$0xff] 0.0
      $region44: #{peft_rn_forward.20} parent=39 // pred_fallthru
        _
      %v301 = vld [vmem:[#allocation2] sm:$0xff]
      %v302 = vld [vmem:[#allocation2 + $0x8] sm:$0xff]
      %v303 = vld [vmem:[%s275] sm:$0xf]
      %v304 = vld [vmem:[%s275 + $0x4] sm:$0xf]
      %v305 = vld [vmem:[%s281] sm:$0xf]
      %v306 = vld [vmem:[%s281 + $0x4] sm:$0xf]
      %v307 = vld [vmem:[%s281 + $0x8] sm:$0xf]
      %v308 = vld [vmem:[%s281 + $0xc] sm:$0xf]
      %v309 = vld [vmem:[%s281 + $0x10] sm:$0xf]
      %v310 = vld [vmem:[%s281 + $0x14] sm:$0xf]
      %v311 = vld [vmem:[%s281 + $0x18] sm:$0xf]
      %v312 = vld [vmem:[%s281 + $0x1c] sm:$0xf]
      %v313 = vld [vmem:[%s281 + $0x20] sm:$0xf]
      %v314 = vld [vmem:[%s281 + $0x24] sm:$0xf]
      %v315 = vld [vmem:[%s281 + $0x28] sm:$0xf]
      %v316 = vld [vmem:[%s281 + $0x2c] sm:$0xf]
      %v317 = vld [vmem:[%s281 + $0x30] sm:$0xf]
      %v318 = vld [vmem:[%s281 + $0x34] sm:$0xf]
      %v319 = vld [vmem:[%s281 + $0x38] sm:$0xf]
      %v320 = vld [vmem:[%s281 + $0x3c] sm:$0xf]
      %v323 = vunpack.c.l.b16 %v303
      %v324 = vunpack.c.l.b16 %v304
      %v325 = vpack.c.b16 %v324, %v323
      %v343 = vunpack.c.l.b16 %v305
      %v344 = vunpack.c.l.b16 %v306
      %v345 = vunpack.c.l.b16 %v307
      %v346 = vunpack.c.l.b16 %v308
      %v347 = vunpack.c.l.b16 %v309
      %v348 = vunpack.c.l.b16 %v310
      %v349 = vunpack.c.l.b16 %v311
      %v350 = vunpack.c.l.b16 %v312
      %v351 = vunpack.c.l.b16 %v313
      %v352 = vunpack.c.l.b16 %v314
      %v353 = vunpack.c.l.b16 %v315
      %v354 = vunpack.c.l.b16 %v316
      %v355 = vunpack.c.l.b16 %v317
      %v356 = vunpack.c.l.b16 %v318
      %v357 = vunpack.c.l.b16 %v319
      %v358 = vunpack.c.l.b16 %v320
      %v359 = vpack.c.b16 %v344, %v343
      %v360 = vpack.c.b16 %v346, %v345
      %v361 = vpack.c.b16 %v348, %v347
      %v362 = vpack.c.b16 %v350, %v349
      %v363 = vpack.c.b16 %v352, %v351
      %v364 = vpack.c.b16 %v354, %v353
      %v365 = vpack.c.b16 %v356, %v355
      %v366 = vpack.c.b16 %v358, %v357
      %375 = vmatpush.bf16.msra.mxu0 %v366
      %376 = vmatpush.bf16.msra.mxu0 %v365
      %377 = vmatpush.bf16.msra.mxu0 %v364
      %378 = vmatpush.bf16.msra.mxu0 %v363
      %379 = vmatpush.bf16.msra.mxu0 %v362
      %380 = vmatpush.bf16.msra.mxu0 %v361
      %381 = vmatpush.bf16.msra.mxu0 %v360
      %382 = vmatpush.bf16.msra.mxu0 %v359
      %383 = vmatmul.bf16.gmra.mxu0 %v325
      %v384 = vpop.f32.mrf.mxu0
      %v385 = vadd.f32 0.0, %v384
      %v386 = vpop.f32.mrf.mxu0
      %v387 = vadd.f32 0.0, %v386
      %388 = vdwg.mxu0
      %v389 = vadd.f32 %v301, %v385
      %v390 = vadd.f32 %v302, %v387
      %391 = vst [vmem:[#allocation2] sm:$0xff] %v389
      %392 = vst [vmem:[#allocation2 + $0x8] sm:$0xff] %v390
      // Predicated region
      $region45: #{peft_rn_forward.20} parent=39 // pred_check
        %p393 = pneg %p295
      $region46: #{peft_rn_forward.20} parent=39 // pred_check_branch
        %395 = sbr.rel (%p393) target = $region48
      $region47: #{peft_rn_forward.20} parent=39 // pred_region
        %v396 = vld [vmem:[#allocation2] sm:$0xff]
        %v397 = vld [vmem:[#allocation2 + $0x8] sm:$0xff]
        %v398 = vld [vmem:[%s2] sm:$0x1]
        %v400 = vperm.slane %v398, 0
        %v402 = vmul.f32 %v396, %v400
        %v403 = vmul.f32 %v397, %v400
        %v404 = vld [vmem:[%s3] sm:$0x1]
        %v406 = vperm.slane %v404, 0
        %v408 = vadd.f32 %v402, %v406
        %v409 = vadd.f32 %v403, %v406
        %v410 = vld [vmem:[%s287] sm:$0xf]
        %v411 = vld [vmem:[%s287 + $0x4] sm:$0xf]
        %v412 = vunpack.c.l.bf16 %v410
        %v413 = vunpack.c.l.bf16 %v411
        %v414 = vadd.f32 %v408, %v412
        %v415 = vadd.f32 %v409, %v413
        %v416 = vmax.f32 %v414, 0.0
        %v417 = vmax.f32 %v415, 0.0
        %v418 = vpack.c.bf16 %v416, %v416
        %v419 = vpack.c.bf16 %v417, %v417
        %420 = vst [vmem:[%s293] sm:$0xf] %v418
        %421 = vst [vmem:[%s293 + $0x4] sm:$0xf] %v419
      $region48: #{peft_rn_forward.20} parent=39 // pred_fallthru
        _
      %s422 = smul.u32 2, %s20
      %p423 = scmp.lt.s32.totalorder %s422, 3
      %s424 = scalar_select %p423, %s422, 3
      %s425 = smul.addr %s424, 4
      %s426 = scalar_lea.vmem %s5, %s425
      // Predicated region
      $region49: #{peft_rn_forward.20} parent=39 // pred_check
        %p427 = pneg %p168
      $region50: #{peft_rn_forward.20} parent=39 // pred_check_branch
        %429 = sbr.rel (%p427) target = $region52
      $region51: #{peft_rn_forward.20} parent=39 // pred_region
        %s430 = smul.u32 2, %s20
      $region52: #{peft_rn_forward.20} parent=39 // pred_fallthru
        _
    $region40: #{peft_rn_forward.20} parent=5 // pred_fallthru
      _
    %p431 = scmp.le.s32.totalorder 2, %s11
    // Predicated region
    $region53: #{peft_rn_forward.20} parent=5 // pred_check
      %p432 = pneg %p431
    $region54: #{peft_rn_forward.20} parent=5 // pred_check_branch
      %434 = sbr.rel (%p432) target = $region56
    $region55: #{peft_rn_forward.20} parent=5 // pred_region
      %s435 = ssub.s32 %s11, 2
      // Predicated region
      $region57: #{peft_rn_forward.20} parent=55 // pred_check
        %p436 = pneg %p174
      $region58: #{peft_rn_forward.20} parent=55 // pred_check_branch
        %438 = sbr.rel (%p436) target = $region60
      $region59: #{peft_rn_forward.20} parent=55 // pred_region
        %s439 = smul.u32 2, %s22
        %p440 = scmp.lt.s32.totalorder %s439, 3
        %s441 = scalar_select %p440, %s439, 3
        %s442 = smul.addr %s441, 4
        %s443 = scalar_lea.vmem %s5, %s442
      $region60: #{peft_rn_forward.20} parent=55 // pred_fallthru
        _
    $region56: #{peft_rn_forward.20} parent=5 // pred_fallthru
      _
  $region6: #{peft_rn_forward.20} parent=0 // loop_footer
    %s15 = sadd.s32 1, %s11
  $region7: #{peft_rn_forward.20} parent=0 // loop_footer_branch
    %10 = sbr.rel target = $region3
  $region8: #{peft_rn_forward.20} parent=0 // loop_exit
    _

// kernel: peft_rn_forward.19
$region0: #{peft_rn_forward.19}
  #allocation0 [shape = 'u32[]', space=smem, size = 0x4, offset = 0x4, fixed_abs, tag = 'smem constant byte address 0x4 - core index']
  #allocation1 [shape = 'u32[72,128]{1,0:T(1,128)}', space=vmem, size = 0x9000, scoped, tag = 'internal scratch']
  #allocation2 [shape = 'f32[16,128]{1,0:T(8,128)}', space=vmem, size = 0x2000, scoped, tag = 'scratch operand']
  %s0 = inlined_call_operand.vmem [shape: bf16[32,128], index: 0, kind: input, shape index: {}]
  %s1 = inlined_call_operand.vmem [shape: bf16[128,128], index: 1, kind: input, shape index: {}]
  %s2 = inlined_call_operand.vmem [shape: f32[1,128], index: 2, kind: input, shape index: {}]
  %s3 = inlined_call_operand.vmem [shape: f32[1,128], index: 3, kind: input, shape index: {}]
  %s4 = inlined_call_operand.vmem [shape: bf16[32,128], index: 4, kind: output, shape index: {}]
  %s5 = sld [smem:[#allocation0]]
  $region57: #{peft_rn_forward.19} parent=0
    _
  %s7 = ssub.s32 1, %s5
  %s8 = scalar_select 0, %s7, %s5
  loop: start=0, step=1, limit=4
  $region2: #{peft_rn_forward.19} parent=0 // loop_pre_header
    _
  $region3: #{peft_rn_forward.19} parent=0 // loop_header
    %s10 = sphi 0, %s14
    %p11 = scmp.ge.s32.totalorder %s10, 4
    %s17 = sphi 0, %s29
    %s18 = sphi 0, %s25
    %s19 = sphi 0, %s17
    %s20 = sphi 0, %s18
    %s21 = sphi 0, %s19
    %s22 = sphi 0, %s20
    %s34 = sphi 0, %s36
    %s37 = sphi 0, %s34
    %s38 = sphi 0, %s37
    %s54 = sphi 0, %s38
    %s60 = sphi 0, %s62
    %s63 = sphi 0, %s60
    %s64 = sphi 0, %s63
    %s80 = sphi 0, %s64
    %s84 = sphi 0, %s84
    %s86 = sphi 0, %s84
    %s87 = sphi 0, %s86
    %s101 = sphi 0, %s87
    %s105 = sphi 0, %s105
    %s107 = sphi 0, %s105
    %s108 = sphi 0, %s107
    %s122 = sphi 0, %s108
    %s128 = sphi 0, %s130
    %s131 = sphi 0, %s128
    %s132 = sphi 0, %s131
    %s148 = sphi 0, %s132
  $region4: #{peft_rn_forward.19} parent=0 // loop_header_branch
    %13 = sbr.rel (%p11) target = $region8
  $region5: #{peft_rn_forward.19} parent=0 // loop_body
    %s15 = ssub.s32 %s10, 1
    %s16 = ssub.s32 %s10, 2
    %s23 = sadd.s32 1, %s18
    %p24 = scmp.ge.s32.totalorder %s23, 1
    %s25 = scalar_select %p24, 0, %s23
    %s26 = sadd.s32 1, %s17
    %s27 = scalar_select %p24, %s26, %s17
    %p28 = scmp.ge.s32.totalorder %s27, 2
    %s29 = scalar_select %p28, 0, %s27
    %s30 = ssub.s32 %s17, %s29
    %s31 = ssub.s32 %s18, %s25
    %s32 = sor.u32 %s30, %s31
    %p33 = scmp.eq.s32.totalorder %s32, 0
    %s35 = sadd.s32 %s34, 1
    %s36 = scalar_select %p33, %s34, %s35
    %p39 = pneg %p33
    %p40 = scmp.eq.s32.totalorder %s10, 1
    %p41 = por %p39, %p40
    %p42 = scmp.ne.s32.totalorder %s34, %s37
    %p43 = scmp.eq.s32.totalorder %s10, 0
    %p44 = por %p42, %p43
    %p45 = scmp.ne.s32.totalorder %s34, %s37
    %p46 = scmp.eq.s32.totalorder %s15, 1
    %p47 = por %p45, %p46
    %p48 = scmp.ne.s32.totalorder %s37, %s38
    %p49 = scmp.eq.s32.totalorder %s15, 0
    %p50 = por %p48, %p49
    %p51 = scmp.ne.s32.totalorder %s37, %s38
    %p52 = scmp.eq.s32.totalorder %s16, 1
    %p53 = por %p51, %p52
    %p55 = scmp.ne.s32.totalorder %s38, %s54
    %p56 = scmp.eq.s32.totalorder %s16, 0
    %p57 = por %p55, %p56
    %s58 = ssub.s32 %s18, %s25
    %p59 = scmp.eq.s32.totalorder %s58, 0
    %s61 = sadd.s32 %s60, 1
    %s62 = scalar_select %p59, %s60, %s61
    %p65 = pneg %p59
    %p66 = scmp.eq.s32.totalorder %s10, 1
    %p67 = por %p65, %p66
    %p68 = scmp.ne.s32.totalorder %s60, %s63
    %p69 = scmp.eq.s32.totalorder %s10, 0
    %p70 = por %p68, %p69
    %p71 = scmp.ne.s32.totalorder %s60, %s63
    %p72 = scmp.eq.s32.totalorder %s15, 1
    %p73 = por %p71, %p72
    %p74 = scmp.ne.s32.totalorder %s63, %s64
    %p75 = scmp.eq.s32.totalorder %s15, 0
    %p76 = por %p74, %p75
    %p77 = scmp.ne.s32.totalorder %s63, %s64
    %p78 = scmp.eq.s32.totalorder %s16, 1
    %p79 = por %p77, %p78
    %p81 = scmp.ne.s32.totalorder %s64, %s80
    %p82 = scmp.eq.s32.totalorder %s16, 0
    %p83 = por %p81, %p82
    %s85 = sadd.s32 %s84, 1
    %p88 = scmp.eq.s32.totalorder %s10, 1
    %p89 = scmp.ne.s32.totalorder %s84, %s86
    %p90 = scmp.eq.s32.totalorder %s10, 0
    %p91 = por %p89, %p90
    %p92 = scmp.ne.s32.totalorder %s84, %s86
    %p93 = scmp.eq.s32.totalorder %s15, 1
    %p94 = por %p92, %p93
    %p95 = scmp.ne.s32.totalorder %s86, %s87
    %p96 = scmp.eq.s32.totalorder %s15, 0
    %p97 = por %p95, %p96
    %p98 = scmp.ne.s32.totalorder %s86, %s87
    %p99 = scmp.eq.s32.totalorder %s16, 1
    %p100 = por %p98, %p99
    %p102 = scmp.ne.s32.totalorder %s87, %s101
    %p103 = scmp.eq.s32.totalorder %s16, 0
    %p104 = por %p102, %p103
    %s106 = sadd.s32 %s105, 1
    %p109 = scmp.eq.s32.totalorder %s10, 1
    %p110 = scmp.ne.s32.totalorder %s105, %s107
    %p111 = scmp.eq.s32.totalorder %s10, 0
    %p112 = por %p110, %p111
    %p113 = scmp.ne.s32.totalorder %s105, %s107
    %p114 = scmp.eq.s32.totalorder %s15, 1
    %p115 = por %p113, %p114
    %p116 = scmp.ne.s32.totalorder %s107, %s108
    %p117 = scmp.eq.s32.totalorder %s15, 0
    %p118 = por %p116, %p117
    %p119 = scmp.ne.s32.totalorder %s107, %s108
    %p120 = scmp.eq.s32.totalorder %s16, 1
    %p121 = por %p119, %p120
    %p123 = scmp.ne.s32.totalorder %s108, %s122
    %p124 = scmp.eq.s32.totalorder %s16, 0
    %p125 = por %p123, %p124
    %s126 = ssub.s32 %s17, %s29
    %p127 = scmp.eq.s32.totalorder %s126, 0
    %s129 = sadd.s32 %s128, 1
    %s130 = scalar_select %p127, %s128, %s129
    %p133 = pneg %p127
    %p134 = scmp.eq.s32.totalorder %s10, 1
    %p135 = por %p133, %p134
    %p136 = scmp.ne.s32.totalorder %s128, %s131
    %p137 = scmp.eq.s32.totalorder %s10, 0
    %p138 = por %p136, %p137
    %p139 = scmp.ne.s32.totalorder %s128, %s131
    %p140 = scmp.eq.s32.totalorder %s15, 1
    %p141 = por %p139, %p140
    %p142 = scmp.ne.s32.totalorder %s131, %s132
    %p143 = scmp.eq.s32.totalorder %s15, 0
    %p144 = por %p142, %p143
    %p145 = scmp.ne.s32.totalorder %s131, %s132
    %p146 = scmp.eq.s32.totalorder %s16, 1
    %p147 = por %p145, %p146
    %p149 = scmp.ne.s32.totalorder %s132, %s148
    %p150 = scmp.eq.s32.totalorder %s16, 0
    %p151 = por %p149, %p150
    %p152 = scmp.le.s32.totalorder 1, %s10
    %p153 = scmp.lt.s32.totalorder %s10, 3
    %p154 = pnand %p152, %p153
    %p155 = pneg %p154
    // Predicated region
    $region9: #{peft_rn_forward.19} parent=5 // pred_check
      _
    $region10: #{peft_rn_forward.19} parent=5 // pred_check_branch
      %157 = sbr.rel (%p154) target = $region12
    $region11: #{peft_rn_forward.19} parent=5 // pred_region
      %s158 = ssub.s32 %s10, 1
      // Predicated region
      $region13: #{peft_rn_forward.19} parent=11 // pred_check
        %p159 = pneg %p76
      $region14: #{peft_rn_forward.19} parent=11 // pred_check_branch
        %161 = sbr.rel (%p159) target = $region16
      $region15: #{peft_rn_forward.19} parent=11 // pred_region
        %s162 = smul.u32 16, %s20
        %p163 = scmp.lt.s32.totalorder %s162, 15
        %s164 = scalar_select %p163, %s162, 15
        %s165 = smul.addr %s164, 4
        %s166 = scalar_lea.vmem %s1, %s165
        %s167 = smul.u32 16, %s20
      $region16: #{peft_rn_forward.19} parent=11 // pred_fallthru
        _
      // Predicated region
      $region17: #{peft_rn_forward.19} parent=11 // pred_check
        %p168 = pneg %p97
      $region18: #{peft_rn_forward.19} parent=11 // pred_check_branch
        %170 = sbr.rel (%p168) target = $region20
      $region19: #{peft_rn_forward.19} parent=11 // pred_region
        _
      $region20: #{peft_rn_forward.19} parent=11 // pred_fallthru
        _
      // Predicated region
      $region21: #{peft_rn_forward.19} parent=11 // pred_check
        %p171 = pneg %p118
      $region22: #{peft_rn_forward.19} parent=11 // pred_check_branch
        %173 = sbr.rel (%p171) target = $region24
      $region23: #{peft_rn_forward.19} parent=11 // pred_region
        _
      $region24: #{peft_rn_forward.19} parent=11 // pred_fallthru
        _
    $region12: #{peft_rn_forward.19} parent=5 // pred_fallthru
      _
    %p174 = scmp.lt.s32.totalorder %s10, 2
    // Predicated region
    $region25: #{peft_rn_forward.19} parent=5 // pred_check
      %p175 = pneg %p174
    $region26: #{peft_rn_forward.19} parent=5 // pred_check_branch
      %177 = sbr.rel (%p175) target = $region28
    $region27: #{peft_rn_forward.19} parent=5 // pred_region
      // Predicated region
      $region29: #{peft_rn_forward.19} parent=27 // pred_check
        %p178 = pneg %p44
      $region30: #{peft_rn_forward.19} parent=27 // pred_check_branch
        %180 = sbr.rel (%p178) target = $region32
      $region31: #{peft_rn_forward.19} parent=27 // pred_region
        %s181 = smul.u32 2, %s17
        %p182 = scmp.lt.s32.totalorder %s181, 3
        %s183 = scalar_select %p182, %s181, 3
        %p184 = scmp.lt.s32.totalorder %s18, 0
        %s185 = scalar_select %p184, %s18, 0
        %s186 = sadd.s32 %s185, %s183
        %s187 = smul.addr %s186, 4
        %s188 = scalar_lea.vmem %s0, %s187
        %s189 = smul.u32 2, %s17
      $region32: #{peft_rn_forward.19} parent=27 // pred_fallthru
        _
    $region28: #{peft_rn_forward.19} parent=5 // pred_fallthru
      _
    %p190 = scmp.le.s32.totalorder 1, %s10
    %p191 = scmp.lt.s32.totalorder %s10, 3
    %p192 = pnand %p190, %p191
    %p193 = pneg %p192
    // Predicated region
    $region33: #{peft_rn_forward.19} parent=5 // pred_check
      _
    $region34: #{peft_rn_forward.19} parent=5 // pred_check_branch
      %195 = sbr.rel (%p192) target = $region36
    $region35: #{peft_rn_forward.19} parent=5 // pred_region
      %s196 = ssub.s32 %s10, 1
      %s197 = smul.u32 2, %s19
      %p198 = scmp.lt.s32.totalorder %s197, 3
      %s199 = scalar_select %p198, %s197, 3
      %p200 = scmp.lt.s32.totalorder %s20, 0
      %s201 = scalar_select %p200, %s20, 0
      %s202 = sadd.s32 %s201, %s199
      %s203 = smul.addr %s202, 4
      %s204 = scalar_lea.vmem %s0, %s203
      %p205 = pneg %p50
      %p206 = pneg %p47
      %s207 = smul.u32 16, %s20
      %p208 = scmp.lt.s32.totalorder %s207, 15
      %s209 = scalar_select %p208, %s207, 15
      %s210 = smul.addr %s209, 4
      %s211 = scalar_lea.vmem %s1, %s210
      %p212 = pneg %p76
      %p213 = pneg %p73
      %p214 = pneg %p97
      %p215 = pneg %p94
      %p216 = pneg %p118
      %p217 = pneg %p115
      %p218 = pneg %p144
      %p219 = pneg %p141
      %s220 = smul.u32 2, %s19
      %p221 = scmp.lt.s32.totalorder %s220, 3
      %s222 = scalar_select %p221, %s220, 3
      %s223 = smul.addr %s222, 4
      %s224 = scalar_lea.vmem %s4, %s223
      %s225 = smul.u32 2, %s19
      %p226 = scmp.lt.s32.totalorder %s225, 3
      %s227 = scalar_select %p226, %s225, 3
      %p228 = scmp.lt.s32.totalorder %s20, 0
      %s229 = scalar_select %p228, %s20, 0
      %s230 = sadd.s32 %s229, %s227
      %s231 = smul.addr %s230, 4
      %s232 = scalar_lea.vmem %s0, %s231
      %s233 = smul.u32 2, %s19
      %s234 = smul.u32 16, %s20
      %p235 = scmp.lt.s32.totalorder %s234, 15
      %s236 = scalar_select %p235, %s234, 15
      %s237 = smul.addr %s236, 4
      %s238 = scalar_lea.vmem %s1, %s237
      %s239 = smul.u32 16, %s20
      %s240 = smul.u32 2, %s19
      %p241 = scmp.lt.s32.totalorder %s240, 3
      %s242 = scalar_select %p241, %s240, 3
      %s243 = smul.addr %s242, 4
      %s244 = scalar_lea.vmem %s4, %s243
      %s245 = smul.u32 2, %s19
      %p246 = scmp.eq.s32.totalorder %s20, 0
      // Predicated region
      $region37: #{peft_rn_forward.19} parent=35 // pred_check
        %p247 = pneg %p246
      $region38: #{peft_rn_forward.19} parent=35 // pred_check_branch
        %249 = sbr.rel (%p247) target = $region40
      $region39: #{peft_rn_forward.19} parent=35 // pred_region
        %250 = vst [vmem:[#allocation2] sm:$0xff] 0.0
        %251 = vst [vmem:[#allocation2 + $0x8] sm:$0xff] 0.0
      $region40: #{peft_rn_forward.19} parent=35 // pred_fallthru
        _
      %v252 = vld [vmem:[#allocation2] sm:$0xff]
      %v253 = vld [vmem:[#allocation2 + $0x8] sm:$0xff]
      %v254 = vld [vmem:[%s232] sm:$0xf]
      %v255 = vld [vmem:[%s232 + $0x4] sm:$0xf]
      %v256 = vld [vmem:[%s238] sm:$0xf]
      %v257 = vld [vmem:[%s238 + $0x4] sm:$0xf]
      %v258 = vld [vmem:[%s238 + $0x8] sm:$0xf]
      %v259 = vld [vmem:[%s238 + $0xc] sm:$0xf]
      %v260 = vld [vmem:[%s238 + $0x10] sm:$0xf]
      %v261 = vld [vmem:[%s238 + $0x14] sm:$0xf]
      %v262 = vld [vmem:[%s238 + $0x18] sm:$0xf]
      %v263 = vld [vmem:[%s238 + $0x1c] sm:$0xf]
      %v264 = vld [vmem:[%s238 + $0x20] sm:$0xf]
      %v265 = vld [vmem:[%s238 + $0x24] sm:$0xf]
      %v266 = vld [vmem:[%s238 + $0x28] sm:$0xf]
      %v267 = vld [vmem:[%s238 + $0x2c] sm:$0xf]
      %v268 = vld [vmem:[%s238 + $0x30] sm:$0xf]
      %v269 = vld [vmem:[%s238 + $0x34] sm:$0xf]
      %v270 = vld [vmem:[%s238 + $0x38] sm:$0xf]
      %v271 = vld [vmem:[%s238 + $0x3c] sm:$0xf]
      %v274 = vunpack.c.l.b16 %v254
      %v275 = vunpack.c.l.b16 %v255
      %v276 = vpack.c.b16 %v275, %v274
      %v294 = vunpack.c.l.b16 %v256
      %v295 = vunpack.c.l.b16 %v257
      %v296 = vunpack.c.l.b16 %v258
      %v297 = vunpack.c.l.b16 %v259
      %v298 = vunpack.c.l.b16 %v260
      %v299 = vunpack.c.l.b16 %v261
      %v300 = vunpack.c.l.b16 %v262
      %v301 = vunpack.c.l.b16 %v263
      %v302 = vunpack.c.l.b16 %v264
      %v303 = vunpack.c.l.b16 %v265
      %v304 = vunpack.c.l.b16 %v266
      %v305 = vunpack.c.l.b16 %v267
      %v306 = vunpack.c.l.b16 %v268
      %v307 = vunpack.c.l.b16 %v269
      %v308 = vunpack.c.l.b16 %v270
      %v309 = vunpack.c.l.b16 %v271
      %v310 = vpack.c.b16 %v295, %v294
      %v311 = vpack.c.b16 %v297, %v296
      %v312 = vpack.c.b16 %v299, %v298
      %v313 = vpack.c.b16 %v301, %v300
      %v314 = vpack.c.b16 %v303, %v302
      %v315 = vpack.c.b16 %v305, %v304
      %v316 = vpack.c.b16 %v307, %v306
      %v317 = vpack.c.b16 %v309, %v308
      %326 = vmatpush.bf16.msra.mxu0 %v317
      %327 = vmatpush.bf16.msra.mxu0 %v316
      %328 = vmatpush.bf16.msra.mxu0 %v315
      %329 = vmatpush.bf16.msra.mxu0 %v314
      %330 = vmatpush.bf16.msra.mxu0 %v313
      %331 = vmatpush.bf16.msra.mxu0 %v312
      %332 = vmatpush.bf16.msra.mxu0 %v311
      %333 = vmatpush.bf16.msra.mxu0 %v310
      %334 = vmatmul.bf16.gmra.mxu0 %v276
      %v335 = vpop.f32.mrf.mxu0
      %v336 = vadd.f32 0.0, %v335
      %v337 = vpop.f32.mrf.mxu0
      %v338 = vadd.f32 0.0, %v337
      %339 = vdwg.mxu0
      %v340 = vadd.f32 %v252, %v336
      %v341 = vadd.f32 %v253, %v338
      %342 = vst [vmem:[#allocation2] sm:$0xff] %v340
      %343 = vst [vmem:[#allocation2 + $0x8] sm:$0xff] %v341
      // Predicated region
      $region41: #{peft_rn_forward.19} parent=35 // pred_check
        %p344 = pneg %p246
      $region42: #{peft_rn_forward.19} parent=35 // pred_check_branch
        %346 = sbr.rel (%p344) target = $region44
      $region43: #{peft_rn_forward.19} parent=35 // pred_region
        %v347 = vld [vmem:[#allocation2] sm:$0xff]
        %v348 = vld [vmem:[#allocation2 + $0x8] sm:$0xff]
        %v349 = vld [vmem:[%s2] sm:$0x1]
        %v351 = vperm.slane %v349, 0
        %v353 = vmul.f32 %v347, %v351
        %v354 = vmul.f32 %v348, %v351
        %v355 = vld [vmem:[%s3] sm:$0x1]
        %v357 = vperm.slane %v355, 0
        %v359 = vadd.f32 %v353, %v357
        %v360 = vadd.f32 %v354, %v357
        %v361 = vpack.c.bf16 %v359, %v359
        %v362 = vpack.c.bf16 %v360, %v360
        %363 = vst [vmem:[%s244] sm:$0xf] %v361
        %364 = vst [vmem:[%s244 + $0x4] sm:$0xf] %v362
      $region44: #{peft_rn_forward.19} parent=35 // pred_fallthru
        _
      %s365 = smul.u32 2, %s19
      %p366 = scmp.lt.s32.totalorder %s365, 3
      %s367 = scalar_select %p366, %s365, 3
      %s368 = smul.addr %s367, 4
      %s369 = scalar_lea.vmem %s4, %s368
      // Predicated region
      $region45: #{peft_rn_forward.19} parent=35 // pred_check
        %p370 = pneg %p141
      $region46: #{peft_rn_forward.19} parent=35 // pred_check_branch
        %372 = sbr.rel (%p370) target = $region48
      $region47: #{peft_rn_forward.19} parent=35 // pred_region
        %s373 = smul.u32 2, %s19
      $region48: #{peft_rn_forward.19} parent=35 // pred_fallthru
        _
    $region36: #{peft_rn_forward.19} parent=5 // pred_fallthru
      _
    %p374 = scmp.le.s32.totalorder 2, %s10
    // Predicated region
    $region49: #{peft_rn_forward.19} parent=5 // pred_check
      %p375 = pneg %p374
    $region50: #{peft_rn_forward.19} parent=5 // pred_check_branch
      %377 = sbr.rel (%p375) target = $region52
    $region51: #{peft_rn_forward.19} parent=5 // pred_region
      %s378 = ssub.s32 %s10, 2
      // Predicated region
      $region53: #{peft_rn_forward.19} parent=51 // pred_check
        %p379 = pneg %p147
      $region54: #{peft_rn_forward.19} parent=51 // pred_check_branch
        %381 = sbr.rel (%p379) target = $region56
      $region55: #{peft_rn_forward.19} parent=51 // pred_region
        %s382 = smul.u32 2, %s21
        %p383 = scmp.lt.s32.totalorder %s382, 3
        %s384 = scalar_select %p383, %s382, 3
        %s385 = smul.addr %s384, 4
        %s386 = scalar_lea.vmem %s4, %s385
      $region56: #{peft_rn_forward.19} parent=51 // pred_fallthru
        _
    $region52: #{peft_rn_forward.19} parent=5 // pred_fallthru
      _
  $region6: #{peft_rn_forward.19} parent=0 // loop_footer
    %s14 = sadd.s32 1, %s10
  $region7: #{peft_rn_forward.19} parent=0 // loop_footer_branch
    %9 = sbr.rel target = $region3
  $region8: #{peft_rn_forward.19} parent=0 // loop_exit
    _

// kernel: peft_rn_forward.21
$region0: #{peft_rn_forward.21}
  #allocation0 [shape = 'u32[]', space=smem, size = 0x4, offset = 0x4, fixed_abs, tag = 'smem constant byte address 0x4 - core index']
  #allocation1 [shape = 'u32[72,128]{1,0:T(1,128)}', space=vmem, size = 0x9000, scoped, tag = 'internal scratch']
  %s0 = inlined_call_operand.vmem [shape: bf16[2,16,128], index: 0, kind: input, shape index: {}]
  %s1 = inlined_call_operand.hbm [shape: f32[2,1,128], index: 1, kind: output, shape index: {}]
  %s2 = sld [smem:[#allocation0]]
  $region37: #{peft_rn_forward.21} parent=0
    _
  %s4 = ssub.s32 1, %s2
  %s5 = scalar_select 0, %s4, %s2
  $region1: #{peft_rn_forward.21} parent=0
    #allocation2 [shape = 'u8[1024]{0}', space=vmem, size = 0x400, scoped, tag = 'output window, operand 0']
    #allocation3 [shape = 's32[2]{0}', space=sflag, size = 0x8, scoped, tag = 'scoped memory for peft_rn_forward.21']
    %6 = vsyncpa [#allocation3], 0
    %s7 = scalar_lea.sflag [#allocation3], 1
    %8 = vsyncpa %s7, 0
    loop: start=0, step=1, limit=4
    $region2: #{peft_rn_forward.21} parent=1 // loop_pre_header
      _
    $region3: #{peft_rn_forward.21} parent=1 // loop_header
      %s10 = sphi 0, %s14
      %p11 = scmp.ge.s32.totalorder %s10, 4
      %s20 = sphi 0, %s22
      %s23 = sphi 0, %s20
      %s24 = sphi 0, %s23
      %s40 = sphi 0, %s24
      %s46 = sphi 0, %s48
      %s49 = sphi 0, %s46
      %s50 = sphi 0, %s49
      %s66 = sphi 0, %s50
    $region4: #{peft_rn_forward.21} parent=1 // loop_header_branch
      %13 = sbr.rel (%p11) target = $region8
    $region5: #{peft_rn_forward.21} parent=1 // loop_body
      %s15 = ssub.s32 %s10, 1
      %s16 = ssub.s32 %s10, 2
      %s17 = sadd.s32 %s10, 1
      %s18 = ssub.s32 %s10, %s17
      %p19 = scmp.eq.s32.totalorder %s18, 0
      %s21 = sadd.s32 %s20, 1
      %s22 = scalar_select %p19, %s20, %s21
      %p25 = pneg %p19
      %p26 = scmp.eq.s32.totalorder %s10, 1
      %p27 = por %p25, %p26
      %p28 = scmp.ne.s32.totalorder %s20, %s23
      %p29 = scmp.eq.s32.totalorder %s10, 0
      %p30 = por %p28, %p29
      %p31 = scmp.ne.s32.totalorder %s20, %s23
      %p32 = scmp.eq.s32.totalorder %s15, 1
      %p33 = por %p31, %p32
      %p34 = scmp.ne.s32.totalorder %s23, %s24
      %p35 = scmp.eq.s32.totalorder %s15, 0
      %p36 = por %p34, %p35
      %p37 = scmp.ne.s32.totalorder %s23, %s24
      %p38 = scmp.eq.s32.totalorder %s16, 1
      %p39 = por %p37, %p38
      %p41 = scmp.ne.s32.totalorder %s24, %s40
      %p42 = scmp.eq.s32.totalorder %s16, 0
      %p43 = por %p41, %p42
      %s44 = ssub.s32 %s10, %s17
      %p45 = scmp.eq.s32.totalorder %s44, 0
      %s47 = sadd.s32 %s46, 1
      %s48 = scalar_select %p45, %s46, %s47
      %p51 = pneg %p45
      %p52 = scmp.eq.s32.totalorder %s10, 1
      %p53 = por %p51, %p52
      %p54 = scmp.ne.s32.totalorder %s46, %s49
      %p55 = scmp.eq.s32.totalorder %s10, 0
      %p56 = por %p54, %p55
      %p57 = scmp.ne.s32.totalorder %s46, %s49
      %p58 = scmp.eq.s32.totalorder %s15, 1
      %p59 = por %p57, %p58
      %p60 = scmp.ne.s32.totalorder %s49, %s50
      %p61 = scmp.eq.s32.totalorder %s15, 0
      %p62 = por %p60, %p61
      %p63 = scmp.ne.s32.totalorder %s49, %s50
      %p64 = scmp.eq.s32.totalorder %s16, 1
      %p65 = por %p63, %p64
      %p67 = scmp.ne.s32.totalorder %s50, %s66
      %p68 = scmp.eq.s32.totalorder %s16, 0
      %p69 = por %p67, %p68
      %p70 = scmp.le.s32.totalorder 1, %s10
      %p71 = scmp.lt.s32.totalorder %s10, 3
      %p72 = pnand %p70, %p71
      %p73 = pneg %p72
      // Predicated region
      $region9: #{peft_rn_forward.21} parent=5 // pred_check
        _
      $region10: #{peft_rn_forward.21} parent=5 // pred_check_branch
        %75 = sbr.rel (%p72) target = $region12
      $region11: #{peft_rn_forward.21} parent=5 // pred_region
        %s76 = ssub.s32 %s10, 1
      $region12: #{peft_rn_forward.21} parent=5 // pred_fallthru
        _
      %p77 = scmp.lt.s32.totalorder %s10, 2
      // Predicated region
      $region13: #{peft_rn_forward.21} parent=5 // pred_check
        %p78 = pneg %p77
      $region14: #{peft_rn_forward.21} parent=5 // pred_check_branch
        %80 = sbr.rel (%p78) target = $region16
      $region15: #{peft_rn_forward.21} parent=5 // pred_region
        // Predicated region
        $region17: #{peft_rn_forward.21} parent=15 // pred_check
          %p81 = pneg %p30
        $region18: #{peft_rn_forward.21} parent=15 // pred_check_branch
          %83 = sbr.rel (%p81) target = $region20
        $region19: #{peft_rn_forward.21} parent=15 // pred_region
          %p84 = scmp.lt.s32.totalorder %s10, 1
          %s85 = scalar_select %p84, %s10, 1
          %s86 = smul.addr %s85, 2
          %s87 = smul.addr %s86, 4
          %s88 = scalar_lea.vmem %s0, %s87
        $region20: #{peft_rn_forward.21} parent=15 // pred_fallthru
          _
      $region16: #{peft_rn_forward.21} parent=5 // pred_fallthru
        _
      %p89 = scmp.le.s32.totalorder 1, %s10
      %p90 = scmp.lt.s32.totalorder %s10, 3
      %p91 = pnand %p89, %p90
      %p92 = pneg %p91
      // Predicated region
      $region21: #{peft_rn_forward.21} parent=5 // pred_check
        _
      $region22: #{peft_rn_forward.21} parent=5 // pred_check_branch
        %94 = sbr.rel (%p91) target = $region24
      $region23: #{peft_rn_forward.21} parent=5 // pred_region
        %s95 = ssub.s32 %s10, 1
        %p96 = scmp.lt.s32.totalorder %s15, 1
        %s97 = scalar_select %p96, %s15, 1
        %s98 = smul.addr %s97, 2
        %s99 = smul.addr %s98, 4
        %s100 = scalar_lea.vmem %s0, %s99
        %p101 = pneg %p36
        %p102 = pneg %p33
        %p103 = pneg %p62
        %p104 = pneg %p59
        %s105 = sand.u32 %s49, 1
        %s106 = scalar_lea.sflag [#allocation3], %s105
        %s107 = sand.u32 %s49, 1
        %s108 = scalar_lea.vmem [#allocation2], %s107
        %p109 = scmp.lt.s32.totalorder %s15, 1
        %s110 = scalar_select %p109, %s15, 1
        %s111 = smul.addr %s110, 2
        %s112 = smul.addr %s111, 4
        %s113 = scalar_lea.vmem %s0, %s112
        %v114 = vld [vmem:[%s113] sm:$0xf]
        %v115 = vld [vmem:[%s113 + $0x4] sm:$0xf]
        %v116 = vunpack.c.l.bf16 %v114
        %v117 = vunpack.c.l.bf16 %v115
        %v118 = vadd.f32 %v116, %v117
        %v119 = vrot.slane %v118, 4
        %v120 = vadd.f32 %v118, %v119
        %v121 = vrot.slane %v120, 2
        %v122 = vadd.f32 %v120, %v121
        %v123 = vrot.slane %v122, 1
        %v124 = vadd.f32 %v122, %v123
        %v125 = vrcp.pop 16.0
        %v126 = vmul.f32 16.0, %v125
        %v127 = vsub.f32 1.0, %v126
        %v128 = vmul.f32 %v125, %v127
        %v129 = vadd.f32 %v125, %v128
        %vm130 = vweird.f32 %v125
        %v131 = vsel %vm130, %v125, %v129
        %v132 = vmul.f32 %v124, %v131
        %133 = vst [vmem:[%s108] sm:$0x1] %v132
        %s134 = sand.u32 %s49, 1
        %s135 = scalar_lea.sflag [#allocation3], %s134
        %s136 = sand.u32 %s49, 1
        %s137 = scalar_lea.vmem [#allocation2], %s136
        // Predicated region
        $region25: #{peft_rn_forward.21} parent=23 // pred_check
          %p138 = pneg %p59
        $region26: #{peft_rn_forward.21} parent=23 // pred_check_branch
          %140 = sbr.rel (%p138) target = $region28
        $region27: #{peft_rn_forward.21} parent=23 // pred_region
          %142 = vsyncadd %s135, 0
          %s143 = scalar_lea.hbm %s1, %s15
          %s145 = sshll.u32 %s137, 4
          %s146 = int_to_ptr.vmem [resolvable:$true] %s145
          %s147 = sshll.u32 %s143, 4
          %s148 = int_to_ptr.hbm [resolvable:$true] %s147
          %150 = dma.vmem_to_hbm [thread:$0]  %s146, 16, %s148, %s135
        $region28: #{peft_rn_forward.21} parent=23 // pred_fallthru
          _
      $region24: #{peft_rn_forward.21} parent=5 // pred_fallthru
        _
      %p151 = scmp.le.s32.totalorder 2, %s10
      // Predicated region
      $region29: #{peft_rn_forward.21} parent=5 // pred_check
        %p152 = pneg %p151
      $region30: #{peft_rn_forward.21} parent=5 // pred_check_branch
        %154 = sbr.rel (%p152) target = $region32
      $region31: #{peft_rn_forward.21} parent=5 // pred_region
        %s155 = ssub.s32 %s10, 2
        // Predicated region
        $region33: #{peft_rn_forward.21} parent=31 // pred_check
          %p156 = pneg %p65
        $region34: #{peft_rn_forward.21} parent=31 // pred_check_branch
          %158 = sbr.rel (%p156) target = $region36
        $region35: #{peft_rn_forward.21} parent=31 // pred_region
          %s159 = sand.u32 %s50, 1
          %s160 = scalar_lea.sflag [#allocation3], %s159
          %s161 = sand.u32 %s50, 1
          %s162 = scalar_lea.vmem [#allocation2], %s161
          %164 = dma.done %s160, 16
        $region36: #{peft_rn_forward.21} parent=31 // pred_fallthru
          _
      $region32: #{peft_rn_forward.21} parent=5 // pred_fallthru
        _
    $region6: #{peft_rn_forward.21} parent=1 // loop_footer
      %s14 = sadd.s32 1, %s10
    $region7: #{peft_rn_forward.21} parent=1 // loop_footer_branch
      %9 = sbr.rel target = $region3
    $region8: #{peft_rn_forward.21} parent=1 // loop_exit
      _
    %165 = vsyncpa [#allocation3], 1
    %s166 = scalar_lea.sflag [#allocation3], 1
    %167 = vsyncpa %s166, 1

</llo_original>
